<compile_context>
chip_gen: v7x
topology: tpu7x:2x2x1
jax: 0.10.0
libtpu: 0.0.40
codegen_flags: <defaults>
</compile_context>

<pallas_src>
import math
import functools
import numpy as np

import jax
import jax.numpy as jnp
from jax.experimental import pallas as pl
from jax.experimental.pallas import tpu as pltpu


# ----------------------------- configuration --------------------------------
CFG = dict(
    image_size=16,          # s2_split_size: the crop size fed to the ViT
    patch_size=4,
    num_channels=3,
    hidden_size=32,
    intermediate_size=64,
    num_heads=4,
    num_layers=3,
    select_layer=-2,        # args.mm_vision_select_layer
    select_feature='patch',
    s2_scales=(16, 32, 48),  # sorted; split_size = 16, s2_image_size = 48
)

_PACK_ORDER = ('patch_w', 'pre_gb', 'ln_gb', 'qkv_w', 'qkv_b', 'o_w', 'ob2',
               'fc1_w', 'fc1_b', 'fc2_w')


# ----------------------------- fused tower kernel -----------------------------
def _vision_tower_kernel(patches_ref, patch_w_ref, pos_ref, pre_gb_ref, ln_gb_ref,
                         qkv_w_ref, qkv_b_ref, o_w_ref, ob2_ref,
                         fc1_w_ref, fc1_b_ref, fc2_w_ref,
                         out_ref, *, num_heads, crops_per_block, tokens_per_crop,
                         valid_tokens, num_patches):
    """Full CLIP vision tower (up to the selected hidden state) for one crop block.

    patches_ref : [nb*S_pad, Cpp]  bf16   (per-crop: P patch rows, zero CLS row, pad rows)
    pos_ref     : [nb*S_pad, D]    f32    (tiled per crop; class emb folded into CLS row)
    out_ref     : [1, P, nb*D]             (per-crop patch features, lane-concatenated)
    """
    nb = crops_per_block
    Sp = tokens_per_crop
    P = num_patches
    H = num_heads
    D = patch_w_ref.shape[1]
    L = qkv_w_ref.shape[0]
    Dh = D // H
    bf16 = jnp.bfloat16
    f32 = jnp.float32

    def _ln(t, g, b):                     # LayerNorm (eps=1e-5), f32 stats
        mu = jnp.mean(t, axis=-1, keepdims=True)
        var = jnp.mean(jnp.square(t - mu), axis=-1, keepdims=True)
        return (t - mu) * jax.lax.rsqrt(var + 1e-5) * g + b

    # key-padding bias: CLS + patch tokens valid, trailing pad rows masked out of the
    # attention (computed once per grid step, hoisted out of all loops)
    kcol = jax.lax.broadcasted_iota(jnp.int32, (1, Sp), 1)
    key_bias = jnp.where(kcol >= valid_tokens, -1e30, 0.0).astype(f32)

    pre_gb = pre_gb_ref[...]                                               # [2, D]

    # ---- patch embed + (pos + folded CLS) + pre-LN, all crops in one matmul ----
    x = jnp.dot(patches_ref[...], patch_w_ref[...], preferred_element_type=f32)
    x = _ln(x + pos_ref[...], pre_gb[0:1], pre_gb[1:2])                    # [nb*Sp, D]

    # ---- encoder layers (only up to hidden_states[select_layer]) ----
    for li in range(L):
        gb = ln_gb_ref[li]        # [4, D]: ln1_g, ln1_b, ln2_g, ln2_b
        ob = ob2_ref[li]          # [2, D]: o_b, fc2_b

        # --- self-attention block ---
        h = _ln(x, gb[0:1], gb[1:2])
        qkv = jnp.dot(h.astype(bf16), qkv_w_ref[li],
                      preferred_element_type=f32) + qkv_b_ref[li]          # [nb*Sp, 3D]

        crop_outs = []
        for c in range(nb):                         # static crop loop (scores only)
            r0 = c * Sp
            heads = []
            for hd in range(H):                     # static head loop, no transposes
                lo = hd * Dh
                q = qkv[r0:r0 + Sp, lo:lo + Dh].astype(bf16)
                k = qkv[r0:r0 + Sp, D + lo:D + lo + Dh].astype(bf16)
                v = qkv[r0:r0 + Sp, 2 * D + lo:2 * D + lo + Dh].astype(bf16)
                s = jax.lax.dot_general(q, k, (((1,), (1,)), ((), ())),
                                        preferred_element_type=f32)        # [Sp, Sp]
                s = s + key_bias
                s = s - jnp.max(s, axis=-1, keepdims=True)
                pexp = jnp.exp(s)
                pexp = pexp * pl.reciprocal(jnp.sum(pexp, axis=-1, keepdims=True),
                                            approx=True)
                heads.append(jnp.dot(pexp.astype(bf16), v,
                                     preferred_element_type=f32))          # [Sp, Dh]
            crop_outs.append(jnp.concatenate(heads, axis=1))               # [Sp, D]
        attn = jnp.concatenate(crop_outs, axis=0).astype(bf16)             # [nb*Sp, D]

        # single out-projection matmul over all crops/heads + residual
        x = x + jnp.dot(attn, o_w_ref[li], preferred_element_type=f32) + ob[0:1]

        # --- MLP block (quick_gelu), residual fused ---
        h = _ln(x, gb[2:3], gb[3:4])
        h = jnp.dot(h.astype(bf16), fc1_w_ref[li],
                    preferred_element_type=f32) + fc1_b_ref[li]
        h = h * pl.reciprocal(1.0 + jnp.exp(-1.702 * h), approx=True)      # quick_gelu
        x = x + jnp.dot(h.astype(bf16), fc2_w_ref[li],
                        preferred_element_type=f32) + ob[1:2]

    # ---- 'patch' select (drop trailing CLS/pad rows) + lane-dense store ----
    pieces = [x[c * Sp:c * Sp + P, :] for c in range(nb)]   # aligned [:P] slices
    out_ref[0] = jnp.concatenate(pieces, axis=1).astype(out_ref.dtype)     # [P, nb*D]


def _pick_nb(n_crops, d_model):
    """Crops per grid step: largest divisor giving a lane-dense (mult of 128) output
    block while keeping >= 2 grid steps for v7x's two TensorCores."""
    divs = [d for d in range(1, min(n_crops, 16) + 1) if n_crops % d == 0]
    best = None
    for d in divs:
        if n_crops // d >= 2 and (d * d_model) % 128 == 0:
            best = d
    if best is None:
        for d in divs:
            if n_crops // d >= 2:
                best = d
    return best or 1


def clip_forward_feature(crops, pack, cfg):
    """Batched CLIP vision tower feature extractor: [N, C, sz, sz] -> [N, P, D]."""
    N, C, Hc, Wc = crops.shape
    p = cfg['patch_size']
    D = cfg['hidden_size']
    nH, nW = Hc // p, Wc // p
    P = nH * nW
    S_pad = pack['pos'].shape[0]            # padded tokens per crop (mult of 8)
    Cpp = C * p * p

    # Conv2d(C, D, kernel=p, stride=p, bias=False) == patchify (layout glue) + in-kernel
    # matmul. Append one zero row (the CLS slot) plus alignment padding at the END.
    patches = crops.reshape(N, C, nH, p, nW, p).transpose(0, 2, 4, 1, 3, 5)
    patches = patches.reshape(N, P, Cpp)
    patches = jnp.pad(patches, ((0, 0), (0, S_pad - P), (0, 0)))
    patches = patches.astype(jnp.bfloat16).reshape(N * S_pad, Cpp)   # bf16 streaming DMA

    nb = _pick_nb(N, D)
    grid = (N // nb,)
    M = nb * S_pad

    pos_tiled = jnp.tile(pack['pos'], (nb, 1))                        # [M, D]

    weights = (pack['patch_w'], pos_tiled, pack['pre_gb'], pack['ln_gb'],
               pack['qkv_w'], pack['qkv_b'], pack['o_w'], pack['ob2'],
               pack['fc1_w'], pack['fc1_b'], pack['fc2_w'])

    def _const_spec(arr):
        r = arr.ndim
        return pl.BlockSpec(arr.shape, lambda i, _r=r: (0,) * _r)

    in_specs = [pl.BlockSpec((M, Cpp), lambda i: (i, 0))]
    in_specs += [_const_spec(w) for w in weights]

    kernel = functools.partial(_vision_tower_kernel,
                               num_heads=cfg['num_heads'],
                               crops_per_block=nb,
                               tokens_per_crop=S_pad,
                               valid_tokens=P + 1,
                               num_patches=P)

    out = pl.pallas_call(
        kernel,
        out_shape=jax.ShapeDtypeStruct((N // nb, P, nb * D), crops.dtype),
        grid=grid,
        in_specs=in_specs,
        out_specs=pl.BlockSpec((1, P, nb * D), lambda i: (i, 0, 0)),
        compiler_params=pltpu.CompilerParams(dimension_semantics=("parallel",)),
    )(patches, *weights)

    # un-interleave lane-concatenated crops: [G, P, nb*D] -> [N, P, D]
    out = out.reshape(N // nb, P, nb, D).transpose(0, 2, 1, 3).reshape(N, P, D)
    return out


# ----------------------------- S2 multiscale wrapper -------------------------
def _bicubic_matrix(out_size, in_size):
    """PyTorch F.interpolate(mode='bicubic', align_corners=False), a=-0.75, no antialias."""
    A = -0.75
    scale = in_size / out_size
    dst = np.arange(out_size, dtype=np.float64)
    src = (dst + 0.5) * scale - 0.5
    t0 = np.floor(src).astype(np.int64)
    t = src - t0

    def w1(x):
        return ((A + 2.0) * x - (A + 3.0)) * x * x + 1.0

    def w2(x):
        return ((A * x - 5.0 * A) * x + 8.0 * A) * x - 4.0 * A

    weights = np.stack([w2(1.0 + t), w1(t), w1(1.0 - t), w2(2.0 - t)], axis=1)
    idx = np.clip(np.stack([t0 - 1, t0, t0 + 1, t0 + 2], axis=1), 0, in_size - 1)
    M = np.zeros((out_size, in_size), dtype=np.float64)
    for o in range(out_size):
        for k in range(4):
            M[o, idx[o, k]] += weights[o, k]
    return jnp.asarray(M, dtype=jnp.float32)


def bicubic_resize(x, size):
    B, C, H, W = x.shape
    if size == H and size == W:
        return x
    Mh = _bicubic_matrix(size, H)
    Mw = _bicubic_matrix(size, W)
    return jnp.einsum('ih,jw,bchw->bcij', Mh, Mw, x)


def split_chessboard(x, ns):
    B, C, H, W = x.shape
    h, w = H // ns, W // ns
    x = x.reshape(B, C, ns, h, ns, w).transpose(2, 4, 0, 1, 3, 5)
    return x.reshape(ns * ns * B, C, h, w)


def merge_chessboard(x, ns):
    Bt, C, h, w = x.shape
    b = Bt // (ns * ns)
    x = x.reshape(ns, ns, b, C, h, w).transpose(2, 3, 0, 4, 1, 5)
    return x.reshape(b, C, ns * h, ns * w)


def area_resize(x, out_size):
    B, C, H, W = x.shape
    if H == out_size and W == out_size:
        return x
    kh, kw = H // out_size, W // out_size
    return x.reshape(B, C, out_size, kh, out_size, kw).mean(axis=(3, 5))


def clip_vision_tower_s2_forward(images, pack, cfg):
    """s2wrapper.multiscale_forward (split_forward=True, output 'bnc') with all crops
    of every scale batched into a single fused tower forward."""
    img_sizes = list(cfg['s2_scales'])
    max_split = cfg['s2_scales'][0]
    num_splits = [math.ceil(s / max_split) for s in img_sizes]

    crops_per_scale = []
    for size, ns in zip(img_sizes, num_splits):
        x = bicubic_resize(images.astype(jnp.float32), size).astype(images.dtype)
        crops_per_scale.append(split_chessboard(x, ns))     # [ns*ns*B, C, split, split]

    # every scale yields split_size x split_size crops -> one batched tower call
    crops = jnp.concatenate(crops_per_scale, axis=0)
    feats = clip_forward_feature(crops, pack, cfg)          # [sum(ns^2)*B, P, D]

    merged = []
    off = 0
    for ns, per_scale in zip(num_splits, crops_per_scale):
        cnt = per_scale.shape[0]
        out = feats[off:off + cnt]
        off += cnt
        n_tok, D = out.shape[1], out.shape[2]
        hs = int(round(n_tok ** 0.5))
        out = out.transpose(0, 2, 1).reshape(-1, D, hs, hs)   # b (h w) c -> b c h w
        merged.append(merge_chessboard(out, ns))              # [B, D, ns*hs, ns*hs]

    out_size = merged[0].shape[-2]                             # resize_output_to_idx=0
    out = jnp.concatenate(
        [area_resize(m.astype(jnp.float32), out_size).astype(m.dtype) for m in merged],
        axis=1)                                                # [B, D*nscales, hs, hs]
    Bo, Ctot, hh, ww = out.shape
    return out.reshape(Bo, Ctot, hh * ww).transpose(0, 2, 1)   # b c h w -> b (h w) c


# ----------------------------- parameter init / packing -----------------------
def init_params(key, cfg):
    D = cfg['hidden_size']
    I = cfg['intermediate_size']
    C = cfg['num_channels']
    p = cfg['patch_size']
    n_patches = (cfg['image_size'] // p) ** 2
    S = n_patches + 1

    ks = jax.random.split(key, 3 + cfg['num_layers'])

    def nrm(k, shape, scale=0.02):
        return scale * jax.random.normal(k, shape, dtype=jnp.float32)

    params = dict(
        patch_w=nrm(ks[0], (C * p * p, D)),   # Conv2d(C,D,p,p,bias=False) weight, re-laid out
        class_emb=nrm(ks[1], (D,)),
        pos_emb=nrm(ks[2], (S, D)),
        pre_ln_g=jnp.ones((1, D), jnp.float32),
        pre_ln_b=jnp.zeros((1, D), jnp.float32),
        layers=[],
    )
    for li in range(cfg['num_layers']):
        lk = jax.random.split(ks[3 + li], 6)
        params['layers'].append(dict(
            ln1_g=jnp.ones((1, D), jnp.float32), ln1_b=jnp.zeros((1, D), jnp.float32),
            q_w=nrm(lk[0], (D, D)), q_b=jnp.zeros((1, D), jnp.float32),
            k_w=nrm(lk[1], (D, D)), k_b=jnp.zeros((1, D), jnp.float32),
            v_w=nrm(lk[2], (D, D)), v_b=jnp.zeros((1, D), jnp.float32),
            o_w=nrm(lk[3], (D, D)), o_b=jnp.zeros((1, D), jnp.float32),
            ln2_g=jnp.ones((1, D), jnp.float32), ln2_b=jnp.zeros((1, D), jnp.float32),
            fc1_w=nrm(lk[4], (D, I)), fc1_b=jnp.zeros((1, I), jnp.float32),
            fc2_w=nrm(lk[5], (I, D)), fc2_b=jnp.zeros((1, D), jnp.float32),
        ))
    return params


def pack_params(params, cfg):
    """Fuse / stack / pre-scale parameters for the single fused tower kernel.

    Layout decisions:
      * q weights/biases pre-scaled by Dh**-0.5; q/k/v fused into one [D,3D] weight.
      * CLS token moved to the LAST row of each crop: pos row order = [patches..., cls],
        class embedding folded into the CLS pos row, rows padded to a multiple of 8.
      * Per-layer LN gammas/betas and biases packed into a few stacked arrays.
    """
    assert cfg['select_feature'] == 'patch'
    L = cfg['num_layers']
    sel = cfg['select_layer']
    idx = sel if sel >= 0 else L + 1 + sel          # index into hidden_states (0..L)
    layers_needed = idx                              # encoder layers to actually run
    assert 1 <= layers_needed <= L

    D = cfg['hidden_size']
    H = cfg['num_heads']
    Dh = D // H
    scale = Dh ** -0.5
    P = (cfg['image_size'] // cfg['patch_size']) ** 2
    S_pad = ((P + 1 + 7) // 8) * 8
    layers = params['layers'][:layers_needed]
    bf16 = jnp.bfloat16

    qkv_w = jnp.stack([jnp.concatenate([lp['q_w'] * scale, lp['k_w'], lp['v_w']], axis=1)
                       for lp in layers]).astype(bf16)                       # [L, D, 3D]
    qkv_b = jnp.stack([jnp.concatenate([lp['q_b'] * scale, lp['k_b'], lp['v_b']], axis=1)
                       for lp in layers])                                    # [L, 1, 3D]
    ln_gb = jnp.stack([jnp.concatenate([lp['ln1_g'], lp['ln1_b'],
                                        lp['ln2_g'], lp['ln2_b']], axis=0)
                       for lp in layers])                                    # [L, 4, D]
    ob2 = jnp.stack([jnp.concatenate([lp['o_b'], lp['fc2_b']], axis=0)
                     for lp in layers])                                      # [L, 2, D]

    # position embedding reordered (patches first, CLS last) + class emb folded in,
    # padded to S_pad rows
    pos = jnp.concatenate([params['pos_emb'][1:],
                           params['pos_emb'][0:1] + params['class_emb'].reshape(1, D)],
                          axis=0)                                            # [P+1, D]
    pos = jnp.pad(pos, ((0, S_pad - (P + 1)), (0, 0)))                       # [S_pad, D]

    return dict(
        patch_w=params['patch_w'].astype(bf16),
        pos=pos,
        pre_gb=jnp.concatenate([params['pre_ln_g'], params['pre_ln_b']], axis=0),  # [2, D]
        ln_gb=ln_gb,
        qkv_w=qkv_w, qkv_b=qkv_b,
        o_w=jnp.stack([lp['o_w'] for lp in layers]).astype(bf16),            # [L, D, D]
        ob2=ob2,
        fc1_w=jnp.stack([lp['fc1_w'] for lp in layers]).astype(bf16),        # [L, D, I]
        fc1_b=jnp.stack([lp['fc1_b'] for lp in layers]),                     # [L, 1, I]
        fc2_w=jnp.stack([lp['fc2_w'] for lp in layers]).astype(bf16),        # [L, I, D]
    )


@jax.jit
def run(images, pack):
    return clip_vision_tower_s2_forward(images, pack, CFG)


# ----------------------------------- main -------------------------------------
if __name__ == "__main__":
    key = jax.random.PRNGKey(0)
    pkey, ikey = jax.random.split(key)

    params = init_params(pkey, CFG)
    pack = pack_params(params, CFG)

    B = 2
    s2_image_size = CFG['s2_scales'][-1]      # image processor resizes to largest scale
    images = jax.random.normal(
        ikey, (B, CFG['num_channels'], s2_image_size, s2_image_size), dtype=jnp.float32)

    out = run(images, pack)
    out = jax.block_until_ready(out)

    expected_shape = (B,
                      (CFG['image_size'] // CFG['patch_size']) ** 2,      # num_patches
                      CFG['hidden_size'] * len(CFG['s2_scales']))          # hidden * nscales
    assert out.shape == expected_shape, (out.shape, expected_shape)
    assert bool(jnp.all(jnp.isfinite(out)))
    print("KERNEL_OK")
</pallas_src>

<mosaic_0001>
module attributes {stable_mosaic.version = 11 : i64} {
  func.func @_vision_tower_kernel(%arg0: i32, %arg1: memref<96x48xbf16, #tpu.memory_space<vmem>>, %arg2: memref<48x32xbf16, #tpu.memory_space<vmem>>, %arg3: memref<96x32xf32, #tpu.memory_space<vmem>>, %arg4: memref<2x32xf32, #tpu.memory_space<vmem>>, %arg5: memref<2x4x32xf32, #tpu.memory_space<vmem>>, %arg6: memref<2x32x96xbf16, #tpu.memory_space<vmem>>, %arg7: memref<2x1x96xf32, #tpu.memory_space<vmem>>, %arg8: memref<2x32x32xbf16, #tpu.memory_space<vmem>>, %arg9: memref<2x2x32xf32, #tpu.memory_space<vmem>>, %arg10: memref<2x32x64xbf16, #tpu.memory_space<vmem>>, %arg11: memref<2x1x64xf32, #tpu.memory_space<vmem>>, %arg12: memref<2x64x32xbf16, #tpu.memory_space<vmem>>, %arg13: memref<1x16x128xf32, #tpu.memory_space<vmem>>) attributes {dimension_semantics = [#tpu.dimension_semantics<parallel>], iteration_bounds = array<i64: 7>, scalar_prefetch = 0 : i64, scratch_operands = 0 : i64, tpu.core_type = #tpu.core_type<tc>, window_params = [{transform_indices = @transform_0, window_bounds = array<i64: 96, 48>}, {pipeline_mode = #tpu.pipeline_mode<synchronous>, transform_indices = @transform_1, window_bounds = array<i64: 48, 32>}, {pipeline_mode = #tpu.pipeline_mode<synchronous>, transform_indices = @transform_2, window_bounds = array<i64: 96, 32>}, {pipeline_mode = #tpu.pipeline_mode<synchronous>, transform_indices = @transform_3, window_bounds = array<i64: 2, 32>}, {pipeline_mode = #tpu.pipeline_mode<synchronous>, transform_indices = @transform_4, window_bounds = array<i64: 2, 4, 32>}, {pipeline_mode = #tpu.pipeline_mode<synchronous>, transform_indices = @transform_5, window_bounds = array<i64: 2, 32, 96>}, {pipeline_mode = #tpu.pipeline_mode<synchronous>, transform_indices = @transform_6, window_bounds = array<i64: 2, 1, 96>}, {pipeline_mode = #tpu.pipeline_mode<synchronous>, transform_indices = @transform_7, window_bounds = array<i64: 2, 32, 32>}, {pipeline_mode = #tpu.pipeline_mode<synchronous>, transform_indices = @transform_8, window_bounds = array<i64: 2, 2, 32>}, {pipeline_mode = #tpu.pipeline_mode<synchronous>, transform_indices = @transform_9, window_bounds = array<i64: 2, 32, 64>}, {pipeline_mode = #tpu.pipeline_mode<synchronous>, transform_indices = @transform_10, window_bounds = array<i64: 2, 1, 64>}, {pipeline_mode = #tpu.pipeline_mode<synchronous>, transform_indices = @transform_11, window_bounds = array<i64: 2, 64, 32>}, {transform_indices = @transform_12, window_bounds = array<i64: 1, 16, 128>}]} {
    %0 = tpu.iota {dimensions = array<i32: 1>} : vector<1x24xi32>
    %c17_i32 = arith.constant 17 : i32
    %1 = vector.broadcast %c17_i32 : i32 to vector<1x24xi32>
    %2 = arith.cmpi sge, %0, %1 : vector<1x24xi32>
    %cst = arith.constant -1.000000e+30 : f32
    %cst_0 = arith.constant 0.000000e+00 : f32
    %3 = vector.broadcast %cst : f32 to vector<1x24xf32>
    %4 = vector.broadcast %cst_0 : f32 to vector<1x24xf32>
    %5 = arith.select %2, %3, %4 : vector<1x24xi1>, vector<1x24xf32>
    %c0 = arith.constant 0 : index
    %c0_1 = arith.constant 0 : index
    %6 = vector.load %arg4[%c0, %c0_1] : memref<2x32xf32, #tpu.memory_space<vmem>>, vector<2x32xf32>
    %c0_2 = arith.constant 0 : index
    %c0_3 = arith.constant 0 : index
    %7 = vector.load %arg1[%c0_2, %c0_3] : memref<96x48xbf16, #tpu.memory_space<vmem>>, vector<96x48xbf16>
    %c0_4 = arith.constant 0 : index
    %c0_5 = arith.constant 0 : index
    %8 = vector.load %arg2[%c0_4, %c0_5] : memref<48x32xbf16, #tpu.memory_space<vmem>>, vector<48x32xbf16>
    %cst_6 = arith.constant dense<0.000000e+00> : vector<96x32xf32>
    %9 = tpu.matmul %7, %8, %cst_6 {dimension_numbers = #tpu.dot_dimension_numbers<[1], [0], [0], [1], [0, 0, 1, 1], [], []>} : vector<96x48xbf16>, vector<48x32xbf16>, vector<96x32xf32> -> vector<96x32xf32>
    %c0_7 = arith.constant 0 : index
    %c0_8 = arith.constant 0 : index
    %10 = vector.load %arg3[%c0_7, %c0_8] : memref<96x32xf32, #tpu.memory_space<vmem>>, vector<96x32xf32>
    %11 = arith.addf %9, %10 : vector<96x32xf32>
    %12 = vector.extract_strided_slice %6 {offsets = [0, 0], sizes = [1, 32], strides = [1, 1]} : vector<2x32xf32> to vector<1x32xf32>
    %13 = vector.extract_strided_slice %6 {offsets = [1, 0], sizes = [1, 32], strides = [1, 1]} : vector<2x32xf32> to vector<1x32xf32>
    %cst_9 = arith.constant dense<0.000000e+00> : vector<96xf32>
    %14 = vector.multi_reduction <add>, %11, %cst_9 [1] : vector<96x32xf32> to vector<96xf32>
    %15 = vector.shape_cast %14 : vector<96xf32> to vector<96x1xf32>
    %cst_10 = arith.constant 3.200000e+01 : f32
    %16 = vector.broadcast %cst_10 : f32 to vector<96x1xf32>
    %17 = arith.divf %15, %16 : vector<96x1xf32>
    %18 = vector.broadcast %17 : vector<96x1xf32> to vector<96x32xf32>
    %19 = arith.subf %11, %18 : vector<96x32xf32>
    %20 = arith.mulf %19, %19 : vector<96x32xf32>
    %cst_11 = arith.constant dense<0.000000e+00> : vector<96xf32>
    %21 = vector.multi_reduction <add>, %20, %cst_11 [1] : vector<96x32xf32> to vector<96xf32>
    %22 = vector.shape_cast %21 : vector<96xf32> to vector<96x1xf32>
    %cst_12 = arith.constant 3.200000e+01 : f32
    %23 = vector.broadcast %cst_12 : f32 to vector<96x1xf32>
    %24 = arith.divf %22, %23 : vector<96x1xf32>
    %25 = vector.broadcast %17 : vector<96x1xf32> to vector<96x32xf32>
    %26 = arith.subf %11, %25 : vector<96x32xf32>
    %cst_13 = arith.constant 9.99999974E-6 : f32
    %27 = vector.broadcast %cst_13 : f32 to vector<96x1xf32>
    %28 = arith.addf %24, %27 : vector<96x1xf32>
    %29 = math.rsqrt %28 : vector<96x1xf32>
    %30 = vector.broadcast %29 : vector<96x1xf32> to vector<96x32xf32>
    %31 = arith.mulf %26, %30 : vector<96x32xf32>
    %32 = vector.broadcast %12 : vector<1x32xf32> to vector<96x32xf32>
    %33 = arith.mulf %31, %32 : vector<96x32xf32>
    %34 = vector.broadcast %13 : vector<1x32xf32> to vector<96x32xf32>
    %35 = arith.addf %33, %34 : vector<96x32xf32>
    %c0_14 = arith.constant 0 : index
    %c0_15 = arith.constant 0 : index
    %c0_16 = arith.constant 0 : index
    %36 = vector.load %arg5[%c0_14, %c0_15, %c0_16] : memref<2x4x32xf32, #tpu.memory_space<vmem>>, vector<1x4x32xf32>
    %37 = vector.shape_cast %36 : vector<1x4x32xf32> to vector<4x32xf32>
    %c0_17 = arith.constant 0 : index
    %c0_18 = arith.constant 0 : index
    %c0_19 = arith.constant 0 : index
    %38 = vector.load %arg9[%c0_17, %c0_18, %c0_19] : memref<2x2x32xf32, #tpu.memory_space<vmem>>, vector<1x2x32xf32>
    %39 = vector.shape_cast %38 : vector<1x2x32xf32> to vector<2x32xf32>
    %40 = vector.extract_strided_slice %37 {offsets = [0, 0], sizes = [1, 32], strides = [1, 1]} : vector<4x32xf32> to vector<1x32xf32>
    %41 = vector.extract_strided_slice %37 {offsets = [1, 0], sizes = [1, 32], strides = [1, 1]} : vector<4x32xf32> to vector<1x32xf32>
    %cst_20 = arith.constant dense<0.000000e+00> : vector<96xf32>
    %42 = vector.multi_reduction <add>, %35, %cst_20 [1] : vector<96x32xf32> to vector<96xf32>
    %43 = vector.shape_cast %42 : vector<96xf32> to vector<96x1xf32>
    %cst_21 = arith.constant 3.200000e+01 : f32
    %44 = vector.broadcast %cst_21 : f32 to vector<96x1xf32>
    %45 = arith.divf %43, %44 : vector<96x1xf32>
    %46 = vector.broadcast %45 : vector<96x1xf32> to vector<96x32xf32>
    %47 = arith.subf %35, %46 : vector<96x32xf32>
    %48 = arith.mulf %47, %47 : vector<96x32xf32>
    %cst_22 = arith.constant dense<0.000000e+00> : vector<96xf32>
    %49 = vector.multi_reduction <add>, %48, %cst_22 [1] : vector<96x32xf32> to vector<96xf32>
    %50 = vector.shape_cast %49 : vector<96xf32> to vector<96x1xf32>
    %cst_23 = arith.constant 3.200000e+01 : f32
    %51 = vector.broadcast %cst_23 : f32 to vector<96x1xf32>
    %52 = arith.divf %50, %51 : vector<96x1xf32>
    %53 = vector.broadcast %45 : vector<96x1xf32> to vector<96x32xf32>
    %54 = arith.subf %35, %53 : vector<96x32xf32>
    %cst_24 = arith.constant 9.99999974E-6 : f32
    %55 = vector.broadcast %cst_24 : f32 to vector<96x1xf32>
    %56 = arith.addf %52, %55 : vector<96x1xf32>
    %57 = math.rsqrt %56 : vector<96x1xf32>
    %58 = vector.broadcast %57 : vector<96x1xf32> to vector<96x32xf32>
    %59 = arith.mulf %54, %58 : vector<96x32xf32>
    %60 = vector.broadcast %40 : vector<1x32xf32> to vector<96x32xf32>
    %61 = arith.mulf %59, %60 : vector<96x32xf32>
    %62 = vector.broadcast %41 : vector<1x32xf32> to vector<96x32xf32>
    %63 = arith.addf %61, %62 : vector<96x32xf32>
    %64 = arith.truncf %63 : vector<96x32xf32> to vector<96x32xbf16>
    %c0_25 = arith.constant 0 : index
    %c0_26 = arith.constant 0 : index
    %c0_27 = arith.constant 0 : index
    %65 = vector.load %arg6[%c0_25, %c0_26, %c0_27] : memref<2x32x96xbf16, #tpu.memory_space<vmem>>, vector<1x32x96xbf16>
    %66 = vector.shape_cast %65 : vector<1x32x96xbf16> to vector<32x96xbf16>
    %cst_28 = arith.constant dense<0.000000e+00> : vector<96x96xf32>
    %67 = tpu.matmul %64, %66, %cst_28 {dimension_numbers = #tpu.dot_dimension_numbers<[1], [0], [0], [1], [0, 0, 1, 1], [], []>} : vector<96x32xbf16>, vector<32x96xbf16>, vector<96x96xf32> -> vector<96x96xf32>
    %c0_29 = arith.constant 0 : index
    %c0_30 = arith.constant 0 : index
    %c0_31 = arith.constant 0 : index
    %68 = vector.load %arg7[%c0_29, %c0_30, %c0_31] : memref<2x1x96xf32, #tpu.memory_space<vmem>>, vector<1x1x96xf32>
    %69 = vector.shape_cast %68 : vector<1x1x96xf32> to vector<1x96xf32>
    %70 = vector.broadcast %69 : vector<1x96xf32> to vector<96x96xf32>
    %71 = arith.addf %67, %70 : vector<96x96xf32>
    %72 = vector.extract_strided_slice %71 {offsets = [0, 0], sizes = [24, 8], strides = [1, 1]} : vector<96x96xf32> to vector<24x8xf32>
    %73 = arith.truncf %72 : vector<24x8xf32> to vector<24x8xbf16>
    %74 = vector.extract_strided_slice %71 {offsets = [0, 32], sizes = [24, 8], strides = [1, 1]} : vector<96x96xf32> to vector<24x8xf32>
    %75 = arith.truncf %74 : vector<24x8xf32> to vector<24x8xbf16>
    %76 = vector.extract_strided_slice %71 {offsets = [0, 64], sizes = [24, 8], strides = [1, 1]} : vector<96x96xf32> to vector<24x8xf32>
    %77 = arith.truncf %76 : vector<24x8xf32> to vector<24x8xbf16>
    %cst_32 = arith.constant dense<0.000000e+00> : vector<24x24xf32>
    %78 = tpu.matmul %73, %75, %cst_32 {dimension_numbers = #tpu.dot_dimension_numbers<[1], [1], [0], [0], [0, 0, 1, 0], [], []>} : vector<24x8xbf16>, vector<24x8xbf16>, vector<24x24xf32> -> vector<24x24xf32>
    %79 = vector.broadcast %5 : vector<1x24xf32> to vector<24x24xf32>
    %80 = arith.addf %78, %79 : vector<24x24xf32>
    %cst_33 = arith.constant dense<0xFF800000> : vector<24xf32>
    %81 = vector.multi_reduction <maximumf>, %80, %cst_33 [1] : vector<24x24xf32> to vector<24xf32>
    %82 = vector.shape_cast %81 : vector<24xf32> to vector<24x1xf32>
    %83 = vector.broadcast %82 : vector<24x1xf32> to vector<24x24xf32>
    %84 = arith.subf %80, %83 : vector<24x24xf32>
    %85 = math.exp %84 : vector<24x24xf32>
    %cst_34 = arith.constant dense<0.000000e+00> : vector<24xf32>
    %86 = vector.multi_reduction <add>, %85, %cst_34 [1] : vector<24x24xf32> to vector<24xf32>
    %87 = vector.shape_cast %86 : vector<24xf32> to vector<24x1xf32>
    %88 = tpu.reciprocal %87 {approx = true} : vector<24x1xf32> -> vector<24x1xf32>
    %89 = vector.broadcast %88 : vector<24x1xf32> to vector<24x24xf32>
    %90 = arith.mulf %85, %89 : vector<24x24xf32>
    %91 = arith.truncf %90 : vector<24x24xf32> to vector<24x24xbf16>
    %cst_35 = arith.constant dense<0.000000e+00> : vector<24x8xf32>
    %92 = tpu.matmul %91, %77, %cst_35 {dimension_numbers = #tpu.dot_dimension_numbers<[1], [0], [0], [1], [0, 0, 1, 1], [], []>} : vector<24x24xbf16>, vector<24x8xbf16>, vector<24x8xf32> -> vector<24x8xf32>
    %93 = vector.extract_strided_slice %71 {offsets = [0, 8], sizes = [24, 8], strides = [1, 1]} : vector<96x96xf32> to vector<24x8xf32>
    %94 = arith.truncf %93 : vector<24x8xf32> to vector<24x8xbf16>
    %95 = vector.extract_strided_slice %71 {offsets = [0, 40], sizes = [24, 8], strides = [1, 1]} : vector<96x96xf32> to vector<24x8xf32>
    %96 = arith.truncf %95 : vector<24x8xf32> to vector<24x8xbf16>
    %97 = vector.extract_strided_slice %71 {offsets = [0, 72], sizes = [24, 8], strides = [1, 1]} : vector<96x96xf32> to vector<24x8xf32>
    %98 = arith.truncf %97 : vector<24x8xf32> to vector<24x8xbf16>
    %cst_36 = arith.constant dense<0.000000e+00> : vector<24x24xf32>
    %99 = tpu.matmul %94, %96, %cst_36 {dimension_numbers = #tpu.dot_dimension_numbers<[1], [1], [0], [0], [0, 0, 1, 0], [], []>} : vector<24x8xbf16>, vector<24x8xbf16>, vector<24x24xf32> -> vector<24x24xf32>
    %100 = vector.broadcast %5 : vector<1x24xf32> to vector<24x24xf32>
    %101 = arith.addf %99, %100 : vector<24x24xf32>
    %cst_37 = arith.constant dense<0xFF800000> : vector<24xf32>
    %102 = vector.multi_reduction <maximumf>, %101, %cst_37 [1] : vector<24x24xf32> to vector<24xf32>
    %103 = vector.shape_cast %102 : vector<24xf32> to vector<24x1xf32>
    %104 = vector.broadcast %103 : vector<24x1xf32> to vector<24x24xf32>
    %105 = arith.subf %101, %104 : vector<24x24xf32>
    %106 = math.exp %105 : vector<24x24xf32>
    %cst_38 = arith.constant dense<0.000000e+00> : vector<24xf32>
    %107 = vector.multi_reduction <add>, %106, %cst_38 [1] : vector<24x24xf32> to vector<24xf32>
    %108 = vector.shape_cast %107 : vector<24xf32> to vector<24x1xf32>
    %109 = tpu.reciprocal %108 {approx = true} : vector<24x1xf32> -> vector<24x1xf32>
    %110 = vector.broadcast %109 : vector<24x1xf32> to vector<24x24xf32>
    %111 = arith.mulf %106, %110 : vector<24x24xf32>
    %112 = arith.truncf %111 : vector<24x24xf32> to vector<24x24xbf16>
    %cst_39 = arith.constant dense<0.000000e+00> : vector<24x8xf32>
    %113 = tpu.matmul %112, %98, %cst_39 {dimension_numbers = #tpu.dot_dimension_numbers<[1], [0], [0], [1], [0, 0, 1, 1], [], []>} : vector<24x24xbf16>, vector<24x8xbf16>, vector<24x8xf32> -> vector<24x8xf32>
    %114 = vector.extract_strided_slice %71 {offsets = [0, 16], sizes = [24, 8], strides = [1, 1]} : vector<96x96xf32> to vector<24x8xf32>
    %115 = arith.truncf %114 : vector<24x8xf32> to vector<24x8xbf16>
    %116 = vector.extract_strided_slice %71 {offsets = [0, 48], sizes = [24, 8], strides = [1, 1]} : vector<96x96xf32> to vector<24x8xf32>
    %117 = arith.truncf %116 : vector<24x8xf32> to vector<24x8xbf16>
    %118 = vector.extract_strided_slice %71 {offsets = [0, 80], sizes = [24, 8], strides = [1, 1]} : vector<96x96xf32> to vector<24x8xf32>
    %119 = arith.truncf %118 : vector<24x8xf32> to vector<24x8xbf16>
    %cst_40 = arith.constant dense<0.000000e+00> : vector<24x24xf32>
    %120 = tpu.matmul %115, %117, %cst_40 {dimension_numbers = #tpu.dot_dimension_numbers<[1], [1], [0], [0], [0, 0, 1, 0], [], []>} : vector<24x8xbf16>, vector<24x8xbf16>, vector<24x24xf32> -> vector<24x24xf32>
    %121 = vector.broadcast %5 : vector<1x24xf32> to vector<24x24xf32>
    %122 = arith.addf %120, %121 : vector<24x24xf32>
    %cst_41 = arith.constant dense<0xFF800000> : vector<24xf32>
    %123 = vector.multi_reduction <maximumf>, %122, %cst_41 [1] : vector<24x24xf32> to vector<24xf32>
    %124 = vector.shape_cast %123 : vector<24xf32> to vector<24x1xf32>
    %125 = vector.broadcast %124 : vector<24x1xf32> to vector<24x24xf32>
    %126 = arith.subf %122, %125 : vector<24x24xf32>
    %127 = math.exp %126 : vector<24x24xf32>
    %cst_42 = arith.constant dense<0.000000e+00> : vector<24xf32>
    %128 = vector.multi_reduction <add>, %127, %cst_42 [1] : vector<24x24xf32> to vector<24xf32>
    %129 = vector.shape_cast %128 : vector<24xf32> to vector<24x1xf32>
    %130 = tpu.reciprocal %129 {approx = true} : vector<24x1xf32> -> vector<24x1xf32>
    %131 = vector.broadcast %130 : vector<24x1xf32> to vector<24x24xf32>
    %132 = arith.mulf %127, %131 : vector<24x24xf32>
    %133 = arith.truncf %132 : vector<24x24xf32> to vector<24x24xbf16>
    %cst_43 = arith.constant dense<0.000000e+00> : vector<24x8xf32>
    %134 = tpu.matmul %133, %119, %cst_43 {dimension_numbers = #tpu.dot_dimension_numbers<[1], [0], [0], [1], [0, 0, 1, 1], [], []>} : vector<24x24xbf16>, vector<24x8xbf16>, vector<24x8xf32> -> vector<24x8xf32>
    %135 = vector.extract_strided_slice %71 {offsets = [0, 24], sizes = [24, 8], strides = [1, 1]} : vector<96x96xf32> to vector<24x8xf32>
    %136 = arith.truncf %135 : vector<24x8xf32> to vector<24x8xbf16>
    %137 = vector.extract_strided_slice %71 {offsets = [0, 56], sizes = [24, 8], strides = [1, 1]} : vector<96x96xf32> to vector<24x8xf32>
    %138 = arith.truncf %137 : vector<24x8xf32> to vector<24x8xbf16>
    %139 = vector.extract_strided_slice %71 {offsets = [0, 88], sizes = [24, 8], strides = [1, 1]} : vector<96x96xf32> to vector<24x8xf32>
    %140 = arith.truncf %139 : vector<24x8xf32> to vector<24x8xbf16>
    %cst_44 = arith.constant dense<0.000000e+00> : vector<24x24xf32>
    %141 = tpu.matmul %136, %138, %cst_44 {dimension_numbers = #tpu.dot_dimension_numbers<[1], [1], [0], [0], [0, 0, 1, 0], [], []>} : vector<24x8xbf16>, vector<24x8xbf16>, vector<24x24xf32> -> vector<24x24xf32>
    %142 = vector.broadcast %5 : vector<1x24xf32> to vector<24x24xf32>
    %143 = arith.addf %141, %142 : vector<24x24xf32>
    %cst_45 = arith.constant dense<0xFF800000> : vector<24xf32>
    %144 = vector.multi_reduction <maximumf>, %143, %cst_45 [1] : vector<24x24xf32> to vector<24xf32>
    %145 = vector.shape_cast %144 : vector<24xf32> to vector<24x1xf32>
    %146 = vector.broadcast %145 : vector<24x1xf32> to vector<24x24xf32>
    %147 = arith.subf %143, %146 : vector<24x24xf32>
    %148 = math.exp %147 : vector<24x24xf32>
    %cst_46 = arith.constant dense<0.000000e+00> : vector<24xf32>
    %149 = vector.multi_reduction <add>, %148, %cst_46 [1] : vector<24x24xf32> to vector<24xf32>
    %150 = vector.shape_cast %149 : vector<24xf32> to vector<24x1xf32>
    %151 = tpu.reciprocal %150 {approx = true} : vector<24x1xf32> -> vector<24x1xf32>
    %152 = vector.broadcast %151 : vector<24x1xf32> to vector<24x24xf32>
    %153 = arith.mulf %148, %152 : vector<24x24xf32>
    %154 = arith.truncf %153 : vector<24x24xf32> to vector<24x24xbf16>
    %cst_47 = arith.constant dense<0.000000e+00> : vector<24x8xf32>
    %155 = tpu.matmul %154, %140, %cst_47 {dimension_numbers = #tpu.dot_dimension_numbers<[1], [0], [0], [1], [0, 0, 1, 1], [], []>} : vector<24x24xbf16>, vector<24x8xbf16>, vector<24x8xf32> -> vector<24x8xf32>
    %156 = tpu.concatenate %92, %113, %134, %155 in 1 : vector<24x8xf32>, vector<24x8xf32>, vector<24x8xf32>, vector<24x8xf32> -> vector<24x32xf32>
    %157 = vector.extract_strided_slice %71 {offsets = [24, 0], sizes = [24, 8], strides = [1, 1]} : vector<96x96xf32> to vector<24x8xf32>
    %158 = arith.truncf %157 : vector<24x8xf32> to vector<24x8xbf16>
    %159 = vector.extract_strided_slice %71 {offsets = [24, 32], sizes = [24, 8], strides = [1, 1]} : vector<96x96xf32> to vector<24x8xf32>
    %160 = arith.truncf %159 : vector<24x8xf32> to vector<24x8xbf16>
    %161 = vector.extract_strided_slice %71 {offsets = [24, 64], sizes = [24, 8], strides = [1, 1]} : vector<96x96xf32> to vector<24x8xf32>
    %162 = arith.truncf %161 : vector<24x8xf32> to vector<24x8xbf16>
    %cst_48 = arith.constant dense<0.000000e+00> : vector<24x24xf32>
    %163 = tpu.matmul %158, %160, %cst_48 {dimension_numbers = #tpu.dot_dimension_numbers<[1], [1], [0], [0], [0, 0, 1, 0], [], []>} : vector<24x8xbf16>, vector<24x8xbf16>, vector<24x24xf32> -> vector<24x24xf32>
    %164 = vector.broadcast %5 : vector<1x24xf32> to vector<24x24xf32>
    %165 = arith.addf %163, %164 : vector<24x24xf32>
    %cst_49 = arith.constant dense<0xFF800000> : vector<24xf32>
    %166 = vector.multi_reduction <maximumf>, %165, %cst_49 [1] : vector<24x24xf32> to vector<24xf32>
    %167 = vector.shape_cast %166 : vector<24xf32> to vector<24x1xf32>
    %168 = vector.broadcast %167 : vector<24x1xf32> to vector<24x24xf32>
    %169 = arith.subf %165, %168 : vector<24x24xf32>
    %170 = math.exp %169 : vector<24x24xf32>
    %cst_50 = arith.constant dense<0.000000e+00> : vector<24xf32>
    %171 = vector.multi_reduction <add>, %170, %cst_50 [1] : vector<24x24xf32> to vector<24xf32>
    %172 = vector.shape_cast %171 : vector<24xf32> to vector<24x1xf32>
    %173 = tpu.reciprocal %172 {approx = true} : vector<24x1xf32> -> vector<24x1xf32>
    %174 = vector.broadcast %173 : vector<24x1xf32> to vector<24x24xf32>
    %175 = arith.mulf %170, %174 : vector<24x24xf32>
    %176 = arith.truncf %175 : vector<24x24xf32> to vector<24x24xbf16>
    %cst_51 = arith.constant dense<0.000000e+00> : vector<24x8xf32>
    %177 = tpu.matmul %176, %162, %cst_51 {dimension_numbers = #tpu.dot_dimension_numbers<[1], [0], [0], [1], [0, 0, 1, 1], [], []>} : vector<24x24xbf16>, vector<24x8xbf16>, vector<24x8xf32> -> vector<24x8xf32>
    %178 = vector.extract_strided_slice %71 {offsets = [24, 8], sizes = [24, 8], strides = [1, 1]} : vector<96x96xf32> to vector<24x8xf32>
    %179 = arith.truncf %178 : vector<24x8xf32> to vector<24x8xbf16>
    %180 = vector.extract_strided_slice %71 {offsets = [24, 40], sizes = [24, 8], strides = [1, 1]} : vector<96x96xf32> to vector<24x8xf32>
    %181 = arith.truncf %180 : vector<24x8xf32> to vector<24x8xbf16>
    %182 = vector.extract_strided_slice %71 {offsets = [24, 72], sizes = [24, 8], strides = [1, 1]} : vector<96x96xf32> to vector<24x8xf32>
    %183 = arith.truncf %182 : vector<24x8xf32> to vector<24x8xbf16>
    %cst_52 = arith.constant dense<0.000000e+00> : vector<24x24xf32>
    %184 = tpu.matmul %179, %181, %cst_52 {dimension_numbers = #tpu.dot_dimension_numbers<[1], [1], [0], [0], [0, 0, 1, 0], [], []>} : vector<24x8xbf16>, vector<24x8xbf16>, vector<24x24xf32> -> vector<24x24xf32>
    %185 = vector.broadcast %5 : vector<1x24xf32> to vector<24x24xf32>
    %186 = arith.addf %184, %185 : vector<24x24xf32>
    %cst_53 = arith.constant dense<0xFF800000> : vector<24xf32>
    %187 = vector.multi_reduction <maximumf>, %186, %cst_53 [1] : vector<24x24xf32> to vector<24xf32>
    %188 = vector.shape_cast %187 : vector<24xf32> to vector<24x1xf32>
    %189 = vector.broadcast %188 : vector<24x1xf32> to vector<24x24xf32>
    %190 = arith.subf %186, %189 : vector<24x24xf32>
    %191 = math.exp %190 : vector<24x24xf32>
    %cst_54 = arith.constant dense<0.000000e+00> : vector<24xf32>
    %192 = vector.multi_reduction <add>, %191, %cst_54 [1] : vector<24x24xf32> to vector<24xf32>
    %193 = vector.shape_cast %192 : vector<24xf32> to vector<24x1xf32>
    %194 = tpu.reciprocal %193 {approx = true} : vector<24x1xf32> -> vector<24x1xf32>
    %195 = vector.broadcast %194 : vector<24x1xf32> to vector<24x24xf32>
    %196 = arith.mulf %191, %195 : vector<24x24xf32>
    %197 = arith.truncf %196 : vector<24x24xf32> to vector<24x24xbf16>
    %cst_55 = arith.constant dense<0.000000e+00> : vector<24x8xf32>
    %198 = tpu.matmul %197, %183, %cst_55 {dimension_numbers = #tpu.dot_dimension_numbers<[1], [0], [0], [1], [0, 0, 1, 1], [], []>} : vector<24x24xbf16>, vector<24x8xbf16>, vector<24x8xf32> -> vector<24x8xf32>
    %199 = vector.extract_strided_slice %71 {offsets = [24, 16], sizes = [24, 8], strides = [1, 1]} : vector<96x96xf32> to vector<24x8xf32>
    %200 = arith.truncf %199 : vector<24x8xf32> to vector<24x8xbf16>
    %201 = vector.extract_strided_slice %71 {offsets = [24, 48], sizes = [24, 8], strides = [1, 1]} : vector<96x96xf32> to vector<24x8xf32>
    %202 = arith.truncf %201 : vector<24x8xf32> to vector<24x8xbf16>
    %203 = vector.extract_strided_slice %71 {offsets = [24, 80], sizes = [24, 8], strides = [1, 1]} : vector<96x96xf32> to vector<24x8xf32>
    %204 = arith.truncf %203 : vector<24x8xf32> to vector<24x8xbf16>
    %cst_56 = arith.constant dense<0.000000e+00> : vector<24x24xf32>
    %205 = tpu.matmul %200, %202, %cst_56 {dimension_numbers = #tpu.dot_dimension_numbers<[1], [1], [0], [0], [0, 0, 1, 0], [], []>} : vector<24x8xbf16>, vector<24x8xbf16>, vector<24x24xf32> -> vector<24x24xf32>
    %206 = vector.broadcast %5 : vector<1x24xf32> to vector<24x24xf32>
    %207 = arith.addf %205, %206 : vector<24x24xf32>
    %cst_57 = arith.constant dense<0xFF800000> : vector<24xf32>
    %208 = vector.multi_reduction <maximumf>, %207, %cst_57 [1] : vector<24x24xf32> to vector<24xf32>
    %209 = vector.shape_cast %208 : vector<24xf32> to vector<24x1xf32>
    %210 = vector.broadcast %209 : vector<24x1xf32> to vector<24x24xf32>
    %211 = arith.subf %207, %210 : vector<24x24xf32>
    %212 = math.exp %211 : vector<24x24xf32>
    %cst_58 = arith.constant dense<0.000000e+00> : vector<24xf32>
    %213 = vector.multi_reduction <add>, %212, %cst_58 [1] : vector<24x24xf32> to vector<24xf32>
    %214 = vector.shape_cast %213 : vector<24xf32> to vector<24x1xf32>
    %215 = tpu.reciprocal %214 {approx = true} : vector<24x1xf32> -> vector<24x1xf32>
    %216 = vector.broadcast %215 : vector<24x1xf32> to vector<24x24xf32>
    %217 = arith.mulf %212, %216 : vector<24x24xf32>
    %218 = arith.truncf %217 : vector<24x24xf32> to vector<24x24xbf16>
    %cst_59 = arith.constant dense<0.000000e+00> : vector<24x8xf32>
    %219 = tpu.matmul %218, %204, %cst_59 {dimension_numbers = #tpu.dot_dimension_numbers<[1], [0], [0], [1], [0, 0, 1, 1], [], []>} : vector<24x24xbf16>, vector<24x8xbf16>, vector<24x8xf32> -> vector<24x8xf32>
    %220 = vector.extract_strided_slice %71 {offsets = [24, 24], sizes = [24, 8], strides = [1, 1]} : vector<96x96xf32> to vector<24x8xf32>
    %221 = arith.truncf %220 : vector<24x8xf32> to vector<24x8xbf16>
    %222 = vector.extract_strided_slice %71 {offsets = [24, 56], sizes = [24, 8], strides = [1, 1]} : vector<96x96xf32> to vector<24x8xf32>
    %223 = arith.truncf %222 : vector<24x8xf32> to vector<24x8xbf16>
    %224 = vector.extract_strided_slice %71 {offsets = [24, 88], sizes = [24, 8], strides = [1, 1]} : vector<96x96xf32> to vector<24x8xf32>
    %225 = arith.truncf %224 : vector<24x8xf32> to vector<24x8xbf16>
    %cst_60 = arith.constant dense<0.000000e+00> : vector<24x24xf32>
    %226 = tpu.matmul %221, %223, %cst_60 {dimension_numbers = #tpu.dot_dimension_numbers<[1], [1], [0], [0], [0, 0, 1, 0], [], []>} : vector<24x8xbf16>, vector<24x8xbf16>, vector<24x24xf32> -> vector<24x24xf32>
    %227 = vector.broadcast %5 : vector<1x24xf32> to vector<24x24xf32>
    %228 = arith.addf %226, %227 : vector<24x24xf32>
    %cst_61 = arith.constant dense<0xFF800000> : vector<24xf32>
    %229 = vector.multi_reduction <maximumf>, %228, %cst_61 [1] : vector<24x24xf32> to vector<24xf32>
    %230 = vector.shape_cast %229 : vector<24xf32> to vector<24x1xf32>
    %231 = vector.broadcast %230 : vector<24x1xf32> to vector<24x24xf32>
    %232 = arith.subf %228, %231 : vector<24x24xf32>
    %233 = math.exp %232 : vector<24x24xf32>
    %cst_62 = arith.constant dense<0.000000e+00> : vector<24xf32>
    %234 = vector.multi_reduction <add>, %233, %cst_62 [1] : vector<24x24xf32> to vector<24xf32>
    %235 = vector.shape_cast %234 : vector<24xf32> to vector<24x1xf32>
    %236 = tpu.reciprocal %235 {approx = true} : vector<24x1xf32> -> vector<24x1xf32>
    %237 = vector.broadcast %236 : vector<24x1xf32> to vector<24x24xf32>
    %238 = arith.mulf %233, %237 : vector<24x24xf32>
    %239 = arith.truncf %238 : vector<24x24xf32> to vector<24x24xbf16>
    %cst_63 = arith.constant dense<0.000000e+00> : vector<24x8xf32>
    %240 = tpu.matmul %239, %225, %cst_63 {dimension_numbers = #tpu.dot_dimension_numbers<[1], [0], [0], [1], [0, 0, 1, 1], [], []>} : vector<24x24xbf16>, vector<24x8xbf16>, vector<24x8xf32> -> vector<24x8xf32>
    %241 = tpu.concatenate %177, %198, %219, %240 in 1 : vector<24x8xf32>, vector<24x8xf32>, vector<24x8xf32>, vector<24x8xf32> -> vector<24x32xf32>
    %242 = vector.extract_strided_slice %71 {offsets = [48, 0], sizes = [24, 8], strides = [1, 1]} : vector<96x96xf32> to vector<24x8xf32>
    %243 = arith.truncf %242 : vector<24x8xf32> to vector<24x8xbf16>
    %244 = vector.extract_strided_slice %71 {offsets = [48, 32], sizes = [24, 8], strides = [1, 1]} : vector<96x96xf32> to vector<24x8xf32>
    %245 = arith.truncf %244 : vector<24x8xf32> to vector<24x8xbf16>
    %246 = vector.extract_strided_slice %71 {offsets = [48, 64], sizes = [24, 8], strides = [1, 1]} : vector<96x96xf32> to vector<24x8xf32>
    %247 = arith.truncf %246 : vector<24x8xf32> to vector<24x8xbf16>
    %cst_64 = arith.constant dense<0.000000e+00> : vector<24x24xf32>
    %248 = tpu.matmul %243, %245, %cst_64 {dimension_numbers = #tpu.dot_dimension_numbers<[1], [1], [0], [0], [0, 0, 1, 0], [], []>} : vector<24x8xbf16>, vector<24x8xbf16>, vector<24x24xf32> -> vector<24x24xf32>
    %249 = vector.broadcast %5 : vector<1x24xf32> to vector<24x24xf32>
    %250 = arith.addf %248, %249 : vector<24x24xf32>
    %cst_65 = arith.constant dense<0xFF800000> : vector<24xf32>
    %251 = vector.multi_reduction <maximumf>, %250, %cst_65 [1] : vector<24x24xf32> to vector<24xf32>
    %252 = vector.shape_cast %251 : vector<24xf32> to vector<24x1xf32>
    %253 = vector.broadcast %252 : vector<24x1xf32> to vector<24x24xf32>
    %254 = arith.subf %250, %253 : vector<24x24xf32>
    %255 = math.exp %254 : vector<24x24xf32>
    %cst_66 = arith.constant dense<0.000000e+00> : vector<24xf32>
    %256 = vector.multi_reduction <add>, %255, %cst_66 [1] : vector<24x24xf32> to vector<24xf32>
    %257 = vector.shape_cast %256 : vector<24xf32> to vector<24x1xf32>
    %258 = tpu.reciprocal %257 {approx = true} : vector<24x1xf32> -> vector<24x1xf32>
    %259 = vector.broadcast %258 : vector<24x1xf32> to vector<24x24xf32>
    %260 = arith.mulf %255, %259 : vector<24x24xf32>
    %261 = arith.truncf %260 : vector<24x24xf32> to vector<24x24xbf16>
    %cst_67 = arith.constant dense<0.000000e+00> : vector<24x8xf32>
    %262 = tpu.matmul %261, %247, %cst_67 {dimension_numbers = #tpu.dot_dimension_numbers<[1], [0], [0], [1], [0, 0, 1, 1], [], []>} : vector<24x24xbf16>, vector<24x8xbf16>, vector<24x8xf32> -> vector<24x8xf32>
    %263 = vector.extract_strided_slice %71 {offsets = [48, 8], sizes = [24, 8], strides = [1, 1]} : vector<96x96xf32> to vector<24x8xf32>
    %264 = arith.truncf %263 : vector<24x8xf32> to vector<24x8xbf16>
    %265 = vector.extract_strided_slice %71 {offsets = [48, 40], sizes = [24, 8], strides = [1, 1]} : vector<96x96xf32> to vector<24x8xf32>
    %266 = arith.truncf %265 : vector<24x8xf32> to vector<24x8xbf16>
    %267 = vector.extract_strided_slice %71 {offsets = [48, 72], sizes = [24, 8], strides = [1, 1]} : vector<96x96xf32> to vector<24x8xf32>
    %268 = arith.truncf %267 : vector<24x8xf32> to vector<24x8xbf16>
    %cst_68 = arith.constant dense<0.000000e+00> : vector<24x24xf32>
    %269 = tpu.matmul %264, %266, %cst_68 {dimension_numbers = #tpu.dot_dimension_numbers<[1], [1], [0], [0], [0, 0, 1, 0], [], []>} : vector<24x8xbf16>, vector<24x8xbf16>, vector<24x24xf32> -> vector<24x24xf32>
    %270 = vector.broadcast %5 : vector<1x24xf32> to vector<24x24xf32>
    %271 = arith.addf %269, %270 : vector<24x24xf32>
    %cst_69 = arith.constant dense<0xFF800000> : vector<24xf32>
    %272 = vector.multi_reduction <maximumf>, %271, %cst_69 [1] : vector<24x24xf32> to vector<24xf32>
    %273 = vector.shape_cast %272 : vector<24xf32> to vector<24x1xf32>
    %274 = vector.broadcast %273 : vector<24x1xf32> to vector<24x24xf32>
    %275 = arith.subf %271, %274 : vector<24x24xf32>
    %276 = math.exp %275 : vector<24x24xf32>
    %cst_70 = arith.constant dense<0.000000e+00> : vector<24xf32>
    %277 = vector.multi_reduction <add>, %276, %cst_70 [1] : vector<24x24xf32> to vector<24xf32>
    %278 = vector.shape_cast %277 : vector<24xf32> to vector<24x1xf32>
    %279 = tpu.reciprocal %278 {approx = true} : vector<24x1xf32> -> vector<24x1xf32>
    %280 = vector.broadcast %279 : vector<24x1xf32> to vector<24x24xf32>
    %281 = arith.mulf %276, %280 : vector<24x24xf32>
    %282 = arith.truncf %281 : vector<24x24xf32> to vector<24x24xbf16>
    %cst_71 = arith.constant dense<0.000000e+00> : vector<24x8xf32>
    %283 = tpu.matmul %282, %268, %cst_71 {dimension_numbers = #tpu.dot_dimension_numbers<[1], [0], [0], [1], [0, 0, 1, 1], [], []>} : vector<24x24xbf16>, vector<24x8xbf16>, vector<24x8xf32> -> vector<24x8xf32>
    %284 = vector.extract_strided_slice %71 {offsets = [48, 16], sizes = [24, 8], strides = [1, 1]} : vector<96x96xf32> to vector<24x8xf32>
    %285 = arith.truncf %284 : vector<24x8xf32> to vector<24x8xbf16>
    %286 = vector.extract_strided_slice %71 {offsets = [48, 48], sizes = [24, 8], strides = [1, 1]} : vector<96x96xf32> to vector<24x8xf32>
    %287 = arith.truncf %286 : vector<24x8xf32> to vector<24x8xbf16>
    %288 = vector.extract_strided_slice %71 {offsets = [48, 80], sizes = [24, 8], strides = [1, 1]} : vector<96x96xf32> to vector<24x8xf32>
    %289 = arith.truncf %288 : vector<24x8xf32> to vector<24x8xbf16>
    %cst_72 = arith.constant dense<0.000000e+00> : vector<24x24xf32>
    %290 = tpu.matmul %285, %287, %cst_72 {dimension_numbers = #tpu.dot_dimension_numbers<[1], [1], [0], [0], [0, 0, 1, 0], [], []>} : vector<24x8xbf16>, vector<24x8xbf16>, vector<24x24xf32> -> vector<24x24xf32>
    %291 = vector.broadcast %5 : vector<1x24xf32> to vector<24x24xf32>
    %292 = arith.addf %290, %291 : vector<24x24xf32>
    %cst_73 = arith.constant dense<0xFF800000> : vector<24xf32>
    %293 = vector.multi_reduction <maximumf>, %292, %cst_73 [1] : vector<24x24xf32> to vector<24xf32>
    %294 = vector.shape_cast %293 : vector<24xf32> to vector<24x1xf32>
    %295 = vector.broadcast %294 : vector<24x1xf32> to vector<24x24xf32>
    %296 = arith.subf %292, %295 : vector<24x24xf32>
    %297 = math.exp %296 : vector<24x24xf32>
    %cst_74 = arith.constant dense<0.000000e+00> : vector<24xf32>
    %298 = vector.multi_reduction <add>, %297, %cst_74 [1] : vector<24x24xf32> to vector<24xf32>
    %299 = vector.shape_cast %298 : vector<24xf32> to vector<24x1xf32>
    %300 = tpu.reciprocal %299 {approx = true} : vector<24x1xf32> -> vector<24x1xf32>
    %301 = vector.broadcast %300 : vector<24x1xf32> to vector<24x24xf32>
    %302 = arith.mulf %297, %301 : vector<24x24xf32>
    %303 = arith.truncf %302 : vector<24x24xf32> to vector<24x24xbf16>
    %cst_75 = arith.constant dense<0.000000e+00> : vector<24x8xf32>
    %304 = tpu.matmul %303, %289, %cst_75 {dimension_numbers = #tpu.dot_dimension_numbers<[1], [0], [0], [1], [0, 0, 1, 1], [], []>} : vector<24x24xbf16>, vector<24x8xbf16>, vector<24x8xf32> -> vector<24x8xf32>
    %305 = vector.extract_strided_slice %71 {offsets = [48, 24], sizes = [24, 8], strides = [1, 1]} : vector<96x96xf32> to vector<24x8xf32>
    %306 = arith.truncf %305 : vector<24x8xf32> to vector<24x8xbf16>
    %307 = vector.extract_strided_slice %71 {offsets = [48, 56], sizes = [24, 8], strides = [1, 1]} : vector<96x96xf32> to vector<24x8xf32>
    %308 = arith.truncf %307 : vector<24x8xf32> to vector<24x8xbf16>
    %309 = vector.extract_strided_slice %71 {offsets = [48, 88], sizes = [24, 8], strides = [1, 1]} : vector<96x96xf32> to vector<24x8xf32>
    %310 = arith.truncf %309 : vector<24x8xf32> to vector<24x8xbf16>
    %cst_76 = arith.constant dense<0.000000e+00> : vector<24x24xf32>
    %311 = tpu.matmul %306, %308, %cst_76 {dimension_numbers = #tpu.dot_dimension_numbers<[1], [1], [0], [0], [0, 0, 1, 0], [], []>} : vector<24x8xbf16>, vector<24x8xbf16>, vector<24x24xf32> -> vector<24x24xf32>
    %312 = vector.broadcast %5 : vector<1x24xf32> to vector<24x24xf32>
    %313 = arith.addf %311, %312 : vector<24x24xf32>
    %cst_77 = arith.constant dense<0xFF800000> : vector<24xf32>
    %314 = vector.multi_reduction <maximumf>, %313, %cst_77 [1] : vector<24x24xf32> to vector<24xf32>
    %315 = vector.shape_cast %314 : vector<24xf32> to vector<24x1xf32>
    %316 = vector.broadcast %315 : vector<24x1xf32> to vector<24x24xf32>
    %317 = arith.subf %313, %316 : vector<24x24xf32>
    %318 = math.exp %317 : vector<24x24xf32>
    %cst_78 = arith.constant dense<0.000000e+00> : vector<24xf32>
    %319 = vector.multi_reduction <add>, %318, %cst_78 [1] : vector<24x24xf32> to vector<24xf32>
    %320 = vector.shape_cast %319 : vector<24xf32> to vector<24x1xf32>
    %321 = tpu.reciprocal %320 {approx = true} : vector<24x1xf32> -> vector<24x1xf32>
    %322 = vector.broadcast %321 : vector<24x1xf32> to vector<24x24xf32>
    %323 = arith.mulf %318, %322 : vector<24x24xf32>
    %324 = arith.truncf %323 : vector<24x24xf32> to vector<24x24xbf16>
    %cst_79 = arith.constant dense<0.000000e+00> : vector<24x8xf32>
    %325 = tpu.matmul %324, %310, %cst_79 {dimension_numbers = #tpu.dot_dimension_numbers<[1], [0], [0], [1], [0, 0, 1, 1], [], []>} : vector<24x24xbf16>, vector<24x8xbf16>, vector<24x8xf32> -> vector<24x8xf32>
    %326 = tpu.concatenate %262, %283, %304, %325 in 1 : vector<24x8xf32>, vector<24x8xf32>, vector<24x8xf32>, vector<24x8xf32> -> vector<24x32xf32>
    %327 = vector.extract_strided_slice %71 {offsets = [72, 0], sizes = [24, 8], strides = [1, 1]} : vector<96x96xf32> to vector<24x8xf32>
    %328 = arith.truncf %327 : vector<24x8xf32> to vector<24x8xbf16>
    %329 = vector.extract_strided_slice %71 {offsets = [72, 32], sizes = [24, 8], strides = [1, 1]} : vector<96x96xf32> to vector<24x8xf32>
    %330 = arith.truncf %329 : vector<24x8xf32> to vector<24x8xbf16>
    %331 = vector.extract_strided_slice %71 {offsets = [72, 64], sizes = [24, 8], strides = [1, 1]} : vector<96x96xf32> to vector<24x8xf32>
    %332 = arith.truncf %331 : vector<24x8xf32> to vector<24x8xbf16>
    %cst_80 = arith.constant dense<0.000000e+00> : vector<24x24xf32>
    %333 = tpu.matmul %328, %330, %cst_80 {dimension_numbers = #tpu.dot_dimension_numbers<[1], [1], [0], [0], [0, 0, 1, 0], [], []>} : vector<24x8xbf16>, vector<24x8xbf16>, vector<24x24xf32> -> vector<24x24xf32>
    %334 = vector.broadcast %5 : vector<1x24xf32> to vector<24x24xf32>
    %335 = arith.addf %333, %334 : vector<24x24xf32>
    %cst_81 = arith.constant dense<0xFF800000> : vector<24xf32>
    %336 = vector.multi_reduction <maximumf>, %335, %cst_81 [1] : vector<24x24xf32> to vector<24xf32>
    %337 = vector.shape_cast %336 : vector<24xf32> to vector<24x1xf32>
    %338 = vector.broadcast %337 : vector<24x1xf32> to vector<24x24xf32>
    %339 = arith.subf %335, %338 : vector<24x24xf32>
    %340 = math.exp %339 : vector<24x24xf32>
    %cst_82 = arith.constant dense<0.000000e+00> : vector<24xf32>
    %341 = vector.multi_reduction <add>, %340, %cst_82 [1] : vector<24x24xf32> to vector<24xf32>
    %342 = vector.shape_cast %341 : vector<24xf32> to vector<24x1xf32>
    %343 = tpu.reciprocal %342 {approx = true} : vector<24x1xf32> -> vector<24x1xf32>
    %344 = vector.broadcast %343 : vector<24x1xf32> to vector<24x24xf32>
    %345 = arith.mulf %340, %344 : vector<24x24xf32>
    %346 = arith.truncf %345 : vector<24x24xf32> to vector<24x24xbf16>
    %cst_83 = arith.constant dense<0.000000e+00> : vector<24x8xf32>
    %347 = tpu.matmul %346, %332, %cst_83 {dimension_numbers = #tpu.dot_dimension_numbers<[1], [0], [0], [1], [0, 0, 1, 1], [], []>} : vector<24x24xbf16>, vector<24x8xbf16>, vector<24x8xf32> -> vector<24x8xf32>
    %348 = vector.extract_strided_slice %71 {offsets = [72, 8], sizes = [24, 8], strides = [1, 1]} : vector<96x96xf32> to vector<24x8xf32>
    %349 = arith.truncf %348 : vector<24x8xf32> to vector<24x8xbf16>
    %350 = vector.extract_strided_slice %71 {offsets = [72, 40], sizes = [24, 8], strides = [1, 1]} : vector<96x96xf32> to vector<24x8xf32>
    %351 = arith.truncf %350 : vector<24x8xf32> to vector<24x8xbf16>
    %352 = vector.extract_strided_slice %71 {offsets = [72, 72], sizes = [24, 8], strides = [1, 1]} : vector<96x96xf32> to vector<24x8xf32>
    %353 = arith.truncf %352 : vector<24x8xf32> to vector<24x8xbf16>
    %cst_84 = arith.constant dense<0.000000e+00> : vector<24x24xf32>
    %354 = tpu.matmul %349, %351, %cst_84 {dimension_numbers = #tpu.dot_dimension_numbers<[1], [1], [0], [0], [0, 0, 1, 0], [], []>} : vector<24x8xbf16>, vector<24x8xbf16>, vector<24x24xf32> -> vector<24x24xf32>
    %355 = vector.broadcast %5 : vector<1x24xf32> to vector<24x24xf32>
    %356 = arith.addf %354, %355 : vector<24x24xf32>
    %cst_85 = arith.constant dense<0xFF800000> : vector<24xf32>
    %357 = vector.multi_reduction <maximumf>, %356, %cst_85 [1] : vector<24x24xf32> to vector<24xf32>
    %358 = vector.shape_cast %357 : vector<24xf32> to vector<24x1xf32>
    %359 = vector.broadcast %358 : vector<24x1xf32> to vector<24x24xf32>
    %360 = arith.subf %356, %359 : vector<24x24xf32>
    %361 = math.exp %360 : vector<24x24xf32>
    %cst_86 = arith.constant dense<0.000000e+00> : vector<24xf32>
    %362 = vector.multi_reduction <add>, %361, %cst_86 [1] : vector<24x24xf32> to vector<24xf32>
    %363 = vector.shape_cast %362 : vector<24xf32> to vector<24x1xf32>
    %364 = tpu.reciprocal %363 {approx = true} : vector<24x1xf32> -> vector<24x1xf32>
    %365 = vector.broadcast %364 : vector<24x1xf32> to vector<24x24xf32>
    %366 = arith.mulf %361, %365 : vector<24x24xf32>
    %367 = arith.truncf %366 : vector<24x24xf32> to vector<24x24xbf16>
    %cst_87 = arith.constant dense<0.000000e+00> : vector<24x8xf32>
    %368 = tpu.matmul %367, %353, %cst_87 {dimension_numbers = #tpu.dot_dimension_numbers<[1], [0], [0], [1], [0, 0, 1, 1], [], []>} : vector<24x24xbf16>, vector<24x8xbf16>, vector<24x8xf32> -> vector<24x8xf32>
    %369 = vector.extract_strided_slice %71 {offsets = [72, 16], sizes = [24, 8], strides = [1, 1]} : vector<96x96xf32> to vector<24x8xf32>
    %370 = arith.truncf %369 : vector<24x8xf32> to vector<24x8xbf16>
    %371 = vector.extract_strided_slice %71 {offsets = [72, 48], sizes = [24, 8], strides = [1, 1]} : vector<96x96xf32> to vector<24x8xf32>
    %372 = arith.truncf %371 : vector<24x8xf32> to vector<24x8xbf16>
    %373 = vector.extract_strided_slice %71 {offsets = [72, 80], sizes = [24, 8], strides = [1, 1]} : vector<96x96xf32> to vector<24x8xf32>
    %374 = arith.truncf %373 : vector<24x8xf32> to vector<24x8xbf16>
    %cst_88 = arith.constant dense<0.000000e+00> : vector<24x24xf32>
    %375 = tpu.matmul %370, %372, %cst_88 {dimension_numbers = #tpu.dot_dimension_numbers<[1], [1], [0], [0], [0, 0, 1, 0], [], []>} : vector<24x8xbf16>, vector<24x8xbf16>, vector<24x24xf32> -> vector<24x24xf32>
    %376 = vector.broadcast %5 : vector<1x24xf32> to vector<24x24xf32>
    %377 = arith.addf %375, %376 : vector<24x24xf32>
    %cst_89 = arith.constant dense<0xFF800000> : vector<24xf32>
    %378 = vector.multi_reduction <maximumf>, %377, %cst_89 [1] : vector<24x24xf32> to vector<24xf32>
    %379 = vector.shape_cast %378 : vector<24xf32> to vector<24x1xf32>
    %380 = vector.broadcast %379 : vector<24x1xf32> to vector<24x24xf32>
    %381 = arith.subf %377, %380 : vector<24x24xf32>
    %382 = math.exp %381 : vector<24x24xf32>
    %cst_90 = arith.constant dense<0.000000e+00> : vector<24xf32>
    %383 = vector.multi_reduction <add>, %382, %cst_90 [1] : vector<24x24xf32> to vector<24xf32>
    %384 = vector.shape_cast %383 : vector<24xf32> to vector<24x1xf32>
    %385 = tpu.reciprocal %384 {approx = true} : vector<24x1xf32> -> vector<24x1xf32>
    %386 = vector.broadcast %385 : vector<24x1xf32> to vector<24x24xf32>
    %387 = arith.mulf %382, %386 : vector<24x24xf32>
    %388 = arith.truncf %387 : vector<24x24xf32> to vector<24x24xbf16>
    %cst_91 = arith.constant dense<0.000000e+00> : vector<24x8xf32>
    %389 = tpu.matmul %388, %374, %cst_91 {dimension_numbers = #tpu.dot_dimension_numbers<[1], [0], [0], [1], [0, 0, 1, 1], [], []>} : vector<24x24xbf16>, vector<24x8xbf16>, vector<24x8xf32> -> vector<24x8xf32>
    %390 = vector.extract_strided_slice %71 {offsets = [72, 24], sizes = [24, 8], strides = [1, 1]} : vector<96x96xf32> to vector<24x8xf32>
    %391 = arith.truncf %390 : vector<24x8xf32> to vector<24x8xbf16>
    %392 = vector.extract_strided_slice %71 {offsets = [72, 56], sizes = [24, 8], strides = [1, 1]} : vector<96x96xf32> to vector<24x8xf32>
    %393 = arith.truncf %392 : vector<24x8xf32> to vector<24x8xbf16>
    %394 = vector.extract_strided_slice %71 {offsets = [72, 88], sizes = [24, 8], strides = [1, 1]} : vector<96x96xf32> to vector<24x8xf32>
    %395 = arith.truncf %394 : vector<24x8xf32> to vector<24x8xbf16>
    %cst_92 = arith.constant dense<0.000000e+00> : vector<24x24xf32>
    %396 = tpu.matmul %391, %393, %cst_92 {dimension_numbers = #tpu.dot_dimension_numbers<[1], [1], [0], [0], [0, 0, 1, 0], [], []>} : vector<24x8xbf16>, vector<24x8xbf16>, vector<24x24xf32> -> vector<24x24xf32>
    %397 = vector.broadcast %5 : vector<1x24xf32> to vector<24x24xf32>
    %398 = arith.addf %396, %397 : vector<24x24xf32>
    %cst_93 = arith.constant dense<0xFF800000> : vector<24xf32>
    %399 = vector.multi_reduction <maximumf>, %398, %cst_93 [1] : vector<24x24xf32> to vector<24xf32>
    %400 = vector.shape_cast %399 : vector<24xf32> to vector<24x1xf32>
    %401 = vector.broadcast %400 : vector<24x1xf32> to vector<24x24xf32>
    %402 = arith.subf %398, %401 : vector<24x24xf32>
    %403 = math.exp %402 : vector<24x24xf32>
    %cst_94 = arith.constant dense<0.000000e+00> : vector<24xf32>
    %404 = vector.multi_reduction <add>, %403, %cst_94 [1] : vector<24x24xf32> to vector<24xf32>
    %405 = vector.shape_cast %404 : vector<24xf32> to vector<24x1xf32>
    %406 = tpu.reciprocal %405 {approx = true} : vector<24x1xf32> -> vector<24x1xf32>
    %407 = vector.broadcast %406 : vector<24x1xf32> to vector<24x24xf32>
    %408 = arith.mulf %403, %407 : vector<24x24xf32>
    %409 = arith.truncf %408 : vector<24x24xf32> to vector<24x24xbf16>
    %cst_95 = arith.constant dense<0.000000e+00> : vector<24x8xf32>
    %410 = tpu.matmul %409, %395, %cst_95 {dimension_numbers = #tpu.dot_dimension_numbers<[1], [0], [0], [1], [0, 0, 1, 1], [], []>} : vector<24x24xbf16>, vector<24x8xbf16>, vector<24x8xf32> -> vector<24x8xf32>
    %411 = tpu.concatenate %347, %368, %389, %410 in 1 : vector<24x8xf32>, vector<24x8xf32>, vector<24x8xf32>, vector<24x8xf32> -> vector<24x32xf32>
    %412 = tpu.concatenate %156, %241, %326, %411 in 0 : vector<24x32xf32>, vector<24x32xf32>, vector<24x32xf32>, vector<24x32xf32> -> vector<96x32xf32>
    %413 = arith.truncf %412 : vector<96x32xf32> to vector<96x32xbf16>
    %c0_96 = arith.constant 0 : index
    %c0_97 = arith.constant 0 : index
    %c0_98 = arith.constant 0 : index
    %414 = vector.load %arg8[%c0_96, %c0_97, %c0_98] : memref<2x32x32xbf16, #tpu.memory_space<vmem>>, vector<1x32x32xbf16>
    %415 = vector.shape_cast %414 : vector<1x32x32xbf16> to vector<32x32xbf16>
    %cst_99 = arith.constant dense<0.000000e+00> : vector<96x32xf32>
    %416 = tpu.matmul %413, %415, %cst_99 {dimension_numbers = #tpu.dot_dimension_numbers<[1], [0], [0], [1], [0, 0, 1, 1], [], []>} : vector<96x32xbf16>, vector<32x32xbf16>, vector<96x32xf32> -> vector<96x32xf32>
    %417 = arith.addf %35, %416 : vector<96x32xf32>
    %418 = vector.extract_strided_slice %39 {offsets = [0, 0], sizes = [1, 32], strides = [1, 1]} : vector<2x32xf32> to vector<1x32xf32>
    %419 = vector.broadcast %418 : vector<1x32xf32> to vector<96x32xf32>
    %420 = arith.addf %417, %419 : vector<96x32xf32>
    %421 = vector.extract_strided_slice %37 {offsets = [2, 0], sizes = [1, 32], strides = [1, 1]} : vector<4x32xf32> to vector<1x32xf32>
    %422 = vector.extract_strided_slice %37 {offsets = [3, 0], sizes = [1, 32], strides = [1, 1]} : vector<4x32xf32> to vector<1x32xf32>
    %cst_100 = arith.constant dense<0.000000e+00> : vector<96xf32>
    %423 = vector.multi_reduction <add>, %420, %cst_100 [1] : vector<96x32xf32> to vector<96xf32>
    %424 = vector.shape_cast %423 : vector<96xf32> to vector<96x1xf32>
    %cst_101 = arith.constant 3.200000e+01 : f32
    %425 = vector.broadcast %cst_101 : f32 to vector<96x1xf32>
    %426 = arith.divf %424, %425 : vector<96x1xf32>
    %427 = vector.broadcast %426 : vector<96x1xf32> to vector<96x32xf32>
    %428 = arith.subf %420, %427 : vector<96x32xf32>
    %429 = arith.mulf %428, %428 : vector<96x32xf32>
    %cst_102 = arith.constant dense<0.000000e+00> : vector<96xf32>
    %430 = vector.multi_reduction <add>, %429, %cst_102 [1] : vector<96x32xf32> to vector<96xf32>
    %431 = vector.shape_cast %430 : vector<96xf32> to vector<96x1xf32>
    %cst_103 = arith.constant 3.200000e+01 : f32
    %432 = vector.broadcast %cst_103 : f32 to vector<96x1xf32>
    %433 = arith.divf %431, %432 : vector<96x1xf32>
    %434 = vector.broadcast %426 : vector<96x1xf32> to vector<96x32xf32>
    %435 = arith.subf %420, %434 : vector<96x32xf32>
    %cst_104 = arith.constant 9.99999974E-6 : f32
    %436 = vector.broadcast %cst_104 : f32 to vector<96x1xf32>
    %437 = arith.addf %433, %436 : vector<96x1xf32>
    %438 = math.rsqrt %437 : vector<96x1xf32>
    %439 = vector.broadcast %438 : vector<96x1xf32> to vector<96x32xf32>
    %440 = arith.mulf %435, %439 : vector<96x32xf32>
    %441 = vector.broadcast %421 : vector<1x32xf32> to vector<96x32xf32>
    %442 = arith.mulf %440, %441 : vector<96x32xf32>
    %443 = vector.broadcast %422 : vector<1x32xf32> to vector<96x32xf32>
    %444 = arith.addf %442, %443 : vector<96x32xf32>
    %445 = arith.truncf %444 : vector<96x32xf32> to vector<96x32xbf16>
    %c0_105 = arith.constant 0 : index
    %c0_106 = arith.constant 0 : index
    %c0_107 = arith.constant 0 : index
    %446 = vector.load %arg10[%c0_105, %c0_106, %c0_107] : memref<2x32x64xbf16, #tpu.memory_space<vmem>>, vector<1x32x64xbf16>
    %447 = vector.shape_cast %446 : vector<1x32x64xbf16> to vector<32x64xbf16>
    %cst_108 = arith.constant dense<0.000000e+00> : vector<96x64xf32>
    %448 = tpu.matmul %445, %447, %cst_108 {dimension_numbers = #tpu.dot_dimension_numbers<[1], [0], [0], [1], [0, 0, 1, 1], [], []>} : vector<96x32xbf16>, vector<32x64xbf16>, vector<96x64xf32> -> vector<96x64xf32>
    %c0_109 = arith.constant 0 : index
    %c0_110 = arith.constant 0 : index
    %c0_111 = arith.constant 0 : index
    %449 = vector.load %arg11[%c0_109, %c0_110, %c0_111] : memref<2x1x64xf32, #tpu.memory_space<vmem>>, vector<1x1x64xf32>
    %450 = vector.shape_cast %449 : vector<1x1x64xf32> to vector<1x64xf32>
    %451 = vector.broadcast %450 : vector<1x64xf32> to vector<96x64xf32>
    %452 = arith.addf %448, %451 : vector<96x64xf32>
    %cst_112 = arith.constant -1.702000e+00 : f32
    %453 = vector.broadcast %cst_112 : f32 to vector<96x64xf32>
    %454 = arith.mulf %453, %452 : vector<96x64xf32>
    %455 = math.exp %454 : vector<96x64xf32>
    %cst_113 = arith.constant 1.000000e+00 : f32
    %456 = vector.broadcast %cst_113 : f32 to vector<96x64xf32>
    %457 = arith.addf %456, %455 : vector<96x64xf32>
    %458 = tpu.reciprocal %457 {approx = true} : vector<96x64xf32> -> vector<96x64xf32>
    %459 = arith.mulf %452, %458 : vector<96x64xf32>
    %460 = arith.truncf %459 : vector<96x64xf32> to vector<96x64xbf16>
    %c0_114 = arith.constant 0 : index
    %c0_115 = arith.constant 0 : index
    %c0_116 = arith.constant 0 : index
    %461 = vector.load %arg12[%c0_114, %c0_115, %c0_116] : memref<2x64x32xbf16, #tpu.memory_space<vmem>>, vector<1x64x32xbf16>
    %462 = vector.shape_cast %461 : vector<1x64x32xbf16> to vector<64x32xbf16>
    %cst_117 = arith.constant dense<0.000000e+00> : vector<96x32xf32>
    %463 = tpu.matmul %460, %462, %cst_117 {dimension_numbers = #tpu.dot_dimension_numbers<[1], [0], [0], [1], [0, 0, 1, 1], [], []>} : vector<96x64xbf16>, vector<64x32xbf16>, vector<96x32xf32> -> vector<96x32xf32>
    %464 = arith.addf %420, %463 : vector<96x32xf32>
    %465 = vector.extract_strided_slice %39 {offsets = [1, 0], sizes = [1, 32], strides = [1, 1]} : vector<2x32xf32> to vector<1x32xf32>
    %466 = vector.broadcast %465 : vector<1x32xf32> to vector<96x32xf32>
    %467 = arith.addf %464, %466 : vector<96x32xf32>
    %c1 = arith.constant 1 : index
    %c0_118 = arith.constant 0 : index
    %c0_119 = arith.constant 0 : index
    %468 = vector.load %arg5[%c1, %c0_118, %c0_119] : memref<2x4x32xf32, #tpu.memory_space<vmem>>, vector<1x4x32xf32>
    %469 = vector.shape_cast %468 : vector<1x4x32xf32> to vector<4x32xf32>
    %c1_120 = arith.constant 1 : index
    %c0_121 = arith.constant 0 : index
    %c0_122 = arith.constant 0 : index
    %470 = vector.load %arg9[%c1_120, %c0_121, %c0_122] : memref<2x2x32xf32, #tpu.memory_space<vmem>>, vector<1x2x32xf32>
    %471 = vector.shape_cast %470 : vector<1x2x32xf32> to vector<2x32xf32>
    %472 = vector.extract_strided_slice %469 {offsets = [0, 0], sizes = [1, 32], strides = [1, 1]} : vector<4x32xf32> to vector<1x32xf32>
    %473 = vector.extract_strided_slice %469 {offsets = [1, 0], sizes = [1, 32], strides = [1, 1]} : vector<4x32xf32> to vector<1x32xf32>
    %cst_123 = arith.constant dense<0.000000e+00> : vector<96xf32>
    %474 = vector.multi_reduction <add>, %467, %cst_123 [1] : vector<96x32xf32> to vector<96xf32>
    %475 = vector.shape_cast %474 : vector<96xf32> to vector<96x1xf32>
    %cst_124 = arith.constant 3.200000e+01 : f32
    %476 = vector.broadcast %cst_124 : f32 to vector<96x1xf32>
    %477 = arith.divf %475, %476 : vector<96x1xf32>
    %478 = vector.broadcast %477 : vector<96x1xf32> to vector<96x32xf32>
    %479 = arith.subf %467, %478 : vector<96x32xf32>
    %480 = arith.mulf %479, %479 : vector<96x32xf32>
    %cst_125 = arith.constant dense<0.000000e+00> : vector<96xf32>
    %481 = vector.multi_reduction <add>, %480, %cst_125 [1] : vector<96x32xf32> to vector<96xf32>
    %482 = vector.shape_cast %481 : vector<96xf32> to vector<96x1xf32>
    %cst_126 = arith.constant 3.200000e+01 : f32
    %483 = vector.broadcast %cst_126 : f32 to vector<96x1xf32>
    %484 = arith.divf %482, %483 : vector<96x1xf32>
    %485 = vector.broadcast %477 : vector<96x1xf32> to vector<96x32xf32>
    %486 = arith.subf %467, %485 : vector<96x32xf32>
    %cst_127 = arith.constant 9.99999974E-6 : f32
    %487 = vector.broadcast %cst_127 : f32 to vector<96x1xf32>
    %488 = arith.addf %484, %487 : vector<96x1xf32>
    %489 = math.rsqrt %488 : vector<96x1xf32>
    %490 = vector.broadcast %489 : vector<96x1xf32> to vector<96x32xf32>
    %491 = arith.mulf %486, %490 : vector<96x32xf32>
    %492 = vector.broadcast %472 : vector<1x32xf32> to vector<96x32xf32>
    %493 = arith.mulf %491, %492 : vector<96x32xf32>
    %494 = vector.broadcast %473 : vector<1x32xf32> to vector<96x32xf32>
    %495 = arith.addf %493, %494 : vector<96x32xf32>
    %496 = arith.truncf %495 : vector<96x32xf32> to vector<96x32xbf16>
    %c1_128 = arith.constant 1 : index
    %c0_129 = arith.constant 0 : index
    %c0_130 = arith.constant 0 : index
    %497 = vector.load %arg6[%c1_128, %c0_129, %c0_130] : memref<2x32x96xbf16, #tpu.memory_space<vmem>>, vector<1x32x96xbf16>
    %498 = vector.shape_cast %497 : vector<1x32x96xbf16> to vector<32x96xbf16>
    %cst_131 = arith.constant dense<0.000000e+00> : vector<96x96xf32>
    %499 = tpu.matmul %496, %498, %cst_131 {dimension_numbers = #tpu.dot_dimension_numbers<[1], [0], [0], [1], [0, 0, 1, 1], [], []>} : vector<96x32xbf16>, vector<32x96xbf16>, vector<96x96xf32> -> vector<96x96xf32>
    %c1_132 = arith.constant 1 : index
    %c0_133 = arith.constant 0 : index
    %c0_134 = arith.constant 0 : index
    %500 = vector.load %arg7[%c1_132, %c0_133, %c0_134] : memref<2x1x96xf32, #tpu.memory_space<vmem>>, vector<1x1x96xf32>
    %501 = vector.shape_cast %500 : vector<1x1x96xf32> to vector<1x96xf32>
    %502 = vector.broadcast %501 : vector<1x96xf32> to vector<96x96xf32>
    %503 = arith.addf %499, %502 : vector<96x96xf32>
    %504 = vector.extract_strided_slice %503 {offsets = [0, 0], sizes = [24, 8], strides = [1, 1]} : vector<96x96xf32> to vector<24x8xf32>
    %505 = arith.truncf %504 : vector<24x8xf32> to vector<24x8xbf16>
    %506 = vector.extract_strided_slice %503 {offsets = [0, 32], sizes = [24, 8], strides = [1, 1]} : vector<96x96xf32> to vector<24x8xf32>
    %507 = arith.truncf %506 : vector<24x8xf32> to vector<24x8xbf16>
    %508 = vector.extract_strided_slice %503 {offsets = [0, 64], sizes = [24, 8], strides = [1, 1]} : vector<96x96xf32> to vector<24x8xf32>
    %509 = arith.truncf %508 : vector<24x8xf32> to vector<24x8xbf16>
    %cst_135 = arith.constant dense<0.000000e+00> : vector<24x24xf32>
    %510 = tpu.matmul %505, %507, %cst_135 {dimension_numbers = #tpu.dot_dimension_numbers<[1], [1], [0], [0], [0, 0, 1, 0], [], []>} : vector<24x8xbf16>, vector<24x8xbf16>, vector<24x24xf32> -> vector<24x24xf32>
    %511 = vector.broadcast %5 : vector<1x24xf32> to vector<24x24xf32>
    %512 = arith.addf %510, %511 : vector<24x24xf32>
    %cst_136 = arith.constant dense<0xFF800000> : vector<24xf32>
    %513 = vector.multi_reduction <maximumf>, %512, %cst_136 [1] : vector<24x24xf32> to vector<24xf32>
    %514 = vector.shape_cast %513 : vector<24xf32> to vector<24x1xf32>
    %515 = vector.broadcast %514 : vector<24x1xf32> to vector<24x24xf32>
    %516 = arith.subf %512, %515 : vector<24x24xf32>
    %517 = math.exp %516 : vector<24x24xf32>
    %cst_137 = arith.constant dense<0.000000e+00> : vector<24xf32>
    %518 = vector.multi_reduction <add>, %517, %cst_137 [1] : vector<24x24xf32> to vector<24xf32>
    %519 = vector.shape_cast %518 : vector<24xf32> to vector<24x1xf32>
    %520 = tpu.reciprocal %519 {approx = true} : vector<24x1xf32> -> vector<24x1xf32>
    %521 = vector.broadcast %520 : vector<24x1xf32> to vector<24x24xf32>
    %522 = arith.mulf %517, %521 : vector<24x24xf32>
    %523 = arith.truncf %522 : vector<24x24xf32> to vector<24x24xbf16>
    %cst_138 = arith.constant dense<0.000000e+00> : vector<24x8xf32>
    %524 = tpu.matmul %523, %509, %cst_138 {dimension_numbers = #tpu.dot_dimension_numbers<[1], [0], [0], [1], [0, 0, 1, 1], [], []>} : vector<24x24xbf16>, vector<24x8xbf16>, vector<24x8xf32> -> vector<24x8xf32>
    %525 = vector.extract_strided_slice %503 {offsets = [0, 8], sizes = [24, 8], strides = [1, 1]} : vector<96x96xf32> to vector<24x8xf32>
    %526 = arith.truncf %525 : vector<24x8xf32> to vector<24x8xbf16>
    %527 = vector.extract_strided_slice %503 {offsets = [0, 40], sizes = [24, 8], strides = [1, 1]} : vector<96x96xf32> to vector<24x8xf32>
    %528 = arith.truncf %527 : vector<24x8xf32> to vector<24x8xbf16>
    %529 = vector.extract_strided_slice %503 {offsets = [0, 72], sizes = [24, 8], strides = [1, 1]} : vector<96x96xf32> to vector<24x8xf32>
    %530 = arith.truncf %529 : vector<24x8xf32> to vector<24x8xbf16>
    %cst_139 = arith.constant dense<0.000000e+00> : vector<24x24xf32>
    %531 = tpu.matmul %526, %528, %cst_139 {dimension_numbers = #tpu.dot_dimension_numbers<[1], [1], [0], [0], [0, 0, 1, 0], [], []>} : vector<24x8xbf16>, vector<24x8xbf16>, vector<24x24xf32> -> vector<24x24xf32>
    %532 = vector.broadcast %5 : vector<1x24xf32> to vector<24x24xf32>
    %533 = arith.addf %531, %532 : vector<24x24xf32>
    %cst_140 = arith.constant dense<0xFF800000> : vector<24xf32>
    %534 = vector.multi_reduction <maximumf>, %533, %cst_140 [1] : vector<24x24xf32> to vector<24xf32>
    %535 = vector.shape_cast %534 : vector<24xf32> to vector<24x1xf32>
    %536 = vector.broadcast %535 : vector<24x1xf32> to vector<24x24xf32>
    %537 = arith.subf %533, %536 : vector<24x24xf32>
    %538 = math.exp %537 : vector<24x24xf32>
    %cst_141 = arith.constant dense<0.000000e+00> : vector<24xf32>
    %539 = vector.multi_reduction <add>, %538, %cst_141 [1] : vector<24x24xf32> to vector<24xf32>
    %540 = vector.shape_cast %539 : vector<24xf32> to vector<24x1xf32>
    %541 = tpu.reciprocal %540 {approx = true} : vector<24x1xf32> -> vector<24x1xf32>
    %542 = vector.broadcast %541 : vector<24x1xf32> to vector<24x24xf32>
    %543 = arith.mulf %538, %542 : vector<24x24xf32>
    %544 = arith.truncf %543 : vector<24x24xf32> to vector<24x24xbf16>
    %cst_142 = arith.constant dense<0.000000e+00> : vector<24x8xf32>
    %545 = tpu.matmul %544, %530, %cst_142 {dimension_numbers = #tpu.dot_dimension_numbers<[1], [0], [0], [1], [0, 0, 1, 1], [], []>} : vector<24x24xbf16>, vector<24x8xbf16>, vector<24x8xf32> -> vector<24x8xf32>
    %546 = vector.extract_strided_slice %503 {offsets = [0, 16], sizes = [24, 8], strides = [1, 1]} : vector<96x96xf32> to vector<24x8xf32>
    %547 = arith.truncf %546 : vector<24x8xf32> to vector<24x8xbf16>
    %548 = vector.extract_strided_slice %503 {offsets = [0, 48], sizes = [24, 8], strides = [1, 1]} : vector<96x96xf32> to vector<24x8xf32>
    %549 = arith.truncf %548 : vector<24x8xf32> to vector<24x8xbf16>
    %550 = vector.extract_strided_slice %503 {offsets = [0, 80], sizes = [24, 8], strides = [1, 1]} : vector<96x96xf32> to vector<24x8xf32>
    %551 = arith.truncf %550 : vector<24x8xf32> to vector<24x8xbf16>
    %cst_143 = arith.constant dense<0.000000e+00> : vector<24x24xf32>
    %552 = tpu.matmul %547, %549, %cst_143 {dimension_numbers = #tpu.dot_dimension_numbers<[1], [1], [0], [0], [0, 0, 1, 0], [], []>} : vector<24x8xbf16>, vector<24x8xbf16>, vector<24x24xf32> -> vector<24x24xf32>
    %553 = vector.broadcast %5 : vector<1x24xf32> to vector<24x24xf32>
    %554 = arith.addf %552, %553 : vector<24x24xf32>
    %cst_144 = arith.constant dense<0xFF800000> : vector<24xf32>
    %555 = vector.multi_reduction <maximumf>, %554, %cst_144 [1] : vector<24x24xf32> to vector<24xf32>
    %556 = vector.shape_cast %555 : vector<24xf32> to vector<24x1xf32>
    %557 = vector.broadcast %556 : vector<24x1xf32> to vector<24x24xf32>
    %558 = arith.subf %554, %557 : vector<24x24xf32>
    %559 = math.exp %558 : vector<24x24xf32>
    %cst_145 = arith.constant dense<0.000000e+00> : vector<24xf32>
    %560 = vector.multi_reduction <add>, %559, %cst_145 [1] : vector<24x24xf32> to vector<24xf32>
    %561 = vector.shape_cast %560 : vector<24xf32> to vector<24x1xf32>
    %562 = tpu.reciprocal %561 {approx = true} : vector<24x1xf32> -> vector<24x1xf32>
    %563 = vector.broadcast %562 : vector<24x1xf32> to vector<24x24xf32>
    %564 = arith.mulf %559, %563 : vector<24x24xf32>
    %565 = arith.truncf %564 : vector<24x24xf32> to vector<24x24xbf16>
    %cst_146 = arith.constant dense<0.000000e+00> : vector<24x8xf32>
    %566 = tpu.matmul %565, %551, %cst_146 {dimension_numbers = #tpu.dot_dimension_numbers<[1], [0], [0], [1], [0, 0, 1, 1], [], []>} : vector<24x24xbf16>, vector<24x8xbf16>, vector<24x8xf32> -> vector<24x8xf32>
    %567 = vector.extract_strided_slice %503 {offsets = [0, 24], sizes = [24, 8], strides = [1, 1]} : vector<96x96xf32> to vector<24x8xf32>
    %568 = arith.truncf %567 : vector<24x8xf32> to vector<24x8xbf16>
    %569 = vector.extract_strided_slice %503 {offsets = [0, 56], sizes = [24, 8], strides = [1, 1]} : vector<96x96xf32> to vector<24x8xf32>
    %570 = arith.truncf %569 : vector<24x8xf32> to vector<24x8xbf16>
    %571 = vector.extract_strided_slice %503 {offsets = [0, 88], sizes = [24, 8], strides = [1, 1]} : vector<96x96xf32> to vector<24x8xf32>
    %572 = arith.truncf %571 : vector<24x8xf32> to vector<24x8xbf16>
    %cst_147 = arith.constant dense<0.000000e+00> : vector<24x24xf32>
    %573 = tpu.matmul %568, %570, %cst_147 {dimension_numbers = #tpu.dot_dimension_numbers<[1], [1], [0], [0], [0, 0, 1, 0], [], []>} : vector<24x8xbf16>, vector<24x8xbf16>, vector<24x24xf32> -> vector<24x24xf32>
    %574 = vector.broadcast %5 : vector<1x24xf32> to vector<24x24xf32>
    %575 = arith.addf %573, %574 : vector<24x24xf32>
    %cst_148 = arith.constant dense<0xFF800000> : vector<24xf32>
    %576 = vector.multi_reduction <maximumf>, %575, %cst_148 [1] : vector<24x24xf32> to vector<24xf32>
    %577 = vector.shape_cast %576 : vector<24xf32> to vector<24x1xf32>
    %578 = vector.broadcast %577 : vector<24x1xf32> to vector<24x24xf32>
    %579 = arith.subf %575, %578 : vector<24x24xf32>
    %580 = math.exp %579 : vector<24x24xf32>
    %cst_149 = arith.constant dense<0.000000e+00> : vector<24xf32>
    %581 = vector.multi_reduction <add>, %580, %cst_149 [1] : vector<24x24xf32> to vector<24xf32>
    %582 = vector.shape_cast %581 : vector<24xf32> to vector<24x1xf32>
    %583 = tpu.reciprocal %582 {approx = true} : vector<24x1xf32> -> vector<24x1xf32>
    %584 = vector.broadcast %583 : vector<24x1xf32> to vector<24x24xf32>
    %585 = arith.mulf %580, %584 : vector<24x24xf32>
    %586 = arith.truncf %585 : vector<24x24xf32> to vector<24x24xbf16>
    %cst_150 = arith.constant dense<0.000000e+00> : vector<24x8xf32>
    %587 = tpu.matmul %586, %572, %cst_150 {dimension_numbers = #tpu.dot_dimension_numbers<[1], [0], [0], [1], [0, 0, 1, 1], [], []>} : vector<24x24xbf16>, vector<24x8xbf16>, vector<24x8xf32> -> vector<24x8xf32>
    %588 = tpu.concatenate %524, %545, %566, %587 in 1 : vector<24x8xf32>, vector<24x8xf32>, vector<24x8xf32>, vector<24x8xf32> -> vector<24x32xf32>
    %589 = vector.extract_strided_slice %503 {offsets = [24, 0], sizes = [24, 8], strides = [1, 1]} : vector<96x96xf32> to vector<24x8xf32>
    %590 = arith.truncf %589 : vector<24x8xf32> to vector<24x8xbf16>
    %591 = vector.extract_strided_slice %503 {offsets = [24, 32], sizes = [24, 8], strides = [1, 1]} : vector<96x96xf32> to vector<24x8xf32>
    %592 = arith.truncf %591 : vector<24x8xf32> to vector<24x8xbf16>
    %593 = vector.extract_strided_slice %503 {offsets = [24, 64], sizes = [24, 8], strides = [1, 1]} : vector<96x96xf32> to vector<24x8xf32>
    %594 = arith.truncf %593 : vector<24x8xf32> to vector<24x8xbf16>
    %cst_151 = arith.constant dense<0.000000e+00> : vector<24x24xf32>
    %595 = tpu.matmul %590, %592, %cst_151 {dimension_numbers = #tpu.dot_dimension_numbers<[1], [1], [0], [0], [0, 0, 1, 0], [], []>} : vector<24x8xbf16>, vector<24x8xbf16>, vector<24x24xf32> -> vector<24x24xf32>
    %596 = vector.broadcast %5 : vector<1x24xf32> to vector<24x24xf32>
    %597 = arith.addf %595, %596 : vector<24x24xf32>
    %cst_152 = arith.constant dense<0xFF800000> : vector<24xf32>
    %598 = vector.multi_reduction <maximumf>, %597, %cst_152 [1] : vector<24x24xf32> to vector<24xf32>
    %599 = vector.shape_cast %598 : vector<24xf32> to vector<24x1xf32>
    %600 = vector.broadcast %599 : vector<24x1xf32> to vector<24x24xf32>
    %601 = arith.subf %597, %600 : vector<24x24xf32>
    %602 = math.exp %601 : vector<24x24xf32>
    %cst_153 = arith.constant dense<0.000000e+00> : vector<24xf32>
    %603 = vector.multi_reduction <add>, %602, %cst_153 [1] : vector<24x24xf32> to vector<24xf32>
    %604 = vector.shape_cast %603 : vector<24xf32> to vector<24x1xf32>
    %605 = tpu.reciprocal %604 {approx = true} : vector<24x1xf32> -> vector<24x1xf32>
    %606 = vector.broadcast %605 : vector<24x1xf32> to vector<24x24xf32>
    %607 = arith.mulf %602, %606 : vector<24x24xf32>
    %608 = arith.truncf %607 : vector<24x24xf32> to vector<24x24xbf16>
    %cst_154 = arith.constant dense<0.000000e+00> : vector<24x8xf32>
    %609 = tpu.matmul %608, %594, %cst_154 {dimension_numbers = #tpu.dot_dimension_numbers<[1], [0], [0], [1], [0, 0, 1, 1], [], []>} : vector<24x24xbf16>, vector<24x8xbf16>, vector<24x8xf32> -> vector<24x8xf32>
    %610 = vector.extract_strided_slice %503 {offsets = [24, 8], sizes = [24, 8], strides = [1, 1]} : vector<96x96xf32> to vector<24x8xf32>
    %611 = arith.truncf %610 : vector<24x8xf32> to vector<24x8xbf16>
    %612 = vector.extract_strided_slice %503 {offsets = [24, 40], sizes = [24, 8], strides = [1, 1]} : vector<96x96xf32> to vector<24x8xf32>
    %613 = arith.truncf %612 : vector<24x8xf32> to vector<24x8xbf16>
    %614 = vector.extract_strided_slice %503 {offsets = [24, 72], sizes = [24, 8], strides = [1, 1]} : vector<96x96xf32> to vector<24x8xf32>
    %615 = arith.truncf %614 : vector<24x8xf32> to vector<24x8xbf16>
    %cst_155 = arith.constant dense<0.000000e+00> : vector<24x24xf32>
    %616 = tpu.matmul %611, %613, %cst_155 {dimension_numbers = #tpu.dot_dimension_numbers<[1], [1], [0], [0], [0, 0, 1, 0], [], []>} : vector<24x8xbf16>, vector<24x8xbf16>, vector<24x24xf32> -> vector<24x24xf32>
    %617 = vector.broadcast %5 : vector<1x24xf32> to vector<24x24xf32>
    %618 = arith.addf %616, %617 : vector<24x24xf32>
    %cst_156 = arith.constant dense<0xFF800000> : vector<24xf32>
    %619 = vector.multi_reduction <maximumf>, %618, %cst_156 [1] : vector<24x24xf32> to vector<24xf32>
    %620 = vector.shape_cast %619 : vector<24xf32> to vector<24x1xf32>
    %621 = vector.broadcast %620 : vector<24x1xf32> to vector<24x24xf32>
    %622 = arith.subf %618, %621 : vector<24x24xf32>
    %623 = math.exp %622 : vector<24x24xf32>
    %cst_157 = arith.constant dense<0.000000e+00> : vector<24xf32>
    %624 = vector.multi_reduction <add>, %623, %cst_157 [1] : vector<24x24xf32> to vector<24xf32>
    %625 = vector.shape_cast %624 : vector<24xf32> to vector<24x1xf32>
    %626 = tpu.reciprocal %625 {approx = true} : vector<24x1xf32> -> vector<24x1xf32>
    %627 = vector.broadcast %626 : vector<24x1xf32> to vector<24x24xf32>
    %628 = arith.mulf %623, %627 : vector<24x24xf32>
    %629 = arith.truncf %628 : vector<24x24xf32> to vector<24x24xbf16>
    %cst_158 = arith.constant dense<0.000000e+00> : vector<24x8xf32>
    %630 = tpu.matmul %629, %615, %cst_158 {dimension_numbers = #tpu.dot_dimension_numbers<[1], [0], [0], [1], [0, 0, 1, 1], [], []>} : vector<24x24xbf16>, vector<24x8xbf16>, vector<24x8xf32> -> vector<24x8xf32>
    %631 = vector.extract_strided_slice %503 {offsets = [24, 16], sizes = [24, 8], strides = [1, 1]} : vector<96x96xf32> to vector<24x8xf32>
    %632 = arith.truncf %631 : vector<24x8xf32> to vector<24x8xbf16>
    %633 = vector.extract_strided_slice %503 {offsets = [24, 48], sizes = [24, 8], strides = [1, 1]} : vector<96x96xf32> to vector<24x8xf32>
    %634 = arith.truncf %633 : vector<24x8xf32> to vector<24x8xbf16>
    %635 = vector.extract_strided_slice %503 {offsets = [24, 80], sizes = [24, 8], strides = [1, 1]} : vector<96x96xf32> to vector<24x8xf32>
    %636 = arith.truncf %635 : vector<24x8xf32> to vector<24x8xbf16>
    %cst_159 = arith.constant dense<0.000000e+00> : vector<24x24xf32>
    %637 = tpu.matmul %632, %634, %cst_159 {dimension_numbers = #tpu.dot_dimension_numbers<[1], [1], [0], [0], [0, 0, 1, 0], [], []>} : vector<24x8xbf16>, vector<24x8xbf16>, vector<24x24xf32> -> vector<24x24xf32>
    %638 = vector.broadcast %5 : vector<1x24xf32> to vector<24x24xf32>
    %639 = arith.addf %637, %638 : vector<24x24xf32>
    %cst_160 = arith.constant dense<0xFF800000> : vector<24xf32>
    %640 = vector.multi_reduction <maximumf>, %639, %cst_160 [1] : vector<24x24xf32> to vector<24xf32>
    %641 = vector.shape_cast %640 : vector<24xf32> to vector<24x1xf32>
    %642 = vector.broadcast %641 : vector<24x1xf32> to vector<24x24xf32>
    %643 = arith.subf %639, %642 : vector<24x24xf32>
    %644 = math.exp %643 : vector<24x24xf32>
    %cst_161 = arith.constant dense<0.000000e+00> : vector<24xf32>
    %645 = vector.multi_reduction <add>, %644, %cst_161 [1] : vector<24x24xf32> to vector<24xf32>
    %646 = vector.shape_cast %645 : vector<24xf32> to vector<24x1xf32>
    %647 = tpu.reciprocal %646 {approx = true} : vector<24x1xf32> -> vector<24x1xf32>
    %648 = vector.broadcast %647 : vector<24x1xf32> to vector<24x24xf32>
    %649 = arith.mulf %644, %648 : vector<24x24xf32>
    %650 = arith.truncf %649 : vector<24x24xf32> to vector<24x24xbf16>
    %cst_162 = arith.constant dense<0.000000e+00> : vector<24x8xf32>
    %651 = tpu.matmul %650, %636, %cst_162 {dimension_numbers = #tpu.dot_dimension_numbers<[1], [0], [0], [1], [0, 0, 1, 1], [], []>} : vector<24x24xbf16>, vector<24x8xbf16>, vector<24x8xf32> -> vector<24x8xf32>
    %652 = vector.extract_strided_slice %503 {offsets = [24, 24], sizes = [24, 8], strides = [1, 1]} : vector<96x96xf32> to vector<24x8xf32>
    %653 = arith.truncf %652 : vector<24x8xf32> to vector<24x8xbf16>
    %654 = vector.extract_strided_slice %503 {offsets = [24, 56], sizes = [24, 8], strides = [1, 1]} : vector<96x96xf32> to vector<24x8xf32>
    %655 = arith.truncf %654 : vector<24x8xf32> to vector<24x8xbf16>
    %656 = vector.extract_strided_slice %503 {offsets = [24, 88], sizes = [24, 8], strides = [1, 1]} : vector<96x96xf32> to vector<24x8xf32>
    %657 = arith.truncf %656 : vector<24x8xf32> to vector<24x8xbf16>
    %cst_163 = arith.constant dense<0.000000e+00> : vector<24x24xf32>
    %658 = tpu.matmul %653, %655, %cst_163 {dimension_numbers = #tpu.dot_dimension_numbers<[1], [1], [0], [0], [0, 0, 1, 0], [], []>} : vector<24x8xbf16>, vector<24x8xbf16>, vector<24x24xf32> -> vector<24x24xf32>
    %659 = vector.broadcast %5 : vector<1x24xf32> to vector<24x24xf32>
    %660 = arith.addf %658, %659 : vector<24x24xf32>
    %cst_164 = arith.constant dense<0xFF800000> : vector<24xf32>
    %661 = vector.multi_reduction <maximumf>, %660, %cst_164 [1] : vector<24x24xf32> to vector<24xf32>
    %662 = vector.shape_cast %661 : vector<24xf32> to vector<24x1xf32>
    %663 = vector.broadcast %662 : vector<24x1xf32> to vector<24x24xf32>
    %664 = arith.subf %660, %663 : vector<24x24xf32>
    %665 = math.exp %664 : vector<24x24xf32>
    %cst_165 = arith.constant dense<0.000000e+00> : vector<24xf32>
    %666 = vector.multi_reduction <add>, %665, %cst_165 [1] : vector<24x24xf32> to vector<24xf32>
    %667 = vector.shape_cast %666 : vector<24xf32> to vector<24x1xf32>
    %668 = tpu.reciprocal %667 {approx = true} : vector<24x1xf32> -> vector<24x1xf32>
    %669 = vector.broadcast %668 : vector<24x1xf32> to vector<24x24xf32>
    %670 = arith.mulf %665, %669 : vector<24x24xf32>
    %671 = arith.truncf %670 : vector<24x24xf32> to vector<24x24xbf16>
    %cst_166 = arith.constant dense<0.000000e+00> : vector<24x8xf32>
    %672 = tpu.matmul %671, %657, %cst_166 {dimension_numbers = #tpu.dot_dimension_numbers<[1], [0], [0], [1], [0, 0, 1, 1], [], []>} : vector<24x24xbf16>, vector<24x8xbf16>, vector<24x8xf32> -> vector<24x8xf32>
    %673 = tpu.concatenate %609, %630, %651, %672 in 1 : vector<24x8xf32>, vector<24x8xf32>, vector<24x8xf32>, vector<24x8xf32> -> vector<24x32xf32>
    %674 = vector.extract_strided_slice %503 {offsets = [48, 0], sizes = [24, 8], strides = [1, 1]} : vector<96x96xf32> to vector<24x8xf32>
    %675 = arith.truncf %674 : vector<24x8xf32> to vector<24x8xbf16>
    %676 = vector.extract_strided_slice %503 {offsets = [48, 32], sizes = [24, 8], strides = [1, 1]} : vector<96x96xf32> to vector<24x8xf32>
    %677 = arith.truncf %676 : vector<24x8xf32> to vector<24x8xbf16>
    %678 = vector.extract_strided_slice %503 {offsets = [48, 64], sizes = [24, 8], strides = [1, 1]} : vector<96x96xf32> to vector<24x8xf32>
    %679 = arith.truncf %678 : vector<24x8xf32> to vector<24x8xbf16>
    %cst_167 = arith.constant dense<0.000000e+00> : vector<24x24xf32>
    %680 = tpu.matmul %675, %677, %cst_167 {dimension_numbers = #tpu.dot_dimension_numbers<[1], [1], [0], [0], [0, 0, 1, 0], [], []>} : vector<24x8xbf16>, vector<24x8xbf16>, vector<24x24xf32> -> vector<24x24xf32>
    %681 = vector.broadcast %5 : vector<1x24xf32> to vector<24x24xf32>
    %682 = arith.addf %680, %681 : vector<24x24xf32>
    %cst_168 = arith.constant dense<0xFF800000> : vector<24xf32>
    %683 = vector.multi_reduction <maximumf>, %682, %cst_168 [1] : vector<24x24xf32> to vector<24xf32>
    %684 = vector.shape_cast %683 : vector<24xf32> to vector<24x1xf32>
    %685 = vector.broadcast %684 : vector<24x1xf32> to vector<24x24xf32>
    %686 = arith.subf %682, %685 : vector<24x24xf32>
    %687 = math.exp %686 : vector<24x24xf32>
    %cst_169 = arith.constant dense<0.000000e+00> : vector<24xf32>
    %688 = vector.multi_reduction <add>, %687, %cst_169 [1] : vector<24x24xf32> to vector<24xf32>
    %689 = vector.shape_cast %688 : vector<24xf32> to vector<24x1xf32>
    %690 = tpu.reciprocal %689 {approx = true} : vector<24x1xf32> -> vector<24x1xf32>
    %691 = vector.broadcast %690 : vector<24x1xf32> to vector<24x24xf32>
    %692 = arith.mulf %687, %691 : vector<24x24xf32>
    %693 = arith.truncf %692 : vector<24x24xf32> to vector<24x24xbf16>
    %cst_170 = arith.constant dense<0.000000e+00> : vector<24x8xf32>
    %694 = tpu.matmul %693, %679, %cst_170 {dimension_numbers = #tpu.dot_dimension_numbers<[1], [0], [0], [1], [0, 0, 1, 1], [], []>} : vector<24x24xbf16>, vector<24x8xbf16>, vector<24x8xf32> -> vector<24x8xf32>
    %695 = vector.extract_strided_slice %503 {offsets = [48, 8], sizes = [24, 8], strides = [1, 1]} : vector<96x96xf32> to vector<24x8xf32>
    %696 = arith.truncf %695 : vector<24x8xf32> to vector<24x8xbf16>
    %697 = vector.extract_strided_slice %503 {offsets = [48, 40], sizes = [24, 8], strides = [1, 1]} : vector<96x96xf32> to vector<24x8xf32>
    %698 = arith.truncf %697 : vector<24x8xf32> to vector<24x8xbf16>
    %699 = vector.extract_strided_slice %503 {offsets = [48, 72], sizes = [24, 8], strides = [1, 1]} : vector<96x96xf32> to vector<24x8xf32>
    %700 = arith.truncf %699 : vector<24x8xf32> to vector<24x8xbf16>
    %cst_171 = arith.constant dense<0.000000e+00> : vector<24x24xf32>
    %701 = tpu.matmul %696, %698, %cst_171 {dimension_numbers = #tpu.dot_dimension_numbers<[1], [1], [0], [0], [0, 0, 1, 0], [], []>} : vector<24x8xbf16>, vector<24x8xbf16>, vector<24x24xf32> -> vector<24x24xf32>
    %702 = vector.broadcast %5 : vector<1x24xf32> to vector<24x24xf32>
    %703 = arith.addf %701, %702 : vector<24x24xf32>
    %cst_172 = arith.constant dense<0xFF800000> : vector<24xf32>
    %704 = vector.multi_reduction <maximumf>, %703, %cst_172 [1] : vector<24x24xf32> to vector<24xf32>
    %705 = vector.shape_cast %704 : vector<24xf32> to vector<24x1xf32>
    %706 = vector.broadcast %705 : vector<24x1xf32> to vector<24x24xf32>
    %707 = arith.subf %703, %706 : vector<24x24xf32>
    %708 = math.exp %707 : vector<24x24xf32>
    %cst_173 = arith.constant dense<0.000000e+00> : vector<24xf32>
    %709 = vector.multi_reduction <add>, %708, %cst_173 [1] : vector<24x24xf32> to vector<24xf32>
    %710 = vector.shape_cast %709 : vector<24xf32> to vector<24x1xf32>
    %711 = tpu.reciprocal %710 {approx = true} : vector<24x1xf32> -> vector<24x1xf32>
    %712 = vector.broadcast %711 : vector<24x1xf32> to vector<24x24xf32>
    %713 = arith.mulf %708, %712 : vector<24x24xf32>
    %714 = arith.truncf %713 : vector<24x24xf32> to vector<24x24xbf16>
    %cst_174 = arith.constant dense<0.000000e+00> : vector<24x8xf32>
    %715 = tpu.matmul %714, %700, %cst_174 {dimension_numbers = #tpu.dot_dimension_numbers<[1], [0], [0], [1], [0, 0, 1, 1], [], []>} : vector<24x24xbf16>, vector<24x8xbf16>, vector<24x8xf32> -> vector<24x8xf32>
    %716 = vector.extract_strided_slice %503 {offsets = [48, 16], sizes = [24, 8], strides = [1, 1]} : vector<96x96xf32> to vector<24x8xf32>
    %717 = arith.truncf %716 : vector<24x8xf32> to vector<24x8xbf16>
    %718 = vector.extract_strided_slice %503 {offsets = [48, 48], sizes = [24, 8], strides = [1, 1]} : vector<96x96xf32> to vector<24x8xf32>
    %719 = arith.truncf %718 : vector<24x8xf32> to vector<24x8xbf16>
    %720 = vector.extract_strided_slice %503 {offsets = [48, 80], sizes = [24, 8], strides = [1, 1]} : vector<96x96xf32> to vector<24x8xf32>
    %721 = arith.truncf %720 : vector<24x8xf32> to vector<24x8xbf16>
    %cst_175 = arith.constant dense<0.000000e+00> : vector<24x24xf32>
    %722 = tpu.matmul %717, %719, %cst_175 {dimension_numbers = #tpu.dot_dimension_numbers<[1], [1], [0], [0], [0, 0, 1, 0], [], []>} : vector<24x8xbf16>, vector<24x8xbf16>, vector<24x24xf32> -> vector<24x24xf32>
    %723 = vector.broadcast %5 : vector<1x24xf32> to vector<24x24xf32>
    %724 = arith.addf %722, %723 : vector<24x24xf32>
    %cst_176 = arith.constant dense<0xFF800000> : vector<24xf32>
    %725 = vector.multi_reduction <maximumf>, %724, %cst_176 [1] : vector<24x24xf32> to vector<24xf32>
    %726 = vector.shape_cast %725 : vector<24xf32> to vector<24x1xf32>
    %727 = vector.broadcast %726 : vector<24x1xf32> to vector<24x24xf32>
    %728 = arith.subf %724, %727 : vector<24x24xf32>
    %729 = math.exp %728 : vector<24x24xf32>
    %cst_177 = arith.constant dense<0.000000e+00> : vector<24xf32>
    %730 = vector.multi_reduction <add>, %729, %cst_177 [1] : vector<24x24xf32> to vector<24xf32>
    %731 = vector.shape_cast %730 : vector<24xf32> to vector<24x1xf32>
    %732 = tpu.reciprocal %731 {approx = true} : vector<24x1xf32> -> vector<24x1xf32>
    %733 = vector.broadcast %732 : vector<24x1xf32> to vector<24x24xf32>
    %734 = arith.mulf %729, %733 : vector<24x24xf32>
    %735 = arith.truncf %734 : vector<24x24xf32> to vector<24x24xbf16>
    %cst_178 = arith.constant dense<0.000000e+00> : vector<24x8xf32>
    %736 = tpu.matmul %735, %721, %cst_178 {dimension_numbers = #tpu.dot_dimension_numbers<[1], [0], [0], [1], [0, 0, 1, 1], [], []>} : vector<24x24xbf16>, vector<24x8xbf16>, vector<24x8xf32> -> vector<24x8xf32>
    %737 = vector.extract_strided_slice %503 {offsets = [48, 24], sizes = [24, 8], strides = [1, 1]} : vector<96x96xf32> to vector<24x8xf32>
    %738 = arith.truncf %737 : vector<24x8xf32> to vector<24x8xbf16>
    %739 = vector.extract_strided_slice %503 {offsets = [48, 56], sizes = [24, 8], strides = [1, 1]} : vector<96x96xf32> to vector<24x8xf32>
    %740 = arith.truncf %739 : vector<24x8xf32> to vector<24x8xbf16>
    %741 = vector.extract_strided_slice %503 {offsets = [48, 88], sizes = [24, 8], strides = [1, 1]} : vector<96x96xf32> to vector<24x8xf32>
    %742 = arith.truncf %741 : vector<24x8xf32> to vector<24x8xbf16>
    %cst_179 = arith.constant dense<0.000000e+00> : vector<24x24xf32>
    %743 = tpu.matmul %738, %740, %cst_179 {dimension_numbers = #tpu.dot_dimension_numbers<[1], [1], [0], [0], [0, 0, 1, 0], [], []>} : vector<24x8xbf16>, vector<24x8xbf16>, vector<24x24xf32> -> vector<24x24xf32>
    %744 = vector.broadcast %5 : vector<1x24xf32> to vector<24x24xf32>
    %745 = arith.addf %743, %744 : vector<24x24xf32>
    %cst_180 = arith.constant dense<0xFF800000> : vector<24xf32>
    %746 = vector.multi_reduction <maximumf>, %745, %cst_180 [1] : vector<24x24xf32> to vector<24xf32>
    %747 = vector.shape_cast %746 : vector<24xf32> to vector<24x1xf32>
    %748 = vector.broadcast %747 : vector<24x1xf32> to vector<24x24xf32>
    %749 = arith.subf %745, %748 : vector<24x24xf32>
    %750 = math.exp %749 : vector<24x24xf32>
    %cst_181 = arith.constant dense<0.000000e+00> : vector<24xf32>
    %751 = vector.multi_reduction <add>, %750, %cst_181 [1] : vector<24x24xf32> to vector<24xf32>
    %752 = vector.shape_cast %751 : vector<24xf32> to vector<24x1xf32>
    %753 = tpu.reciprocal %752 {approx = true} : vector<24x1xf32> -> vector<24x1xf32>
    %754 = vector.broadcast %753 : vector<24x1xf32> to vector<24x24xf32>
    %755 = arith.mulf %750, %754 : vector<24x24xf32>
    %756 = arith.truncf %755 : vector<24x24xf32> to vector<24x24xbf16>
    %cst_182 = arith.constant dense<0.000000e+00> : vector<24x8xf32>
    %757 = tpu.matmul %756, %742, %cst_182 {dimension_numbers = #tpu.dot_dimension_numbers<[1], [0], [0], [1], [0, 0, 1, 1], [], []>} : vector<24x24xbf16>, vector<24x8xbf16>, vector<24x8xf32> -> vector<24x8xf32>
    %758 = tpu.concatenate %694, %715, %736, %757 in 1 : vector<24x8xf32>, vector<24x8xf32>, vector<24x8xf32>, vector<24x8xf32> -> vector<24x32xf32>
    %759 = vector.extract_strided_slice %503 {offsets = [72, 0], sizes = [24, 8], strides = [1, 1]} : vector<96x96xf32> to vector<24x8xf32>
    %760 = arith.truncf %759 : vector<24x8xf32> to vector<24x8xbf16>
    %761 = vector.extract_strided_slice %503 {offsets = [72, 32], sizes = [24, 8], strides = [1, 1]} : vector<96x96xf32> to vector<24x8xf32>
    %762 = arith.truncf %761 : vector<24x8xf32> to vector<24x8xbf16>
    %763 = vector.extract_strided_slice %503 {offsets = [72, 64], sizes = [24, 8], strides = [1, 1]} : vector<96x96xf32> to vector<24x8xf32>
    %764 = arith.truncf %763 : vector<24x8xf32> to vector<24x8xbf16>
    %cst_183 = arith.constant dense<0.000000e+00> : vector<24x24xf32>
    %765 = tpu.matmul %760, %762, %cst_183 {dimension_numbers = #tpu.dot_dimension_numbers<[1], [1], [0], [0], [0, 0, 1, 0], [], []>} : vector<24x8xbf16>, vector<24x8xbf16>, vector<24x24xf32> -> vector<24x24xf32>
    %766 = vector.broadcast %5 : vector<1x24xf32> to vector<24x24xf32>
    %767 = arith.addf %765, %766 : vector<24x24xf32>
    %cst_184 = arith.constant dense<0xFF800000> : vector<24xf32>
    %768 = vector.multi_reduction <maximumf>, %767, %cst_184 [1] : vector<24x24xf32> to vector<24xf32>
    %769 = vector.shape_cast %768 : vector<24xf32> to vector<24x1xf32>
    %770 = vector.broadcast %769 : vector<24x1xf32> to vector<24x24xf32>
    %771 = arith.subf %767, %770 : vector<24x24xf32>
    %772 = math.exp %771 : vector<24x24xf32>
    %cst_185 = arith.constant dense<0.000000e+00> : vector<24xf32>
    %773 = vector.multi_reduction <add>, %772, %cst_185 [1] : vector<24x24xf32> to vector<24xf32>
    %774 = vector.shape_cast %773 : vector<24xf32> to vector<24x1xf32>
    %775 = tpu.reciprocal %774 {approx = true} : vector<24x1xf32> -> vector<24x1xf32>
    %776 = vector.broadcast %775 : vector<24x1xf32> to vector<24x24xf32>
    %777 = arith.mulf %772, %776 : vector<24x24xf32>
    %778 = arith.truncf %777 : vector<24x24xf32> to vector<24x24xbf16>
    %cst_186 = arith.constant dense<0.000000e+00> : vector<24x8xf32>
    %779 = tpu.matmul %778, %764, %cst_186 {dimension_numbers = #tpu.dot_dimension_numbers<[1], [0], [0], [1], [0, 0, 1, 1], [], []>} : vector<24x24xbf16>, vector<24x8xbf16>, vector<24x8xf32> -> vector<24x8xf32>
    %780 = vector.extract_strided_slice %503 {offsets = [72, 8], sizes = [24, 8], strides = [1, 1]} : vector<96x96xf32> to vector<24x8xf32>
    %781 = arith.truncf %780 : vector<24x8xf32> to vector<24x8xbf16>
    %782 = vector.extract_strided_slice %503 {offsets = [72, 40], sizes = [24, 8], strides = [1, 1]} : vector<96x96xf32> to vector<24x8xf32>
    %783 = arith.truncf %782 : vector<24x8xf32> to vector<24x8xbf16>
    %784 = vector.extract_strided_slice %503 {offsets = [72, 72], sizes = [24, 8], strides = [1, 1]} : vector<96x96xf32> to vector<24x8xf32>
    %785 = arith.truncf %784 : vector<24x8xf32> to vector<24x8xbf16>
    %cst_187 = arith.constant dense<0.000000e+00> : vector<24x24xf32>
    %786 = tpu.matmul %781, %783, %cst_187 {dimension_numbers = #tpu.dot_dimension_numbers<[1], [1], [0], [0], [0, 0, 1, 0], [], []>} : vector<24x8xbf16>, vector<24x8xbf16>, vector<24x24xf32> -> vector<24x24xf32>
    %787 = vector.broadcast %5 : vector<1x24xf32> to vector<24x24xf32>
    %788 = arith.addf %786, %787 : vector<24x24xf32>
    %cst_188 = arith.constant dense<0xFF800000> : vector<24xf32>
    %789 = vector.multi_reduction <maximumf>, %788, %cst_188 [1] : vector<24x24xf32> to vector<24xf32>
    %790 = vector.shape_cast %789 : vector<24xf32> to vector<24x1xf32>
    %791 = vector.broadcast %790 : vector<24x1xf32> to vector<24x24xf32>
    %792 = arith.subf %788, %791 : vector<24x24xf32>
    %793 = math.exp %792 : vector<24x24xf32>
    %cst_189 = arith.constant dense<0.000000e+00> : vector<24xf32>
    %794 = vector.multi_reduction <add>, %793, %cst_189 [1] : vector<24x24xf32> to vector<24xf32>
    %795 = vector.shape_cast %794 : vector<24xf32> to vector<24x1xf32>
    %796 = tpu.reciprocal %795 {approx = true} : vector<24x1xf32> -> vector<24x1xf32>
    %797 = vector.broadcast %796 : vector<24x1xf32> to vector<24x24xf32>
    %798 = arith.mulf %793, %797 : vector<24x24xf32>
    %799 = arith.truncf %798 : vector<24x24xf32> to vector<24x24xbf16>
    %cst_190 = arith.constant dense<0.000000e+00> : vector<24x8xf32>
    %800 = tpu.matmul %799, %785, %cst_190 {dimension_numbers = #tpu.dot_dimension_numbers<[1], [0], [0], [1], [0, 0, 1, 1], [], []>} : vector<24x24xbf16>, vector<24x8xbf16>, vector<24x8xf32> -> vector<24x8xf32>
    %801 = vector.extract_strided_slice %503 {offsets = [72, 16], sizes = [24, 8], strides = [1, 1]} : vector<96x96xf32> to vector<24x8xf32>
    %802 = arith.truncf %801 : vector<24x8xf32> to vector<24x8xbf16>
    %803 = vector.extract_strided_slice %503 {offsets = [72, 48], sizes = [24, 8], strides = [1, 1]} : vector<96x96xf32> to vector<24x8xf32>
    %804 = arith.truncf %803 : vector<24x8xf32> to vector<24x8xbf16>
    %805 = vector.extract_strided_slice %503 {offsets = [72, 80], sizes = [24, 8], strides = [1, 1]} : vector<96x96xf32> to vector<24x8xf32>
    %806 = arith.truncf %805 : vector<24x8xf32> to vector<24x8xbf16>
    %cst_191 = arith.constant dense<0.000000e+00> : vector<24x24xf32>
    %807 = tpu.matmul %802, %804, %cst_191 {dimension_numbers = #tpu.dot_dimension_numbers<[1], [1], [0], [0], [0, 0, 1, 0], [], []>} : vector<24x8xbf16>, vector<24x8xbf16>, vector<24x24xf32> -> vector<24x24xf32>
    %808 = vector.broadcast %5 : vector<1x24xf32> to vector<24x24xf32>
    %809 = arith.addf %807, %808 : vector<24x24xf32>
    %cst_192 = arith.constant dense<0xFF800000> : vector<24xf32>
    %810 = vector.multi_reduction <maximumf>, %809, %cst_192 [1] : vector<24x24xf32> to vector<24xf32>
    %811 = vector.shape_cast %810 : vector<24xf32> to vector<24x1xf32>
    %812 = vector.broadcast %811 : vector<24x1xf32> to vector<24x24xf32>
    %813 = arith.subf %809, %812 : vector<24x24xf32>
    %814 = math.exp %813 : vector<24x24xf32>
    %cst_193 = arith.constant dense<0.000000e+00> : vector<24xf32>
    %815 = vector.multi_reduction <add>, %814, %cst_193 [1] : vector<24x24xf32> to vector<24xf32>
    %816 = vector.shape_cast %815 : vector<24xf32> to vector<24x1xf32>
    %817 = tpu.reciprocal %816 {approx = true} : vector<24x1xf32> -> vector<24x1xf32>
    %818 = vector.broadcast %817 : vector<24x1xf32> to vector<24x24xf32>
    %819 = arith.mulf %814, %818 : vector<24x24xf32>
    %820 = arith.truncf %819 : vector<24x24xf32> to vector<24x24xbf16>
    %cst_194 = arith.constant dense<0.000000e+00> : vector<24x8xf32>
    %821 = tpu.matmul %820, %806, %cst_194 {dimension_numbers = #tpu.dot_dimension_numbers<[1], [0], [0], [1], [0, 0, 1, 1], [], []>} : vector<24x24xbf16>, vector<24x8xbf16>, vector<24x8xf32> -> vector<24x8xf32>
    %822 = vector.extract_strided_slice %503 {offsets = [72, 24], sizes = [24, 8], strides = [1, 1]} : vector<96x96xf32> to vector<24x8xf32>
    %823 = arith.truncf %822 : vector<24x8xf32> to vector<24x8xbf16>
    %824 = vector.extract_strided_slice %503 {offsets = [72, 56], sizes = [24, 8], strides = [1, 1]} : vector<96x96xf32> to vector<24x8xf32>
    %825 = arith.truncf %824 : vector<24x8xf32> to vector<24x8xbf16>
    %826 = vector.extract_strided_slice %503 {offsets = [72, 88], sizes = [24, 8], strides = [1, 1]} : vector<96x96xf32> to vector<24x8xf32>
    %827 = arith.truncf %826 : vector<24x8xf32> to vector<24x8xbf16>
    %cst_195 = arith.constant dense<0.000000e+00> : vector<24x24xf32>
    %828 = tpu.matmul %823, %825, %cst_195 {dimension_numbers = #tpu.dot_dimension_numbers<[1], [1], [0], [0], [0, 0, 1, 0], [], []>} : vector<24x8xbf16>, vector<24x8xbf16>, vector<24x24xf32> -> vector<24x24xf32>
    %829 = vector.broadcast %5 : vector<1x24xf32> to vector<24x24xf32>
    %830 = arith.addf %828, %829 : vector<24x24xf32>
    %cst_196 = arith.constant dense<0xFF800000> : vector<24xf32>
    %831 = vector.multi_reduction <maximumf>, %830, %cst_196 [1] : vector<24x24xf32> to vector<24xf32>
    %832 = vector.shape_cast %831 : vector<24xf32> to vector<24x1xf32>
    %833 = vector.broadcast %832 : vector<24x1xf32> to vector<24x24xf32>
    %834 = arith.subf %830, %833 : vector<24x24xf32>
    %835 = math.exp %834 : vector<24x24xf32>
    %cst_197 = arith.constant dense<0.000000e+00> : vector<24xf32>
    %836 = vector.multi_reduction <add>, %835, %cst_197 [1] : vector<24x24xf32> to vector<24xf32>
    %837 = vector.shape_cast %836 : vector<24xf32> to vector<24x1xf32>
    %838 = tpu.reciprocal %837 {approx = true} : vector<24x1xf32> -> vector<24x1xf32>
    %839 = vector.broadcast %838 : vector<24x1xf32> to vector<24x24xf32>
    %840 = arith.mulf %835, %839 : vector<24x24xf32>
    %841 = arith.truncf %840 : vector<24x24xf32> to vector<24x24xbf16>
    %cst_198 = arith.constant dense<0.000000e+00> : vector<24x8xf32>
    %842 = tpu.matmul %841, %827, %cst_198 {dimension_numbers = #tpu.dot_dimension_numbers<[1], [0], [0], [1], [0, 0, 1, 1], [], []>} : vector<24x24xbf16>, vector<24x8xbf16>, vector<24x8xf32> -> vector<24x8xf32>
    %843 = tpu.concatenate %779, %800, %821, %842 in 1 : vector<24x8xf32>, vector<24x8xf32>, vector<24x8xf32>, vector<24x8xf32> -> vector<24x32xf32>
    %844 = tpu.concatenate %588, %673, %758, %843 in 0 : vector<24x32xf32>, vector<24x32xf32>, vector<24x32xf32>, vector<24x32xf32> -> vector<96x32xf32>
    %845 = arith.truncf %844 : vector<96x32xf32> to vector<96x32xbf16>
    %c1_199 = arith.constant 1 : index
    %c0_200 = arith.constant 0 : index
    %c0_201 = arith.constant 0 : index
    %846 = vector.load %arg8[%c1_199, %c0_200, %c0_201] : memref<2x32x32xbf16, #tpu.memory_space<vmem>>, vector<1x32x32xbf16>
    %847 = vector.shape_cast %846 : vector<1x32x32xbf16> to vector<32x32xbf16>
    %cst_202 = arith.constant dense<0.000000e+00> : vector<96x32xf32>
    %848 = tpu.matmul %845, %847, %cst_202 {dimension_numbers = #tpu.dot_dimension_numbers<[1], [0], [0], [1], [0, 0, 1, 1], [], []>} : vector<96x32xbf16>, vector<32x32xbf16>, vector<96x32xf32> -> vector<96x32xf32>
    %849 = arith.addf %467, %848 : vector<96x32xf32>
    %850 = vector.extract_strided_slice %471 {offsets = [0, 0], sizes = [1, 32], strides = [1, 1]} : vector<2x32xf32> to vector<1x32xf32>
    %851 = vector.broadcast %850 : vector<1x32xf32> to vector<96x32xf32>
    %852 = arith.addf %849, %851 : vector<96x32xf32>
    %853 = vector.extract_strided_slice %469 {offsets = [2, 0], sizes = [1, 32], strides = [1, 1]} : vector<4x32xf32> to vector<1x32xf32>
    %854 = vector.extract_strided_slice %469 {offsets = [3, 0], sizes = [1, 32], strides = [1, 1]} : vector<4x32xf32> to vector<1x32xf32>
    %cst_203 = arith.constant dense<0.000000e+00> : vector<96xf32>
    %855 = vector.multi_reduction <add>, %852, %cst_203 [1] : vector<96x32xf32> to vector<96xf32>
    %856 = vector.shape_cast %855 : vector<96xf32> to vector<96x1xf32>
    %cst_204 = arith.constant 3.200000e+01 : f32
    %857 = vector.broadcast %cst_204 : f32 to vector<96x1xf32>
    %858 = arith.divf %856, %857 : vector<96x1xf32>
    %859 = vector.broadcast %858 : vector<96x1xf32> to vector<96x32xf32>
    %860 = arith.subf %852, %859 : vector<96x32xf32>
    %861 = arith.mulf %860, %860 : vector<96x32xf32>
    %cst_205 = arith.constant dense<0.000000e+00> : vector<96xf32>
    %862 = vector.multi_reduction <add>, %861, %cst_205 [1] : vector<96x32xf32> to vector<96xf32>
    %863 = vector.shape_cast %862 : vector<96xf32> to vector<96x1xf32>
    %cst_206 = arith.constant 3.200000e+01 : f32
    %864 = vector.broadcast %cst_206 : f32 to vector<96x1xf32>
    %865 = arith.divf %863, %864 : vector<96x1xf32>
    %866 = vector.broadcast %858 : vector<96x1xf32> to vector<96x32xf32>
    %867 = arith.subf %852, %866 : vector<96x32xf32>
    %cst_207 = arith.constant 9.99999974E-6 : f32
    %868 = vector.broadcast %cst_207 : f32 to vector<96x1xf32>
    %869 = arith.addf %865, %868 : vector<96x1xf32>
    %870 = math.rsqrt %869 : vector<96x1xf32>
    %871 = vector.broadcast %870 : vector<96x1xf32> to vector<96x32xf32>
    %872 = arith.mulf %867, %871 : vector<96x32xf32>
    %873 = vector.broadcast %853 : vector<1x32xf32> to vector<96x32xf32>
    %874 = arith.mulf %872, %873 : vector<96x32xf32>
    %875 = vector.broadcast %854 : vector<1x32xf32> to vector<96x32xf32>
    %876 = arith.addf %874, %875 : vector<96x32xf32>
    %877 = arith.truncf %876 : vector<96x32xf32> to vector<96x32xbf16>
    %c1_208 = arith.constant 1 : index
    %c0_209 = arith.constant 0 : index
    %c0_210 = arith.constant 0 : index
    %878 = vector.load %arg10[%c1_208, %c0_209, %c0_210] : memref<2x32x64xbf16, #tpu.memory_space<vmem>>, vector<1x32x64xbf16>
    %879 = vector.shape_cast %878 : vector<1x32x64xbf16> to vector<32x64xbf16>
    %cst_211 = arith.constant dense<0.000000e+00> : vector<96x64xf32>
    %880 = tpu.matmul %877, %879, %cst_211 {dimension_numbers = #tpu.dot_dimension_numbers<[1], [0], [0], [1], [0, 0, 1, 1], [], []>} : vector<96x32xbf16>, vector<32x64xbf16>, vector<96x64xf32> -> vector<96x64xf32>
    %c1_212 = arith.constant 1 : index
    %c0_213 = arith.constant 0 : index
    %c0_214 = arith.constant 0 : index
    %881 = vector.load %arg11[%c1_212, %c0_213, %c0_214] : memref<2x1x64xf32, #tpu.memory_space<vmem>>, vector<1x1x64xf32>
    %882 = vector.shape_cast %881 : vector<1x1x64xf32> to vector<1x64xf32>
    %883 = vector.broadcast %882 : vector<1x64xf32> to vector<96x64xf32>
    %884 = arith.addf %880, %883 : vector<96x64xf32>
    %cst_215 = arith.constant -1.702000e+00 : f32
    %885 = vector.broadcast %cst_215 : f32 to vector<96x64xf32>
    %886 = arith.mulf %885, %884 : vector<96x64xf32>
    %887 = math.exp %886 : vector<96x64xf32>
    %cst_216 = arith.constant 1.000000e+00 : f32
    %888 = vector.broadcast %cst_216 : f32 to vector<96x64xf32>
    %889 = arith.addf %888, %887 : vector<96x64xf32>
    %890 = tpu.reciprocal %889 {approx = true} : vector<96x64xf32> -> vector<96x64xf32>
    %891 = arith.mulf %884, %890 : vector<96x64xf32>
    %892 = arith.truncf %891 : vector<96x64xf32> to vector<96x64xbf16>
    %c1_217 = arith.constant 1 : index
    %c0_218 = arith.constant 0 : index
    %c0_219 = arith.constant 0 : index
    %893 = vector.load %arg12[%c1_217, %c0_218, %c0_219] : memref<2x64x32xbf16, #tpu.memory_space<vmem>>, vector<1x64x32xbf16>
    %894 = vector.shape_cast %893 : vector<1x64x32xbf16> to vector<64x32xbf16>
    %cst_220 = arith.constant dense<0.000000e+00> : vector<96x32xf32>
    %895 = tpu.matmul %892, %894, %cst_220 {dimension_numbers = #tpu.dot_dimension_numbers<[1], [0], [0], [1], [0, 0, 1, 1], [], []>} : vector<96x64xbf16>, vector<64x32xbf16>, vector<96x32xf32> -> vector<96x32xf32>
    %896 = arith.addf %852, %895 : vector<96x32xf32>
    %897 = vector.extract_strided_slice %471 {offsets = [1, 0], sizes = [1, 32], strides = [1, 1]} : vector<2x32xf32> to vector<1x32xf32>
    %898 = vector.broadcast %897 : vector<1x32xf32> to vector<96x32xf32>
    %899 = arith.addf %896, %898 : vector<96x32xf32>
    %900 = vector.extract_strided_slice %899 {offsets = [0, 0], sizes = [16, 32], strides = [1, 1]} : vector<96x32xf32> to vector<16x32xf32>
    %901 = vector.extract_strided_slice %899 {offsets = [24, 0], sizes = [16, 32], strides = [1, 1]} : vector<96x32xf32> to vector<16x32xf32>
    %902 = vector.extract_strided_slice %899 {offsets = [48, 0], sizes = [16, 32], strides = [1, 1]} : vector<96x32xf32> to vector<16x32xf32>
    %903 = vector.extract_strided_slice %899 {offsets = [72, 0], sizes = [16, 32], strides = [1, 1]} : vector<96x32xf32> to vector<16x32xf32>
    %904 = tpu.concatenate %900, %901, %902, %903 in 1 : vector<16x32xf32>, vector<16x32xf32>, vector<16x32xf32>, vector<16x32xf32> -> vector<16x128xf32>
    %c0_221 = arith.constant 0 : index
    %c0_222 = arith.constant 0 : index
    %c0_223 = arith.constant 0 : index
    %905 = vector.load %arg13[%c0_221, %c0_222, %c0_223] : memref<1x16x128xf32, #tpu.memory_space<vmem>>, vector<1x16x128xf32>
    %906 = vector.shape_cast %905 : vector<1x16x128xf32> to vector<16x128xf32>
    %907 = vector.shape_cast %904 : vector<16x128xf32> to vector<1x16x128xf32>
    tpu.vector_store %arg13[%c0_221, %c0_222, %c0_223], %907 {strides = array<i32>} : memref<1x16x128xf32, #tpu.memory_space<vmem>>, vector<1x16x128xf32>,
    return
  }
  func.func @transform_0(%arg0: i32) -> (i32, i32) {
    %c0_i32 = arith.constant 0 : i32
    %c0_i32_0 = arith.constant 0 : i32
    return %arg0, %c0_i32 : i32, i32
  }
  func.func @transform_1(%arg0: i32) -> (i32, i32) {
    %c0_i32 = arith.constant 0 : i32
    %c0_i32_0 = arith.constant 0 : i32
    %c0_i32_1 = arith.constant 0 : i32
    return %c0_i32, %c0_i32_0 : i32, i32
  }
  func.func @transform_2(%arg0: i32) -> (i32, i32) {
    %c0_i32 = arith.constant 0 : i32
    %c0_i32_0 = arith.constant 0 : i32
    %c0_i32_1 = arith.constant 0 : i32
    return %c0_i32, %c0_i32_0 : i32, i32
  }
  func.func @transform_3(%arg0: i32) -> (i32, i32) {
    %c0_i32 = arith.constant 0 : i32
    %c0_i32_0 = arith.constant 0 : i32
    %c0_i32_1 = arith.constant 0 : i32
    return %c0_i32, %c0_i32_0 : i32, i32
  }
  func.func @transform_4(%arg0: i32) -> (i32, i32, i32) {
    %c0_i32 = arith.constant 0 : i32
    %c0_i32_0 = arith.constant 0 : i32
    %c0_i32_1 = arith.constant 0 : i32
    %c0_i32_2 = arith.constant 0 : i32
    return %c0_i32, %c0_i32_0, %c0_i32_1 : i32, i32, i32
  }
  func.func @transform_5(%arg0: i32) -> (i32, i32, i32) {
    %c0_i32 = arith.constant 0 : i32
    %c0_i32_0 = arith.constant 0 : i32
    %c0_i32_1 = arith.constant 0 : i32
    %c0_i32_2 = arith.constant 0 : i32
    return %c0_i32, %c0_i32_0, %c0_i32_1 : i32, i32, i32
  }
  func.func @transform_6(%arg0: i32) -> (i32, i32, i32) {
    %c0_i32 = arith.constant 0 : i32
    %c0_i32_0 = arith.constant 0 : i32
    %c0_i32_1 = arith.constant 0 : i32
    %c0_i32_2 = arith.constant 0 : i32
    return %c0_i32, %c0_i32_0, %c0_i32_1 : i32, i32, i32
  }
  func.func @transform_7(%arg0: i32) -> (i32, i32, i32) {
    %c0_i32 = arith.constant 0 : i32
    %c0_i32_0 = arith.constant 0 : i32
    %c0_i32_1 = arith.constant 0 : i32
    %c0_i32_2 = arith.constant 0 : i32
    return %c0_i32, %c0_i32_0, %c0_i32_1 : i32, i32, i32
  }
  func.func @transform_8(%arg0: i32) -> (i32, i32, i32) {
    %c0_i32 = arith.constant 0 : i32
    %c0_i32_0 = arith.constant 0 : i32
    %c0_i32_1 = arith.constant 0 : i32
    %c0_i32_2 = arith.constant 0 : i32
    return %c0_i32, %c0_i32_0, %c0_i32_1 : i32, i32, i32
  }
  func.func @transform_9(%arg0: i32) -> (i32, i32, i32) {
    %c0_i32 = arith.constant 0 : i32
    %c0_i32_0 = arith.constant 0 : i32
    %c0_i32_1 = arith.constant 0 : i32
    %c0_i32_2 = arith.constant 0 : i32
    return %c0_i32, %c0_i32_0, %c0_i32_1 : i32, i32, i32
  }
  func.func @transform_10(%arg0: i32) -> (i32, i32, i32) {
    %c0_i32 = arith.constant 0 : i32
    %c0_i32_0 = arith.constant 0 : i32
    %c0_i32_1 = arith.constant 0 : i32
    %c0_i32_2 = arith.constant 0 : i32
    return %c0_i32, %c0_i32_0, %c0_i32_1 : i32, i32, i32
  }
  func.func @transform_11(%arg0: i32) -> (i32, i32, i32) {
    %c0_i32 = arith.constant 0 : i32
    %c0_i32_0 = arith.constant 0 : i32
    %c0_i32_1 = arith.constant 0 : i32
    %c0_i32_2 = arith.constant 0 : i32
    return %c0_i32, %c0_i32_0, %c0_i32_1 : i32, i32, i32
  }
  func.func @transform_12(%arg0: i32) -> (i32, i32, i32) {
    %c0_i32 = arith.constant 0 : i32
    %c0_i32_0 = arith.constant 0 : i32
    %c0_i32_1 = arith.constant 0 : i32
    return %arg0, %c0_i32, %c0_i32_0 : i32, i32, i32
  }
}

</mosaic_0001>

<llo_original>
// kernel: run.1
$region0: #{run.1}
  #allocation0 [shape = 'u32[]', space=smem, size = 0x4, offset = 0x4, fixed_abs, tag = 'smem constant byte address 0x4 - core index']
  #allocation1 [shape = 'u32[144,128]{1,0:T(1,128)}', space=vmem, size = 0x12000, scoped, tag = 'internal scratch']
  %s0 = inlined_call_operand.vmem [shape: bf16[672,48], index: 0, kind: input, shape index: {}]
  %s1 = inlined_call_operand.vmem [shape: bf16[48,32], index: 1, kind: input, shape index: {}]
  %s2 = inlined_call_operand.vmem [shape: f32[96,32], index: 2, kind: input, shape index: {}]
  %s3 = inlined_call_operand.vmem [shape: f32[2,32], index: 3, kind: input, shape index: {}]
  %s4 = inlined_call_operand.vmem [shape: f32[2,4,32], index: 4, kind: input, shape index: {}]
  %s5 = inlined_call_operand.vmem [shape: bf16[2,32,96], index: 5, kind: input, shape index: {}]
  %s6 = inlined_call_operand.vmem [shape: f32[2,1,96], index: 6, kind: input, shape index: {}]
  %s7 = inlined_call_operand.vmem [shape: bf16[2,32,32], index: 7, kind: input, shape index: {}]
  %s8 = inlined_call_operand.vmem [shape: f32[2,2,32], index: 8, kind: input, shape index: {}]
  %s9 = inlined_call_operand.vmem [shape: bf16[2,32,64], index: 9, kind: input, shape index: {}]
  %s10 = inlined_call_operand.vmem [shape: f32[2,1,64], index: 10, kind: input, shape index: {}]
  %s11 = inlined_call_operand.vmem [shape: bf16[2,64,32], index: 11, kind: input, shape index: {}]
  %s12 = inlined_call_operand.vmem [shape: f32[7,16,128], index: 12, kind: output, shape index: {}]
  %s13 = sld [smem:[#allocation0]]
  $region81: #{run.1} parent=0
    _
  %s15 = ssub.s32 1, %s13
  %s16 = scalar_select 0, %s15, %s13
  loop: start=0, step=1, limit=9
  $region2: #{run.1} parent=0 // loop_pre_header
    _
  $region3: #{run.1} parent=0 // loop_header
    %s18 = sphi 0, %s22
    %p19 = scmp.ge.s32.totalorder %s18, 9
    %s28 = sphi 0, %s30
    %s31 = sphi 0, %s28
    %s32 = sphi 0, %s31
    %s48 = sphi 0, %s32
    %s52 = sphi 0, %s52
    %s54 = sphi 0, %s52
    %s55 = sphi 0, %s54
    %s69 = sphi 0, %s55
    %s73 = sphi 0, %s73
    %s75 = sphi 0, %s73
    %s76 = sphi 0, %s75
    %s90 = sphi 0, %s76
    %s94 = sphi 0, %s94
    %s96 = sphi 0, %s94
    %s97 = sphi 0, %s96
    %s111 = sphi 0, %s97
    %s115 = sphi 0, %s115
    %s117 = sphi 0, %s115
    %s118 = sphi 0, %s117
    %s132 = sphi 0, %s118
    %s136 = sphi 0, %s136
    %s138 = sphi 0, %s136
    %s139 = sphi 0, %s138
    %s153 = sphi 0, %s139
    %s157 = sphi 0, %s157
    %s159 = sphi 0, %s157
    %s160 = sphi 0, %s159
    %s174 = sphi 0, %s160
    %s178 = sphi 0, %s178
    %s180 = sphi 0, %s178
    %s181 = sphi 0, %s180
    %s195 = sphi 0, %s181
    %s199 = sphi 0, %s199
    %s201 = sphi 0, %s199
    %s202 = sphi 0, %s201
    %s216 = sphi 0, %s202
    %s220 = sphi 0, %s220
    %s222 = sphi 0, %s220
    %s223 = sphi 0, %s222
    %s237 = sphi 0, %s223
    %s241 = sphi 0, %s241
    %s243 = sphi 0, %s241
    %s244 = sphi 0, %s243
    %s258 = sphi 0, %s244
    %s262 = sphi 0, %s262
    %s264 = sphi 0, %s262
    %s265 = sphi 0, %s264
    %s279 = sphi 0, %s265
    %s285 = sphi 0, %s287
    %s288 = sphi 0, %s285
    %s289 = sphi 0, %s288
    %s305 = sphi 0, %s289
  $region4: #{run.1} parent=0 // loop_header_branch
    %21 = sbr.rel (%p19) target = $region8
  $region5: #{run.1} parent=0 // loop_body
    %s23 = ssub.s32 %s18, 1
    %s24 = ssub.s32 %s18, 2
    %s25 = sadd.s32 %s18, 1
    %s26 = ssub.s32 %s18, %s25
    %p27 = scmp.eq.s32.totalorder %s26, 0
    %s29 = sadd.s32 %s28, 1
    %s30 = scalar_select %p27, %s28, %s29
    %p33 = pneg %p27
    %p34 = scmp.eq.s32.totalorder %s18, 6
    %p35 = por %p33, %p34
    %p36 = scmp.ne.s32.totalorder %s28, %s31
    %p37 = scmp.eq.s32.totalorder %s18, 0
    %p38 = por %p36, %p37
    %p39 = scmp.ne.s32.totalorder %s28, %s31
    %p40 = scmp.eq.s32.totalorder %s23, 6
    %p41 = por %p39, %p40
    %p42 = scmp.ne.s32.totalorder %s31, %s32
    %p43 = scmp.eq.s32.totalorder %s23, 0
    %p44 = por %p42, %p43
    %p45 = scmp.ne.s32.totalorder %s31, %s32
    %p46 = scmp.eq.s32.totalorder %s24, 6
    %p47 = por %p45, %p46
    %p49 = scmp.ne.s32.totalorder %s32, %s48
    %p50 = scmp.eq.s32.totalorder %s24, 0
    %p51 = por %p49, %p50
    %s53 = sadd.s32 %s52, 1
    %p56 = scmp.eq.s32.totalorder %s18, 6
    %p57 = scmp.ne.s32.totalorder %s52, %s54
    %p58 = scmp.eq.s32.totalorder %s18, 0
    %p59 = por %p57, %p58
    %p60 = scmp.ne.s32.totalorder %s52, %s54
    %p61 = scmp.eq.s32.totalorder %s23, 6
    %p62 = por %p60, %p61
    %p63 = scmp.ne.s32.totalorder %s54, %s55
    %p64 = scmp.eq.s32.totalorder %s23, 0
    %p65 = por %p63, %p64
    %p66 = scmp.ne.s32.totalorder %s54, %s55
    %p67 = scmp.eq.s32.totalorder %s24, 6
    %p68 = por %p66, %p67
    %p70 = scmp.ne.s32.totalorder %s55, %s69
    %p71 = scmp.eq.s32.totalorder %s24, 0
    %p72 = por %p70, %p71
    %s74 = sadd.s32 %s73, 1
    %p77 = scmp.eq.s32.totalorder %s18, 6
    %p78 = scmp.ne.s32.totalorder %s73, %s75
    %p79 = scmp.eq.s32.totalorder %s18, 0
    %p80 = por %p78, %p79
    %p81 = scmp.ne.s32.totalorder %s73, %s75
    %p82 = scmp.eq.s32.totalorder %s23, 6
    %p83 = por %p81, %p82
    %p84 = scmp.ne.s32.totalorder %s75, %s76
    %p85 = scmp.eq.s32.totalorder %s23, 0
    %p86 = por %p84, %p85
    %p87 = scmp.ne.s32.totalorder %s75, %s76
    %p88 = scmp.eq.s32.totalorder %s24, 6
    %p89 = por %p87, %p88
    %p91 = scmp.ne.s32.totalorder %s76, %s90
    %p92 = scmp.eq.s32.totalorder %s24, 0
    %p93 = por %p91, %p92
    %s95 = sadd.s32 %s94, 1
    %p98 = scmp.eq.s32.totalorder %s18, 6
    %p99 = scmp.ne.s32.totalorder %s94, %s96
    %p100 = scmp.eq.s32.totalorder %s18, 0
    %p101 = por %p99, %p100
    %p102 = scmp.ne.s32.totalorder %s94, %s96
    %p103 = scmp.eq.s32.totalorder %s23, 6
    %p104 = por %p102, %p103
    %p105 = scmp.ne.s32.totalorder %s96, %s97
    %p106 = scmp.eq.s32.totalorder %s23, 0
    %p107 = por %p105, %p106
    %p108 = scmp.ne.s32.totalorder %s96, %s97
    %p109 = scmp.eq.s32.totalorder %s24, 6
    %p110 = por %p108, %p109
    %p112 = scmp.ne.s32.totalorder %s97, %s111
    %p113 = scmp.eq.s32.totalorder %s24, 0
    %p114 = por %p112, %p113
    %s116 = sadd.s32 %s115, 1
    %p119 = scmp.eq.s32.totalorder %s18, 6
    %p120 = scmp.ne.s32.totalorder %s115, %s117
    %p121 = scmp.eq.s32.totalorder %s18, 0
    %p122 = por %p120, %p121
    %p123 = scmp.ne.s32.totalorder %s115, %s117
    %p124 = scmp.eq.s32.totalorder %s23, 6
    %p125 = por %p123, %p124
    %p126 = scmp.ne.s32.totalorder %s117, %s118
    %p127 = scmp.eq.s32.totalorder %s23, 0
    %p128 = por %p126, %p127
    %p129 = scmp.ne.s32.totalorder %s117, %s118
    %p130 = scmp.eq.s32.totalorder %s24, 6
    %p131 = por %p129, %p130
    %p133 = scmp.ne.s32.totalorder %s118, %s132
    %p134 = scmp.eq.s32.totalorder %s24, 0
    %p135 = por %p133, %p134
    %s137 = sadd.s32 %s136, 1
    %p140 = scmp.eq.s32.totalorder %s18, 6
    %p141 = scmp.ne.s32.totalorder %s136, %s138
    %p142 = scmp.eq.s32.totalorder %s18, 0
    %p143 = por %p141, %p142
    %p144 = scmp.ne.s32.totalorder %s136, %s138
    %p145 = scmp.eq.s32.totalorder %s23, 6
    %p146 = por %p144, %p145
    %p147 = scmp.ne.s32.totalorder %s138, %s139
    %p148 = scmp.eq.s32.totalorder %s23, 0
    %p149 = por %p147, %p148
    %p150 = scmp.ne.s32.totalorder %s138, %s139
    %p151 = scmp.eq.s32.totalorder %s24, 6
    %p152 = por %p150, %p151
    %p154 = scmp.ne.s32.totalorder %s139, %s153
    %p155 = scmp.eq.s32.totalorder %s24, 0
    %p156 = por %p154, %p155
    %s158 = sadd.s32 %s157, 1
    %p161 = scmp.eq.s32.totalorder %s18, 6
    %p162 = scmp.ne.s32.totalorder %s157, %s159
    %p163 = scmp.eq.s32.totalorder %s18, 0
    %p164 = por %p162, %p163
    %p165 = scmp.ne.s32.totalorder %s157, %s159
    %p166 = scmp.eq.s32.totalorder %s23, 6
    %p167 = por %p165, %p166
    %p168 = scmp.ne.s32.totalorder %s159, %s160
    %p169 = scmp.eq.s32.totalorder %s23, 0
    %p170 = por %p168, %p169
    %p171 = scmp.ne.s32.totalorder %s159, %s160
    %p172 = scmp.eq.s32.totalorder %s24, 6
    %p173 = por %p171, %p172
    %p175 = scmp.ne.s32.totalorder %s160, %s174
    %p176 = scmp.eq.s32.totalorder %s24, 0
    %p177 = por %p175, %p176
    %s179 = sadd.s32 %s178, 1
    %p182 = scmp.eq.s32.totalorder %s18, 6
    %p183 = scmp.ne.s32.totalorder %s178, %s180
    %p184 = scmp.eq.s32.totalorder %s18, 0
    %p185 = por %p183, %p184
    %p186 = scmp.ne.s32.totalorder %s178, %s180
    %p187 = scmp.eq.s32.totalorder %s23, 6
    %p188 = por %p186, %p187
    %p189 = scmp.ne.s32.totalorder %s180, %s181
    %p190 = scmp.eq.s32.totalorder %s23, 0
    %p191 = por %p189, %p190
    %p192 = scmp.ne.s32.totalorder %s180, %s181
    %p193 = scmp.eq.s32.totalorder %s24, 6
    %p194 = por %p192, %p193
    %p196 = scmp.ne.s32.totalorder %s181, %s195
    %p197 = scmp.eq.s32.totalorder %s24, 0
    %p198 = por %p196, %p197
    %s200 = sadd.s32 %s199, 1
    %p203 = scmp.eq.s32.totalorder %s18, 6
    %p204 = scmp.ne.s32.totalorder %s199, %s201
    %p205 = scmp.eq.s32.totalorder %s18, 0
    %p206 = por %p204, %p205
    %p207 = scmp.ne.s32.totalorder %s199, %s201
    %p208 = scmp.eq.s32.totalorder %s23, 6
    %p209 = por %p207, %p208
    %p210 = scmp.ne.s32.totalorder %s201, %s202
    %p211 = scmp.eq.s32.totalorder %s23, 0
    %p212 = por %p210, %p211
    %p213 = scmp.ne.s32.totalorder %s201, %s202
    %p214 = scmp.eq.s32.totalorder %s24, 6
    %p215 = por %p213, %p214
    %p217 = scmp.ne.s32.totalorder %s202, %s216
    %p218 = scmp.eq.s32.totalorder %s24, 0
    %p219 = por %p217, %p218
    %s221 = sadd.s32 %s220, 1
    %p224 = scmp.eq.s32.totalorder %s18, 6
    %p225 = scmp.ne.s32.totalorder %s220, %s222
    %p226 = scmp.eq.s32.totalorder %s18, 0
    %p227 = por %p225, %p226
    %p228 = scmp.ne.s32.totalorder %s220, %s222
    %p229 = scmp.eq.s32.totalorder %s23, 6
    %p230 = por %p228, %p229
    %p231 = scmp.ne.s32.totalorder %s222, %s223
    %p232 = scmp.eq.s32.totalorder %s23, 0
    %p233 = por %p231, %p232
    %p234 = scmp.ne.s32.totalorder %s222, %s223
    %p235 = scmp.eq.s32.totalorder %s24, 6
    %p236 = por %p234, %p235
    %p238 = scmp.ne.s32.totalorder %s223, %s237
    %p239 = scmp.eq.s32.totalorder %s24, 0
    %p240 = por %p238, %p239
    %s242 = sadd.s32 %s241, 1
    %p245 = scmp.eq.s32.totalorder %s18, 6
    %p246 = scmp.ne.s32.totalorder %s241, %s243
    %p247 = scmp.eq.s32.totalorder %s18, 0
    %p248 = por %p246, %p247
    %p249 = scmp.ne.s32.totalorder %s241, %s243
    %p250 = scmp.eq.s32.totalorder %s23, 6
    %p251 = por %p249, %p250
    %p252 = scmp.ne.s32.totalorder %s243, %s244
    %p253 = scmp.eq.s32.totalorder %s23, 0
    %p254 = por %p252, %p253
    %p255 = scmp.ne.s32.totalorder %s243, %s244
    %p256 = scmp.eq.s32.totalorder %s24, 6
    %p257 = por %p255, %p256
    %p259 = scmp.ne.s32.totalorder %s244, %s258
    %p260 = scmp.eq.s32.totalorder %s24, 0
    %p261 = por %p259, %p260
    %s263 = sadd.s32 %s262, 1
    %p266 = scmp.eq.s32.totalorder %s18, 6
    %p267 = scmp.ne.s32.totalorder %s262, %s264
    %p268 = scmp.eq.s32.totalorder %s18, 0
    %p269 = por %p267, %p268
    %p270 = scmp.ne.s32.totalorder %s262, %s264
    %p271 = scmp.eq.s32.totalorder %s23, 6
    %p272 = por %p270, %p271
    %p273 = scmp.ne.s32.totalorder %s264, %s265
    %p274 = scmp.eq.s32.totalorder %s23, 0
    %p275 = por %p273, %p274
    %p276 = scmp.ne.s32.totalorder %s264, %s265
    %p277 = scmp.eq.s32.totalorder %s24, 6
    %p278 = por %p276, %p277
    %p280 = scmp.ne.s32.totalorder %s265, %s279
    %p281 = scmp.eq.s32.totalorder %s24, 0
    %p282 = por %p280, %p281
    %s283 = ssub.s32 %s18, %s25
    %p284 = scmp.eq.s32.totalorder %s283, 0
    %s286 = sadd.s32 %s285, 1
    %s287 = scalar_select %p284, %s285, %s286
    %p290 = pneg %p284
    %p291 = scmp.eq.s32.totalorder %s18, 6
    %p292 = por %p290, %p291
    %p293 = scmp.ne.s32.totalorder %s285, %s288
    %p294 = scmp.eq.s32.totalorder %s18, 0
    %p295 = por %p293, %p294
    %p296 = scmp.ne.s32.totalorder %s285, %s288
    %p297 = scmp.eq.s32.totalorder %s23, 6
    %p298 = por %p296, %p297
    %p299 = scmp.ne.s32.totalorder %s288, %s289
    %p300 = scmp.eq.s32.totalorder %s23, 0
    %p301 = por %p299, %p300
    %p302 = scmp.ne.s32.totalorder %s288, %s289
    %p303 = scmp.eq.s32.totalorder %s24, 6
    %p304 = por %p302, %p303
    %p306 = scmp.ne.s32.totalorder %s289, %s305
    %p307 = scmp.eq.s32.totalorder %s24, 0
    %p308 = por %p306, %p307
    %p309 = scmp.le.s32.totalorder 1, %s18
    %p310 = scmp.lt.s32.totalorder %s18, 8
    %p311 = pnand %p309, %p310
    %p312 = pneg %p311
    // Predicated region
    $region9: #{run.1} parent=5 // pred_check
      _
    $region10: #{run.1} parent=5 // pred_check_branch
      %314 = sbr.rel (%p311) target = $region12
    $region11: #{run.1} parent=5 // pred_region
      %s315 = ssub.s32 %s18, 1
      // Predicated region
      $region13: #{run.1} parent=11 // pred_check
        %p316 = pneg %p65
      $region14: #{run.1} parent=11 // pred_check_branch
        %318 = sbr.rel (%p316) target = $region16
      $region15: #{run.1} parent=11 // pred_region
        _
      $region16: #{run.1} parent=11 // pred_fallthru
        _
      // Predicated region
      $region17: #{run.1} parent=11 // pred_check
        %p319 = pneg %p86
      $region18: #{run.1} parent=11 // pred_check_branch
        %321 = sbr.rel (%p319) target = $region20
      $region19: #{run.1} parent=11 // pred_region
        _
      $region20: #{run.1} parent=11 // pred_fallthru
        _
      // Predicated region
      $region21: #{run.1} parent=11 // pred_check
        %p322 = pneg %p107
      $region22: #{run.1} parent=11 // pred_check_branch
        %324 = sbr.rel (%p322) target = $region24
      $region23: #{run.1} parent=11 // pred_region
        _
      $region24: #{run.1} parent=11 // pred_fallthru
        _
      // Predicated region
      $region25: #{run.1} parent=11 // pred_check
        %p325 = pneg %p128
      $region26: #{run.1} parent=11 // pred_check_branch
        %327 = sbr.rel (%p325) target = $region28
      $region27: #{run.1} parent=11 // pred_region
        _
      $region28: #{run.1} parent=11 // pred_fallthru
        _
      // Predicated region
      $region29: #{run.1} parent=11 // pred_check
        %p328 = pneg %p149
      $region30: #{run.1} parent=11 // pred_check_branch
        %330 = sbr.rel (%p328) target = $region32
      $region31: #{run.1} parent=11 // pred_region
        _
      $region32: #{run.1} parent=11 // pred_fallthru
        _
      // Predicated region
      $region33: #{run.1} parent=11 // pred_check
        %p331 = pneg %p170
      $region34: #{run.1} parent=11 // pred_check_branch
        %333 = sbr.rel (%p331) target = $region36
      $region35: #{run.1} parent=11 // pred_region
        _
      $region36: #{run.1} parent=11 // pred_fallthru
        _
      // Predicated region
      $region37: #{run.1} parent=11 // pred_check
        %p334 = pneg %p191
      $region38: #{run.1} parent=11 // pred_check_branch
        %336 = sbr.rel (%p334) target = $region40
      $region39: #{run.1} parent=11 // pred_region
        _
      $region40: #{run.1} parent=11 // pred_fallthru
        _
      // Predicated region
      $region41: #{run.1} parent=11 // pred_check
        %p337 = pneg %p212
      $region42: #{run.1} parent=11 // pred_check_branch
        %339 = sbr.rel (%p337) target = $region44
      $region43: #{run.1} parent=11 // pred_region
        _
      $region44: #{run.1} parent=11 // pred_fallthru
        _
      // Predicated region
      $region45: #{run.1} parent=11 // pred_check
        %p340 = pneg %p233
      $region46: #{run.1} parent=11 // pred_check_branch
        %342 = sbr.rel (%p340) target = $region48
      $region47: #{run.1} parent=11 // pred_region
        _
      $region48: #{run.1} parent=11 // pred_fallthru
        _
      // Predicated region
      $region49: #{run.1} parent=11 // pred_check
        %p343 = pneg %p254
      $region50: #{run.1} parent=11 // pred_check_branch
        %345 = sbr.rel (%p343) target = $region52
      $region51: #{run.1} parent=11 // pred_region
        _
      $region52: #{run.1} parent=11 // pred_fallthru
        _
      // Predicated region
      $region53: #{run.1} parent=11 // pred_check
        %p346 = pneg %p275
      $region54: #{run.1} parent=11 // pred_check_branch
        %348 = sbr.rel (%p346) target = $region56
      $region55: #{run.1} parent=11 // pred_region
        _
      $region56: #{run.1} parent=11 // pred_fallthru
        _
    $region12: #{run.1} parent=5 // pred_fallthru
      _
    %p349 = scmp.lt.s32.totalorder %s18, 7
    // Predicated region
    $region57: #{run.1} parent=5 // pred_check
      %p350 = pneg %p349
    $region58: #{run.1} parent=5 // pred_check_branch
      %352 = sbr.rel (%p350) target = $region60
    $region59: #{run.1} parent=5 // pred_region
      // Predicated region
      $region61: #{run.1} parent=59 // pred_check
        %p353 = pneg %p38
      $region62: #{run.1} parent=59 // pred_check_branch
        %355 = sbr.rel (%p353) target = $region64
      $region63: #{run.1} parent=59 // pred_region
        %s356 = smul.u32 12, %s18
        %p357 = scmp.lt.s32.totalorder %s356, 83
        %s358 = scalar_select %p357, %s356, 83
        %s359 = smul.addr %s358, 4
        %s360 = scalar_lea.vmem %s0, %s359
        %s361 = smul.u32 12, %s18
      $region64: #{run.1} parent=59 // pred_fallthru
        _
    $region60: #{run.1} parent=5 // pred_fallthru
      _
    %p362 = scmp.le.s32.totalorder 1, %s18
    %p363 = scmp.lt.s32.totalorder %s18, 8
    %p364 = pnand %p362, %p363
    %p365 = pneg %p364
    // Predicated region
    $region65: #{run.1} parent=5 // pred_check
      _
    $region66: #{run.1} parent=5 // pred_check_branch
      %367 = sbr.rel (%p364) target = $region68
    $region67: #{run.1} parent=5 // pred_region
      %s368 = ssub.s32 %s18, 1
      %s369 = smul.u32 12, %s23
      %p370 = scmp.lt.s32.totalorder %s369, 83
      %s371 = scalar_select %p370, %s369, 83
      %s372 = smul.addr %s371, 4
      %s373 = scalar_lea.vmem %s0, %s372
      %p374 = pneg %p44
      %p375 = pneg %p41
      %p376 = pneg %p65
      %p377 = pneg %p62
      %p378 = pneg %p86
      %p379 = pneg %p83
      %p380 = pneg %p107
      %p381 = pneg %p104
      %p382 = pneg %p128
      %p383 = pneg %p125
      %p384 = pneg %p149
      %p385 = pneg %p146
      %p386 = pneg %p170
      %p387 = pneg %p167
      %p388 = pneg %p191
      %p389 = pneg %p188
      %p390 = pneg %p212
      %p391 = pneg %p209
      %p392 = pneg %p233
      %p393 = pneg %p230
      %p394 = pneg %p254
      %p395 = pneg %p251
      %p396 = pneg %p275
      %p397 = pneg %p272
      %p398 = pneg %p301
      %p399 = pneg %p298
      %p400 = scmp.lt.s32.totalorder %s23, 6
      %s401 = scalar_select %p400, %s23, 6
      %s402 = smul.addr %s401, 2
      %s403 = smul.addr %s402, 8
      %s404 = scalar_lea.vmem %s12, %s403
      %s405 = smul.u32 12, %s23
      %p406 = scmp.lt.s32.totalorder %s405, 83
      %s407 = scalar_select %p406, %s405, 83
      %s408 = smul.addr %s407, 4
      %s409 = scalar_lea.vmem %s0, %s408
      %s410 = smul.u32 12, %s23
      %p411 = scmp.lt.s32.totalorder %s23, 6
      %s412 = scalar_select %p411, %s23, 6
      %s413 = smul.addr %s412, 2
      %s414 = smul.addr %s413, 8
      %s415 = scalar_lea.vmem %s12, %s414
      %v417 = vlaneseq
      %v418 = vand.u32 %v417, 127
      %vm419 = vcmp.ge.s32.totalorder %v418, 17
      %v420 = vsel %vm419, -1e+30, 0.0
      %v421 = vld [vmem:[%s3] sm:$0x3]
      %v422 = vld [vmem:[%s409] sm:$0xf]
      %v423 = vld [vmem:[%s409 + $0x4] sm:$0xf]
      %v424 = vld [vmem:[%s409 + $0x8] sm:$0xf]
      %v425 = vld [vmem:[%s409 + $0xc] sm:$0xf]
      %v426 = vld [vmem:[%s409 + $0x10] sm:$0xf]
      %v427 = vld [vmem:[%s409 + $0x14] sm:$0xf]
      %v428 = vld [vmem:[%s409 + $0x18] sm:$0xf]
      %v429 = vld [vmem:[%s409 + $0x1c] sm:$0xf]
      %v430 = vld [vmem:[%s409 + $0x20] sm:$0xf]
      %v431 = vld [vmem:[%s409 + $0x24] sm:$0xf]
      %v432 = vld [vmem:[%s409 + $0x28] sm:$0xf]
      %v433 = vld [vmem:[%s409 + $0x2c] sm:$0xf]
      %v434 = vld [vmem:[%s1] sm:$0xf]
      %v435 = vld [vmem:[%s1 + $0x4] sm:$0xf]
      %v436 = vld [vmem:[%s1 + $0x8] sm:$0xf]
      %v437 = vld [vmem:[%s1 + $0xc] sm:$0xf]
      %v438 = vld [vmem:[%s1 + $0x10] sm:$0xf]
      %v439 = vld [vmem:[%s1 + $0x14] sm:$0xf]
      %v440 = vld [vmem:[%s2] sm:$0xff]
      %v441 = vld [vmem:[%s2 + $0x8] sm:$0xff]
      %v442 = vld [vmem:[%s2 + $0x10] sm:$0xff]
      %v443 = vld [vmem:[%s2 + $0x18] sm:$0xff]
      %v444 = vld [vmem:[%s2 + $0x20] sm:$0xff]
      %v445 = vld [vmem:[%s2 + $0x28] sm:$0xff]
      %v446 = vld [vmem:[%s2 + $0x30] sm:$0xff]
      %v447 = vld [vmem:[%s2 + $0x38] sm:$0xff]
      %v448 = vld [vmem:[%s2 + $0x40] sm:$0xff]
      %v449 = vld [vmem:[%s2 + $0x48] sm:$0xff]
      %v450 = vld [vmem:[%s2 + $0x50] sm:$0xff]
      %v451 = vld [vmem:[%s2 + $0x58] sm:$0xff]
      %v464 = vunpack.c.l.b16 %v422
      %v465 = vunpack.c.l.b16 %v423
      %v466 = vunpack.c.l.b16 %v424
      %v467 = vunpack.c.l.b16 %v425
      %v468 = vunpack.c.l.b16 %v426
      %v469 = vunpack.c.l.b16 %v427
      %v470 = vunpack.c.l.b16 %v428
      %v471 = vunpack.c.l.b16 %v429
      %v472 = vunpack.c.l.b16 %v430
      %v473 = vunpack.c.l.b16 %v431
      %v474 = vunpack.c.l.b16 %v432
      %v475 = vunpack.c.l.b16 %v433
      %v476 = vpack.c.b16 %v465, %v464
      %v477 = vpack.c.b16 %v467, %v466
      %v478 = vpack.c.b16 %v469, %v468
      %v479 = vpack.c.b16 %v471, %v470
      %v480 = vpack.c.b16 %v473, %v472
      %v481 = vpack.c.b16 %v475, %v474
      %v488 = vunpack.c.l.b16 %v434
      %v489 = vunpack.c.l.b16 %v435
      %v490 = vunpack.c.l.b16 %v436
      %v491 = vunpack.c.l.b16 %v437
      %v492 = vunpack.c.l.b16 %v438
      %v493 = vunpack.c.l.b16 %v439
      %v494 = vpack.c.b16 %v489, %v488
      %v495 = vpack.c.b16 %v491, %v490
      %v496 = vpack.c.b16 %v493, %v492
      %vm500 = vcmask 392192
      %v502 = vsel %vm500, %v476, 0
      %v505 = vsel %vm500, %v477, 0
      %v508 = vsel %vm500, %v478, 0
      %v511 = vsel %vm500, %v479, 0
      %v514 = vsel %vm500, %v480, 0
      %v517 = vsel %vm500, %v481, 0
      %519 = vmatprep.subr.bf16.mxu0 0
      %520 = vmatpush1.bf16.msra.mxu0 %v494
      %521 = vmatprep.subr.bf16.mxu0 0
      %522 = vmatpush1.bf16.msra.mxu0 %v495
      %523 = vmatprep.subr.bf16.mxu0 0
      %524 = vmatpush1.bf16.msra.mxu0 %v496
      %525 = vmatprep.subr.bf16.mxu0 0
      %526 = vmatpush1.bf16.msra.mxu0 0
      %527 = vmatprep.subr.bf16.mxu0 0
      %528 = vmatpush1.bf16.msra.mxu0 0
      %529 = vmatprep.subr.bf16.mxu0 0
      %530 = vmatpush1.bf16.msra.mxu0 0
      %531 = vmatprep.subr.bf16.mxu0 0
      %532 = vmatpush1.bf16.msra.mxu0 0
      %533 = vmatprep.subr.bf16.mxu0 0
      %534 = vmatpush1.bf16.msra.mxu0 0
      %535 = vmatprep.subr.bf16.mxu0 0
      %536 = vmatpush1.bf16.msra.mxu0 0
      %537 = vmatprep.subr.bf16.mxu0 0
      %538 = vmatpush1.bf16.msra.mxu0 0
      %539 = vmatprep.subr.bf16.mxu0 0
      %540 = vmatpush1.bf16.msra.mxu0 0
      %541 = vmatprep.subr.bf16.mxu0 0
      %542 = vmatpush1.bf16.msra.mxu0 0
      %543 = vmatprep.subr.bf16.mxu0 0
      %544 = vmatpush1.bf16.msra.mxu0 0
      %545 = vmatprep.subr.bf16.mxu0 0
      %546 = vmatpush1.bf16.msra.mxu0 0
      %547 = vmatprep.subr.bf16.mxu0 0
      %548 = vmatpush1.bf16.msra.mxu0 0
      %549 = vmatprep.subr.bf16.mxu0 0
      %550 = vmatpush1.bf16.msra.mxu0 0
      %551 = vmatprep.mubr.bf16.mxu0 0
      %552 = vmatmul.mubr.bf16.gmra.mrb[0].mxu0 %v502
      %v553 = vpop.f32.mrb[0].mxu0
      %v554 = vadd.f32 %v440, %v553
      %v555 = vpop.f32.mrb[0].mxu0
      %v556 = vpop.f32.mrb[0].mxu0
      %v557 = vadd.f32 %v441, %v556
      %v558 = vpop.f32.mrb[0].mxu0
      %559 = vmatprep.mubr.bf16.mxu0 0
      %560 = vmatmul.mubr.bf16.gmra.mrb[0].mxu0 %v505
      %v561 = vpop.f32.mrb[0].mxu0
      %v562 = vadd.f32 %v442, %v561
      %v563 = vpop.f32.mrb[0].mxu0
      %v564 = vpop.f32.mrb[0].mxu0
      %v565 = vadd.f32 %v443, %v564
      %v566 = vpop.f32.mrb[0].mxu0
      %567 = vmatprep.mubr.bf16.mxu0 0
      %568 = vmatmul.mubr.bf16.gmra.mrb[0].mxu0 %v508
      %v569 = vpop.f32.mrb[0].mxu0
      %v570 = vadd.f32 %v444, %v569
      %v571 = vpop.f32.mrb[0].mxu0
      %v572 = vpop.f32.mrb[0].mxu0
      %v573 = vadd.f32 %v445, %v572
      %v574 = vpop.f32.mrb[0].mxu0
      %575 = vmatprep.mubr.bf16.mxu0 0
      %576 = vmatmul.mubr.bf16.gmra.mrb[0].mxu0 %v511
      %v577 = vpop.f32.mrb[0].mxu0
      %v578 = vadd.f32 %v446, %v577
      %v579 = vpop.f32.mrb[0].mxu0
      %v580 = vpop.f32.mrb[0].mxu0
      %v581 = vadd.f32 %v447, %v580
      %v582 = vpop.f32.mrb[0].mxu0
      %583 = vmatprep.mubr.bf16.mxu0 0
      %584 = vmatmul.mubr.bf16.gmra.mrb[0].mxu0 %v514
      %v585 = vpop.f32.mrb[0].mxu0
      %v586 = vadd.f32 %v448, %v585
      %v587 = vpop.f32.mrb[0].mxu0
      %v588 = vpop.f32.mrb[0].mxu0
      %v589 = vadd.f32 %v449, %v588
      %v590 = vpop.f32.mrb[0].mxu0
      %591 = vmatprep.mubr.bf16.mxu0 0
      %592 = vmatmul.mubr.bf16.gmra.mrb[0].mxu0 %v517
      %v593 = vpop.f32.mrb[0].mxu0
      %v594 = vadd.f32 %v450, %v593
      %v595 = vpop.f32.mrb[0].mxu0
      %v596 = vpop.f32.mrb[0].mxu0
      %v597 = vadd.f32 %v451, %v596
      %v598 = vpop.f32.mrb[0].mxu0
      %599 = vdwg.mxu0
      %vm600 = vcmask 261120
      %v601 = vsel %vm600, %v554, 0.0
      %602 = vadd.xlane.f32.xlu0 %v601
      %v603 = vpop.xlane.xlu0 %602
      %v604 = vsel %vm600, %v557, 0.0
      %605 = vadd.xlane.f32.xlu0 %v604
      %v606 = vpop.xlane.xlu0 %605
      %v607 = vsel %vm600, %v562, 0.0
      %608 = vadd.xlane.f32.xlu0 %v607
      %v609 = vpop.xlane.xlu0 %608
      %v610 = vsel %vm600, %v565, 0.0
      %611 = vadd.xlane.f32.xlu0 %v610
      %v612 = vpop.xlane.xlu0 %611
      %v613 = vsel %vm600, %v570, 0.0
      %614 = vadd.xlane.f32.xlu0 %v613
      %v615 = vpop.xlane.xlu0 %614
      %v616 = vsel %vm600, %v573, 0.0
      %617 = vadd.xlane.f32.xlu0 %v616
      %v618 = vpop.xlane.xlu0 %617
      %v619 = vsel %vm600, %v578, 0.0
      %620 = vadd.xlane.f32.xlu0 %v619
      %v621 = vpop.xlane.xlu0 %620
      %v622 = vsel %vm600, %v581, 0.0
      %623 = vadd.xlane.f32.xlu0 %v622
      %v624 = vpop.xlane.xlu0 %623
      %v625 = vsel %vm600, %v586, 0.0
      %626 = vadd.xlane.f32.xlu0 %v625
      %v627 = vpop.xlane.xlu0 %626
      %v628 = vsel %vm600, %v589, 0.0
      %629 = vadd.xlane.f32.xlu0 %v628
      %v630 = vpop.xlane.xlu0 %629
      %v631 = vsel %vm600, %v594, 0.0
      %632 = vadd.xlane.f32.xlu0 %v631
      %v633 = vpop.xlane.xlu0 %632
      %v634 = vsel %vm600, %v597, 0.0
      %635 = vadd.xlane.f32.xlu0 %v634
      %v636 = vpop.xlane.xlu0 %635
      %v637 = vrcp.pop 32.0
      %v638 = vmul.f32 %v603, %v637
      %v639 = vmul.f32 %v606, %v637
      %v640 = vmul.f32 %v609, %v637
      %v641 = vmul.f32 %v612, %v637
      %v642 = vmul.f32 %v615, %v637
      %v643 = vmul.f32 %v618, %v637
      %v644 = vmul.f32 %v621, %v637
      %v645 = vmul.f32 %v624, %v637
      %v646 = vmul.f32 %v627, %v637
      %v647 = vmul.f32 %v630, %v637
      %v648 = vmul.f32 %v633, %v637
      %v649 = vmul.f32 %v636, %v637
      %v650 = vsub.f32 %v554, %v638
      %v651 = vsub.f32 %v557, %v639
      %v652 = vsub.f32 %v562, %v640
      %v653 = vsub.f32 %v565, %v641
      %v654 = vsub.f32 %v570, %v642
      %v655 = vsub.f32 %v573, %v643
      %v656 = vsub.f32 %v578, %v644
      %v657 = vsub.f32 %v581, %v645
      %v658 = vsub.f32 %v586, %v646
      %v659 = vsub.f32 %v589, %v647
      %v660 = vsub.f32 %v594, %v648
      %v661 = vsub.f32 %v597, %v649
      %v662 = vmul.f32 %v650, %v650
      %v663 = vmul.f32 %v651, %v651
      %v664 = vmul.f32 %v652, %v652
      %v665 = vmul.f32 %v653, %v653
      %v666 = vmul.f32 %v654, %v654
      %v667 = vmul.f32 %v655, %v655
      %v668 = vmul.f32 %v656, %v656
      %v669 = vmul.f32 %v657, %v657
      %v670 = vmul.f32 %v658, %v658
      %v671 = vmul.f32 %v659, %v659
      %v672 = vmul.f32 %v660, %v660
      %v673 = vmul.f32 %v661, %v661
      %v674 = vsel %vm600, %v662, 0.0
      %675 = vadd.xlane.f32.xlu0 %v674
      %v676 = vpop.xlane.xlu0 %675
      %v677 = vsel %vm600, %v663, 0.0
      %678 = vadd.xlane.f32.xlu0 %v677
      %v679 = vpop.xlane.xlu0 %678
      %v680 = vsel %vm600, %v664, 0.0
      %681 = vadd.xlane.f32.xlu0 %v680
      %v682 = vpop.xlane.xlu0 %681
      %v683 = vsel %vm600, %v665, 0.0
      %684 = vadd.xlane.f32.xlu0 %v683
      %v685 = vpop.xlane.xlu0 %684
      %v686 = vsel %vm600, %v666, 0.0
      %687 = vadd.xlane.f32.xlu0 %v686
      %v688 = vpop.xlane.xlu0 %687
      %v689 = vsel %vm600, %v667, 0.0
      %690 = vadd.xlane.f32.xlu0 %v689
      %v691 = vpop.xlane.xlu0 %690
      %v692 = vsel %vm600, %v668, 0.0
      %693 = vadd.xlane.f32.xlu0 %v692
      %v694 = vpop.xlane.xlu0 %693
      %v695 = vsel %vm600, %v669, 0.0
      %696 = vadd.xlane.f32.xlu0 %v695
      %v697 = vpop.xlane.xlu0 %696
      %v698 = vsel %vm600, %v670, 0.0
      %699 = vadd.xlane.f32.xlu0 %v698
      %v700 = vpop.xlane.xlu0 %699
      %v701 = vsel %vm600, %v671, 0.0
      %702 = vadd.xlane.f32.xlu0 %v701
      %v703 = vpop.xlane.xlu0 %702
      %v704 = vsel %vm600, %v672, 0.0
      %705 = vadd.xlane.f32.xlu0 %v704
      %v706 = vpop.xlane.xlu0 %705
      %v707 = vsel %vm600, %v673, 0.0
      %708 = vadd.xlane.f32.xlu0 %v707
      %v709 = vpop.xlane.xlu0 %708
      %v710 = vmul.f32 %v676, %v637
      %v711 = vmul.f32 %v679, %v637
      %v712 = vmul.f32 %v682, %v637
      %v713 = vmul.f32 %v685, %v637
      %v714 = vmul.f32 %v688, %v637
      %v715 = vmul.f32 %v691, %v637
      %v716 = vmul.f32 %v694, %v637
      %v717 = vmul.f32 %v697, %v637
      %v718 = vmul.f32 %v700, %v637
      %v719 = vmul.f32 %v703, %v637
      %v720 = vmul.f32 %v706, %v637
      %v721 = vmul.f32 %v709, %v637
      %v722 = vadd.f32 %v710, 1e-05
      %v723 = vadd.f32 %v711, 1e-05
      %v724 = vadd.f32 %v712, 1e-05
      %v725 = vadd.f32 %v713, 1e-05
      %v726 = vadd.f32 %v714, 1e-05
      %v727 = vadd.f32 %v715, 1e-05
      %v728 = vadd.f32 %v716, 1e-05
      %v729 = vadd.f32 %v717, 1e-05
      %v730 = vadd.f32 %v718, 1e-05
      %v731 = vadd.f32 %v719, 1e-05
      %v732 = vadd.f32 %v720, 1e-05
      %v733 = vadd.f32 %v721, 1e-05
      %v734 = vrsqrt.pop %v722
      %v735 = vrsqrt.pop %v723
      %v736 = vrsqrt.pop %v724
      %v737 = vrsqrt.pop %v725
      %v738 = vrsqrt.pop %v726
      %v739 = vrsqrt.pop %v727
      %v740 = vrsqrt.pop %v728
      %v741 = vrsqrt.pop %v729
      %v742 = vrsqrt.pop %v730
      %v743 = vrsqrt.pop %v731
      %v744 = vrsqrt.pop %v732
      %v745 = vrsqrt.pop %v733
      %v746 = vmul.f32 %v650, %v734
      %v747 = vmul.f32 %v651, %v735
      %v748 = vmul.f32 %v652, %v736
      %v749 = vmul.f32 %v653, %v737
      %v750 = vmul.f32 %v654, %v738
      %v751 = vmul.f32 %v655, %v739
      %v752 = vmul.f32 %v656, %v740
      %v753 = vmul.f32 %v657, %v741
      %v754 = vmul.f32 %v658, %v742
      %v755 = vmul.f32 %v659, %v743
      %v756 = vmul.f32 %v660, %v744
      %v757 = vmul.f32 %v661, %v745
      %v758 = vlaneseq
      %v759 = vshrl.u32 %v758, 7
      %v760 = vsub.s32 0, %v759
      %v761 = vrot.slane %v421, %v760
      %v762 = vmul.f32 %v746, %v761
      %v763 = vmul.f32 %v747, %v761
      %v764 = vmul.f32 %v748, %v761
      %v765 = vmul.f32 %v749, %v761
      %v766 = vmul.f32 %v750, %v761
      %v767 = vmul.f32 %v751, %v761
      %v768 = vmul.f32 %v752, %v761
      %v769 = vmul.f32 %v753, %v761
      %v770 = vmul.f32 %v754, %v761
      %v771 = vmul.f32 %v755, %v761
      %v772 = vmul.f32 %v756, %v761
      %v773 = vmul.f32 %v757, %v761
      %v774 = vlaneseq
      %v775 = vshrl.u32 %v774, 7
      %v776 = vsub.s32 1, %v775
      %v777 = vrot.slane %v421, %v776
      %v778 = vadd.f32 %v762, %v777
      %v779 = vadd.f32 %v763, %v777
      %v780 = vadd.f32 %v764, %v777
      %v781 = vadd.f32 %v765, %v777
      %v782 = vadd.f32 %v766, %v777
      %v783 = vadd.f32 %v767, %v777
      %v784 = vadd.f32 %v768, %v777
      %v785 = vadd.f32 %v769, %v777
      %v786 = vadd.f32 %v770, %v777
      %v787 = vadd.f32 %v771, %v777
      %v788 = vadd.f32 %v772, %v777
      %v789 = vadd.f32 %v773, %v777
      %v790 = vld [vmem:[%s4] sm:$0xf]
      %v791 = vld [vmem:[%s8] sm:$0x3]
      %v792 = vsel %vm600, %v778, 0.0
      %793 = vadd.xlane.f32.xlu0 %v792
      %v794 = vpop.xlane.xlu0 %793
      %v795 = vsel %vm600, %v779, 0.0
      %796 = vadd.xlane.f32.xlu0 %v795
      %v797 = vpop.xlane.xlu0 %796
      %v798 = vsel %vm600, %v780, 0.0
      %799 = vadd.xlane.f32.xlu0 %v798
      %v800 = vpop.xlane.xlu0 %799
      %v801 = vsel %vm600, %v781, 0.0
      %802 = vadd.xlane.f32.xlu0 %v801
      %v803 = vpop.xlane.xlu0 %802
      %v804 = vsel %vm600, %v782, 0.0
      %805 = vadd.xlane.f32.xlu0 %v804
      %v806 = vpop.xlane.xlu0 %805
      %v807 = vsel %vm600, %v783, 0.0
      %808 = vadd.xlane.f32.xlu0 %v807
      %v809 = vpop.xlane.xlu0 %808
      %v810 = vsel %vm600, %v784, 0.0
      %811 = vadd.xlane.f32.xlu0 %v810
      %v812 = vpop.xlane.xlu0 %811
      %v813 = vsel %vm600, %v785, 0.0
      %814 = vadd.xlane.f32.xlu0 %v813
      %v815 = vpop.xlane.xlu0 %814
      %v816 = vsel %vm600, %v786, 0.0
      %817 = vadd.xlane.f32.xlu0 %v816
      %v818 = vpop.xlane.xlu0 %817
      %v819 = vsel %vm600, %v787, 0.0
      %820 = vadd.xlane.f32.xlu0 %v819
      %v821 = vpop.xlane.xlu0 %820
      %v822 = vsel %vm600, %v788, 0.0
      %823 = vadd.xlane.f32.xlu0 %v822
      %v824 = vpop.xlane.xlu0 %823
      %v825 = vsel %vm600, %v789, 0.0
      %826 = vadd.xlane.f32.xlu0 %v825
      %v827 = vpop.xlane.xlu0 %826
      %v828 = vmul.f32 %v794, %v637
      %v829 = vmul.f32 %v797, %v637
      %v830 = vmul.f32 %v800, %v637
      %v831 = vmul.f32 %v803, %v637
      %v832 = vmul.f32 %v806, %v637
      %v833 = vmul.f32 %v809, %v637
      %v834 = vmul.f32 %v812, %v637
      %v835 = vmul.f32 %v815, %v637
      %v836 = vmul.f32 %v818, %v637
      %v837 = vmul.f32 %v821, %v637
      %v838 = vmul.f32 %v824, %v637
      %v839 = vmul.f32 %v827, %v637
      %v840 = vsub.f32 %v778, %v828
      %v841 = vsub.f32 %v779, %v829
      %v842 = vsub.f32 %v780, %v830
      %v843 = vsub.f32 %v781, %v831
      %v844 = vsub.f32 %v782, %v832
      %v845 = vsub.f32 %v783, %v833
      %v846 = vsub.f32 %v784, %v834
      %v847 = vsub.f32 %v785, %v835
      %v848 = vsub.f32 %v786, %v836
      %v849 = vsub.f32 %v787, %v837
      %v850 = vsub.f32 %v788, %v838
      %v851 = vsub.f32 %v789, %v839
      %v852 = vmul.f32 %v840, %v840
      %v853 = vmul.f32 %v841, %v841
      %v854 = vmul.f32 %v842, %v842
      %v855 = vmul.f32 %v843, %v843
      %v856 = vmul.f32 %v844, %v844
      %v857 = vmul.f32 %v845, %v845
      %v858 = vmul.f32 %v846, %v846
      %v859 = vmul.f32 %v847, %v847
      %v860 = vmul.f32 %v848, %v848
      %v861 = vmul.f32 %v849, %v849
      %v862 = vmul.f32 %v850, %v850
      %v863 = vmul.f32 %v851, %v851
      %v864 = vsel %vm600, %v852, 0.0
      %865 = vadd.xlane.f32.xlu0 %v864
      %v866 = vpop.xlane.xlu0 %865
      %v867 = vsel %vm600, %v853, 0.0
      %868 = vadd.xlane.f32.xlu0 %v867
      %v869 = vpop.xlane.xlu0 %868
      %v870 = vsel %vm600, %v854, 0.0
      %871 = vadd.xlane.f32.xlu0 %v870
      %v872 = vpop.xlane.xlu0 %871
      %v873 = vsel %vm600, %v855, 0.0
      %874 = vadd.xlane.f32.xlu0 %v873
      %v875 = vpop.xlane.xlu0 %874
      %v876 = vsel %vm600, %v856, 0.0
      %877 = vadd.xlane.f32.xlu0 %v876
      %v878 = vpop.xlane.xlu0 %877
      %v879 = vsel %vm600, %v857, 0.0
      %880 = vadd.xlane.f32.xlu0 %v879
      %v881 = vpop.xlane.xlu0 %880
      %v882 = vsel %vm600, %v858, 0.0
      %883 = vadd.xlane.f32.xlu0 %v882
      %v884 = vpop.xlane.xlu0 %883
      %v885 = vsel %vm600, %v859, 0.0
      %886 = vadd.xlane.f32.xlu0 %v885
      %v887 = vpop.xlane.xlu0 %886
      %v888 = vsel %vm600, %v860, 0.0
      %889 = vadd.xlane.f32.xlu0 %v888
      %v890 = vpop.xlane.xlu0 %889
      %v891 = vsel %vm600, %v861, 0.0
      %892 = vadd.xlane.f32.xlu0 %v891
      %v893 = vpop.xlane.xlu0 %892
      %v894 = vsel %vm600, %v862, 0.0
      %895 = vadd.xlane.f32.xlu0 %v894
      %v896 = vpop.xlane.xlu0 %895
      %v897 = vsel %vm600, %v863, 0.0
      %898 = vadd.xlane.f32.xlu0 %v897
      %v899 = vpop.xlane.xlu0 %898
      %v900 = vmul.f32 %v866, %v637
      %v901 = vmul.f32 %v869, %v637
      %v902 = vmul.f32 %v872, %v637
      %v903 = vmul.f32 %v875, %v637
      %v904 = vmul.f32 %v878, %v637
      %v905 = vmul.f32 %v881, %v637
      %v906 = vmul.f32 %v884, %v637
      %v907 = vmul.f32 %v887, %v637
      %v908 = vmul.f32 %v890, %v637
      %v909 = vmul.f32 %v893, %v637
      %v910 = vmul.f32 %v896, %v637
      %v911 = vmul.f32 %v899, %v637
      %v912 = vadd.f32 %v900, 1e-05
      %v913 = vadd.f32 %v901, 1e-05
      %v914 = vadd.f32 %v902, 1e-05
      %v915 = vadd.f32 %v903, 1e-05
      %v916 = vadd.f32 %v904, 1e-05
      %v917 = vadd.f32 %v905, 1e-05
      %v918 = vadd.f32 %v906, 1e-05
      %v919 = vadd.f32 %v907, 1e-05
      %v920 = vadd.f32 %v908, 1e-05
      %v921 = vadd.f32 %v909, 1e-05
      %v922 = vadd.f32 %v910, 1e-05
      %v923 = vadd.f32 %v911, 1e-05
      %v924 = vrsqrt.pop %v912
      %v925 = vrsqrt.pop %v913
      %v926 = vrsqrt.pop %v914
      %v927 = vrsqrt.pop %v915
      %v928 = vrsqrt.pop %v916
      %v929 = vrsqrt.pop %v917
      %v930 = vrsqrt.pop %v918
      %v931 = vrsqrt.pop %v919
      %v932 = vrsqrt.pop %v920
      %v933 = vrsqrt.pop %v921
      %v934 = vrsqrt.pop %v922
      %v935 = vrsqrt.pop %v923
      %v936 = vmul.f32 %v840, %v924
      %v937 = vmul.f32 %v841, %v925
      %v938 = vmul.f32 %v842, %v926
      %v939 = vmul.f32 %v843, %v927
      %v940 = vmul.f32 %v844, %v928
      %v941 = vmul.f32 %v845, %v929
      %v942 = vmul.f32 %v846, %v930
      %v943 = vmul.f32 %v847, %v931
      %v944 = vmul.f32 %v848, %v932
      %v945 = vmul.f32 %v849, %v933
      %v946 = vmul.f32 %v850, %v934
      %v947 = vmul.f32 %v851, %v935
      %v948 = vlaneseq
      %v949 = vshrl.u32 %v948, 7
      %v950 = vsub.s32 0, %v949
      %v951 = vrot.slane %v790, %v950
      %v952 = vmul.f32 %v936, %v951
      %v953 = vmul.f32 %v937, %v951
      %v954 = vmul.f32 %v938, %v951
      %v955 = vmul.f32 %v939, %v951
      %v956 = vmul.f32 %v940, %v951
      %v957 = vmul.f32 %v941, %v951
      %v958 = vmul.f32 %v942, %v951
      %v959 = vmul.f32 %v943, %v951
      %v960 = vmul.f32 %v944, %v951
      %v961 = vmul.f32 %v945, %v951
      %v962 = vmul.f32 %v946, %v951
      %v963 = vmul.f32 %v947, %v951
      %v964 = vlaneseq
      %v965 = vshrl.u32 %v964, 7
      %v966 = vsub.s32 1, %v965
      %v967 = vrot.slane %v790, %v966
      %v968 = vadd.f32 %v952, %v967
      %v969 = vadd.f32 %v953, %v967
      %v970 = vadd.f32 %v954, %v967
      %v971 = vadd.f32 %v955, %v967
      %v972 = vadd.f32 %v956, %v967
      %v973 = vadd.f32 %v957, %v967
      %v974 = vadd.f32 %v958, %v967
      %v975 = vadd.f32 %v959, %v967
      %v976 = vadd.f32 %v960, %v967
      %v977 = vadd.f32 %v961, %v967
      %v978 = vadd.f32 %v962, %v967
      %v979 = vadd.f32 %v963, %v967
      %v980 = vpack.c.bf16 %v969, %v968
      %v981 = vpack.c.bf16 %v971, %v970
      %v982 = vpack.c.bf16 %v973, %v972
      %v983 = vpack.c.bf16 %v975, %v974
      %v984 = vpack.c.bf16 %v977, %v976
      %v985 = vpack.c.bf16 %v979, %v978
      %v986 = vld [vmem:[%s5] sm:$0xf]
      %v987 = vld [vmem:[%s5 + $0x4] sm:$0xf]
      %v988 = vld [vmem:[%s5 + $0x8] sm:$0xf]
      %v989 = vld [vmem:[%s5 + $0xc] sm:$0xf]
      %v990 = vld [vmem:[%s6] sm:$0x1]
      %v992 = vlaneseq
      %v993 = vshrl.u32 %v992, 7
      %v994 = vsub.s32 0, %v993
      %v995 = vrot.slane %v990, %v994
      %v1001 = vunpack.c.l.b16 %v986
      %v1002 = vunpack.c.l.b16 %v987
      %v1003 = vunpack.c.l.b16 %v988
      %v1004 = vunpack.c.l.b16 %v989
      %v1005 = vpack.c.b16 %v1002, %v1001
      %v1006 = vpack.c.b16 %v1004, %v1003
      %v1010 = vsel %vm600, %v980, 0
      %v1013 = vsel %vm600, %v981, 0
      %v1016 = vsel %vm600, %v982, 0
      %v1019 = vsel %vm600, %v983, 0
      %v1022 = vsel %vm600, %v984, 0
      %v1025 = vsel %vm600, %v985, 0
      %1027 = vmatprep.subr.bf16.mxu0 0
      %1028 = vmatpush1.bf16.msra.mxu0 %v1005
      %1029 = vmatprep.subr.bf16.mxu0 0
      %1030 = vmatpush1.bf16.msra.mxu0 %v1006
      %1031 = vmatprep.subr.bf16.mxu0 0
      %1032 = vmatpush1.bf16.msra.mxu0 0
      %1033 = vmatprep.subr.bf16.mxu0 0
      %1034 = vmatpush1.bf16.msra.mxu0 0
      %1035 = vmatprep.subr.bf16.mxu0 0
      %1036 = vmatpush1.bf16.msra.mxu0 0
      %1037 = vmatprep.subr.bf16.mxu0 0
      %1038 = vmatpush1.bf16.msra.mxu0 0
      %1039 = vmatprep.subr.bf16.mxu0 0
      %1040 = vmatpush1.bf16.msra.mxu0 0
      %1041 = vmatprep.subr.bf16.mxu0 0
      %1042 = vmatpush1.bf16.msra.mxu0 0
      %1043 = vmatprep.subr.bf16.mxu0 0
      %1044 = vmatpush1.bf16.msra.mxu0 0
      %1045 = vmatprep.subr.bf16.mxu0 0
      %1046 = vmatpush1.bf16.msra.mxu0 0
      %1047 = vmatprep.subr.bf16.mxu0 0
      %1048 = vmatpush1.bf16.msra.mxu0 0
      %1049 = vmatprep.subr.bf16.mxu0 0
      %1050 = vmatpush1.bf16.msra.mxu0 0
      %1051 = vmatprep.subr.bf16.mxu0 0
      %1052 = vmatpush1.bf16.msra.mxu0 0
      %1053 = vmatprep.subr.bf16.mxu0 0
      %1054 = vmatpush1.bf16.msra.mxu0 0
      %1055 = vmatprep.subr.bf16.mxu0 0
      %1056 = vmatpush1.bf16.msra.mxu0 0
      %1057 = vmatprep.subr.bf16.mxu0 0
      %1058 = vmatpush1.bf16.msra.mxu0 0
      %1059 = vmatprep.mubr.bf16.mxu0 0
      %1060 = vmatmul.mubr.bf16.gmra.mrb[0].mxu0 %v1010
      %v1061 = vpop.f32.mrb[0].mxu0
      %v1062 = vadd.f32 %v995, %v1061
      %v1063 = vpop.f32.mrb[0].mxu0
      %v1064 = vpop.f32.mrb[0].mxu0
      %v1065 = vadd.f32 %v995, %v1064
      %v1066 = vpop.f32.mrb[0].mxu0
      %1067 = vmatprep.mubr.bf16.mxu0 0
      %1068 = vmatmul.mubr.bf16.gmra.mrb[0].mxu0 %v1013
      %v1069 = vpop.f32.mrb[0].mxu0
      %v1070 = vadd.f32 %v995, %v1069
      %v1071 = vpop.f32.mrb[0].mxu0
      %v1072 = vpop.f32.mrb[0].mxu0
      %v1073 = vadd.f32 %v995, %v1072
      %v1074 = vpop.f32.mrb[0].mxu0
      %1075 = vmatprep.mubr.bf16.mxu0 0
      %1076 = vmatmul.mubr.bf16.gmra.mrb[0].mxu0 %v1016
      %v1077 = vpop.f32.mrb[0].mxu0
      %v1078 = vadd.f32 %v995, %v1077
      %v1079 = vpop.f32.mrb[0].mxu0
      %v1080 = vpop.f32.mrb[0].mxu0
      %v1081 = vadd.f32 %v995, %v1080
      %v1082 = vpop.f32.mrb[0].mxu0
      %1083 = vmatprep.mubr.bf16.mxu0 0
      %1084 = vmatmul.mubr.bf16.gmra.mrb[0].mxu0 %v1019
      %v1085 = vpop.f32.mrb[0].mxu0
      %v1086 = vadd.f32 %v995, %v1085
      %v1087 = vpop.f32.mrb[0].mxu0
      %v1088 = vpop.f32.mrb[0].mxu0
      %v1089 = vadd.f32 %v995, %v1088
      %v1090 = vpop.f32.mrb[0].mxu0
      %1091 = vmatprep.mubr.bf16.mxu0 0
      %1092 = vmatmul.mubr.bf16.gmra.mrb[0].mxu0 %v1022
      %v1093 = vpop.f32.mrb[0].mxu0
      %v1094 = vadd.f32 %v995, %v1093
      %v1095 = vpop.f32.mrb[0].mxu0
      %v1096 = vpop.f32.mrb[0].mxu0
      %v1097 = vadd.f32 %v995, %v1096
      %v1098 = vpop.f32.mrb[0].mxu0
      %1099 = vmatprep.mubr.bf16.mxu0 0
      %1100 = vmatmul.mubr.bf16.gmra.mrb[0].mxu0 %v1025
      %v1101 = vpop.f32.mrb[0].mxu0
      %v1102 = vadd.f32 %v995, %v1101
      %v1103 = vpop.f32.mrb[0].mxu0
      %v1104 = vpop.f32.mrb[0].mxu0
      %v1105 = vadd.f32 %v995, %v1104
      %v1106 = vpop.f32.mrb[0].mxu0
      %1107 = vdwg.mxu0
      %v1108 = vpack.c.bf16 %v1065, %v1062
      %v1109 = vpack.c.bf16 %v1070, %v1070
      %1112 = vrot.lane.b32.xlu0 %v1108, 96
      %v1113 = vpop.permute.xlu0 %1112
      %1114 = vrot.lane.b32.xlu0 %v1109, 96
      %v1115 = vpop.permute.xlu0 %1114
      %vm1116 = vcmask 64512
      %v1118 = vsel %vm1116, %v1108, 0
      %v1121 = vsel %vm1116, %v1109, 0
      %v1124 = vsel %vm1116, %v1113, 0
      %v1127 = vsel %vm1116, %v1115, 0
      %1129 = vmatprep.subr.bf16.mxu0 0
      %1130 = vmatpush1.bf16.xpose.msra.mxu0 %v1124
      %1131 = vmatprep.subr.bf16.mxu0 0
      %1132 = vmatpush1.bf16.xpose.msra.mxu0 %v1127
      %1133 = vmatprep.subr.bf16.mxu0 0
      %1134 = vmatpush1.bf16.xpose.msra.mxu0 0
      %1135 = vmatprep.subr.bf16.mxu0 0
      %1136 = vmatpush1.bf16.xpose.msra.mxu0 0
      %1137 = vmatprep.subr.bf16.mxu0 0
      %1138 = vmatpush1.bf16.xpose.msra.mxu0 0
      %1139 = vmatprep.subr.bf16.mxu0 0
      %1140 = vmatpush1.bf16.xpose.msra.mxu0 0
      %1141 = vmatprep.subr.bf16.mxu0 0
      %1142 = vmatpush1.bf16.xpose.msra.mxu0 0
      %1143 = vmatprep.subr.bf16.mxu0 0
      %1144 = vmatpush1.bf16.xpose.msra.mxu0 0
      %1145 = vmatprep.subr.bf16.mxu0 0
      %1146 = vmatpush1.bf16.xpose.msra.mxu0 0
      %1147 = vmatprep.subr.bf16.mxu0 0
      %1148 = vmatpush1.bf16.xpose.msra.mxu0 0
      %1149 = vmatprep.subr.bf16.mxu0 0
      %1150 = vmatpush1.bf16.xpose.msra.mxu0 0
      %1151 = vmatprep.subr.bf16.mxu0 0
      %1152 = vmatpush1.bf16.xpose.msra.mxu0 0
      %1153 = vmatprep.subr.bf16.mxu0 0
      %1154 = vmatpush1.bf16.xpose.msra.mxu0 0
      %1155 = vmatprep.subr.bf16.mxu0 0
      %1156 = vmatpush1.bf16.xpose.msra.mxu0 0
      %1157 = vmatprep.subr.bf16.mxu0 0
      %1158 = vmatpush1.bf16.xpose.msra.mxu0 0
      %1159 = vmatprep.subr.bf16.mxu0 0
      %1160 = vmatpush1.bf16.xpose.msra.mxu0 0
      %1161 = vmatprep.mubr.bf16.mxu0 0
      %1162 = vmatmul.mubr.bf16.gmra.mrb[0].mxu0 %v1118
      %v1163 = vpop.f32.mrb[0].mxu0
      %v1164 = vadd.f32 %v420, %v1163
      %v1165 = vpop.f32.mrb[0].mxu0
      %v1166 = vpop.f32.mrb[0].mxu0
      %v1167 = vadd.f32 %v420, %v1166
      %v1168 = vpop.f32.mrb[0].mxu0
      %1169 = vmatprep.mubr.bf16.mxu0 0
      %1170 = vmatmul.mubr.bf16.gmra.mrb[0].mxu0 %v1121
      %v1171 = vpop.f32.mrb[0].mxu0
      %v1172 = vadd.f32 %v420, %v1171
      %v1173 = vpop.f32.mrb[0].mxu0
      %v1174 = vpop.f32.mrb[0].mxu0
      %v1175 = vpop.f32.mrb[0].mxu0
      %1176 = vdwg.mxu0
      %vm1177 = vcmask 195584
      %v1178 = vsel %vm1177, %v1164, -inf
      %1179 = vmax.xlane.f32.xlu0 %v1178
      %v1180 = vpop.xlane.xlu0 %1179
      %v1181 = vsel %vm1177, %v1167, -inf
      %1182 = vmax.xlane.f32.xlu0 %v1181
      %v1183 = vpop.xlane.xlu0 %1182
      %v1184 = vsel %vm1177, %v1172, -inf
      %1185 = vmax.xlane.f32.xlu0 %v1184
      %v1186 = vpop.xlane.xlu0 %1185
      %v1187 = vsub.f32 %v1164, %v1180
      %v1188 = vsub.f32 %v1167, %v1183
      %v1189 = vsub.f32 %v1172, %v1186
      %v1190 = vmul.f32 %v1187, 1.442695
      %v1191 = vpow.pop %v1190
      %v1192 = vmul.f32 %v1188, 1.442695
      %v1193 = vpow.pop %v1192
      %v1194 = vmul.f32 %v1189, 1.442695
      %v1195 = vpow.pop %v1194
      %v1196 = vsel %vm1177, %v1191, 0.0
      %1197 = vadd.xlane.f32.xlu0 %v1196
      %v1198 = vpop.xlane.xlu0 %1197
      %v1199 = vsel %vm1177, %v1193, 0.0
      %1200 = vadd.xlane.f32.xlu0 %v1199
      %v1201 = vpop.xlane.xlu0 %1200
      %v1202 = vsel %vm1177, %v1195, 0.0
      %1203 = vadd.xlane.f32.xlu0 %v1202
      %v1204 = vpop.xlane.xlu0 %1203
      %v1205 = vrcp.pop %v1198
      %v1206 = vrcp.pop %v1201
      %v1207 = vrcp.pop %v1204
      %v1208 = vmul.f32 %v1191, %v1205
      %v1209 = vmul.f32 %v1193, %v1206
      %v1210 = vmul.f32 %v1195, %v1207
      %v1211 = vpack.c.bf16 %v1209, %v1208
      %v1212 = vpack.c.bf16 %v1210, %v1210
      %1213 = vrot.lane.b32.xlu0 %v1108, 64
      %v1214 = vpop.permute.xlu0 %1213
      %1215 = vrot.lane.b32.xlu0 %v1109, 64
      %v1216 = vpop.permute.xlu0 %1215
      %v1219 = vsel %vm1177, %v1211, 0
      %v1222 = vsel %vm1177, %v1212, 0
      %vm1224 = vcmask 1043456
      %v1226 = vsel %vm1224, %v1216, 0
      %1228 = vmatprep.subr.bf16.mxu0 0
      %1229 = vmatpush1.bf16.msra.mxu0 %v1214
      %1230 = vmatprep.subr.bf16.mxu0 0
      %1231 = vmatpush1.bf16.msra.mxu0 %v1226
      %1232 = vmatprep.subr.bf16.mxu0 0
      %1233 = vmatpush1.bf16.msra.mxu0 0
      %1234 = vmatprep.subr.bf16.mxu0 0
      %1235 = vmatpush1.bf16.msra.mxu0 0
      %1236 = vmatprep.subr.bf16.mxu0 0
      %1237 = vmatpush1.bf16.msra.mxu0 0
      %1238 = vmatprep.subr.bf16.mxu0 0
      %1239 = vmatpush1.bf16.msra.mxu0 0
      %1240 = vmatprep.subr.bf16.mxu0 0
      %1241 = vmatpush1.bf16.msra.mxu0 0
      %1242 = vmatprep.subr.bf16.mxu0 0
      %1243 = vmatpush1.bf16.msra.mxu0 0
      %1244 = vmatprep.subr.bf16.mxu0 0
      %1245 = vmatpush1.bf16.msra.mxu0 0
      %1246 = vmatprep.subr.bf16.mxu0 0
      %1247 = vmatpush1.bf16.msra.mxu0 0
      %1248 = vmatprep.subr.bf16.mxu0 0
      %1249 = vmatpush1.bf16.msra.mxu0 0
      %1250 = vmatprep.subr.bf16.mxu0 0
      %1251 = vmatpush1.bf16.msra.mxu0 0
      %1252 = vmatprep.subr.bf16.mxu0 0
      %1253 = vmatpush1.bf16.msra.mxu0 0
      %1254 = vmatprep.subr.bf16.mxu0 0
      %1255 = vmatpush1.bf16.msra.mxu0 0
      %1256 = vmatprep.subr.bf16.mxu0 0
      %1257 = vmatpush1.bf16.msra.mxu0 0
      %1258 = vmatprep.subr.bf16.mxu0 0
      %1259 = vmatpush1.bf16.msra.mxu0 0
      %1260 = vmatprep.mubr.bf16.mxu0 0
      %1261 = vmatmul.mubr.bf16.gmra.mrb[0].mxu0 %v1219
      %v1262 = vpop.f32.mrb[0].mxu0
      %v1263 = vadd.f32 0.0, %v1262
      %v1264 = vpop.f32.mrb[0].mxu0
      %v1265 = vpop.f32.mrb[0].mxu0
      %v1266 = vadd.f32 0.0, %v1265
      %v1267 = vpop.f32.mrb[0].mxu0
      %1268 = vmatprep.mubr.bf16.mxu0 0
      %1269 = vmatmul.mubr.bf16.gmra.mrb[0].mxu0 %v1222
      %v1270 = vpop.f32.mrb[0].mxu0
      %v1271 = vadd.f32 0.0, %v1270
      %v1272 = vpop.f32.mrb[0].mxu0
      %v1273 = vpop.f32.mrb[0].mxu0
      %v1274 = vpop.f32.mrb[0].mxu0
      %1275 = vdwg.mxu0
      %1276 = vrot.lane.b32.xlu0 %v1108, 120
      %v1277 = vpop.permute.xlu0 %1276
      %1278 = vrot.lane.b32.xlu0 %v1109, 120
      %v1279 = vpop.permute.xlu0 %1278
      %1280 = vrot.lane.b32.xlu0 %v1108, 88
      %v1281 = vpop.permute.xlu0 %1280
      %1282 = vrot.lane.b32.xlu0 %v1109, 88
      %v1283 = vpop.permute.xlu0 %1282
      %v1285 = vsel %vm1116, %v1277, 0
      %v1288 = vsel %vm1116, %v1279, 0
      %v1291 = vsel %vm1116, %v1281, 0
      %v1294 = vsel %vm1116, %v1283, 0
      %1296 = vmatprep.subr.bf16.mxu0 0
      %1297 = vmatpush1.bf16.xpose.msra.mxu0 %v1291
      %1298 = vmatprep.subr.bf16.mxu0 0
      %1299 = vmatpush1.bf16.xpose.msra.mxu0 %v1294
      %1300 = vmatprep.subr.bf16.mxu0 0
      %1301 = vmatpush1.bf16.xpose.msra.mxu0 0
      %1302 = vmatprep.subr.bf16.mxu0 0
      %1303 = vmatpush1.bf16.xpose.msra.mxu0 0
      %1304 = vmatprep.subr.bf16.mxu0 0
      %1305 = vmatpush1.bf16.xpose.msra.mxu0 0
      %1306 = vmatprep.subr.bf16.mxu0 0
      %1307 = vmatpush1.bf16.xpose.msra.mxu0 0
      %1308 = vmatprep.subr.bf16.mxu0 0
      %1309 = vmatpush1.bf16.xpose.msra.mxu0 0
      %1310 = vmatprep.subr.bf16.mxu0 0
      %1311 = vmatpush1.bf16.xpose.msra.mxu0 0
      %1312 = vmatprep.subr.bf16.mxu0 0
      %1313 = vmatpush1.bf16.xpose.msra.mxu0 0
      %1314 = vmatprep.subr.bf16.mxu0 0
      %1315 = vmatpush1.bf16.xpose.msra.mxu0 0
      %1316 = vmatprep.subr.bf16.mxu0 0
      %1317 = vmatpush1.bf16.xpose.msra.mxu0 0
      %1318 = vmatprep.subr.bf16.mxu0 0
      %1319 = vmatpush1.bf16.xpose.msra.mxu0 0
      %1320 = vmatprep.subr.bf16.mxu0 0
      %1321 = vmatpush1.bf16.xpose.msra.mxu0 0
      %1322 = vmatprep.subr.bf16.mxu0 0
      %1323 = vmatpush1.bf16.xpose.msra.mxu0 0
      %1324 = vmatprep.subr.bf16.mxu0 0
      %1325 = vmatpush1.bf16.xpose.msra.mxu0 0
      %1326 = vmatprep.subr.bf16.mxu0 0
      %1327 = vmatpush1.bf16.xpose.msra.mxu0 0
      %1328 = vmatprep.mubr.bf16.mxu0 0
      %1329 = vmatmul.mubr.bf16.gmra.mrb[0].mxu0 %v1285
      %v1330 = vpop.f32.mrb[0].mxu0
      %v1331 = vadd.f32 %v420, %v1330
      %v1332 = vpop.f32.mrb[0].mxu0
      %v1333 = vpop.f32.mrb[0].mxu0
      %v1334 = vadd.f32 %v420, %v1333
      %v1335 = vpop.f32.mrb[0].mxu0
      %1336 = vmatprep.mubr.bf16.mxu0 0
      %1337 = vmatmul.mubr.bf16.gmra.mrb[0].mxu0 %v1288
      %v1338 = vpop.f32.mrb[0].mxu0
      %v1339 = vadd.f32 %v420, %v1338
      %v1340 = vpop.f32.mrb[0].mxu0
      %v1341 = vpop.f32.mrb[0].mxu0
      %v1342 = vpop.f32.mrb[0].mxu0
      %1343 = vdwg.mxu0
      %v1344 = vsel %vm1177, %v1331, -inf
      %1345 = vmax.xlane.f32.xlu0 %v1344
      %v1346 = vpop.xlane.xlu0 %1345
      %v1347 = vsel %vm1177, %v1334, -inf
      %1348 = vmax.xlane.f32.xlu0 %v1347
      %v1349 = vpop.xlane.xlu0 %1348
      %v1350 = vsel %vm1177, %v1339, -inf
      %1351 = vmax.xlane.f32.xlu0 %v1350
      %v1352 = vpop.xlane.xlu0 %1351
      %v1353 = vsub.f32 %v1331, %v1346
      %v1354 = vsub.f32 %v1334, %v1349
      %v1355 = vsub.f32 %v1339, %v1352
      %v1356 = vmul.f32 %v1353, 1.442695
      %v1357 = vpow.pop %v1356
      %v1358 = vmul.f32 %v1354, 1.442695
      %v1359 = vpow.pop %v1358
      %v1360 = vmul.f32 %v1355, 1.442695
      %v1361 = vpow.pop %v1360
      %v1362 = vsel %vm1177, %v1357, 0.0
      %1363 = vadd.xlane.f32.xlu0 %v1362
      %v1364 = vpop.xlane.xlu0 %1363
      %v1365 = vsel %vm1177, %v1359, 0.0
      %1366 = vadd.xlane.f32.xlu0 %v1365
      %v1367 = vpop.xlane.xlu0 %1366
      %v1368 = vsel %vm1177, %v1361, 0.0
      %1369 = vadd.xlane.f32.xlu0 %v1368
      %v1370 = vpop.xlane.xlu0 %1369
      %v1371 = vrcp.pop %v1364
      %v1372 = vrcp.pop %v1367
      %v1373 = vrcp.pop %v1370
      %v1374 = vmul.f32 %v1357, %v1371
      %v1375 = vmul.f32 %v1359, %v1372
      %v1376 = vmul.f32 %v1361, %v1373
      %v1377 = vpack.c.bf16 %v1375, %v1374
      %v1378 = vpack.c.bf16 %v1376, %v1376
      %1379 = vrot.lane.b32.xlu0 %v1108, 56
      %v1380 = vpop.permute.xlu0 %1379
      %1381 = vrot.lane.b32.xlu0 %v1109, 56
      %v1382 = vpop.permute.xlu0 %1381
      %v1385 = vsel %vm1177, %v1377, 0
      %v1388 = vsel %vm1177, %v1378, 0
      %v1391 = vsel %vm1224, %v1382, 0
      %1393 = vmatprep.subr.bf16.mxu0 0
      %1394 = vmatpush1.bf16.msra.mxu0 %v1380
      %1395 = vmatprep.subr.bf16.mxu0 0
      %1396 = vmatpush1.bf16.msra.mxu0 %v1391
      %1397 = vmatprep.subr.bf16.mxu0 0
      %1398 = vmatpush1.bf16.msra.mxu0 0
      %1399 = vmatprep.subr.bf16.mxu0 0
      %1400 = vmatpush1.bf16.msra.mxu0 0
      %1401 = vmatprep.subr.bf16.mxu0 0
      %1402 = vmatpush1.bf16.msra.mxu0 0
      %1403 = vmatprep.subr.bf16.mxu0 0
      %1404 = vmatpush1.bf16.msra.mxu0 0
      %1405 = vmatprep.subr.bf16.mxu0 0
      %1406 = vmatpush1.bf16.msra.mxu0 0
      %1407 = vmatprep.subr.bf16.mxu0 0
      %1408 = vmatpush1.bf16.msra.mxu0 0
      %1409 = vmatprep.subr.bf16.mxu0 0
      %1410 = vmatpush1.bf16.msra.mxu0 0
      %1411 = vmatprep.subr.bf16.mxu0 0
      %1412 = vmatpush1.bf16.msra.mxu0 0
      %1413 = vmatprep.subr.bf16.mxu0 0
      %1414 = vmatpush1.bf16.msra.mxu0 0
      %1415 = vmatprep.subr.bf16.mxu0 0
      %1416 = vmatpush1.bf16.msra.mxu0 0
      %1417 = vmatprep.subr.bf16.mxu0 0
      %1418 = vmatpush1.bf16.msra.mxu0 0
      %1419 = vmatprep.subr.bf16.mxu0 0
      %1420 = vmatpush1.bf16.msra.mxu0 0
      %1421 = vmatprep.subr.bf16.mxu0 0
      %1422 = vmatpush1.bf16.msra.mxu0 0
      %1423 = vmatprep.subr.bf16.mxu0 0
      %1424 = vmatpush1.bf16.msra.mxu0 0
      %1425 = vmatprep.mubr.bf16.mxu0 0
      %1426 = vmatmul.mubr.bf16.gmra.mrb[0].mxu0 %v1385
      %v1427 = vpop.f32.mrb[0].mxu0
      %v1428 = vadd.f32 0.0, %v1427
      %v1429 = vpop.f32.mrb[0].mxu0
      %v1430 = vpop.f32.mrb[0].mxu0
      %v1431 = vadd.f32 0.0, %v1430
      %v1432 = vpop.f32.mrb[0].mxu0
      %1433 = vmatprep.mubr.bf16.mxu0 0
      %1434 = vmatmul.mubr.bf16.gmra.mrb[0].mxu0 %v1388
      %v1435 = vpop.f32.mrb[0].mxu0
      %v1436 = vadd.f32 0.0, %v1435
      %v1437 = vpop.f32.mrb[0].mxu0
      %v1438 = vpop.f32.mrb[0].mxu0
      %v1439 = vpop.f32.mrb[0].mxu0
      %1440 = vdwg.mxu0
      %1441 = vrot.lane.b32.xlu0 %v1108, 112
      %v1442 = vpop.permute.xlu0 %1441
      %1443 = vrot.lane.b32.xlu0 %v1109, 112
      %v1444 = vpop.permute.xlu0 %1443
      %1445 = vrot.lane.b32.xlu0 %v1108, 80
      %v1446 = vpop.permute.xlu0 %1445
      %1447 = vrot.lane.b32.xlu0 %v1109, 80
      %v1448 = vpop.permute.xlu0 %1447
      %v1450 = vsel %vm1116, %v1442, 0
      %v1453 = vsel %vm1116, %v1444, 0
      %v1456 = vsel %vm1116, %v1446, 0
      %v1459 = vsel %vm1116, %v1448, 0
      %1461 = vmatprep.subr.bf16.mxu0 0
      %1462 = vmatpush1.bf16.xpose.msra.mxu0 %v1456
      %1463 = vmatprep.subr.bf16.mxu0 0
      %1464 = vmatpush1.bf16.xpose.msra.mxu0 %v1459
      %1465 = vmatprep.subr.bf16.mxu0 0
      %1466 = vmatpush1.bf16.xpose.msra.mxu0 0
      %1467 = vmatprep.subr.bf16.mxu0 0
      %1468 = vmatpush1.bf16.xpose.msra.mxu0 0
      %1469 = vmatprep.subr.bf16.mxu0 0
      %1470 = vmatpush1.bf16.xpose.msra.mxu0 0
      %1471 = vmatprep.subr.bf16.mxu0 0
      %1472 = vmatpush1.bf16.xpose.msra.mxu0 0
      %1473 = vmatprep.subr.bf16.mxu0 0
      %1474 = vmatpush1.bf16.xpose.msra.mxu0 0
      %1475 = vmatprep.subr.bf16.mxu0 0
      %1476 = vmatpush1.bf16.xpose.msra.mxu0 0
      %1477 = vmatprep.subr.bf16.mxu0 0
      %1478 = vmatpush1.bf16.xpose.msra.mxu0 0
      %1479 = vmatprep.subr.bf16.mxu0 0
      %1480 = vmatpush1.bf16.xpose.msra.mxu0 0
      %1481 = vmatprep.subr.bf16.mxu0 0
      %1482 = vmatpush1.bf16.xpose.msra.mxu0 0
      %1483 = vmatprep.subr.bf16.mxu0 0
      %1484 = vmatpush1.bf16.xpose.msra.mxu0 0
      %1485 = vmatprep.subr.bf16.mxu0 0
      %1486 = vmatpush1.bf16.xpose.msra.mxu0 0
      %1487 = vmatprep.subr.bf16.mxu0 0
      %1488 = vmatpush1.bf16.xpose.msra.mxu0 0
      %1489 = vmatprep.subr.bf16.mxu0 0
      %1490 = vmatpush1.bf16.xpose.msra.mxu0 0
      %1491 = vmatprep.subr.bf16.mxu0 0
      %1492 = vmatpush1.bf16.xpose.msra.mxu0 0
      %1493 = vmatprep.mubr.bf16.mxu0 0
      %1494 = vmatmul.mubr.bf16.gmra.mrb[0].mxu0 %v1450
      %v1495 = vpop.f32.mrb[0].mxu0
      %v1496 = vadd.f32 %v420, %v1495
      %v1497 = vpop.f32.mrb[0].mxu0
      %v1498 = vpop.f32.mrb[0].mxu0
      %v1499 = vadd.f32 %v420, %v1498
      %v1500 = vpop.f32.mrb[0].mxu0
      %1501 = vmatprep.mubr.bf16.mxu0 0
      %1502 = vmatmul.mubr.bf16.gmra.mrb[0].mxu0 %v1453
      %v1503 = vpop.f32.mrb[0].mxu0
      %v1504 = vadd.f32 %v420, %v1503
      %v1505 = vpop.f32.mrb[0].mxu0
      %v1506 = vpop.f32.mrb[0].mxu0
      %v1507 = vpop.f32.mrb[0].mxu0
      %1508 = vdwg.mxu0
      %v1509 = vsel %vm1177, %v1496, -inf
      %1510 = vmax.xlane.f32.xlu0 %v1509
      %v1511 = vpop.xlane.xlu0 %1510
      %v1512 = vsel %vm1177, %v1499, -inf
      %1513 = vmax.xlane.f32.xlu0 %v1512
      %v1514 = vpop.xlane.xlu0 %1513
      %v1515 = vsel %vm1177, %v1504, -inf
      %1516 = vmax.xlane.f32.xlu0 %v1515
      %v1517 = vpop.xlane.xlu0 %1516
      %v1518 = vsub.f32 %v1496, %v1511
      %v1519 = vsub.f32 %v1499, %v1514
      %v1520 = vsub.f32 %v1504, %v1517
      %v1521 = vmul.f32 %v1518, 1.442695
      %v1522 = vpow.pop %v1521
      %v1523 = vmul.f32 %v1519, 1.442695
      %v1524 = vpow.pop %v1523
      %v1525 = vmul.f32 %v1520, 1.442695
      %v1526 = vpow.pop %v1525
      %v1527 = vsel %vm1177, %v1522, 0.0
      %1528 = vadd.xlane.f32.xlu0 %v1527
      %v1529 = vpop.xlane.xlu0 %1528
      %v1530 = vsel %vm1177, %v1524, 0.0
      %1531 = vadd.xlane.f32.xlu0 %v1530
      %v1532 = vpop.xlane.xlu0 %1531
      %v1533 = vsel %vm1177, %v1526, 0.0
      %1534 = vadd.xlane.f32.xlu0 %v1533
      %v1535 = vpop.xlane.xlu0 %1534
      %v1536 = vrcp.pop %v1529
      %v1537 = vrcp.pop %v1532
      %v1538 = vrcp.pop %v1535
      %v1539 = vmul.f32 %v1522, %v1536
      %v1540 = vmul.f32 %v1524, %v1537
      %v1541 = vmul.f32 %v1526, %v1538
      %v1542 = vpack.c.bf16 %v1540, %v1539
      %v1543 = vpack.c.bf16 %v1541, %v1541
      %1544 = vrot.lane.b32.xlu0 %v1108, 48
      %v1545 = vpop.permute.xlu0 %1544
      %1546 = vrot.lane.b32.xlu0 %v1109, 48
      %v1547 = vpop.permute.xlu0 %1546
      %v1550 = vsel %vm1177, %v1542, 0
      %v1553 = vsel %vm1177, %v1543, 0
      %v1556 = vsel %vm1224, %v1547, 0
      %1558 = vmatprep.subr.bf16.mxu0 0
      %1559 = vmatpush1.bf16.msra.mxu0 %v1545
      %1560 = vmatprep.subr.bf16.mxu0 0
      %1561 = vmatpush1.bf16.msra.mxu0 %v1556
      %1562 = vmatprep.subr.bf16.mxu0 0
      %1563 = vmatpush1.bf16.msra.mxu0 0
      %1564 = vmatprep.subr.bf16.mxu0 0
      %1565 = vmatpush1.bf16.msra.mxu0 0
      %1566 = vmatprep.subr.bf16.mxu0 0
      %1567 = vmatpush1.bf16.msra.mxu0 0
      %1568 = vmatprep.subr.bf16.mxu0 0
      %1569 = vmatpush1.bf16.msra.mxu0 0
      %1570 = vmatprep.subr.bf16.mxu0 0
      %1571 = vmatpush1.bf16.msra.mxu0 0
      %1572 = vmatprep.subr.bf16.mxu0 0
      %1573 = vmatpush1.bf16.msra.mxu0 0
      %1574 = vmatprep.subr.bf16.mxu0 0
      %1575 = vmatpush1.bf16.msra.mxu0 0
      %1576 = vmatprep.subr.bf16.mxu0 0
      %1577 = vmatpush1.bf16.msra.mxu0 0
      %1578 = vmatprep.subr.bf16.mxu0 0
      %1579 = vmatpush1.bf16.msra.mxu0 0
      %1580 = vmatprep.subr.bf16.mxu0 0
      %1581 = vmatpush1.bf16.msra.mxu0 0
      %1582 = vmatprep.subr.bf16.mxu0 0
      %1583 = vmatpush1.bf16.msra.mxu0 0
      %1584 = vmatprep.subr.bf16.mxu0 0
      %1585 = vmatpush1.bf16.msra.mxu0 0
      %1586 = vmatprep.subr.bf16.mxu0 0
      %1587 = vmatpush1.bf16.msra.mxu0 0
      %1588 = vmatprep.subr.bf16.mxu0 0
      %1589 = vmatpush1.bf16.msra.mxu0 0
      %1590 = vmatprep.mubr.bf16.mxu0 0
      %1591 = vmatmul.mubr.bf16.gmra.mrb[0].mxu0 %v1550
      %v1592 = vpop.f32.mrb[0].mxu0
      %v1593 = vadd.f32 0.0, %v1592
      %v1594 = vpop.f32.mrb[0].mxu0
      %v1595 = vpop.f32.mrb[0].mxu0
      %v1596 = vadd.f32 0.0, %v1595
      %v1597 = vpop.f32.mrb[0].mxu0
      %1598 = vmatprep.mubr.bf16.mxu0 0
      %1599 = vmatmul.mubr.bf16.gmra.mrb[0].mxu0 %v1553
      %v1600 = vpop.f32.mrb[0].mxu0
      %v1601 = vadd.f32 0.0, %v1600
      %v1602 = vpop.f32.mrb[0].mxu0
      %v1603 = vpop.f32.mrb[0].mxu0
      %v1604 = vpop.f32.mrb[0].mxu0
      %1605 = vdwg.mxu0
      %1606 = vrot.lane.b32.xlu0 %v1108, 104
      %v1607 = vpop.permute.xlu0 %1606
      %1608 = vrot.lane.b32.xlu0 %v1109, 104
      %v1609 = vpop.permute.xlu0 %1608
      %1610 = vrot.lane.b32.xlu0 %v1108, 72
      %v1611 = vpop.permute.xlu0 %1610
      %1612 = vrot.lane.b32.xlu0 %v1109, 72
      %v1613 = vpop.permute.xlu0 %1612
      %v1615 = vsel %vm1116, %v1607, 0
      %v1618 = vsel %vm1116, %v1609, 0
      %v1621 = vsel %vm1116, %v1611, 0
      %v1624 = vsel %vm1116, %v1613, 0
      %1626 = vmatprep.subr.bf16.mxu0 0
      %1627 = vmatpush1.bf16.xpose.msra.mxu0 %v1621
      %1628 = vmatprep.subr.bf16.mxu0 0
      %1629 = vmatpush1.bf16.xpose.msra.mxu0 %v1624
      %1630 = vmatprep.subr.bf16.mxu0 0
      %1631 = vmatpush1.bf16.xpose.msra.mxu0 0
      %1632 = vmatprep.subr.bf16.mxu0 0
      %1633 = vmatpush1.bf16.xpose.msra.mxu0 0
      %1634 = vmatprep.subr.bf16.mxu0 0
      %1635 = vmatpush1.bf16.xpose.msra.mxu0 0
      %1636 = vmatprep.subr.bf16.mxu0 0
      %1637 = vmatpush1.bf16.xpose.msra.mxu0 0
      %1638 = vmatprep.subr.bf16.mxu0 0
      %1639 = vmatpush1.bf16.xpose.msra.mxu0 0
      %1640 = vmatprep.subr.bf16.mxu0 0
      %1641 = vmatpush1.bf16.xpose.msra.mxu0 0
      %1642 = vmatprep.subr.bf16.mxu0 0
      %1643 = vmatpush1.bf16.xpose.msra.mxu0 0
      %1644 = vmatprep.subr.bf16.mxu0 0
      %1645 = vmatpush1.bf16.xpose.msra.mxu0 0
      %1646 = vmatprep.subr.bf16.mxu0 0
      %1647 = vmatpush1.bf16.xpose.msra.mxu0 0
      %1648 = vmatprep.subr.bf16.mxu0 0
      %1649 = vmatpush1.bf16.xpose.msra.mxu0 0
      %1650 = vmatprep.subr.bf16.mxu0 0
      %1651 = vmatpush1.bf16.xpose.msra.mxu0 0
      %1652 = vmatprep.subr.bf16.mxu0 0
      %1653 = vmatpush1.bf16.xpose.msra.mxu0 0
      %1654 = vmatprep.subr.bf16.mxu0 0
      %1655 = vmatpush1.bf16.xpose.msra.mxu0 0
      %1656 = vmatprep.subr.bf16.mxu0 0
      %1657 = vmatpush1.bf16.xpose.msra.mxu0 0
      %1658 = vmatprep.mubr.bf16.mxu0 0
      %1659 = vmatmul.mubr.bf16.gmra.mrb[0].mxu0 %v1615
      %v1660 = vpop.f32.mrb[0].mxu0
      %v1661 = vadd.f32 %v420, %v1660
      %v1662 = vpop.f32.mrb[0].mxu0
      %v1663 = vpop.f32.mrb[0].mxu0
      %v1664 = vadd.f32 %v420, %v1663
      %v1665 = vpop.f32.mrb[0].mxu0
      %1666 = vmatprep.mubr.bf16.mxu0 0
      %1667 = vmatmul.mubr.bf16.gmra.mrb[0].mxu0 %v1618
      %v1668 = vpop.f32.mrb[0].mxu0
      %v1669 = vadd.f32 %v420, %v1668
      %v1670 = vpop.f32.mrb[0].mxu0
      %v1671 = vpop.f32.mrb[0].mxu0
      %v1672 = vpop.f32.mrb[0].mxu0
      %1673 = vdwg.mxu0
      %v1674 = vsel %vm1177, %v1661, -inf
      %1675 = vmax.xlane.f32.xlu0 %v1674
      %v1676 = vpop.xlane.xlu0 %1675
      %v1677 = vsel %vm1177, %v1664, -inf
      %1678 = vmax.xlane.f32.xlu0 %v1677
      %v1679 = vpop.xlane.xlu0 %1678
      %v1680 = vsel %vm1177, %v1669, -inf
      %1681 = vmax.xlane.f32.xlu0 %v1680
      %v1682 = vpop.xlane.xlu0 %1681
      %v1683 = vsub.f32 %v1661, %v1676
      %v1684 = vsub.f32 %v1664, %v1679
      %v1685 = vsub.f32 %v1669, %v1682
      %v1686 = vmul.f32 %v1683, 1.442695
      %v1687 = vpow.pop %v1686
      %v1688 = vmul.f32 %v1684, 1.442695
      %v1689 = vpow.pop %v1688
      %v1690 = vmul.f32 %v1685, 1.442695
      %v1691 = vpow.pop %v1690
      %v1692 = vsel %vm1177, %v1687, 0.0
      %1693 = vadd.xlane.f32.xlu0 %v1692
      %v1694 = vpop.xlane.xlu0 %1693
      %v1695 = vsel %vm1177, %v1689, 0.0
      %1696 = vadd.xlane.f32.xlu0 %v1695
      %v1697 = vpop.xlane.xlu0 %1696
      %v1698 = vsel %vm1177, %v1691, 0.0
      %1699 = vadd.xlane.f32.xlu0 %v1698
      %v1700 = vpop.xlane.xlu0 %1699
      %v1701 = vrcp.pop %v1694
      %v1702 = vrcp.pop %v1697
      %v1703 = vrcp.pop %v1700
      %v1704 = vmul.f32 %v1687, %v1701
      %v1705 = vmul.f32 %v1689, %v1702
      %v1706 = vmul.f32 %v1691, %v1703
      %v1707 = vpack.c.bf16 %v1705, %v1704
      %v1708 = vpack.c.bf16 %v1706, %v1706
      %1709 = vrot.lane.b32.xlu0 %v1108, 40
      %v1710 = vpop.permute.xlu0 %1709
      %1711 = vrot.lane.b32.xlu0 %v1109, 40
      %v1712 = vpop.permute.xlu0 %1711
      %v1715 = vsel %vm1177, %v1707, 0
      %v1718 = vsel %vm1177, %v1708, 0
      %v1721 = vsel %vm1224, %v1712, 0
      %1723 = vmatprep.subr.bf16.mxu0 0
      %1724 = vmatpush1.bf16.msra.mxu0 %v1710
      %1725 = vmatprep.subr.bf16.mxu0 0
      %1726 = vmatpush1.bf16.msra.mxu0 %v1721
      %1727 = vmatprep.subr.bf16.mxu0 0
      %1728 = vmatpush1.bf16.msra.mxu0 0
      %1729 = vmatprep.subr.bf16.mxu0 0
      %1730 = vmatpush1.bf16.msra.mxu0 0
      %1731 = vmatprep.subr.bf16.mxu0 0
      %1732 = vmatpush1.bf16.msra.mxu0 0
      %1733 = vmatprep.subr.bf16.mxu0 0
      %1734 = vmatpush1.bf16.msra.mxu0 0
      %1735 = vmatprep.subr.bf16.mxu0 0
      %1736 = vmatpush1.bf16.msra.mxu0 0
      %1737 = vmatprep.subr.bf16.mxu0 0
      %1738 = vmatpush1.bf16.msra.mxu0 0
      %1739 = vmatprep.subr.bf16.mxu0 0
      %1740 = vmatpush1.bf16.msra.mxu0 0
      %1741 = vmatprep.subr.bf16.mxu0 0
      %1742 = vmatpush1.bf16.msra.mxu0 0
      %1743 = vmatprep.subr.bf16.mxu0 0
      %1744 = vmatpush1.bf16.msra.mxu0 0
      %1745 = vmatprep.subr.bf16.mxu0 0
      %1746 = vmatpush1.bf16.msra.mxu0 0
      %1747 = vmatprep.subr.bf16.mxu0 0
      %1748 = vmatpush1.bf16.msra.mxu0 0
      %1749 = vmatprep.subr.bf16.mxu0 0
      %1750 = vmatpush1.bf16.msra.mxu0 0
      %1751 = vmatprep.subr.bf16.mxu0 0
      %1752 = vmatpush1.bf16.msra.mxu0 0
      %1753 = vmatprep.subr.bf16.mxu0 0
      %1754 = vmatpush1.bf16.msra.mxu0 0
      %1755 = vmatprep.mubr.bf16.mxu0 0
      %1756 = vmatmul.mubr.bf16.gmra.mrb[0].mxu0 %v1715
      %v1757 = vpop.f32.mrb[0].mxu0
      %v1758 = vadd.f32 0.0, %v1757
      %v1759 = vpop.f32.mrb[0].mxu0
      %v1760 = vpop.f32.mrb[0].mxu0
      %v1761 = vadd.f32 0.0, %v1760
      %v1762 = vpop.f32.mrb[0].mxu0
      %1763 = vmatprep.mubr.bf16.mxu0 0
      %1764 = vmatmul.mubr.bf16.gmra.mrb[0].mxu0 %v1718
      %v1765 = vpop.f32.mrb[0].mxu0
      %v1766 = vadd.f32 0.0, %v1765
      %v1767 = vpop.f32.mrb[0].mxu0
      %v1768 = vpop.f32.mrb[0].mxu0
      %v1769 = vpop.f32.mrb[0].mxu0
      %1770 = vdwg.mxu0
      %1774 = vrot.lane.b32.xlu0 %v1428, 8
      %v1775 = vpop.permute.xlu0 %1774
      %1776 = vrot.lane.b32.xlu0 %v1431, 8
      %v1777 = vpop.permute.xlu0 %1776
      %1778 = vrot.lane.b32.xlu0 %v1436, 8
      %v1779 = vpop.permute.xlu0 %1778
      %1786 = vrot.lane.b32.xlu0 %v1593, 16
      %v1787 = vpop.permute.xlu0 %1786
      %1788 = vrot.lane.b32.xlu0 %v1596, 16
      %v1789 = vpop.permute.xlu0 %1788
      %1790 = vrot.lane.b32.xlu0 %v1601, 16
      %v1791 = vpop.permute.xlu0 %1790
      %1798 = vrot.lane.b32.xlu0 %v1758, 24
      %v1799 = vpop.permute.xlu0 %1798
      %1800 = vrot.lane.b32.xlu0 %v1761, 24
      %v1801 = vpop.permute.xlu0 %1800
      %1802 = vrot.lane.b32.xlu0 %v1766, 24
      %v1803 = vpop.permute.xlu0 %1802
      %v1807 = vsel %vm1116, %v1263, %v1775
      %v1808 = vsel %vm1116, %v1266, %v1777
      %v1809 = vsel %vm1116, %v1271, %v1779
      %vm1810 = vcmask 130048
      %v1811 = vsel %vm1810, %v1807, %v1787
      %v1812 = vsel %vm1810, %v1808, %v1789
      %v1813 = vsel %vm1810, %v1809, %v1791
      %v1814 = vsel %vm1177, %v1811, %v1799
      %v1815 = vsel %vm1177, %v1812, %v1801
      %v1816 = vsel %vm1177, %v1813, %v1803
      %v1817 = vpack.c.bf16 %v1078, %v1073
      %v1818 = vpack.c.bf16 %v1081, %v1081
      %1821 = vrot.lane.b32.xlu0 %v1817, 96
      %v1822 = vpop.permute.xlu0 %1821
      %1823 = vrot.lane.b32.xlu0 %v1818, 96
      %v1824 = vpop.permute.xlu0 %1823
      %v1826 = vsel %vm1116, %v1817, 0
      %v1829 = vsel %vm1116, %v1818, 0
      %v1832 = vsel %vm1116, %v1822, 0
      %v1835 = vsel %vm1116, %v1824, 0
      %1837 = vmatprep.subr.bf16.mxu0 0
      %1838 = vmatpush1.bf16.xpose.msra.mxu0 %v1832
      %1839 = vmatprep.subr.bf16.mxu0 0
      %1840 = vmatpush1.bf16.xpose.msra.mxu0 %v1835
      %1841 = vmatprep.subr.bf16.mxu0 0
      %1842 = vmatpush1.bf16.xpose.msra.mxu0 0
      %1843 = vmatprep.subr.bf16.mxu0 0
      %1844 = vmatpush1.bf16.xpose.msra.mxu0 0
      %1845 = vmatprep.subr.bf16.mxu0 0
      %1846 = vmatpush1.bf16.xpose.msra.mxu0 0
      %1847 = vmatprep.subr.bf16.mxu0 0
      %1848 = vmatpush1.bf16.xpose.msra.mxu0 0
      %1849 = vmatprep.subr.bf16.mxu0 0
      %1850 = vmatpush1.bf16.xpose.msra.mxu0 0
      %1851 = vmatprep.subr.bf16.mxu0 0
      %1852 = vmatpush1.bf16.xpose.msra.mxu0 0
      %1853 = vmatprep.subr.bf16.mxu0 0
      %1854 = vmatpush1.bf16.xpose.msra.mxu0 0
      %1855 = vmatprep.subr.bf16.mxu0 0
      %1856 = vmatpush1.bf16.xpose.msra.mxu0 0
      %1857 = vmatprep.subr.bf16.mxu0 0
      %1858 = vmatpush1.bf16.xpose.msra.mxu0 0
      %1859 = vmatprep.subr.bf16.mxu0 0
      %1860 = vmatpush1.bf16.xpose.msra.mxu0 0
      %1861 = vmatprep.subr.bf16.mxu0 0
      %1862 = vmatpush1.bf16.xpose.msra.mxu0 0
      %1863 = vmatprep.subr.bf16.mxu0 0
      %1864 = vmatpush1.bf16.xpose.msra.mxu0 0
      %1865 = vmatprep.subr.bf16.mxu0 0
      %1866 = vmatpush1.bf16.xpose.msra.mxu0 0
      %1867 = vmatprep.subr.bf16.mxu0 0
      %1868 = vmatpush1.bf16.xpose.msra.mxu0 0
      %1869 = vmatprep.mubr.bf16.mxu0 0
      %1870 = vmatmul.mubr.bf16.gmra.mrb[0].mxu0 %v1826
      %v1871 = vpop.f32.mrb[0].mxu0
      %v1872 = vadd.f32 %v420, %v1871
      %v1873 = vpop.f32.mrb[0].mxu0
      %v1874 = vpop.f32.mrb[0].mxu0
      %v1875 = vadd.f32 %v420, %v1874
      %v1876 = vpop.f32.mrb[0].mxu0
      %1877 = vmatprep.mubr.bf16.mxu0 0
      %1878 = vmatmul.mubr.bf16.gmra.mrb[0].mxu0 %v1829
      %v1879 = vpop.f32.mrb[0].mxu0
      %v1880 = vadd.f32 %v420, %v1879
      %v1881 = vpop.f32.mrb[0].mxu0
      %v1882 = vpop.f32.mrb[0].mxu0
      %v1883 = vpop.f32.mrb[0].mxu0
      %1884 = vdwg.mxu0
      %v1885 = vsel %vm1177, %v1872, -inf
      %1886 = vmax.xlane.f32.xlu0 %v1885
      %v1887 = vpop.xlane.xlu0 %1886
      %v1888 = vsel %vm1177, %v1875, -inf
      %1889 = vmax.xlane.f32.xlu0 %v1888
      %v1890 = vpop.xlane.xlu0 %1889
      %v1891 = vsel %vm1177, %v1880, -inf
      %1892 = vmax.xlane.f32.xlu0 %v1891
      %v1893 = vpop.xlane.xlu0 %1892
      %v1894 = vsub.f32 %v1872, %v1887
      %v1895 = vsub.f32 %v1875, %v1890
      %v1896 = vsub.f32 %v1880, %v1893
      %v1897 = vmul.f32 %v1894, 1.442695
      %v1898 = vpow.pop %v1897
      %v1899 = vmul.f32 %v1895, 1.442695
      %v1900 = vpow.pop %v1899
      %v1901 = vmul.f32 %v1896, 1.442695
      %v1902 = vpow.pop %v1901
      %v1903 = vsel %vm1177, %v1898, 0.0
      %1904 = vadd.xlane.f32.xlu0 %v1903
      %v1905 = vpop.xlane.xlu0 %1904
      %v1906 = vsel %vm1177, %v1900, 0.0
      %1907 = vadd.xlane.f32.xlu0 %v1906
      %v1908 = vpop.xlane.xlu0 %1907
      %v1909 = vsel %vm1177, %v1902, 0.0
      %1910 = vadd.xlane.f32.xlu0 %v1909
      %v1911 = vpop.xlane.xlu0 %1910
      %v1912 = vrcp.pop %v1905
      %v1913 = vrcp.pop %v1908
      %v1914 = vrcp.pop %v1911
      %v1915 = vmul.f32 %v1898, %v1912
      %v1916 = vmul.f32 %v1900, %v1913
      %v1917 = vmul.f32 %v1902, %v1914
      %v1918 = vpack.c.bf16 %v1916, %v1915
      %v1919 = vpack.c.bf16 %v1917, %v1917
      %1920 = vrot.lane.b32.xlu0 %v1817, 64
      %v1921 = vpop.permute.xlu0 %1920
      %1922 = vrot.lane.b32.xlu0 %v1818, 64
      %v1923 = vpop.permute.xlu0 %1922
      %v1926 = vsel %vm1177, %v1918, 0
      %v1929 = vsel %vm1177, %v1919, 0
      %v1932 = vsel %vm1224, %v1923, 0
      %1934 = vmatprep.subr.bf16.mxu0 0
      %1935 = vmatpush1.bf16.msra.mxu0 %v1921
      %1936 = vmatprep.subr.bf16.mxu0 0
      %1937 = vmatpush1.bf16.msra.mxu0 %v1932
      %1938 = vmatprep.subr.bf16.mxu0 0
      %1939 = vmatpush1.bf16.msra.mxu0 0
      %1940 = vmatprep.subr.bf16.mxu0 0
      %1941 = vmatpush1.bf16.msra.mxu0 0
      %1942 = vmatprep.subr.bf16.mxu0 0
      %1943 = vmatpush1.bf16.msra.mxu0 0
      %1944 = vmatprep.subr.bf16.mxu0 0
      %1945 = vmatpush1.bf16.msra.mxu0 0
      %1946 = vmatprep.subr.bf16.mxu0 0
      %1947 = vmatpush1.bf16.msra.mxu0 0
      %1948 = vmatprep.subr.bf16.mxu0 0
      %1949 = vmatpush1.bf16.msra.mxu0 0
      %1950 = vmatprep.subr.bf16.mxu0 0
      %1951 = vmatpush1.bf16.msra.mxu0 0
      %1952 = vmatprep.subr.bf16.mxu0 0
      %1953 = vmatpush1.bf16.msra.mxu0 0
      %1954 = vmatprep.subr.bf16.mxu0 0
      %1955 = vmatpush1.bf16.msra.mxu0 0
      %1956 = vmatprep.subr.bf16.mxu0 0
      %1957 = vmatpush1.bf16.msra.mxu0 0
      %1958 = vmatprep.subr.bf16.mxu0 0
      %1959 = vmatpush1.bf16.msra.mxu0 0
      %1960 = vmatprep.subr.bf16.mxu0 0
      %1961 = vmatpush1.bf16.msra.mxu0 0
      %1962 = vmatprep.subr.bf16.mxu0 0
      %1963 = vmatpush1.bf16.msra.mxu0 0
      %1964 = vmatprep.subr.bf16.mxu0 0
      %1965 = vmatpush1.bf16.msra.mxu0 0
      %1966 = vmatprep.mubr.bf16.mxu0 0
      %1967 = vmatmul.mubr.bf16.gmra.mrb[0].mxu0 %v1926
      %v1968 = vpop.f32.mrb[0].mxu0
      %v1969 = vadd.f32 0.0, %v1968
      %v1970 = vpop.f32.mrb[0].mxu0
      %v1971 = vpop.f32.mrb[0].mxu0
      %v1972 = vadd.f32 0.0, %v1971
      %v1973 = vpop.f32.mrb[0].mxu0
      %1974 = vmatprep.mubr.bf16.mxu0 0
      %1975 = vmatmul.mubr.bf16.gmra.mrb[0].mxu0 %v1929
      %v1976 = vpop.f32.mrb[0].mxu0
      %v1977 = vadd.f32 0.0, %v1976
      %v1978 = vpop.f32.mrb[0].mxu0
      %v1979 = vpop.f32.mrb[0].mxu0
      %v1980 = vpop.f32.mrb[0].mxu0
      %1981 = vdwg.mxu0
      %1982 = vrot.lane.b32.xlu0 %v1817, 120
      %v1983 = vpop.permute.xlu0 %1982
      %1984 = vrot.lane.b32.xlu0 %v1818, 120
      %v1985 = vpop.permute.xlu0 %1984
      %1986 = vrot.lane.b32.xlu0 %v1817, 88
      %v1987 = vpop.permute.xlu0 %1986
      %1988 = vrot.lane.b32.xlu0 %v1818, 88
      %v1989 = vpop.permute.xlu0 %1988
      %v1991 = vsel %vm1116, %v1983, 0
      %v1994 = vsel %vm1116, %v1985, 0
      %v1997 = vsel %vm1116, %v1987, 0
      %v2000 = vsel %vm1116, %v1989, 0
      %2002 = vmatprep.subr.bf16.mxu0 0
      %2003 = vmatpush1.bf16.xpose.msra.mxu0 %v1997
      %2004 = vmatprep.subr.bf16.mxu0 0
      %2005 = vmatpush1.bf16.xpose.msra.mxu0 %v2000
      %2006 = vmatprep.subr.bf16.mxu0 0
      %2007 = vmatpush1.bf16.xpose.msra.mxu0 0
      %2008 = vmatprep.subr.bf16.mxu0 0
      %2009 = vmatpush1.bf16.xpose.msra.mxu0 0
      %2010 = vmatprep.subr.bf16.mxu0 0
      %2011 = vmatpush1.bf16.xpose.msra.mxu0 0
      %2012 = vmatprep.subr.bf16.mxu0 0
      %2013 = vmatpush1.bf16.xpose.msra.mxu0 0
      %2014 = vmatprep.subr.bf16.mxu0 0
      %2015 = vmatpush1.bf16.xpose.msra.mxu0 0
      %2016 = vmatprep.subr.bf16.mxu0 0
      %2017 = vmatpush1.bf16.xpose.msra.mxu0 0
      %2018 = vmatprep.subr.bf16.mxu0 0
      %2019 = vmatpush1.bf16.xpose.msra.mxu0 0
      %2020 = vmatprep.subr.bf16.mxu0 0
      %2021 = vmatpush1.bf16.xpose.msra.mxu0 0
      %2022 = vmatprep.subr.bf16.mxu0 0
      %2023 = vmatpush1.bf16.xpose.msra.mxu0 0
      %2024 = vmatprep.subr.bf16.mxu0 0
      %2025 = vmatpush1.bf16.xpose.msra.mxu0 0
      %2026 = vmatprep.subr.bf16.mxu0 0
      %2027 = vmatpush1.bf16.xpose.msra.mxu0 0
      %2028 = vmatprep.subr.bf16.mxu0 0
      %2029 = vmatpush1.bf16.xpose.msra.mxu0 0
      %2030 = vmatprep.subr.bf16.mxu0 0
      %2031 = vmatpush1.bf16.xpose.msra.mxu0 0
      %2032 = vmatprep.subr.bf16.mxu0 0
      %2033 = vmatpush1.bf16.xpose.msra.mxu0 0
      %2034 = vmatprep.mubr.bf16.mxu0 0
      %2035 = vmatmul.mubr.bf16.gmra.mrb[0].mxu0 %v1991
      %v2036 = vpop.f32.mrb[0].mxu0
      %v2037 = vadd.f32 %v420, %v2036
      %v2038 = vpop.f32.mrb[0].mxu0
      %v2039 = vpop.f32.mrb[0].mxu0
      %v2040 = vadd.f32 %v420, %v2039
      %v2041 = vpop.f32.mrb[0].mxu0
      %2042 = vmatprep.mubr.bf16.mxu0 0
      %2043 = vmatmul.mubr.bf16.gmra.mrb[0].mxu0 %v1994
      %v2044 = vpop.f32.mrb[0].mxu0
      %v2045 = vadd.f32 %v420, %v2044
      %v2046 = vpop.f32.mrb[0].mxu0
      %v2047 = vpop.f32.mrb[0].mxu0
      %v2048 = vpop.f32.mrb[0].mxu0
      %2049 = vdwg.mxu0
      %v2050 = vsel %vm1177, %v2037, -inf
      %2051 = vmax.xlane.f32.xlu0 %v2050
      %v2052 = vpop.xlane.xlu0 %2051
      %v2053 = vsel %vm1177, %v2040, -inf
      %2054 = vmax.xlane.f32.xlu0 %v2053
      %v2055 = vpop.xlane.xlu0 %2054
      %v2056 = vsel %vm1177, %v2045, -inf
      %2057 = vmax.xlane.f32.xlu0 %v2056
      %v2058 = vpop.xlane.xlu0 %2057
      %v2059 = vsub.f32 %v2037, %v2052
      %v2060 = vsub.f32 %v2040, %v2055
      %v2061 = vsub.f32 %v2045, %v2058
      %v2062 = vmul.f32 %v2059, 1.442695
      %v2063 = vpow.pop %v2062
      %v2064 = vmul.f32 %v2060, 1.442695
      %v2065 = vpow.pop %v2064
      %v2066 = vmul.f32 %v2061, 1.442695
      %v2067 = vpow.pop %v2066
      %v2068 = vsel %vm1177, %v2063, 0.0
      %2069 = vadd.xlane.f32.xlu0 %v2068
      %v2070 = vpop.xlane.xlu0 %2069
      %v2071 = vsel %vm1177, %v2065, 0.0
      %2072 = vadd.xlane.f32.xlu0 %v2071
      %v2073 = vpop.xlane.xlu0 %2072
      %v2074 = vsel %vm1177, %v2067, 0.0
      %2075 = vadd.xlane.f32.xlu0 %v2074
      %v2076 = vpop.xlane.xlu0 %2075
      %v2077 = vrcp.pop %v2070
      %v2078 = vrcp.pop %v2073
      %v2079 = vrcp.pop %v2076
      %v2080 = vmul.f32 %v2063, %v2077
      %v2081 = vmul.f32 %v2065, %v2078
      %v2082 = vmul.f32 %v2067, %v2079
      %v2083 = vpack.c.bf16 %v2081, %v2080
      %v2084 = vpack.c.bf16 %v2082, %v2082
      %2085 = vrot.lane.b32.xlu0 %v1817, 56
      %v2086 = vpop.permute.xlu0 %2085
      %2087 = vrot.lane.b32.xlu0 %v1818, 56
      %v2088 = vpop.permute.xlu0 %2087
      %v2091 = vsel %vm1177, %v2083, 0
      %v2094 = vsel %vm1177, %v2084, 0
      %v2097 = vsel %vm1224, %v2088, 0
      %2099 = vmatprep.subr.bf16.mxu0 0
      %2100 = vmatpush1.bf16.msra.mxu0 %v2086
      %2101 = vmatprep.subr.bf16.mxu0 0
      %2102 = vmatpush1.bf16.msra.mxu0 %v2097
      %2103 = vmatprep.subr.bf16.mxu0 0
      %2104 = vmatpush1.bf16.msra.mxu0 0
      %2105 = vmatprep.subr.bf16.mxu0 0
      %2106 = vmatpush1.bf16.msra.mxu0 0
      %2107 = vmatprep.subr.bf16.mxu0 0
      %2108 = vmatpush1.bf16.msra.mxu0 0
      %2109 = vmatprep.subr.bf16.mxu0 0
      %2110 = vmatpush1.bf16.msra.mxu0 0
      %2111 = vmatprep.subr.bf16.mxu0 0
      %2112 = vmatpush1.bf16.msra.mxu0 0
      %2113 = vmatprep.subr.bf16.mxu0 0
      %2114 = vmatpush1.bf16.msra.mxu0 0
      %2115 = vmatprep.subr.bf16.mxu0 0
      %2116 = vmatpush1.bf16.msra.mxu0 0
      %2117 = vmatprep.subr.bf16.mxu0 0
      %2118 = vmatpush1.bf16.msra.mxu0 0
      %2119 = vmatprep.subr.bf16.mxu0 0
      %2120 = vmatpush1.bf16.msra.mxu0 0
      %2121 = vmatprep.subr.bf16.mxu0 0
      %2122 = vmatpush1.bf16.msra.mxu0 0
      %2123 = vmatprep.subr.bf16.mxu0 0
      %2124 = vmatpush1.bf16.msra.mxu0 0
      %2125 = vmatprep.subr.bf16.mxu0 0
      %2126 = vmatpush1.bf16.msra.mxu0 0
      %2127 = vmatprep.subr.bf16.mxu0 0
      %2128 = vmatpush1.bf16.msra.mxu0 0
      %2129 = vmatprep.subr.bf16.mxu0 0
      %2130 = vmatpush1.bf16.msra.mxu0 0
      %2131 = vmatprep.mubr.bf16.mxu0 0
      %2132 = vmatmul.mubr.bf16.gmra.mrb[0].mxu0 %v2091
      %v2133 = vpop.f32.mrb[0].mxu0
      %v2134 = vadd.f32 0.0, %v2133
      %v2135 = vpop.f32.mrb[0].mxu0
      %v2136 = vpop.f32.mrb[0].mxu0
      %v2137 = vadd.f32 0.0, %v2136
      %v2138 = vpop.f32.mrb[0].mxu0
      %2139 = vmatprep.mubr.bf16.mxu0 0
      %2140 = vmatmul.mubr.bf16.gmra.mrb[0].mxu0 %v2094
      %v2141 = vpop.f32.mrb[0].mxu0
      %v2142 = vadd.f32 0.0, %v2141
      %v2143 = vpop.f32.mrb[0].mxu0
      %v2144 = vpop.f32.mrb[0].mxu0
      %v2145 = vpop.f32.mrb[0].mxu0
      %2146 = vdwg.mxu0
      %2147 = vrot.lane.b32.xlu0 %v1817, 112
      %v2148 = vpop.permute.xlu0 %2147
      %2149 = vrot.lane.b32.xlu0 %v1818, 112
      %v2150 = vpop.permute.xlu0 %2149
      %2151 = vrot.lane.b32.xlu0 %v1817, 80
      %v2152 = vpop.permute.xlu0 %2151
      %2153 = vrot.lane.b32.xlu0 %v1818, 80
      %v2154 = vpop.permute.xlu0 %2153
      %v2156 = vsel %vm1116, %v2148, 0
      %v2159 = vsel %vm1116, %v2150, 0
      %v2162 = vsel %vm1116, %v2152, 0
      %v2165 = vsel %vm1116, %v2154, 0
      %2167 = vmatprep.subr.bf16.mxu0 0
      %2168 = vmatpush1.bf16.xpose.msra.mxu0 %v2162
      %2169 = vmatprep.subr.bf16.mxu0 0
      %2170 = vmatpush1.bf16.xpose.msra.mxu0 %v2165
      %2171 = vmatprep.subr.bf16.mxu0 0
      %2172 = vmatpush1.bf16.xpose.msra.mxu0 0
      %2173 = vmatprep.subr.bf16.mxu0 0
      %2174 = vmatpush1.bf16.xpose.msra.mxu0 0
      %2175 = vmatprep.subr.bf16.mxu0 0
      %2176 = vmatpush1.bf16.xpose.msra.mxu0 0
      %2177 = vmatprep.subr.bf16.mxu0 0
      %2178 = vmatpush1.bf16.xpose.msra.mxu0 0
      %2179 = vmatprep.subr.bf16.mxu0 0
      %2180 = vmatpush1.bf16.xpose.msra.mxu0 0
      %2181 = vmatprep.subr.bf16.mxu0 0
      %2182 = vmatpush1.bf16.xpose.msra.mxu0 0
      %2183 = vmatprep.subr.bf16.mxu0 0
      %2184 = vmatpush1.bf16.xpose.msra.mxu0 0
      %2185 = vmatprep.subr.bf16.mxu0 0
      %2186 = vmatpush1.bf16.xpose.msra.mxu0 0
      %2187 = vmatprep.subr.bf16.mxu0 0
      %2188 = vmatpush1.bf16.xpose.msra.mxu0 0
      %2189 = vmatprep.subr.bf16.mxu0 0
      %2190 = vmatpush1.bf16.xpose.msra.mxu0 0
      %2191 = vmatprep.subr.bf16.mxu0 0
      %2192 = vmatpush1.bf16.xpose.msra.mxu0 0
      %2193 = vmatprep.subr.bf16.mxu0 0
      %2194 = vmatpush1.bf16.xpose.msra.mxu0 0
      %2195 = vmatprep.subr.bf16.mxu0 0
      %2196 = vmatpush1.bf16.xpose.msra.mxu0 0
      %2197 = vmatprep.subr.bf16.mxu0 0
      %2198 = vmatpush1.bf16.xpose.msra.mxu0 0
      %2199 = vmatprep.mubr.bf16.mxu0 0
      %2200 = vmatmul.mubr.bf16.gmra.mrb[0].mxu0 %v2156
      %v2201 = vpop.f32.mrb[0].mxu0
      %v2202 = vadd.f32 %v420, %v2201
      %v2203 = vpop.f32.mrb[0].mxu0
      %v2204 = vpop.f32.mrb[0].mxu0
      %v2205 = vadd.f32 %v420, %v2204
      %v2206 = vpop.f32.mrb[0].mxu0
      %2207 = vmatprep.mubr.bf16.mxu0 0
      %2208 = vmatmul.mubr.bf16.gmra.mrb[0].mxu0 %v2159
      %v2209 = vpop.f32.mrb[0].mxu0
      %v2210 = vadd.f32 %v420, %v2209
      %v2211 = vpop.f32.mrb[0].mxu0
      %v2212 = vpop.f32.mrb[0].mxu0
      %v2213 = vpop.f32.mrb[0].mxu0
      %2214 = vdwg.mxu0
      %v2215 = vsel %vm1177, %v2202, -inf
      %2216 = vmax.xlane.f32.xlu0 %v2215
      %v2217 = vpop.xlane.xlu0 %2216
      %v2218 = vsel %vm1177, %v2205, -inf
      %2219 = vmax.xlane.f32.xlu0 %v2218
      %v2220 = vpop.xlane.xlu0 %2219
      %v2221 = vsel %vm1177, %v2210, -inf
      %2222 = vmax.xlane.f32.xlu0 %v2221
      %v2223 = vpop.xlane.xlu0 %2222
      %v2224 = vsub.f32 %v2202, %v2217
      %v2225 = vsub.f32 %v2205, %v2220
      %v2226 = vsub.f32 %v2210, %v2223
      %v2227 = vmul.f32 %v2224, 1.442695
      %v2228 = vpow.pop %v2227
      %v2229 = vmul.f32 %v2225, 1.442695
      %v2230 = vpow.pop %v2229
      %v2231 = vmul.f32 %v2226, 1.442695
      %v2232 = vpow.pop %v2231
      %v2233 = vsel %vm1177, %v2228, 0.0
      %2234 = vadd.xlane.f32.xlu0 %v2233
      %v2235 = vpop.xlane.xlu0 %2234
      %v2236 = vsel %vm1177, %v2230, 0.0
      %2237 = vadd.xlane.f32.xlu0 %v2236
      %v2238 = vpop.xlane.xlu0 %2237
      %v2239 = vsel %vm1177, %v2232, 0.0
      %2240 = vadd.xlane.f32.xlu0 %v2239
      %v2241 = vpop.xlane.xlu0 %2240
      %v2242 = vrcp.pop %v2235
      %v2243 = vrcp.pop %v2238
      %v2244 = vrcp.pop %v2241
      %v2245 = vmul.f32 %v2228, %v2242
      %v2246 = vmul.f32 %v2230, %v2243
      %v2247 = vmul.f32 %v2232, %v2244
      %v2248 = vpack.c.bf16 %v2246, %v2245
      %v2249 = vpack.c.bf16 %v2247, %v2247
      %2250 = vrot.lane.b32.xlu0 %v1817, 48
      %v2251 = vpop.permute.xlu0 %2250
      %2252 = vrot.lane.b32.xlu0 %v1818, 48
      %v2253 = vpop.permute.xlu0 %2252
      %v2256 = vsel %vm1177, %v2248, 0
      %v2259 = vsel %vm1177, %v2249, 0
      %v2262 = vsel %vm1224, %v2253, 0
      %2264 = vmatprep.subr.bf16.mxu0 0
      %2265 = vmatpush1.bf16.msra.mxu0 %v2251
      %2266 = vmatprep.subr.bf16.mxu0 0
      %2267 = vmatpush1.bf16.msra.mxu0 %v2262
      %2268 = vmatprep.subr.bf16.mxu0 0
      %2269 = vmatpush1.bf16.msra.mxu0 0
      %2270 = vmatprep.subr.bf16.mxu0 0
      %2271 = vmatpush1.bf16.msra.mxu0 0
      %2272 = vmatprep.subr.bf16.mxu0 0
      %2273 = vmatpush1.bf16.msra.mxu0 0
      %2274 = vmatprep.subr.bf16.mxu0 0
      %2275 = vmatpush1.bf16.msra.mxu0 0
      %2276 = vmatprep.subr.bf16.mxu0 0
      %2277 = vmatpush1.bf16.msra.mxu0 0
      %2278 = vmatprep.subr.bf16.mxu0 0
      %2279 = vmatpush1.bf16.msra.mxu0 0
      %2280 = vmatprep.subr.bf16.mxu0 0
      %2281 = vmatpush1.bf16.msra.mxu0 0
      %2282 = vmatprep.subr.bf16.mxu0 0
      %2283 = vmatpush1.bf16.msra.mxu0 0
      %2284 = vmatprep.subr.bf16.mxu0 0
      %2285 = vmatpush1.bf16.msra.mxu0 0
      %2286 = vmatprep.subr.bf16.mxu0 0
      %2287 = vmatpush1.bf16.msra.mxu0 0
      %2288 = vmatprep.subr.bf16.mxu0 0
      %2289 = vmatpush1.bf16.msra.mxu0 0
      %2290 = vmatprep.subr.bf16.mxu0 0
      %2291 = vmatpush1.bf16.msra.mxu0 0
      %2292 = vmatprep.subr.bf16.mxu0 0
      %2293 = vmatpush1.bf16.msra.mxu0 0
      %2294 = vmatprep.subr.bf16.mxu0 0
      %2295 = vmatpush1.bf16.msra.mxu0 0
      %2296 = vmatprep.mubr.bf16.mxu0 0
      %2297 = vmatmul.mubr.bf16.gmra.mrb[0].mxu0 %v2256
      %v2298 = vpop.f32.mrb[0].mxu0
      %v2299 = vadd.f32 0.0, %v2298
      %v2300 = vpop.f32.mrb[0].mxu0
      %v2301 = vpop.f32.mrb[0].mxu0
      %v2302 = vadd.f32 0.0, %v2301
      %v2303 = vpop.f32.mrb[0].mxu0
      %2304 = vmatprep.mubr.bf16.mxu0 0
      %2305 = vmatmul.mubr.bf16.gmra.mrb[0].mxu0 %v2259
      %v2306 = vpop.f32.mrb[0].mxu0
      %v2307 = vadd.f32 0.0, %v2306
      %v2308 = vpop.f32.mrb[0].mxu0
      %v2309 = vpop.f32.mrb[0].mxu0
      %v2310 = vpop.f32.mrb[0].mxu0
      %2311 = vdwg.mxu0
      %2312 = vrot.lane.b32.xlu0 %v1817, 104
      %v2313 = vpop.permute.xlu0 %2312
      %2314 = vrot.lane.b32.xlu0 %v1818, 104
      %v2315 = vpop.permute.xlu0 %2314
      %2316 = vrot.lane.b32.xlu0 %v1817, 72
      %v2317 = vpop.permute.xlu0 %2316
      %2318 = vrot.lane.b32.xlu0 %v1818, 72
      %v2319 = vpop.permute.xlu0 %2318
      %v2321 = vsel %vm1116, %v2313, 0
      %v2324 = vsel %vm1116, %v2315, 0
      %v2327 = vsel %vm1116, %v2317, 0
      %v2330 = vsel %vm1116, %v2319, 0
      %2332 = vmatprep.subr.bf16.mxu0 0
      %2333 = vmatpush1.bf16.xpose.msra.mxu0 %v2327
      %2334 = vmatprep.subr.bf16.mxu0 0
      %2335 = vmatpush1.bf16.xpose.msra.mxu0 %v2330
      %2336 = vmatprep.subr.bf16.mxu0 0
      %2337 = vmatpush1.bf16.xpose.msra.mxu0 0
      %2338 = vmatprep.subr.bf16.mxu0 0
      %2339 = vmatpush1.bf16.xpose.msra.mxu0 0
      %2340 = vmatprep.subr.bf16.mxu0 0
      %2341 = vmatpush1.bf16.xpose.msra.mxu0 0
      %2342 = vmatprep.subr.bf16.mxu0 0
      %2343 = vmatpush1.bf16.xpose.msra.mxu0 0
      %2344 = vmatprep.subr.bf16.mxu0 0
      %2345 = vmatpush1.bf16.xpose.msra.mxu0 0
      %2346 = vmatprep.subr.bf16.mxu0 0
      %2347 = vmatpush1.bf16.xpose.msra.mxu0 0
      %2348 = vmatprep.subr.bf16.mxu0 0
      %2349 = vmatpush1.bf16.xpose.msra.mxu0 0
      %2350 = vmatprep.subr.bf16.mxu0 0
      %2351 = vmatpush1.bf16.xpose.msra.mxu0 0
      %2352 = vmatprep.subr.bf16.mxu0 0
      %2353 = vmatpush1.bf16.xpose.msra.mxu0 0
      %2354 = vmatprep.subr.bf16.mxu0 0
      %2355 = vmatpush1.bf16.xpose.msra.mxu0 0
      %2356 = vmatprep.subr.bf16.mxu0 0
      %2357 = vmatpush1.bf16.xpose.msra.mxu0 0
      %2358 = vmatprep.subr.bf16.mxu0 0
      %2359 = vmatpush1.bf16.xpose.msra.mxu0 0
      %2360 = vmatprep.subr.bf16.mxu0 0
      %2361 = vmatpush1.bf16.xpose.msra.mxu0 0
      %2362 = vmatprep.subr.bf16.mxu0 0
      %2363 = vmatpush1.bf16.xpose.msra.mxu0 0
      %2364 = vmatprep.mubr.bf16.mxu0 0
      %2365 = vmatmul.mubr.bf16.gmra.mrb[0].mxu0 %v2321
      %v2366 = vpop.f32.mrb[0].mxu0
      %v2367 = vadd.f32 %v420, %v2366
      %v2368 = vpop.f32.mrb[0].mxu0
      %v2369 = vpop.f32.mrb[0].mxu0
      %v2370 = vadd.f32 %v420, %v2369
      %v2371 = vpop.f32.mrb[0].mxu0
      %2372 = vmatprep.mubr.bf16.mxu0 0
      %2373 = vmatmul.mubr.bf16.gmra.mrb[0].mxu0 %v2324
      %v2374 = vpop.f32.mrb[0].mxu0
      %v2375 = vadd.f32 %v420, %v2374
      %v2376 = vpop.f32.mrb[0].mxu0
      %v2377 = vpop.f32.mrb[0].mxu0
      %v2378 = vpop.f32.mrb[0].mxu0
      %2379 = vdwg.mxu0
      %v2380 = vsel %vm1177, %v2367, -inf
      %2381 = vmax.xlane.f32.xlu0 %v2380
      %v2382 = vpop.xlane.xlu0 %2381
      %v2383 = vsel %vm1177, %v2370, -inf
      %2384 = vmax.xlane.f32.xlu0 %v2383
      %v2385 = vpop.xlane.xlu0 %2384
      %v2386 = vsel %vm1177, %v2375, -inf
      %2387 = vmax.xlane.f32.xlu0 %v2386
      %v2388 = vpop.xlane.xlu0 %2387
      %v2389 = vsub.f32 %v2367, %v2382
      %v2390 = vsub.f32 %v2370, %v2385
      %v2391 = vsub.f32 %v2375, %v2388
      %v2392 = vmul.f32 %v2389, 1.442695
      %v2393 = vpow.pop %v2392
      %v2394 = vmul.f32 %v2390, 1.442695
      %v2395 = vpow.pop %v2394
      %v2396 = vmul.f32 %v2391, 1.442695
      %v2397 = vpow.pop %v2396
      %v2398 = vsel %vm1177, %v2393, 0.0
      %2399 = vadd.xlane.f32.xlu0 %v2398
      %v2400 = vpop.xlane.xlu0 %2399
      %v2401 = vsel %vm1177, %v2395, 0.0
      %2402 = vadd.xlane.f32.xlu0 %v2401
      %v2403 = vpop.xlane.xlu0 %2402
      %v2404 = vsel %vm1177, %v2397, 0.0
      %2405 = vadd.xlane.f32.xlu0 %v2404
      %v2406 = vpop.xlane.xlu0 %2405
      %v2407 = vrcp.pop %v2400
      %v2408 = vrcp.pop %v2403
      %v2409 = vrcp.pop %v2406
      %v2410 = vmul.f32 %v2393, %v2407
      %v2411 = vmul.f32 %v2395, %v2408
      %v2412 = vmul.f32 %v2397, %v2409
      %v2413 = vpack.c.bf16 %v2411, %v2410
      %v2414 = vpack.c.bf16 %v2412, %v2412
      %2415 = vrot.lane.b32.xlu0 %v1817, 40
      %v2416 = vpop.permute.xlu0 %2415
      %2417 = vrot.lane.b32.xlu0 %v1818, 40
      %v2418 = vpop.permute.xlu0 %2417
      %v2421 = vsel %vm1177, %v2413, 0
      %v2424 = vsel %vm1177, %v2414, 0
      %v2427 = vsel %vm1224, %v2418, 0
      %2429 = vmatprep.subr.bf16.mxu0 0
      %2430 = vmatpush1.bf16.msra.mxu0 %v2416
      %2431 = vmatprep.subr.bf16.mxu0 0
      %2432 = vmatpush1.bf16.msra.mxu0 %v2427
      %2433 = vmatprep.subr.bf16.mxu0 0
      %2434 = vmatpush1.bf16.msra.mxu0 0
      %2435 = vmatprep.subr.bf16.mxu0 0
      %2436 = vmatpush1.bf16.msra.mxu0 0
      %2437 = vmatprep.subr.bf16.mxu0 0
      %2438 = vmatpush1.bf16.msra.mxu0 0
      %2439 = vmatprep.subr.bf16.mxu0 0
      %2440 = vmatpush1.bf16.msra.mxu0 0
      %2441 = vmatprep.subr.bf16.mxu0 0
      %2442 = vmatpush1.bf16.msra.mxu0 0
      %2443 = vmatprep.subr.bf16.mxu0 0
      %2444 = vmatpush1.bf16.msra.mxu0 0
      %2445 = vmatprep.subr.bf16.mxu0 0
      %2446 = vmatpush1.bf16.msra.mxu0 0
      %2447 = vmatprep.subr.bf16.mxu0 0
      %2448 = vmatpush1.bf16.msra.mxu0 0
      %2449 = vmatprep.subr.bf16.mxu0 0
      %2450 = vmatpush1.bf16.msra.mxu0 0
      %2451 = vmatprep.subr.bf16.mxu0 0
      %2452 = vmatpush1.bf16.msra.mxu0 0
      %2453 = vmatprep.subr.bf16.mxu0 0
      %2454 = vmatpush1.bf16.msra.mxu0 0
      %2455 = vmatprep.subr.bf16.mxu0 0
      %2456 = vmatpush1.bf16.msra.mxu0 0
      %2457 = vmatprep.subr.bf16.mxu0 0
      %2458 = vmatpush1.bf16.msra.mxu0 0
      %2459 = vmatprep.subr.bf16.mxu0 0
      %2460 = vmatpush1.bf16.msra.mxu0 0
      %2461 = vmatprep.mubr.bf16.mxu0 0
      %2462 = vmatmul.mubr.bf16.gmra.mrb[0].mxu0 %v2421
      %v2463 = vpop.f32.mrb[0].mxu0
      %v2464 = vadd.f32 0.0, %v2463
      %v2465 = vpop.f32.mrb[0].mxu0
      %v2466 = vpop.f32.mrb[0].mxu0
      %v2467 = vadd.f32 0.0, %v2466
      %v2468 = vpop.f32.mrb[0].mxu0
      %2469 = vmatprep.mubr.bf16.mxu0 0
      %2470 = vmatmul.mubr.bf16.gmra.mrb[0].mxu0 %v2424
      %v2471 = vpop.f32.mrb[0].mxu0
      %v2472 = vadd.f32 0.0, %v2471
      %v2473 = vpop.f32.mrb[0].mxu0
      %v2474 = vpop.f32.mrb[0].mxu0
      %v2475 = vpop.f32.mrb[0].mxu0
      %2476 = vdwg.mxu0
      %2480 = vrot.lane.b32.xlu0 %v2134, 8
      %v2481 = vpop.permute.xlu0 %2480
      %2482 = vrot.lane.b32.xlu0 %v2137, 8
      %v2483 = vpop.permute.xlu0 %2482
      %2484 = vrot.lane.b32.xlu0 %v2142, 8
      %v2485 = vpop.permute.xlu0 %2484
      %2492 = vrot.lane.b32.xlu0 %v2299, 16
      %v2493 = vpop.permute.xlu0 %2492
      %2494 = vrot.lane.b32.xlu0 %v2302, 16
      %v2495 = vpop.permute.xlu0 %2494
      %2496 = vrot.lane.b32.xlu0 %v2307, 16
      %v2497 = vpop.permute.xlu0 %2496
      %2504 = vrot.lane.b32.xlu0 %v2464, 24
      %v2505 = vpop.permute.xlu0 %2504
      %2506 = vrot.lane.b32.xlu0 %v2467, 24
      %v2507 = vpop.permute.xlu0 %2506
      %2508 = vrot.lane.b32.xlu0 %v2472, 24
      %v2509 = vpop.permute.xlu0 %2508
      %v2513 = vsel %vm1116, %v1969, %v2481
      %v2514 = vsel %vm1116, %v1972, %v2483
      %v2515 = vsel %vm1116, %v1977, %v2485
      %v2516 = vsel %vm1810, %v2513, %v2493
      %v2517 = vsel %vm1810, %v2514, %v2495
      %v2518 = vsel %vm1810, %v2515, %v2497
      %v2519 = vsel %vm1177, %v2516, %v2505
      %v2520 = vsel %vm1177, %v2517, %v2507
      %v2521 = vsel %vm1177, %v2518, %v2509
      %v2522 = vpack.c.bf16 %v1089, %v1086
      %v2523 = vpack.c.bf16 %v1094, %v1094
      %2526 = vrot.lane.b32.xlu0 %v2522, 96
      %v2527 = vpop.permute.xlu0 %2526
      %2528 = vrot.lane.b32.xlu0 %v2523, 96
      %v2529 = vpop.permute.xlu0 %2528
      %v2531 = vsel %vm1116, %v2522, 0
      %v2534 = vsel %vm1116, %v2523, 0
      %v2537 = vsel %vm1116, %v2527, 0
      %v2540 = vsel %vm1116, %v2529, 0
      %2542 = vmatprep.subr.bf16.mxu0 0
      %2543 = vmatpush1.bf16.xpose.msra.mxu0 %v2537
      %2544 = vmatprep.subr.bf16.mxu0 0
      %2545 = vmatpush1.bf16.xpose.msra.mxu0 %v2540
      %2546 = vmatprep.subr.bf16.mxu0 0
      %2547 = vmatpush1.bf16.xpose.msra.mxu0 0
      %2548 = vmatprep.subr.bf16.mxu0 0
      %2549 = vmatpush1.bf16.xpose.msra.mxu0 0
      %2550 = vmatprep.subr.bf16.mxu0 0
      %2551 = vmatpush1.bf16.xpose.msra.mxu0 0
      %2552 = vmatprep.subr.bf16.mxu0 0
      %2553 = vmatpush1.bf16.xpose.msra.mxu0 0
      %2554 = vmatprep.subr.bf16.mxu0 0
      %2555 = vmatpush1.bf16.xpose.msra.mxu0 0
      %2556 = vmatprep.subr.bf16.mxu0 0
      %2557 = vmatpush1.bf16.xpose.msra.mxu0 0
      %2558 = vmatprep.subr.bf16.mxu0 0
      %2559 = vmatpush1.bf16.xpose.msra.mxu0 0
      %2560 = vmatprep.subr.bf16.mxu0 0
      %2561 = vmatpush1.bf16.xpose.msra.mxu0 0
      %2562 = vmatprep.subr.bf16.mxu0 0
      %2563 = vmatpush1.bf16.xpose.msra.mxu0 0
      %2564 = vmatprep.subr.bf16.mxu0 0
      %2565 = vmatpush1.bf16.xpose.msra.mxu0 0
      %2566 = vmatprep.subr.bf16.mxu0 0
      %2567 = vmatpush1.bf16.xpose.msra.mxu0 0
      %2568 = vmatprep.subr.bf16.mxu0 0
      %2569 = vmatpush1.bf16.xpose.msra.mxu0 0
      %2570 = vmatprep.subr.bf16.mxu0 0
      %2571 = vmatpush1.bf16.xpose.msra.mxu0 0
      %2572 = vmatprep.subr.bf16.mxu0 0
      %2573 = vmatpush1.bf16.xpose.msra.mxu0 0
      %2574 = vmatprep.mubr.bf16.mxu0 0
      %2575 = vmatmul.mubr.bf16.gmra.mrb[0].mxu0 %v2531
      %v2576 = vpop.f32.mrb[0].mxu0
      %v2577 = vadd.f32 %v420, %v2576
      %v2578 = vpop.f32.mrb[0].mxu0
      %v2579 = vpop.f32.mrb[0].mxu0
      %v2580 = vadd.f32 %v420, %v2579
      %v2581 = vpop.f32.mrb[0].mxu0
      %2582 = vmatprep.mubr.bf16.mxu0 0
      %2583 = vmatmul.mubr.bf16.gmra.mrb[0].mxu0 %v2534
      %v2584 = vpop.f32.mrb[0].mxu0
      %v2585 = vadd.f32 %v420, %v2584
      %v2586 = vpop.f32.mrb[0].mxu0
      %v2587 = vpop.f32.mrb[0].mxu0
      %v2588 = vpop.f32.mrb[0].mxu0
      %2589 = vdwg.mxu0
      %v2590 = vsel %vm1177, %v2577, -inf
      %2591 = vmax.xlane.f32.xlu0 %v2590
      %v2592 = vpop.xlane.xlu0 %2591
      %v2593 = vsel %vm1177, %v2580, -inf
      %2594 = vmax.xlane.f32.xlu0 %v2593
      %v2595 = vpop.xlane.xlu0 %2594
      %v2596 = vsel %vm1177, %v2585, -inf
      %2597 = vmax.xlane.f32.xlu0 %v2596
      %v2598 = vpop.xlane.xlu0 %2597
      %v2599 = vsub.f32 %v2577, %v2592
      %v2600 = vsub.f32 %v2580, %v2595
      %v2601 = vsub.f32 %v2585, %v2598
      %v2602 = vmul.f32 %v2599, 1.442695
      %v2603 = vpow.pop %v2602
      %v2604 = vmul.f32 %v2600, 1.442695
      %v2605 = vpow.pop %v2604
      %v2606 = vmul.f32 %v2601, 1.442695
      %v2607 = vpow.pop %v2606
      %v2608 = vsel %vm1177, %v2603, 0.0
      %2609 = vadd.xlane.f32.xlu0 %v2608
      %v2610 = vpop.xlane.xlu0 %2609
      %v2611 = vsel %vm1177, %v2605, 0.0
      %2612 = vadd.xlane.f32.xlu0 %v2611
      %v2613 = vpop.xlane.xlu0 %2612
      %v2614 = vsel %vm1177, %v2607, 0.0
      %2615 = vadd.xlane.f32.xlu0 %v2614
      %v2616 = vpop.xlane.xlu0 %2615
      %v2617 = vrcp.pop %v2610
      %v2618 = vrcp.pop %v2613
      %v2619 = vrcp.pop %v2616
      %v2620 = vmul.f32 %v2603, %v2617
      %v2621 = vmul.f32 %v2605, %v2618
      %v2622 = vmul.f32 %v2607, %v2619
      %v2623 = vpack.c.bf16 %v2621, %v2620
      %v2624 = vpack.c.bf16 %v2622, %v2622
      %2625 = vrot.lane.b32.xlu0 %v2522, 64
      %v2626 = vpop.permute.xlu0 %2625
      %2627 = vrot.lane.b32.xlu0 %v2523, 64
      %v2628 = vpop.permute.xlu0 %2627
      %v2631 = vsel %vm1177, %v2623, 0
      %v2634 = vsel %vm1177, %v2624, 0
      %v2637 = vsel %vm1224, %v2628, 0
      %2639 = vmatprep.subr.bf16.mxu0 0
      %2640 = vmatpush1.bf16.msra.mxu0 %v2626
      %2641 = vmatprep.subr.bf16.mxu0 0
      %2642 = vmatpush1.bf16.msra.mxu0 %v2637
      %2643 = vmatprep.subr.bf16.mxu0 0
      %2644 = vmatpush1.bf16.msra.mxu0 0
      %2645 = vmatprep.subr.bf16.mxu0 0
      %2646 = vmatpush1.bf16.msra.mxu0 0
      %2647 = vmatprep.subr.bf16.mxu0 0
      %2648 = vmatpush1.bf16.msra.mxu0 0
      %2649 = vmatprep.subr.bf16.mxu0 0
      %2650 = vmatpush1.bf16.msra.mxu0 0
      %2651 = vmatprep.subr.bf16.mxu0 0
      %2652 = vmatpush1.bf16.msra.mxu0 0
      %2653 = vmatprep.subr.bf16.mxu0 0
      %2654 = vmatpush1.bf16.msra.mxu0 0
      %2655 = vmatprep.subr.bf16.mxu0 0
      %2656 = vmatpush1.bf16.msra.mxu0 0
      %2657 = vmatprep.subr.bf16.mxu0 0
      %2658 = vmatpush1.bf16.msra.mxu0 0
      %2659 = vmatprep.subr.bf16.mxu0 0
      %2660 = vmatpush1.bf16.msra.mxu0 0
      %2661 = vmatprep.subr.bf16.mxu0 0
      %2662 = vmatpush1.bf16.msra.mxu0 0
      %2663 = vmatprep.subr.bf16.mxu0 0
      %2664 = vmatpush1.bf16.msra.mxu0 0
      %2665 = vmatprep.subr.bf16.mxu0 0
      %2666 = vmatpush1.bf16.msra.mxu0 0
      %2667 = vmatprep.subr.bf16.mxu0 0
      %2668 = vmatpush1.bf16.msra.mxu0 0
      %2669 = vmatprep.subr.bf16.mxu0 0
      %2670 = vmatpush1.bf16.msra.mxu0 0
      %2671 = vmatprep.mubr.bf16.mxu0 0
      %2672 = vmatmul.mubr.bf16.gmra.mrb[0].mxu0 %v2631
      %v2673 = vpop.f32.mrb[0].mxu0
      %v2674 = vadd.f32 0.0, %v2673
      %v2675 = vpop.f32.mrb[0].mxu0
      %v2676 = vpop.f32.mrb[0].mxu0
      %v2677 = vadd.f32 0.0, %v2676
      %v2678 = vpop.f32.mrb[0].mxu0
      %2679 = vmatprep.mubr.bf16.mxu0 0
      %2680 = vmatmul.mubr.bf16.gmra.mrb[0].mxu0 %v2634
      %v2681 = vpop.f32.mrb[0].mxu0
      %v2682 = vadd.f32 0.0, %v2681
      %v2683 = vpop.f32.mrb[0].mxu0
      %v2684 = vpop.f32.mrb[0].mxu0
      %v2685 = vpop.f32.mrb[0].mxu0
      %2686 = vdwg.mxu0
      %2687 = vrot.lane.b32.xlu0 %v2522, 120
      %v2688 = vpop.permute.xlu0 %2687
      %2689 = vrot.lane.b32.xlu0 %v2523, 120
      %v2690 = vpop.permute.xlu0 %2689
      %2691 = vrot.lane.b32.xlu0 %v2522, 88
      %v2692 = vpop.permute.xlu0 %2691
      %2693 = vrot.lane.b32.xlu0 %v2523, 88
      %v2694 = vpop.permute.xlu0 %2693
      %v2696 = vsel %vm1116, %v2688, 0
      %v2699 = vsel %vm1116, %v2690, 0
      %v2702 = vsel %vm1116, %v2692, 0
      %v2705 = vsel %vm1116, %v2694, 0
      %2707 = vmatprep.subr.bf16.mxu0 0
      %2708 = vmatpush1.bf16.xpose.msra.mxu0 %v2702
      %2709 = vmatprep.subr.bf16.mxu0 0
      %2710 = vmatpush1.bf16.xpose.msra.mxu0 %v2705
      %2711 = vmatprep.subr.bf16.mxu0 0
      %2712 = vmatpush1.bf16.xpose.msra.mxu0 0
      %2713 = vmatprep.subr.bf16.mxu0 0
      %2714 = vmatpush1.bf16.xpose.msra.mxu0 0
      %2715 = vmatprep.subr.bf16.mxu0 0
      %2716 = vmatpush1.bf16.xpose.msra.mxu0 0
      %2717 = vmatprep.subr.bf16.mxu0 0
      %2718 = vmatpush1.bf16.xpose.msra.mxu0 0
      %2719 = vmatprep.subr.bf16.mxu0 0
      %2720 = vmatpush1.bf16.xpose.msra.mxu0 0
      %2721 = vmatprep.subr.bf16.mxu0 0
      %2722 = vmatpush1.bf16.xpose.msra.mxu0 0
      %2723 = vmatprep.subr.bf16.mxu0 0
      %2724 = vmatpush1.bf16.xpose.msra.mxu0 0
      %2725 = vmatprep.subr.bf16.mxu0 0
      %2726 = vmatpush1.bf16.xpose.msra.mxu0 0
      %2727 = vmatprep.subr.bf16.mxu0 0
      %2728 = vmatpush1.bf16.xpose.msra.mxu0 0
      %2729 = vmatprep.subr.bf16.mxu0 0
      %2730 = vmatpush1.bf16.xpose.msra.mxu0 0
      %2731 = vmatprep.subr.bf16.mxu0 0
      %2732 = vmatpush1.bf16.xpose.msra.mxu0 0
      %2733 = vmatprep.subr.bf16.mxu0 0
      %2734 = vmatpush1.bf16.xpose.msra.mxu0 0
      %2735 = vmatprep.subr.bf16.mxu0 0
      %2736 = vmatpush1.bf16.xpose.msra.mxu0 0
      %2737 = vmatprep.subr.bf16.mxu0 0
      %2738 = vmatpush1.bf16.xpose.msra.mxu0 0
      %2739 = vmatprep.mubr.bf16.mxu0 0
      %2740 = vmatmul.mubr.bf16.gmra.mrb[0].mxu0 %v2696
      %v2741 = vpop.f32.mrb[0].mxu0
      %v2742 = vadd.f32 %v420, %v2741
      %v2743 = vpop.f32.mrb[0].mxu0
      %v2744 = vpop.f32.mrb[0].mxu0
      %v2745 = vadd.f32 %v420, %v2744
      %v2746 = vpop.f32.mrb[0].mxu0
      %2747 = vmatprep.mubr.bf16.mxu0 0
      %2748 = vmatmul.mubr.bf16.gmra.mrb[0].mxu0 %v2699
      %v2749 = vpop.f32.mrb[0].mxu0
      %v2750 = vadd.f32 %v420, %v2749
      %v2751 = vpop.f32.mrb[0].mxu0
      %v2752 = vpop.f32.mrb[0].mxu0
      %v2753 = vpop.f32.mrb[0].mxu0
      %2754 = vdwg.mxu0
      %v2755 = vsel %vm1177, %v2742, -inf
      %2756 = vmax.xlane.f32.xlu0 %v2755
      %v2757 = vpop.xlane.xlu0 %2756
      %v2758 = vsel %vm1177, %v2745, -inf
      %2759 = vmax.xlane.f32.xlu0 %v2758
      %v2760 = vpop.xlane.xlu0 %2759
      %v2761 = vsel %vm1177, %v2750, -inf
      %2762 = vmax.xlane.f32.xlu0 %v2761
      %v2763 = vpop.xlane.xlu0 %2762
      %v2764 = vsub.f32 %v2742, %v2757
      %v2765 = vsub.f32 %v2745, %v2760
      %v2766 = vsub.f32 %v2750, %v2763
      %v2767 = vmul.f32 %v2764, 1.442695
      %v2768 = vpow.pop %v2767
      %v2769 = vmul.f32 %v2765, 1.442695
      %v2770 = vpow.pop %v2769
      %v2771 = vmul.f32 %v2766, 1.442695
      %v2772 = vpow.pop %v2771
      %v2773 = vsel %vm1177, %v2768, 0.0
      %2774 = vadd.xlane.f32.xlu0 %v2773
      %v2775 = vpop.xlane.xlu0 %2774
      %v2776 = vsel %vm1177, %v2770, 0.0
      %2777 = vadd.xlane.f32.xlu0 %v2776
      %v2778 = vpop.xlane.xlu0 %2777
      %v2779 = vsel %vm1177, %v2772, 0.0
      %2780 = vadd.xlane.f32.xlu0 %v2779
      %v2781 = vpop.xlane.xlu0 %2780
      %v2782 = vrcp.pop %v2775
      %v2783 = vrcp.pop %v2778
      %v2784 = vrcp.pop %v2781
      %v2785 = vmul.f32 %v2768, %v2782
      %v2786 = vmul.f32 %v2770, %v2783
      %v2787 = vmul.f32 %v2772, %v2784
      %v2788 = vpack.c.bf16 %v2786, %v2785
      %v2789 = vpack.c.bf16 %v2787, %v2787
      %2790 = vrot.lane.b32.xlu0 %v2522, 56
      %v2791 = vpop.permute.xlu0 %2790
      %2792 = vrot.lane.b32.xlu0 %v2523, 56
      %v2793 = vpop.permute.xlu0 %2792
      %v2796 = vsel %vm1177, %v2788, 0
      %v2799 = vsel %vm1177, %v2789, 0
      %v2802 = vsel %vm1224, %v2793, 0
      %2804 = vmatprep.subr.bf16.mxu0 0
      %2805 = vmatpush1.bf16.msra.mxu0 %v2791
      %2806 = vmatprep.subr.bf16.mxu0 0
      %2807 = vmatpush1.bf16.msra.mxu0 %v2802
      %2808 = vmatprep.subr.bf16.mxu0 0
      %2809 = vmatpush1.bf16.msra.mxu0 0
      %2810 = vmatprep.subr.bf16.mxu0 0
      %2811 = vmatpush1.bf16.msra.mxu0 0
      %2812 = vmatprep.subr.bf16.mxu0 0
      %2813 = vmatpush1.bf16.msra.mxu0 0
      %2814 = vmatprep.subr.bf16.mxu0 0
      %2815 = vmatpush1.bf16.msra.mxu0 0
      %2816 = vmatprep.subr.bf16.mxu0 0
      %2817 = vmatpush1.bf16.msra.mxu0 0
      %2818 = vmatprep.subr.bf16.mxu0 0
      %2819 = vmatpush1.bf16.msra.mxu0 0
      %2820 = vmatprep.subr.bf16.mxu0 0
      %2821 = vmatpush1.bf16.msra.mxu0 0
      %2822 = vmatprep.subr.bf16.mxu0 0
      %2823 = vmatpush1.bf16.msra.mxu0 0
      %2824 = vmatprep.subr.bf16.mxu0 0
      %2825 = vmatpush1.bf16.msra.mxu0 0
      %2826 = vmatprep.subr.bf16.mxu0 0
      %2827 = vmatpush1.bf16.msra.mxu0 0
      %2828 = vmatprep.subr.bf16.mxu0 0
      %2829 = vmatpush1.bf16.msra.mxu0 0
      %2830 = vmatprep.subr.bf16.mxu0 0
      %2831 = vmatpush1.bf16.msra.mxu0 0
      %2832 = vmatprep.subr.bf16.mxu0 0
      %2833 = vmatpush1.bf16.msra.mxu0 0
      %2834 = vmatprep.subr.bf16.mxu0 0
      %2835 = vmatpush1.bf16.msra.mxu0 0
      %2836 = vmatprep.mubr.bf16.mxu0 0
      %2837 = vmatmul.mubr.bf16.gmra.mrb[0].mxu0 %v2796
      %v2838 = vpop.f32.mrb[0].mxu0
      %v2839 = vadd.f32 0.0, %v2838
      %v2840 = vpop.f32.mrb[0].mxu0
      %v2841 = vpop.f32.mrb[0].mxu0
      %v2842 = vadd.f32 0.0, %v2841
      %v2843 = vpop.f32.mrb[0].mxu0
      %2844 = vmatprep.mubr.bf16.mxu0 0
      %2845 = vmatmul.mubr.bf16.gmra.mrb[0].mxu0 %v2799
      %v2846 = vpop.f32.mrb[0].mxu0
      %v2847 = vadd.f32 0.0, %v2846
      %v2848 = vpop.f32.mrb[0].mxu0
      %v2849 = vpop.f32.mrb[0].mxu0
      %v2850 = vpop.f32.mrb[0].mxu0
      %2851 = vdwg.mxu0
      %2852 = vrot.lane.b32.xlu0 %v2522, 112
      %v2853 = vpop.permute.xlu0 %2852
      %2854 = vrot.lane.b32.xlu0 %v2523, 112
      %v2855 = vpop.permute.xlu0 %2854
      %2856 = vrot.lane.b32.xlu0 %v2522, 80
      %v2857 = vpop.permute.xlu0 %2856
      %2858 = vrot.lane.b32.xlu0 %v2523, 80
      %v2859 = vpop.permute.xlu0 %2858
      %v2861 = vsel %vm1116, %v2853, 0
      %v2864 = vsel %vm1116, %v2855, 0
      %v2867 = vsel %vm1116, %v2857, 0
      %v2870 = vsel %vm1116, %v2859, 0
      %2872 = vmatprep.subr.bf16.mxu0 0
      %2873 = vmatpush1.bf16.xpose.msra.mxu0 %v2867
      %2874 = vmatprep.subr.bf16.mxu0 0
      %2875 = vmatpush1.bf16.xpose.msra.mxu0 %v2870
      %2876 = vmatprep.subr.bf16.mxu0 0
      %2877 = vmatpush1.bf16.xpose.msra.mxu0 0
      %2878 = vmatprep.subr.bf16.mxu0 0
      %2879 = vmatpush1.bf16.xpose.msra.mxu0 0
      %2880 = vmatprep.subr.bf16.mxu0 0
      %2881 = vmatpush1.bf16.xpose.msra.mxu0 0
      %2882 = vmatprep.subr.bf16.mxu0 0
      %2883 = vmatpush1.bf16.xpose.msra.mxu0 0
      %2884 = vmatprep.subr.bf16.mxu0 0
      %2885 = vmatpush1.bf16.xpose.msra.mxu0 0
      %2886 = vmatprep.subr.bf16.mxu0 0
      %2887 = vmatpush1.bf16.xpose.msra.mxu0 0
      %2888 = vmatprep.subr.bf16.mxu0 0
      %2889 = vmatpush1.bf16.xpose.msra.mxu0 0
      %2890 = vmatprep.subr.bf16.mxu0 0
      %2891 = vmatpush1.bf16.xpose.msra.mxu0 0
      %2892 = vmatprep.subr.bf16.mxu0 0
      %2893 = vmatpush1.bf16.xpose.msra.mxu0 0
      %2894 = vmatprep.subr.bf16.mxu0 0
      %2895 = vmatpush1.bf16.xpose.msra.mxu0 0
      %2896 = vmatprep.subr.bf16.mxu0 0
      %2897 = vmatpush1.bf16.xpose.msra.mxu0 0
      %2898 = vmatprep.subr.bf16.mxu0 0
      %2899 = vmatpush1.bf16.xpose.msra.mxu0 0
      %2900 = vmatprep.subr.bf16.mxu0 0
      %2901 = vmatpush1.bf16.xpose.msra.mxu0 0
      %2902 = vmatprep.subr.bf16.mxu0 0
      %2903 = vmatpush1.bf16.xpose.msra.mxu0 0
      %2904 = vmatprep.mubr.bf16.mxu0 0
      %2905 = vmatmul.mubr.bf16.gmra.mrb[0].mxu0 %v2861
      %v2906 = vpop.f32.mrb[0].mxu0
      %v2907 = vadd.f32 %v420, %v2906
      %v2908 = vpop.f32.mrb[0].mxu0
      %v2909 = vpop.f32.mrb[0].mxu0
      %v2910 = vadd.f32 %v420, %v2909
      %v2911 = vpop.f32.mrb[0].mxu0
      %2912 = vmatprep.mubr.bf16.mxu0 0
      %2913 = vmatmul.mubr.bf16.gmra.mrb[0].mxu0 %v2864
      %v2914 = vpop.f32.mrb[0].mxu0
      %v2915 = vadd.f32 %v420, %v2914
      %v2916 = vpop.f32.mrb[0].mxu0
      %v2917 = vpop.f32.mrb[0].mxu0
      %v2918 = vpop.f32.mrb[0].mxu0
      %2919 = vdwg.mxu0
      %v2920 = vsel %vm1177, %v2907, -inf
      %2921 = vmax.xlane.f32.xlu0 %v2920
      %v2922 = vpop.xlane.xlu0 %2921
      %v2923 = vsel %vm1177, %v2910, -inf
      %2924 = vmax.xlane.f32.xlu0 %v2923
      %v2925 = vpop.xlane.xlu0 %2924
      %v2926 = vsel %vm1177, %v2915, -inf
      %2927 = vmax.xlane.f32.xlu0 %v2926
      %v2928 = vpop.xlane.xlu0 %2927
      %v2929 = vsub.f32 %v2907, %v2922
      %v2930 = vsub.f32 %v2910, %v2925
      %v2931 = vsub.f32 %v2915, %v2928
      %v2932 = vmul.f32 %v2929, 1.442695
      %v2933 = vpow.pop %v2932
      %v2934 = vmul.f32 %v2930, 1.442695
      %v2935 = vpow.pop %v2934
      %v2936 = vmul.f32 %v2931, 1.442695
      %v2937 = vpow.pop %v2936
      %v2938 = vsel %vm1177, %v2933, 0.0
      %2939 = vadd.xlane.f32.xlu0 %v2938
      %v2940 = vpop.xlane.xlu0 %2939
      %v2941 = vsel %vm1177, %v2935, 0.0
      %2942 = vadd.xlane.f32.xlu0 %v2941
      %v2943 = vpop.xlane.xlu0 %2942
      %v2944 = vsel %vm1177, %v2937, 0.0
      %2945 = vadd.xlane.f32.xlu0 %v2944
      %v2946 = vpop.xlane.xlu0 %2945
      %v2947 = vrcp.pop %v2940
      %v2948 = vrcp.pop %v2943
      %v2949 = vrcp.pop %v2946
      %v2950 = vmul.f32 %v2933, %v2947
      %v2951 = vmul.f32 %v2935, %v2948
      %v2952 = vmul.f32 %v2937, %v2949
      %v2953 = vpack.c.bf16 %v2951, %v2950
      %v2954 = vpack.c.bf16 %v2952, %v2952
      %2955 = vrot.lane.b32.xlu0 %v2522, 48
      %v2956 = vpop.permute.xlu0 %2955
      %2957 = vrot.lane.b32.xlu0 %v2523, 48
      %v2958 = vpop.permute.xlu0 %2957
      %v2961 = vsel %vm1177, %v2953, 0
      %v2964 = vsel %vm1177, %v2954, 0
      %v2967 = vsel %vm1224, %v2958, 0
      %2969 = vmatprep.subr.bf16.mxu0 0
      %2970 = vmatpush1.bf16.msra.mxu0 %v2956
      %2971 = vmatprep.subr.bf16.mxu0 0
      %2972 = vmatpush1.bf16.msra.mxu0 %v2967
      %2973 = vmatprep.subr.bf16.mxu0 0
      %2974 = vmatpush1.bf16.msra.mxu0 0
      %2975 = vmatprep.subr.bf16.mxu0 0
      %2976 = vmatpush1.bf16.msra.mxu0 0
      %2977 = vmatprep.subr.bf16.mxu0 0
      %2978 = vmatpush1.bf16.msra.mxu0 0
      %2979 = vmatprep.subr.bf16.mxu0 0
      %2980 = vmatpush1.bf16.msra.mxu0 0
      %2981 = vmatprep.subr.bf16.mxu0 0
      %2982 = vmatpush1.bf16.msra.mxu0 0
      %2983 = vmatprep.subr.bf16.mxu0 0
      %2984 = vmatpush1.bf16.msra.mxu0 0
      %2985 = vmatprep.subr.bf16.mxu0 0
      %2986 = vmatpush1.bf16.msra.mxu0 0
      %2987 = vmatprep.subr.bf16.mxu0 0
      %2988 = vmatpush1.bf16.msra.mxu0 0
      %2989 = vmatprep.subr.bf16.mxu0 0
      %2990 = vmatpush1.bf16.msra.mxu0 0
      %2991 = vmatprep.subr.bf16.mxu0 0
      %2992 = vmatpush1.bf16.msra.mxu0 0
      %2993 = vmatprep.subr.bf16.mxu0 0
      %2994 = vmatpush1.bf16.msra.mxu0 0
      %2995 = vmatprep.subr.bf16.mxu0 0
      %2996 = vmatpush1.bf16.msra.mxu0 0
      %2997 = vmatprep.subr.bf16.mxu0 0
      %2998 = vmatpush1.bf16.msra.mxu0 0
      %2999 = vmatprep.subr.bf16.mxu0 0
      %3000 = vmatpush1.bf16.msra.mxu0 0
      %3001 = vmatprep.mubr.bf16.mxu0 0
      %3002 = vmatmul.mubr.bf16.gmra.mrb[0].mxu0 %v2961
      %v3003 = vpop.f32.mrb[0].mxu0
      %v3004 = vadd.f32 0.0, %v3003
      %v3005 = vpop.f32.mrb[0].mxu0
      %v3006 = vpop.f32.mrb[0].mxu0
      %v3007 = vadd.f32 0.0, %v3006
      %v3008 = vpop.f32.mrb[0].mxu0
      %3009 = vmatprep.mubr.bf16.mxu0 0
      %3010 = vmatmul.mubr.bf16.gmra.mrb[0].mxu0 %v2964
      %v3011 = vpop.f32.mrb[0].mxu0
      %v3012 = vadd.f32 0.0, %v3011
      %v3013 = vpop.f32.mrb[0].mxu0
      %v3014 = vpop.f32.mrb[0].mxu0
      %v3015 = vpop.f32.mrb[0].mxu0
      %3016 = vdwg.mxu0
      %3017 = vrot.lane.b32.xlu0 %v2522, 104
      %v3018 = vpop.permute.xlu0 %3017
      %3019 = vrot.lane.b32.xlu0 %v2523, 104
      %v3020 = vpop.permute.xlu0 %3019
      %3021 = vrot.lane.b32.xlu0 %v2522, 72
      %v3022 = vpop.permute.xlu0 %3021
      %3023 = vrot.lane.b32.xlu0 %v2523, 72
      %v3024 = vpop.permute.xlu0 %3023
      %v3026 = vsel %vm1116, %v3018, 0
      %v3029 = vsel %vm1116, %v3020, 0
      %v3032 = vsel %vm1116, %v3022, 0
      %v3035 = vsel %vm1116, %v3024, 0
      %3037 = vmatprep.subr.bf16.mxu0 0
      %3038 = vmatpush1.bf16.xpose.msra.mxu0 %v3032
      %3039 = vmatprep.subr.bf16.mxu0 0
      %3040 = vmatpush1.bf16.xpose.msra.mxu0 %v3035
      %3041 = vmatprep.subr.bf16.mxu0 0
      %3042 = vmatpush1.bf16.xpose.msra.mxu0 0
      %3043 = vmatprep.subr.bf16.mxu0 0
      %3044 = vmatpush1.bf16.xpose.msra.mxu0 0
      %3045 = vmatprep.subr.bf16.mxu0 0
      %3046 = vmatpush1.bf16.xpose.msra.mxu0 0
      %3047 = vmatprep.subr.bf16.mxu0 0
      %3048 = vmatpush1.bf16.xpose.msra.mxu0 0
      %3049 = vmatprep.subr.bf16.mxu0 0
      %3050 = vmatpush1.bf16.xpose.msra.mxu0 0
      %3051 = vmatprep.subr.bf16.mxu0 0
      %3052 = vmatpush1.bf16.xpose.msra.mxu0 0
      %3053 = vmatprep.subr.bf16.mxu0 0
      %3054 = vmatpush1.bf16.xpose.msra.mxu0 0
      %3055 = vmatprep.subr.bf16.mxu0 0
      %3056 = vmatpush1.bf16.xpose.msra.mxu0 0
      %3057 = vmatprep.subr.bf16.mxu0 0
      %3058 = vmatpush1.bf16.xpose.msra.mxu0 0
      %3059 = vmatprep.subr.bf16.mxu0 0
      %3060 = vmatpush1.bf16.xpose.msra.mxu0 0
      %3061 = vmatprep.subr.bf16.mxu0 0
      %3062 = vmatpush1.bf16.xpose.msra.mxu0 0
      %3063 = vmatprep.subr.bf16.mxu0 0
      %3064 = vmatpush1.bf16.xpose.msra.mxu0 0
      %3065 = vmatprep.subr.bf16.mxu0 0
      %3066 = vmatpush1.bf16.xpose.msra.mxu0 0
      %3067 = vmatprep.subr.bf16.mxu0 0
      %3068 = vmatpush1.bf16.xpose.msra.mxu0 0
      %3069 = vmatprep.mubr.bf16.mxu0 0
      %3070 = vmatmul.mubr.bf16.gmra.mrb[0].mxu0 %v3026
      %v3071 = vpop.f32.mrb[0].mxu0
      %v3072 = vadd.f32 %v420, %v3071
      %v3073 = vpop.f32.mrb[0].mxu0
      %v3074 = vpop.f32.mrb[0].mxu0
      %v3075 = vadd.f32 %v420, %v3074
      %v3076 = vpop.f32.mrb[0].mxu0
      %3077 = vmatprep.mubr.bf16.mxu0 0
      %3078 = vmatmul.mubr.bf16.gmra.mrb[0].mxu0 %v3029
      %v3079 = vpop.f32.mrb[0].mxu0
      %v3080 = vadd.f32 %v420, %v3079
      %v3081 = vpop.f32.mrb[0].mxu0
      %v3082 = vpop.f32.mrb[0].mxu0
      %v3083 = vpop.f32.mrb[0].mxu0
      %3084 = vdwg.mxu0
      %v3085 = vsel %vm1177, %v3072, -inf
      %3086 = vmax.xlane.f32.xlu0 %v3085
      %v3087 = vpop.xlane.xlu0 %3086
      %v3088 = vsel %vm1177, %v3075, -inf
      %3089 = vmax.xlane.f32.xlu0 %v3088
      %v3090 = vpop.xlane.xlu0 %3089
      %v3091 = vsel %vm1177, %v3080, -inf
      %3092 = vmax.xlane.f32.xlu0 %v3091
      %v3093 = vpop.xlane.xlu0 %3092
      %v3094 = vsub.f32 %v3072, %v3087
      %v3095 = vsub.f32 %v3075, %v3090
      %v3096 = vsub.f32 %v3080, %v3093
      %v3097 = vmul.f32 %v3094, 1.442695
      %v3098 = vpow.pop %v3097
      %v3099 = vmul.f32 %v3095, 1.442695
      %v3100 = vpow.pop %v3099
      %v3101 = vmul.f32 %v3096, 1.442695
      %v3102 = vpow.pop %v3101
      %v3103 = vsel %vm1177, %v3098, 0.0
      %3104 = vadd.xlane.f32.xlu0 %v3103
      %v3105 = vpop.xlane.xlu0 %3104
      %v3106 = vsel %vm1177, %v3100, 0.0
      %3107 = vadd.xlane.f32.xlu0 %v3106
      %v3108 = vpop.xlane.xlu0 %3107
      %v3109 = vsel %vm1177, %v3102, 0.0
      %3110 = vadd.xlane.f32.xlu0 %v3109
      %v3111 = vpop.xlane.xlu0 %3110
      %v3112 = vrcp.pop %v3105
      %v3113 = vrcp.pop %v3108
      %v3114 = vrcp.pop %v3111
      %v3115 = vmul.f32 %v3098, %v3112
      %v3116 = vmul.f32 %v3100, %v3113
      %v3117 = vmul.f32 %v3102, %v3114
      %v3118 = vpack.c.bf16 %v3116, %v3115
      %v3119 = vpack.c.bf16 %v3117, %v3117
      %3120 = vrot.lane.b32.xlu0 %v2522, 40
      %v3121 = vpop.permute.xlu0 %3120
      %3122 = vrot.lane.b32.xlu0 %v2523, 40
      %v3123 = vpop.permute.xlu0 %3122
      %v3126 = vsel %vm1177, %v3118, 0
      %v3129 = vsel %vm1177, %v3119, 0
      %v3132 = vsel %vm1224, %v3123, 0
      %3134 = vmatprep.subr.bf16.mxu0 0
      %3135 = vmatpush1.bf16.msra.mxu0 %v3121
      %3136 = vmatprep.subr.bf16.mxu0 0
      %3137 = vmatpush1.bf16.msra.mxu0 %v3132
      %3138 = vmatprep.subr.bf16.mxu0 0
      %3139 = vmatpush1.bf16.msra.mxu0 0
      %3140 = vmatprep.subr.bf16.mxu0 0
      %3141 = vmatpush1.bf16.msra.mxu0 0
      %3142 = vmatprep.subr.bf16.mxu0 0
      %3143 = vmatpush1.bf16.msra.mxu0 0
      %3144 = vmatprep.subr.bf16.mxu0 0
      %3145 = vmatpush1.bf16.msra.mxu0 0
      %3146 = vmatprep.subr.bf16.mxu0 0
      %3147 = vmatpush1.bf16.msra.mxu0 0
      %3148 = vmatprep.subr.bf16.mxu0 0
      %3149 = vmatpush1.bf16.msra.mxu0 0
      %3150 = vmatprep.subr.bf16.mxu0 0
      %3151 = vmatpush1.bf16.msra.mxu0 0
      %3152 = vmatprep.subr.bf16.mxu0 0
      %3153 = vmatpush1.bf16.msra.mxu0 0
      %3154 = vmatprep.subr.bf16.mxu0 0
      %3155 = vmatpush1.bf16.msra.mxu0 0
      %3156 = vmatprep.subr.bf16.mxu0 0
      %3157 = vmatpush1.bf16.msra.mxu0 0
      %3158 = vmatprep.subr.bf16.mxu0 0
      %3159 = vmatpush1.bf16.msra.mxu0 0
      %3160 = vmatprep.subr.bf16.mxu0 0
      %3161 = vmatpush1.bf16.msra.mxu0 0
      %3162 = vmatprep.subr.bf16.mxu0 0
      %3163 = vmatpush1.bf16.msra.mxu0 0
      %3164 = vmatprep.subr.bf16.mxu0 0
      %3165 = vmatpush1.bf16.msra.mxu0 0
      %3166 = vmatprep.mubr.bf16.mxu0 0
      %3167 = vmatmul.mubr.bf16.gmra.mrb[0].mxu0 %v3126
      %v3168 = vpop.f32.mrb[0].mxu0
      %v3169 = vadd.f32 0.0, %v3168
      %v3170 = vpop.f32.mrb[0].mxu0
      %v3171 = vpop.f32.mrb[0].mxu0
      %v3172 = vadd.f32 0.0, %v3171
      %v3173 = vpop.f32.mrb[0].mxu0
      %3174 = vmatprep.mubr.bf16.mxu0 0
      %3175 = vmatmul.mubr.bf16.gmra.mrb[0].mxu0 %v3129
      %v3176 = vpop.f32.mrb[0].mxu0
      %v3177 = vadd.f32 0.0, %v3176
      %v3178 = vpop.f32.mrb[0].mxu0
      %v3179 = vpop.f32.mrb[0].mxu0
      %v3180 = vpop.f32.mrb[0].mxu0
      %3181 = vdwg.mxu0
      %3185 = vrot.lane.b32.xlu0 %v2839, 8
      %v3186 = vpop.permute.xlu0 %3185
      %3187 = vrot.lane.b32.xlu0 %v2842, 8
      %v3188 = vpop.permute.xlu0 %3187
      %3189 = vrot.lane.b32.xlu0 %v2847, 8
      %v3190 = vpop.permute.xlu0 %3189
      %3197 = vrot.lane.b32.xlu0 %v3004, 16
      %v3198 = vpop.permute.xlu0 %3197
      %3199 = vrot.lane.b32.xlu0 %v3007, 16
      %v3200 = vpop.permute.xlu0 %3199
      %3201 = vrot.lane.b32.xlu0 %v3012, 16
      %v3202 = vpop.permute.xlu0 %3201
      %3209 = vrot.lane.b32.xlu0 %v3169, 24
      %v3210 = vpop.permute.xlu0 %3209
      %3211 = vrot.lane.b32.xlu0 %v3172, 24
      %v3212 = vpop.permute.xlu0 %3211
      %3213 = vrot.lane.b32.xlu0 %v3177, 24
      %v3214 = vpop.permute.xlu0 %3213
      %v3218 = vsel %vm1116, %v2674, %v3186
      %v3219 = vsel %vm1116, %v2677, %v3188
      %v3220 = vsel %vm1116, %v2682, %v3190
      %v3221 = vsel %vm1810, %v3218, %v3198
      %v3222 = vsel %vm1810, %v3219, %v3200
      %v3223 = vsel %vm1810, %v3220, %v3202
      %v3224 = vsel %vm1177, %v3221, %v3210
      %v3225 = vsel %vm1177, %v3222, %v3212
      %v3226 = vsel %vm1177, %v3223, %v3214
      %v3227 = vpack.c.bf16 %v1102, %v1097
      %v3228 = vpack.c.bf16 %v1105, %v1105
      %3231 = vrot.lane.b32.xlu0 %v3227, 96
      %v3232 = vpop.permute.xlu0 %3231
      %3233 = vrot.lane.b32.xlu0 %v3228, 96
      %v3234 = vpop.permute.xlu0 %3233
      %v3236 = vsel %vm1116, %v3227, 0
      %v3239 = vsel %vm1116, %v3228, 0
      %v3242 = vsel %vm1116, %v3232, 0
      %v3245 = vsel %vm1116, %v3234, 0
      %3247 = vmatprep.subr.bf16.mxu0 0
      %3248 = vmatpush1.bf16.xpose.msra.mxu0 %v3242
      %3249 = vmatprep.subr.bf16.mxu0 0
      %3250 = vmatpush1.bf16.xpose.msra.mxu0 %v3245
      %3251 = vmatprep.subr.bf16.mxu0 0
      %3252 = vmatpush1.bf16.xpose.msra.mxu0 0
      %3253 = vmatprep.subr.bf16.mxu0 0
      %3254 = vmatpush1.bf16.xpose.msra.mxu0 0
      %3255 = vmatprep.subr.bf16.mxu0 0
      %3256 = vmatpush1.bf16.xpose.msra.mxu0 0
      %3257 = vmatprep.subr.bf16.mxu0 0
      %3258 = vmatpush1.bf16.xpose.msra.mxu0 0
      %3259 = vmatprep.subr.bf16.mxu0 0
      %3260 = vmatpush1.bf16.xpose.msra.mxu0 0
      %3261 = vmatprep.subr.bf16.mxu0 0
      %3262 = vmatpush1.bf16.xpose.msra.mxu0 0
      %3263 = vmatprep.subr.bf16.mxu0 0
      %3264 = vmatpush1.bf16.xpose.msra.mxu0 0
      %3265 = vmatprep.subr.bf16.mxu0 0
      %3266 = vmatpush1.bf16.xpose.msra.mxu0 0
      %3267 = vmatprep.subr.bf16.mxu0 0
      %3268 = vmatpush1.bf16.xpose.msra.mxu0 0
      %3269 = vmatprep.subr.bf16.mxu0 0
      %3270 = vmatpush1.bf16.xpose.msra.mxu0 0
      %3271 = vmatprep.subr.bf16.mxu0 0
      %3272 = vmatpush1.bf16.xpose.msra.mxu0 0
      %3273 = vmatprep.subr.bf16.mxu0 0
      %3274 = vmatpush1.bf16.xpose.msra.mxu0 0
      %3275 = vmatprep.subr.bf16.mxu0 0
      %3276 = vmatpush1.bf16.xpose.msra.mxu0 0
      %3277 = vmatprep.subr.bf16.mxu0 0
      %3278 = vmatpush1.bf16.xpose.msra.mxu0 0
      %3279 = vmatprep.mubr.bf16.mxu0 0
      %3280 = vmatmul.mubr.bf16.gmra.mrb[0].mxu0 %v3236
      %v3281 = vpop.f32.mrb[0].mxu0
      %v3282 = vadd.f32 %v420, %v3281
      %v3283 = vpop.f32.mrb[0].mxu0
      %v3284 = vpop.f32.mrb[0].mxu0
      %v3285 = vadd.f32 %v420, %v3284
      %v3286 = vpop.f32.mrb[0].mxu0
      %3287 = vmatprep.mubr.bf16.mxu0 0
      %3288 = vmatmul.mubr.bf16.gmra.mrb[0].mxu0 %v3239
      %v3289 = vpop.f32.mrb[0].mxu0
      %v3290 = vadd.f32 %v420, %v3289
      %v3291 = vpop.f32.mrb[0].mxu0
      %v3292 = vpop.f32.mrb[0].mxu0
      %v3293 = vpop.f32.mrb[0].mxu0
      %3294 = vdwg.mxu0
      %v3295 = vsel %vm1177, %v3282, -inf
      %3296 = vmax.xlane.f32.xlu0 %v3295
      %v3297 = vpop.xlane.xlu0 %3296
      %v3298 = vsel %vm1177, %v3285, -inf
      %3299 = vmax.xlane.f32.xlu0 %v3298
      %v3300 = vpop.xlane.xlu0 %3299
      %v3301 = vsel %vm1177, %v3290, -inf
      %3302 = vmax.xlane.f32.xlu0 %v3301
      %v3303 = vpop.xlane.xlu0 %3302
      %v3304 = vsub.f32 %v3282, %v3297
      %v3305 = vsub.f32 %v3285, %v3300
      %v3306 = vsub.f32 %v3290, %v3303
      %v3307 = vmul.f32 %v3304, 1.442695
      %v3308 = vpow.pop %v3307
      %v3309 = vmul.f32 %v3305, 1.442695
      %v3310 = vpow.pop %v3309
      %v3311 = vmul.f32 %v3306, 1.442695
      %v3312 = vpow.pop %v3311
      %v3313 = vsel %vm1177, %v3308, 0.0
      %3314 = vadd.xlane.f32.xlu0 %v3313
      %v3315 = vpop.xlane.xlu0 %3314
      %v3316 = vsel %vm1177, %v3310, 0.0
      %3317 = vadd.xlane.f32.xlu0 %v3316
      %v3318 = vpop.xlane.xlu0 %3317
      %v3319 = vsel %vm1177, %v3312, 0.0
      %3320 = vadd.xlane.f32.xlu0 %v3319
      %v3321 = vpop.xlane.xlu0 %3320
      %v3322 = vrcp.pop %v3315
      %v3323 = vrcp.pop %v3318
      %v3324 = vrcp.pop %v3321
      %v3325 = vmul.f32 %v3308, %v3322
      %v3326 = vmul.f32 %v3310, %v3323
      %v3327 = vmul.f32 %v3312, %v3324
      %v3328 = vpack.c.bf16 %v3326, %v3325
      %v3329 = vpack.c.bf16 %v3327, %v3327
      %3330 = vrot.lane.b32.xlu0 %v3227, 64
      %v3331 = vpop.permute.xlu0 %3330
      %3332 = vrot.lane.b32.xlu0 %v3228, 64
      %v3333 = vpop.permute.xlu0 %3332
      %v3336 = vsel %vm1177, %v3328, 0
      %v3339 = vsel %vm1177, %v3329, 0
      %v3342 = vsel %vm1224, %v3333, 0
      %3344 = vmatprep.subr.bf16.mxu0 0
      %3345 = vmatpush1.bf16.msra.mxu0 %v3331
      %3346 = vmatprep.subr.bf16.mxu0 0
      %3347 = vmatpush1.bf16.msra.mxu0 %v3342
      %3348 = vmatprep.subr.bf16.mxu0 0
      %3349 = vmatpush1.bf16.msra.mxu0 0
      %3350 = vmatprep.subr.bf16.mxu0 0
      %3351 = vmatpush1.bf16.msra.mxu0 0
      %3352 = vmatprep.subr.bf16.mxu0 0
      %3353 = vmatpush1.bf16.msra.mxu0 0
      %3354 = vmatprep.subr.bf16.mxu0 0
      %3355 = vmatpush1.bf16.msra.mxu0 0
      %3356 = vmatprep.subr.bf16.mxu0 0
      %3357 = vmatpush1.bf16.msra.mxu0 0
      %3358 = vmatprep.subr.bf16.mxu0 0
      %3359 = vmatpush1.bf16.msra.mxu0 0
      %3360 = vmatprep.subr.bf16.mxu0 0
      %3361 = vmatpush1.bf16.msra.mxu0 0
      %3362 = vmatprep.subr.bf16.mxu0 0
      %3363 = vmatpush1.bf16.msra.mxu0 0
      %3364 = vmatprep.subr.bf16.mxu0 0
      %3365 = vmatpush1.bf16.msra.mxu0 0
      %3366 = vmatprep.subr.bf16.mxu0 0
      %3367 = vmatpush1.bf16.msra.mxu0 0
      %3368 = vmatprep.subr.bf16.mxu0 0
      %3369 = vmatpush1.bf16.msra.mxu0 0
      %3370 = vmatprep.subr.bf16.mxu0 0
      %3371 = vmatpush1.bf16.msra.mxu0 0
      %3372 = vmatprep.subr.bf16.mxu0 0
      %3373 = vmatpush1.bf16.msra.mxu0 0
      %3374 = vmatprep.subr.bf16.mxu0 0
      %3375 = vmatpush1.bf16.msra.mxu0 0
      %3376 = vmatprep.mubr.bf16.mxu0 0
      %3377 = vmatmul.mubr.bf16.gmra.mrb[0].mxu0 %v3336
      %v3378 = vpop.f32.mrb[0].mxu0
      %v3379 = vadd.f32 0.0, %v3378
      %v3380 = vpop.f32.mrb[0].mxu0
      %v3381 = vpop.f32.mrb[0].mxu0
      %v3382 = vadd.f32 0.0, %v3381
      %v3383 = vpop.f32.mrb[0].mxu0
      %3384 = vmatprep.mubr.bf16.mxu0 0
      %3385 = vmatmul.mubr.bf16.gmra.mrb[0].mxu0 %v3339
      %v3386 = vpop.f32.mrb[0].mxu0
      %v3387 = vadd.f32 0.0, %v3386
      %v3388 = vpop.f32.mrb[0].mxu0
      %v3389 = vpop.f32.mrb[0].mxu0
      %v3390 = vpop.f32.mrb[0].mxu0
      %3391 = vdwg.mxu0
      %3392 = vrot.lane.b32.xlu0 %v3227, 120
      %v3393 = vpop.permute.xlu0 %3392
      %3394 = vrot.lane.b32.xlu0 %v3228, 120
      %v3395 = vpop.permute.xlu0 %3394
      %3396 = vrot.lane.b32.xlu0 %v3227, 88
      %v3397 = vpop.permute.xlu0 %3396
      %3398 = vrot.lane.b32.xlu0 %v3228, 88
      %v3399 = vpop.permute.xlu0 %3398
      %v3401 = vsel %vm1116, %v3393, 0
      %v3404 = vsel %vm1116, %v3395, 0
      %v3407 = vsel %vm1116, %v3397, 0
      %v3410 = vsel %vm1116, %v3399, 0
      %3412 = vmatprep.subr.bf16.mxu0 0
      %3413 = vmatpush1.bf16.xpose.msra.mxu0 %v3407
      %3414 = vmatprep.subr.bf16.mxu0 0
      %3415 = vmatpush1.bf16.xpose.msra.mxu0 %v3410
      %3416 = vmatprep.subr.bf16.mxu0 0
      %3417 = vmatpush1.bf16.xpose.msra.mxu0 0
      %3418 = vmatprep.subr.bf16.mxu0 0
      %3419 = vmatpush1.bf16.xpose.msra.mxu0 0
      %3420 = vmatprep.subr.bf16.mxu0 0
      %3421 = vmatpush1.bf16.xpose.msra.mxu0 0
      %3422 = vmatprep.subr.bf16.mxu0 0
      %3423 = vmatpush1.bf16.xpose.msra.mxu0 0
      %3424 = vmatprep.subr.bf16.mxu0 0
      %3425 = vmatpush1.bf16.xpose.msra.mxu0 0
      %3426 = vmatprep.subr.bf16.mxu0 0
      %3427 = vmatpush1.bf16.xpose.msra.mxu0 0
      %3428 = vmatprep.subr.bf16.mxu0 0
      %3429 = vmatpush1.bf16.xpose.msra.mxu0 0
      %3430 = vmatprep.subr.bf16.mxu0 0
      %3431 = vmatpush1.bf16.xpose.msra.mxu0 0
      %3432 = vmatprep.subr.bf16.mxu0 0
      %3433 = vmatpush1.bf16.xpose.msra.mxu0 0
      %3434 = vmatprep.subr.bf16.mxu0 0
      %3435 = vmatpush1.bf16.xpose.msra.mxu0 0
      %3436 = vmatprep.subr.bf16.mxu0 0
      %3437 = vmatpush1.bf16.xpose.msra.mxu0 0
      %3438 = vmatprep.subr.bf16.mxu0 0
      %3439 = vmatpush1.bf16.xpose.msra.mxu0 0
      %3440 = vmatprep.subr.bf16.mxu0 0
      %3441 = vmatpush1.bf16.xpose.msra.mxu0 0
      %3442 = vmatprep.subr.bf16.mxu0 0
      %3443 = vmatpush1.bf16.xpose.msra.mxu0 0
      %3444 = vmatprep.mubr.bf16.mxu0 0
      %3445 = vmatmul.mubr.bf16.gmra.mrb[0].mxu0 %v3401
      %v3446 = vpop.f32.mrb[0].mxu0
      %v3447 = vadd.f32 %v420, %v3446
      %v3448 = vpop.f32.mrb[0].mxu0
      %v3449 = vpop.f32.mrb[0].mxu0
      %v3450 = vadd.f32 %v420, %v3449
      %v3451 = vpop.f32.mrb[0].mxu0
      %3452 = vmatprep.mubr.bf16.mxu0 0
      %3453 = vmatmul.mubr.bf16.gmra.mrb[0].mxu0 %v3404
      %v3454 = vpop.f32.mrb[0].mxu0
      %v3455 = vadd.f32 %v420, %v3454
      %v3456 = vpop.f32.mrb[0].mxu0
      %v3457 = vpop.f32.mrb[0].mxu0
      %v3458 = vpop.f32.mrb[0].mxu0
      %3459 = vdwg.mxu0
      %v3460 = vsel %vm1177, %v3447, -inf
      %3461 = vmax.xlane.f32.xlu0 %v3460
      %v3462 = vpop.xlane.xlu0 %3461
      %v3463 = vsel %vm1177, %v3450, -inf
      %3464 = vmax.xlane.f32.xlu0 %v3463
      %v3465 = vpop.xlane.xlu0 %3464
      %v3466 = vsel %vm1177, %v3455, -inf
      %3467 = vmax.xlane.f32.xlu0 %v3466
      %v3468 = vpop.xlane.xlu0 %3467
      %v3469 = vsub.f32 %v3447, %v3462
      %v3470 = vsub.f32 %v3450, %v3465
      %v3471 = vsub.f32 %v3455, %v3468
      %v3472 = vmul.f32 %v3469, 1.442695
      %v3473 = vpow.pop %v3472
      %v3474 = vmul.f32 %v3470, 1.442695
      %v3475 = vpow.pop %v3474
      %v3476 = vmul.f32 %v3471, 1.442695
      %v3477 = vpow.pop %v3476
      %v3478 = vsel %vm1177, %v3473, 0.0
      %3479 = vadd.xlane.f32.xlu0 %v3478
      %v3480 = vpop.xlane.xlu0 %3479
      %v3481 = vsel %vm1177, %v3475, 0.0
      %3482 = vadd.xlane.f32.xlu0 %v3481
      %v3483 = vpop.xlane.xlu0 %3482
      %v3484 = vsel %vm1177, %v3477, 0.0
      %3485 = vadd.xlane.f32.xlu0 %v3484
      %v3486 = vpop.xlane.xlu0 %3485
      %v3487 = vrcp.pop %v3480
      %v3488 = vrcp.pop %v3483
      %v3489 = vrcp.pop %v3486
      %v3490 = vmul.f32 %v3473, %v3487
      %v3491 = vmul.f32 %v3475, %v3488
      %v3492 = vmul.f32 %v3477, %v3489
      %v3493 = vpack.c.bf16 %v3491, %v3490
      %v3494 = vpack.c.bf16 %v3492, %v3492
      %3495 = vrot.lane.b32.xlu0 %v3227, 56
      %v3496 = vpop.permute.xlu0 %3495
      %3497 = vrot.lane.b32.xlu0 %v3228, 56
      %v3498 = vpop.permute.xlu0 %3497
      %v3501 = vsel %vm1177, %v3493, 0
      %v3504 = vsel %vm1177, %v3494, 0
      %v3507 = vsel %vm1224, %v3498, 0
      %3509 = vmatprep.subr.bf16.mxu0 0
      %3510 = vmatpush1.bf16.msra.mxu0 %v3496
      %3511 = vmatprep.subr.bf16.mxu0 0
      %3512 = vmatpush1.bf16.msra.mxu0 %v3507
      %3513 = vmatprep.subr.bf16.mxu0 0
      %3514 = vmatpush1.bf16.msra.mxu0 0
      %3515 = vmatprep.subr.bf16.mxu0 0
      %3516 = vmatpush1.bf16.msra.mxu0 0
      %3517 = vmatprep.subr.bf16.mxu0 0
      %3518 = vmatpush1.bf16.msra.mxu0 0
      %3519 = vmatprep.subr.bf16.mxu0 0
      %3520 = vmatpush1.bf16.msra.mxu0 0
      %3521 = vmatprep.subr.bf16.mxu0 0
      %3522 = vmatpush1.bf16.msra.mxu0 0
      %3523 = vmatprep.subr.bf16.mxu0 0
      %3524 = vmatpush1.bf16.msra.mxu0 0
      %3525 = vmatprep.subr.bf16.mxu0 0
      %3526 = vmatpush1.bf16.msra.mxu0 0
      %3527 = vmatprep.subr.bf16.mxu0 0
      %3528 = vmatpush1.bf16.msra.mxu0 0
      %3529 = vmatprep.subr.bf16.mxu0 0
      %3530 = vmatpush1.bf16.msra.mxu0 0
      %3531 = vmatprep.subr.bf16.mxu0 0
      %3532 = vmatpush1.bf16.msra.mxu0 0
      %3533 = vmatprep.subr.bf16.mxu0 0
      %3534 = vmatpush1.bf16.msra.mxu0 0
      %3535 = vmatprep.subr.bf16.mxu0 0
      %3536 = vmatpush1.bf16.msra.mxu0 0
      %3537 = vmatprep.subr.bf16.mxu0 0
      %3538 = vmatpush1.bf16.msra.mxu0 0
      %3539 = vmatprep.subr.bf16.mxu0 0
      %3540 = vmatpush1.bf16.msra.mxu0 0
      %3541 = vmatprep.mubr.bf16.mxu0 0
      %3542 = vmatmul.mubr.bf16.gmra.mrb[0].mxu0 %v3501
      %v3543 = vpop.f32.mrb[0].mxu0
      %v3544 = vadd.f32 0.0, %v3543
      %v3545 = vpop.f32.mrb[0].mxu0
      %v3546 = vpop.f32.mrb[0].mxu0
      %v3547 = vadd.f32 0.0, %v3546
      %v3548 = vpop.f32.mrb[0].mxu0
      %3549 = vmatprep.mubr.bf16.mxu0 0
      %3550 = vmatmul.mubr.bf16.gmra.mrb[0].mxu0 %v3504
      %v3551 = vpop.f32.mrb[0].mxu0
      %v3552 = vadd.f32 0.0, %v3551
      %v3553 = vpop.f32.mrb[0].mxu0
      %v3554 = vpop.f32.mrb[0].mxu0
      %v3555 = vpop.f32.mrb[0].mxu0
      %3556 = vdwg.mxu0
      %3557 = vrot.lane.b32.xlu0 %v3227, 112
      %v3558 = vpop.permute.xlu0 %3557
      %3559 = vrot.lane.b32.xlu0 %v3228, 112
      %v3560 = vpop.permute.xlu0 %3559
      %3561 = vrot.lane.b32.xlu0 %v3227, 80
      %v3562 = vpop.permute.xlu0 %3561
      %3563 = vrot.lane.b32.xlu0 %v3228, 80
      %v3564 = vpop.permute.xlu0 %3563
      %v3566 = vsel %vm1116, %v3558, 0
      %v3569 = vsel %vm1116, %v3560, 0
      %v3572 = vsel %vm1116, %v3562, 0
      %v3575 = vsel %vm1116, %v3564, 0
      %3577 = vmatprep.subr.bf16.mxu0 0
      %3578 = vmatpush1.bf16.xpose.msra.mxu0 %v3572
      %3579 = vmatprep.subr.bf16.mxu0 0
      %3580 = vmatpush1.bf16.xpose.msra.mxu0 %v3575
      %3581 = vmatprep.subr.bf16.mxu0 0
      %3582 = vmatpush1.bf16.xpose.msra.mxu0 0
      %3583 = vmatprep.subr.bf16.mxu0 0
      %3584 = vmatpush1.bf16.xpose.msra.mxu0 0
      %3585 = vmatprep.subr.bf16.mxu0 0
      %3586 = vmatpush1.bf16.xpose.msra.mxu0 0
      %3587 = vmatprep.subr.bf16.mxu0 0
      %3588 = vmatpush1.bf16.xpose.msra.mxu0 0
      %3589 = vmatprep.subr.bf16.mxu0 0
      %3590 = vmatpush1.bf16.xpose.msra.mxu0 0
      %3591 = vmatprep.subr.bf16.mxu0 0
      %3592 = vmatpush1.bf16.xpose.msra.mxu0 0
      %3593 = vmatprep.subr.bf16.mxu0 0
      %3594 = vmatpush1.bf16.xpose.msra.mxu0 0
      %3595 = vmatprep.subr.bf16.mxu0 0
      %3596 = vmatpush1.bf16.xpose.msra.mxu0 0
      %3597 = vmatprep.subr.bf16.mxu0 0
      %3598 = vmatpush1.bf16.xpose.msra.mxu0 0
      %3599 = vmatprep.subr.bf16.mxu0 0
      %3600 = vmatpush1.bf16.xpose.msra.mxu0 0
      %3601 = vmatprep.subr.bf16.mxu0 0
      %3602 = vmatpush1.bf16.xpose.msra.mxu0 0
      %3603 = vmatprep.subr.bf16.mxu0 0
      %3604 = vmatpush1.bf16.xpose.msra.mxu0 0
      %3605 = vmatprep.subr.bf16.mxu0 0
      %3606 = vmatpush1.bf16.xpose.msra.mxu0 0
      %3607 = vmatprep.subr.bf16.mxu0 0
      %3608 = vmatpush1.bf16.xpose.msra.mxu0 0
      %3609 = vmatprep.mubr.bf16.mxu0 0
      %3610 = vmatmul.mubr.bf16.gmra.mrb[0].mxu0 %v3566
      %v3611 = vpop.f32.mrb[0].mxu0
      %v3612 = vadd.f32 %v420, %v3611
      %v3613 = vpop.f32.mrb[0].mxu0
      %v3614 = vpop.f32.mrb[0].mxu0
      %v3615 = vadd.f32 %v420, %v3614
      %v3616 = vpop.f32.mrb[0].mxu0
      %3617 = vmatprep.mubr.bf16.mxu0 0
      %3618 = vmatmul.mubr.bf16.gmra.mrb[0].mxu0 %v3569
      %v3619 = vpop.f32.mrb[0].mxu0
      %v3620 = vadd.f32 %v420, %v3619
      %v3621 = vpop.f32.mrb[0].mxu0
      %v3622 = vpop.f32.mrb[0].mxu0
      %v3623 = vpop.f32.mrb[0].mxu0
      %3624 = vdwg.mxu0
      %v3625 = vsel %vm1177, %v3612, -inf
      %3626 = vmax.xlane.f32.xlu0 %v3625
      %v3627 = vpop.xlane.xlu0 %3626
      %v3628 = vsel %vm1177, %v3615, -inf
      %3629 = vmax.xlane.f32.xlu0 %v3628
      %v3630 = vpop.xlane.xlu0 %3629
      %v3631 = vsel %vm1177, %v3620, -inf
      %3632 = vmax.xlane.f32.xlu0 %v3631
      %v3633 = vpop.xlane.xlu0 %3632
      %v3634 = vsub.f32 %v3612, %v3627
      %v3635 = vsub.f32 %v3615, %v3630
      %v3636 = vsub.f32 %v3620, %v3633
      %v3637 = vmul.f32 %v3634, 1.442695
      %v3638 = vpow.pop %v3637
      %v3639 = vmul.f32 %v3635, 1.442695
      %v3640 = vpow.pop %v3639
      %v3641 = vmul.f32 %v3636, 1.442695
      %v3642 = vpow.pop %v3641
      %v3643 = vsel %vm1177, %v3638, 0.0
      %3644 = vadd.xlane.f32.xlu0 %v3643
      %v3645 = vpop.xlane.xlu0 %3644
      %v3646 = vsel %vm1177, %v3640, 0.0
      %3647 = vadd.xlane.f32.xlu0 %v3646
      %v3648 = vpop.xlane.xlu0 %3647
      %v3649 = vsel %vm1177, %v3642, 0.0
      %3650 = vadd.xlane.f32.xlu0 %v3649
      %v3651 = vpop.xlane.xlu0 %3650
      %v3652 = vrcp.pop %v3645
      %v3653 = vrcp.pop %v3648
      %v3654 = vrcp.pop %v3651
      %v3655 = vmul.f32 %v3638, %v3652
      %v3656 = vmul.f32 %v3640, %v3653
      %v3657 = vmul.f32 %v3642, %v3654
      %v3658 = vpack.c.bf16 %v3656, %v3655
      %v3659 = vpack.c.bf16 %v3657, %v3657
      %3660 = vrot.lane.b32.xlu0 %v3227, 48
      %v3661 = vpop.permute.xlu0 %3660
      %3662 = vrot.lane.b32.xlu0 %v3228, 48
      %v3663 = vpop.permute.xlu0 %3662
      %v3666 = vsel %vm1177, %v3658, 0
      %v3669 = vsel %vm1177, %v3659, 0
      %v3672 = vsel %vm1224, %v3663, 0
      %3674 = vmatprep.subr.bf16.mxu0 0
      %3675 = vmatpush1.bf16.msra.mxu0 %v3661
      %3676 = vmatprep.subr.bf16.mxu0 0
      %3677 = vmatpush1.bf16.msra.mxu0 %v3672
      %3678 = vmatprep.subr.bf16.mxu0 0
      %3679 = vmatpush1.bf16.msra.mxu0 0
      %3680 = vmatprep.subr.bf16.mxu0 0
      %3681 = vmatpush1.bf16.msra.mxu0 0
      %3682 = vmatprep.subr.bf16.mxu0 0
      %3683 = vmatpush1.bf16.msra.mxu0 0
      %3684 = vmatprep.subr.bf16.mxu0 0
      %3685 = vmatpush1.bf16.msra.mxu0 0
      %3686 = vmatprep.subr.bf16.mxu0 0
      %3687 = vmatpush1.bf16.msra.mxu0 0
      %3688 = vmatprep.subr.bf16.mxu0 0
      %3689 = vmatpush1.bf16.msra.mxu0 0
      %3690 = vmatprep.subr.bf16.mxu0 0
      %3691 = vmatpush1.bf16.msra.mxu0 0
      %3692 = vmatprep.subr.bf16.mxu0 0
      %3693 = vmatpush1.bf16.msra.mxu0 0
      %3694 = vmatprep.subr.bf16.mxu0 0
      %3695 = vmatpush1.bf16.msra.mxu0 0
      %3696 = vmatprep.subr.bf16.mxu0 0
      %3697 = vmatpush1.bf16.msra.mxu0 0
      %3698 = vmatprep.subr.bf16.mxu0 0
      %3699 = vmatpush1.bf16.msra.mxu0 0
      %3700 = vmatprep.subr.bf16.mxu0 0
      %3701 = vmatpush1.bf16.msra.mxu0 0
      %3702 = vmatprep.subr.bf16.mxu0 0
      %3703 = vmatpush1.bf16.msra.mxu0 0
      %3704 = vmatprep.subr.bf16.mxu0 0
      %3705 = vmatpush1.bf16.msra.mxu0 0
      %3706 = vmatprep.mubr.bf16.mxu0 0
      %3707 = vmatmul.mubr.bf16.gmra.mrb[0].mxu0 %v3666
      %v3708 = vpop.f32.mrb[0].mxu0
      %v3709 = vadd.f32 0.0, %v3708
      %v3710 = vpop.f32.mrb[0].mxu0
      %v3711 = vpop.f32.mrb[0].mxu0
      %v3712 = vadd.f32 0.0, %v3711
      %v3713 = vpop.f32.mrb[0].mxu0
      %3714 = vmatprep.mubr.bf16.mxu0 0
      %3715 = vmatmul.mubr.bf16.gmra.mrb[0].mxu0 %v3669
      %v3716 = vpop.f32.mrb[0].mxu0
      %v3717 = vadd.f32 0.0, %v3716
      %v3718 = vpop.f32.mrb[0].mxu0
      %v3719 = vpop.f32.mrb[0].mxu0
      %v3720 = vpop.f32.mrb[0].mxu0
      %3721 = vdwg.mxu0
      %3722 = vrot.lane.b32.xlu0 %v3227, 104
      %v3723 = vpop.permute.xlu0 %3722
      %3724 = vrot.lane.b32.xlu0 %v3228, 104
      %v3725 = vpop.permute.xlu0 %3724
      %3726 = vrot.lane.b32.xlu0 %v3227, 72
      %v3727 = vpop.permute.xlu0 %3726
      %3728 = vrot.lane.b32.xlu0 %v3228, 72
      %v3729 = vpop.permute.xlu0 %3728
      %v3731 = vsel %vm1116, %v3723, 0
      %v3734 = vsel %vm1116, %v3725, 0
      %v3737 = vsel %vm1116, %v3727, 0
      %v3740 = vsel %vm1116, %v3729, 0
      %3742 = vmatprep.subr.bf16.mxu0 0
      %3743 = vmatpush1.bf16.xpose.msra.mxu0 %v3737
      %3744 = vmatprep.subr.bf16.mxu0 0
      %3745 = vmatpush1.bf16.xpose.msra.mxu0 %v3740
      %3746 = vmatprep.subr.bf16.mxu0 0
      %3747 = vmatpush1.bf16.xpose.msra.mxu0 0
      %3748 = vmatprep.subr.bf16.mxu0 0
      %3749 = vmatpush1.bf16.xpose.msra.mxu0 0
      %3750 = vmatprep.subr.bf16.mxu0 0
      %3751 = vmatpush1.bf16.xpose.msra.mxu0 0
      %3752 = vmatprep.subr.bf16.mxu0 0
      %3753 = vmatpush1.bf16.xpose.msra.mxu0 0
      %3754 = vmatprep.subr.bf16.mxu0 0
      %3755 = vmatpush1.bf16.xpose.msra.mxu0 0
      %3756 = vmatprep.subr.bf16.mxu0 0
      %3757 = vmatpush1.bf16.xpose.msra.mxu0 0
      %3758 = vmatprep.subr.bf16.mxu0 0
      %3759 = vmatpush1.bf16.xpose.msra.mxu0 0
      %3760 = vmatprep.subr.bf16.mxu0 0
      %3761 = vmatpush1.bf16.xpose.msra.mxu0 0
      %3762 = vmatprep.subr.bf16.mxu0 0
      %3763 = vmatpush1.bf16.xpose.msra.mxu0 0
      %3764 = vmatprep.subr.bf16.mxu0 0
      %3765 = vmatpush1.bf16.xpose.msra.mxu0 0
      %3766 = vmatprep.subr.bf16.mxu0 0
      %3767 = vmatpush1.bf16.xpose.msra.mxu0 0
      %3768 = vmatprep.subr.bf16.mxu0 0
      %3769 = vmatpush1.bf16.xpose.msra.mxu0 0
      %3770 = vmatprep.subr.bf16.mxu0 0
      %3771 = vmatpush1.bf16.xpose.msra.mxu0 0
      %3772 = vmatprep.subr.bf16.mxu0 0
      %3773 = vmatpush1.bf16.xpose.msra.mxu0 0
      %3774 = vmatprep.mubr.bf16.mxu0 0
      %3775 = vmatmul.mubr.bf16.gmra.mrb[0].mxu0 %v3731
      %v3776 = vpop.f32.mrb[0].mxu0
      %v3777 = vadd.f32 %v420, %v3776
      %v3778 = vpop.f32.mrb[0].mxu0
      %v3779 = vpop.f32.mrb[0].mxu0
      %v3780 = vadd.f32 %v420, %v3779
      %v3781 = vpop.f32.mrb[0].mxu0
      %3782 = vmatprep.mubr.bf16.mxu0 0
      %3783 = vmatmul.mubr.bf16.gmra.mrb[0].mxu0 %v3734
      %v3784 = vpop.f32.mrb[0].mxu0
      %v3785 = vadd.f32 %v420, %v3784
      %v3786 = vpop.f32.mrb[0].mxu0
      %v3787 = vpop.f32.mrb[0].mxu0
      %v3788 = vpop.f32.mrb[0].mxu0
      %3789 = vdwg.mxu0
      %v3790 = vsel %vm1177, %v3777, -inf
      %3791 = vmax.xlane.f32.xlu0 %v3790
      %v3792 = vpop.xlane.xlu0 %3791
      %v3793 = vsel %vm1177, %v3780, -inf
      %3794 = vmax.xlane.f32.xlu0 %v3793
      %v3795 = vpop.xlane.xlu0 %3794
      %v3796 = vsel %vm1177, %v3785, -inf
      %3797 = vmax.xlane.f32.xlu0 %v3796
      %v3798 = vpop.xlane.xlu0 %3797
      %v3799 = vsub.f32 %v3777, %v3792
      %v3800 = vsub.f32 %v3780, %v3795
      %v3801 = vsub.f32 %v3785, %v3798
      %v3802 = vmul.f32 %v3799, 1.442695
      %v3803 = vpow.pop %v3802
      %v3804 = vmul.f32 %v3800, 1.442695
      %v3805 = vpow.pop %v3804
      %v3806 = vmul.f32 %v3801, 1.442695
      %v3807 = vpow.pop %v3806
      %v3808 = vsel %vm1177, %v3803, 0.0
      %3809 = vadd.xlane.f32.xlu0 %v3808
      %v3810 = vpop.xlane.xlu0 %3809
      %v3811 = vsel %vm1177, %v3805, 0.0
      %3812 = vadd.xlane.f32.xlu0 %v3811
      %v3813 = vpop.xlane.xlu0 %3812
      %v3814 = vsel %vm1177, %v3807, 0.0
      %3815 = vadd.xlane.f32.xlu0 %v3814
      %v3816 = vpop.xlane.xlu0 %3815
      %v3817 = vrcp.pop %v3810
      %v3818 = vrcp.pop %v3813
      %v3819 = vrcp.pop %v3816
      %v3820 = vmul.f32 %v3803, %v3817
      %v3821 = vmul.f32 %v3805, %v3818
      %v3822 = vmul.f32 %v3807, %v3819
      %v3823 = vpack.c.bf16 %v3821, %v3820
      %v3824 = vpack.c.bf16 %v3822, %v3822
      %3825 = vrot.lane.b32.xlu0 %v3227, 40
      %v3826 = vpop.permute.xlu0 %3825
      %3827 = vrot.lane.b32.xlu0 %v3228, 40
      %v3828 = vpop.permute.xlu0 %3827
      %v3831 = vsel %vm1177, %v3823, 0
      %v3834 = vsel %vm1177, %v3824, 0
      %v3837 = vsel %vm1224, %v3828, 0
      %3839 = vmatprep.subr.bf16.mxu0 0
      %3840 = vmatpush1.bf16.msra.mxu0 %v3826
      %3841 = vmatprep.subr.bf16.mxu0 0
      %3842 = vmatpush1.bf16.msra.mxu0 %v3837
      %3843 = vmatprep.subr.bf16.mxu0 0
      %3844 = vmatpush1.bf16.msra.mxu0 0
      %3845 = vmatprep.subr.bf16.mxu0 0
      %3846 = vmatpush1.bf16.msra.mxu0 0
      %3847 = vmatprep.subr.bf16.mxu0 0
      %3848 = vmatpush1.bf16.msra.mxu0 0
      %3849 = vmatprep.subr.bf16.mxu0 0
      %3850 = vmatpush1.bf16.msra.mxu0 0
      %3851 = vmatprep.subr.bf16.mxu0 0
      %3852 = vmatpush1.bf16.msra.mxu0 0
      %3853 = vmatprep.subr.bf16.mxu0 0
      %3854 = vmatpush1.bf16.msra.mxu0 0
      %3855 = vmatprep.subr.bf16.mxu0 0
      %3856 = vmatpush1.bf16.msra.mxu0 0
      %3857 = vmatprep.subr.bf16.mxu0 0
      %3858 = vmatpush1.bf16.msra.mxu0 0
      %3859 = vmatprep.subr.bf16.mxu0 0
      %3860 = vmatpush1.bf16.msra.mxu0 0
      %3861 = vmatprep.subr.bf16.mxu0 0
      %3862 = vmatpush1.bf16.msra.mxu0 0
      %3863 = vmatprep.subr.bf16.mxu0 0
      %3864 = vmatpush1.bf16.msra.mxu0 0
      %3865 = vmatprep.subr.bf16.mxu0 0
      %3866 = vmatpush1.bf16.msra.mxu0 0
      %3867 = vmatprep.subr.bf16.mxu0 0
      %3868 = vmatpush1.bf16.msra.mxu0 0
      %3869 = vmatprep.subr.bf16.mxu0 0
      %3870 = vmatpush1.bf16.msra.mxu0 0
      %3871 = vmatprep.mubr.bf16.mxu0 0
      %3872 = vmatmul.mubr.bf16.gmra.mrb[0].mxu0 %v3831
      %v3873 = vpop.f32.mrb[0].mxu0
      %v3874 = vadd.f32 0.0, %v3873
      %v3875 = vpop.f32.mrb[0].mxu0
      %v3876 = vpop.f32.mrb[0].mxu0
      %v3877 = vadd.f32 0.0, %v3876
      %v3878 = vpop.f32.mrb[0].mxu0
      %3879 = vmatprep.mubr.bf16.mxu0 0
      %3880 = vmatmul.mubr.bf16.gmra.mrb[0].mxu0 %v3834
      %v3881 = vpop.f32.mrb[0].mxu0
      %v3882 = vadd.f32 0.0, %v3881
      %v3883 = vpop.f32.mrb[0].mxu0
      %v3884 = vpop.f32.mrb[0].mxu0
      %v3885 = vpop.f32.mrb[0].mxu0
      %3886 = vdwg.mxu0
      %3890 = vrot.lane.b32.xlu0 %v3544, 8
      %v3891 = vpop.permute.xlu0 %3890
      %3892 = vrot.lane.b32.xlu0 %v3547, 8
      %v3893 = vpop.permute.xlu0 %3892
      %3894 = vrot.lane.b32.xlu0 %v3552, 8
      %v3895 = vpop.permute.xlu0 %3894
      %3902 = vrot.lane.b32.xlu0 %v3709, 16
      %v3903 = vpop.permute.xlu0 %3902
      %3904 = vrot.lane.b32.xlu0 %v3712, 16
      %v3905 = vpop.permute.xlu0 %3904
      %3906 = vrot.lane.b32.xlu0 %v3717, 16
      %v3907 = vpop.permute.xlu0 %3906
      %3914 = vrot.lane.b32.xlu0 %v3874, 24
      %v3915 = vpop.permute.xlu0 %3914
      %3916 = vrot.lane.b32.xlu0 %v3877, 24
      %v3917 = vpop.permute.xlu0 %3916
      %3918 = vrot.lane.b32.xlu0 %v3882, 24
      %v3919 = vpop.permute.xlu0 %3918
      %v3923 = vsel %vm1116, %v3379, %v3891
      %v3924 = vsel %vm1116, %v3382, %v3893
      %v3925 = vsel %vm1116, %v3387, %v3895
      %v3926 = vsel %vm1810, %v3923, %v3903
      %v3927 = vsel %vm1810, %v3924, %v3905
      %v3928 = vsel %vm1810, %v3925, %v3907
      %v3929 = vsel %vm1177, %v3926, %v3915
      %v3930 = vsel %vm1177, %v3927, %v3917
      %v3931 = vsel %vm1177, %v3928, %v3919
      %v3932 = vpack.c.bf16 %v1815, %v1814
      %v3933 = vpack.c.bf16 %v2519, %v1816
      %v3934 = vpack.c.bf16 %v2521, %v2520
      %v3935 = vpack.c.bf16 %v3225, %v3224
      %v3936 = vpack.c.bf16 %v3929, %v3226
      %v3937 = vpack.c.bf16 %v3931, %v3930
      %v3938 = vld [vmem:[%s7] sm:$0xf]
      %v3939 = vld [vmem:[%s7 + $0x4] sm:$0xf]
      %v3940 = vld [vmem:[%s7 + $0x8] sm:$0xf]
      %v3941 = vld [vmem:[%s7 + $0xc] sm:$0xf]
      %v3946 = vunpack.c.l.b16 %v3938
      %v3947 = vunpack.c.l.b16 %v3939
      %v3948 = vunpack.c.l.b16 %v3940
      %v3949 = vunpack.c.l.b16 %v3941
      %v3950 = vpack.c.b16 %v3947, %v3946
      %v3951 = vpack.c.b16 %v3949, %v3948
      %v3955 = vsel %vm600, %v3932, 0
      %v3958 = vsel %vm600, %v3933, 0
      %v3961 = vsel %vm600, %v3934, 0
      %v3964 = vsel %vm600, %v3935, 0
      %v3967 = vsel %vm600, %v3936, 0
      %v3970 = vsel %vm600, %v3937, 0
      %3972 = vmatprep.subr.bf16.mxu0 0
      %3973 = vmatpush1.bf16.msra.mxu0 %v3950
      %3974 = vmatprep.subr.bf16.mxu0 0
      %3975 = vmatpush1.bf16.msra.mxu0 %v3951
      %3976 = vmatprep.subr.bf16.mxu0 0
      %3977 = vmatpush1.bf16.msra.mxu0 0
      %3978 = vmatprep.subr.bf16.mxu0 0
      %3979 = vmatpush1.bf16.msra.mxu0 0
      %3980 = vmatprep.subr.bf16.mxu0 0
      %3981 = vmatpush1.bf16.msra.mxu0 0
      %3982 = vmatprep.subr.bf16.mxu0 0
      %3983 = vmatpush1.bf16.msra.mxu0 0
      %3984 = vmatprep.subr.bf16.mxu0 0
      %3985 = vmatpush1.bf16.msra.mxu0 0
      %3986 = vmatprep.subr.bf16.mxu0 0
      %3987 = vmatpush1.bf16.msra.mxu0 0
      %3988 = vmatprep.subr.bf16.mxu0 0
      %3989 = vmatpush1.bf16.msra.mxu0 0
      %3990 = vmatprep.subr.bf16.mxu0 0
      %3991 = vmatpush1.bf16.msra.mxu0 0
      %3992 = vmatprep.subr.bf16.mxu0 0
      %3993 = vmatpush1.bf16.msra.mxu0 0
      %3994 = vmatprep.subr.bf16.mxu0 0
      %3995 = vmatpush1.bf16.msra.mxu0 0
      %3996 = vmatprep.subr.bf16.mxu0 0
      %3997 = vmatpush1.bf16.msra.mxu0 0
      %3998 = vmatprep.subr.bf16.mxu0 0
      %3999 = vmatpush1.bf16.msra.mxu0 0
      %4000 = vmatprep.subr.bf16.mxu0 0
      %4001 = vmatpush1.bf16.msra.mxu0 0
      %4002 = vmatprep.subr.bf16.mxu0 0
      %4003 = vmatpush1.bf16.msra.mxu0 0
      %4004 = vmatprep.mubr.bf16.mxu0 0
      %4005 = vmatmul.mubr.bf16.gmra.mrb[0].mxu0 %v3955
      %v4006 = vpop.f32.mrb[0].mxu0
      %v4007 = vadd.f32 0.0, %v4006
      %v4008 = vpop.f32.mrb[0].mxu0
      %v4009 = vpop.f32.mrb[0].mxu0
      %v4010 = vadd.f32 0.0, %v4009
      %v4011 = vpop.f32.mrb[0].mxu0
      %4012 = vmatprep.mubr.bf16.mxu0 0
      %4013 = vmatmul.mubr.bf16.gmra.mrb[0].mxu0 %v3958
      %v4014 = vpop.f32.mrb[0].mxu0
      %v4015 = vadd.f32 0.0, %v4014
      %v4016 = vpop.f32.mrb[0].mxu0
      %v4017 = vpop.f32.mrb[0].mxu0
      %v4018 = vadd.f32 0.0, %v4017
      %v4019 = vpop.f32.mrb[0].mxu0
      %4020 = vmatprep.mubr.bf16.mxu0 0
      %4021 = vmatmul.mubr.bf16.gmra.mrb[0].mxu0 %v3961
      %v4022 = vpop.f32.mrb[0].mxu0
      %v4023 = vadd.f32 0.0, %v4022
      %v4024 = vpop.f32.mrb[0].mxu0
      %v4025 = vpop.f32.mrb[0].mxu0
      %v4026 = vadd.f32 0.0, %v4025
      %v4027 = vpop.f32.mrb[0].mxu0
      %4028 = vmatprep.mubr.bf16.mxu0 0
      %4029 = vmatmul.mubr.bf16.gmra.mrb[0].mxu0 %v3964
      %v4030 = vpop.f32.mrb[0].mxu0
      %v4031 = vadd.f32 0.0, %v4030
      %v4032 = vpop.f32.mrb[0].mxu0
      %v4033 = vpop.f32.mrb[0].mxu0
      %v4034 = vadd.f32 0.0, %v4033
      %v4035 = vpop.f32.mrb[0].mxu0
      %4036 = vmatprep.mubr.bf16.mxu0 0
      %4037 = vmatmul.mubr.bf16.gmra.mrb[0].mxu0 %v3967
      %v4038 = vpop.f32.mrb[0].mxu0
      %v4039 = vadd.f32 0.0, %v4038
      %v4040 = vpop.f32.mrb[0].mxu0
      %v4041 = vpop.f32.mrb[0].mxu0
      %v4042 = vadd.f32 0.0, %v4041
      %v4043 = vpop.f32.mrb[0].mxu0
      %4044 = vmatprep.mubr.bf16.mxu0 0
      %4045 = vmatmul.mubr.bf16.gmra.mrb[0].mxu0 %v3970
      %v4046 = vpop.f32.mrb[0].mxu0
      %v4047 = vadd.f32 0.0, %v4046
      %v4048 = vpop.f32.mrb[0].mxu0
      %v4049 = vpop.f32.mrb[0].mxu0
      %v4050 = vadd.f32 0.0, %v4049
      %v4051 = vpop.f32.mrb[0].mxu0
      %4052 = vdwg.mxu0
      %v4053 = vadd.f32 %v778, %v4007
      %v4054 = vadd.f32 %v779, %v4010
      %v4055 = vadd.f32 %v780, %v4015
      %v4056 = vadd.f32 %v781, %v4018
      %v4057 = vadd.f32 %v782, %v4023
      %v4058 = vadd.f32 %v783, %v4026
      %v4059 = vadd.f32 %v784, %v4031
      %v4060 = vadd.f32 %v785, %v4034
      %v4061 = vadd.f32 %v786, %v4039
      %v4062 = vadd.f32 %v787, %v4042
      %v4063 = vadd.f32 %v788, %v4047
      %v4064 = vadd.f32 %v789, %v4050
      %v4065 = vlaneseq
      %v4066 = vshrl.u32 %v4065, 7
      %v4067 = vsub.s32 0, %v4066
      %v4068 = vrot.slane %v791, %v4067
      %v4069 = vadd.f32 %v4053, %v4068
      %v4070 = vadd.f32 %v4054, %v4068
      %v4071 = vadd.f32 %v4055, %v4068
      %v4072 = vadd.f32 %v4056, %v4068
      %v4073 = vadd.f32 %v4057, %v4068
      %v4074 = vadd.f32 %v4058, %v4068
      %v4075 = vadd.f32 %v4059, %v4068
      %v4076 = vadd.f32 %v4060, %v4068
      %v4077 = vadd.f32 %v4061, %v4068
      %v4078 = vadd.f32 %v4062, %v4068
      %v4079 = vadd.f32 %v4063, %v4068
      %v4080 = vadd.f32 %v4064, %v4068
      %v4081 = vsel %vm600, %v4069, 0.0
      %4082 = vadd.xlane.f32.xlu0 %v4081
      %v4083 = vpop.xlane.xlu0 %4082
      %v4084 = vsel %vm600, %v4070, 0.0
      %4085 = vadd.xlane.f32.xlu0 %v4084
      %v4086 = vpop.xlane.xlu0 %4085
      %v4087 = vsel %vm600, %v4071, 0.0
      %4088 = vadd.xlane.f32.xlu0 %v4087
      %v4089 = vpop.xlane.xlu0 %4088
      %v4090 = vsel %vm600, %v4072, 0.0
      %4091 = vadd.xlane.f32.xlu0 %v4090
      %v4092 = vpop.xlane.xlu0 %4091
      %v4093 = vsel %vm600, %v4073, 0.0
      %4094 = vadd.xlane.f32.xlu0 %v4093
      %v4095 = vpop.xlane.xlu0 %4094
      %v4096 = vsel %vm600, %v4074, 0.0
      %4097 = vadd.xlane.f32.xlu0 %v4096
      %v4098 = vpop.xlane.xlu0 %4097
      %v4099 = vsel %vm600, %v4075, 0.0
      %4100 = vadd.xlane.f32.xlu0 %v4099
      %v4101 = vpop.xlane.xlu0 %4100
      %v4102 = vsel %vm600, %v4076, 0.0
      %4103 = vadd.xlane.f32.xlu0 %v4102
      %v4104 = vpop.xlane.xlu0 %4103
      %v4105 = vsel %vm600, %v4077, 0.0
      %4106 = vadd.xlane.f32.xlu0 %v4105
      %v4107 = vpop.xlane.xlu0 %4106
      %v4108 = vsel %vm600, %v4078, 0.0
      %4109 = vadd.xlane.f32.xlu0 %v4108
      %v4110 = vpop.xlane.xlu0 %4109
      %v4111 = vsel %vm600, %v4079, 0.0
      %4112 = vadd.xlane.f32.xlu0 %v4111
      %v4113 = vpop.xlane.xlu0 %4112
      %v4114 = vsel %vm600, %v4080, 0.0
      %4115 = vadd.xlane.f32.xlu0 %v4114
      %v4116 = vpop.xlane.xlu0 %4115
      %v4117 = vmul.f32 %v4083, %v637
      %v4118 = vmul.f32 %v4086, %v637
      %v4119 = vmul.f32 %v4089, %v637
      %v4120 = vmul.f32 %v4092, %v637
      %v4121 = vmul.f32 %v4095, %v637
      %v4122 = vmul.f32 %v4098, %v637
      %v4123 = vmul.f32 %v4101, %v637
      %v4124 = vmul.f32 %v4104, %v637
      %v4125 = vmul.f32 %v4107, %v637
      %v4126 = vmul.f32 %v4110, %v637
      %v4127 = vmul.f32 %v4113, %v637
      %v4128 = vmul.f32 %v4116, %v637
      %v4129 = vsub.f32 %v4069, %v4117
      %v4130 = vsub.f32 %v4070, %v4118
      %v4131 = vsub.f32 %v4071, %v4119
      %v4132 = vsub.f32 %v4072, %v4120
      %v4133 = vsub.f32 %v4073, %v4121
      %v4134 = vsub.f32 %v4074, %v4122
      %v4135 = vsub.f32 %v4075, %v4123
      %v4136 = vsub.f32 %v4076, %v4124
      %v4137 = vsub.f32 %v4077, %v4125
      %v4138 = vsub.f32 %v4078, %v4126
      %v4139 = vsub.f32 %v4079, %v4127
      %v4140 = vsub.f32 %v4080, %v4128
      %v4141 = vmul.f32 %v4129, %v4129
      %v4142 = vmul.f32 %v4130, %v4130
      %v4143 = vmul.f32 %v4131, %v4131
      %v4144 = vmul.f32 %v4132, %v4132
      %v4145 = vmul.f32 %v4133, %v4133
      %v4146 = vmul.f32 %v4134, %v4134
      %v4147 = vmul.f32 %v4135, %v4135
      %v4148 = vmul.f32 %v4136, %v4136
      %v4149 = vmul.f32 %v4137, %v4137
      %v4150 = vmul.f32 %v4138, %v4138
      %v4151 = vmul.f32 %v4139, %v4139
      %v4152 = vmul.f32 %v4140, %v4140
      %v4153 = vsel %vm600, %v4141, 0.0
      %4154 = vadd.xlane.f32.xlu0 %v4153
      %v4155 = vpop.xlane.xlu0 %4154
      %v4156 = vsel %vm600, %v4142, 0.0
      %4157 = vadd.xlane.f32.xlu0 %v4156
      %v4158 = vpop.xlane.xlu0 %4157
      %v4159 = vsel %vm600, %v4143, 0.0
      %4160 = vadd.xlane.f32.xlu0 %v4159
      %v4161 = vpop.xlane.xlu0 %4160
      %v4162 = vsel %vm600, %v4144, 0.0
      %4163 = vadd.xlane.f32.xlu0 %v4162
      %v4164 = vpop.xlane.xlu0 %4163
      %v4165 = vsel %vm600, %v4145, 0.0
      %4166 = vadd.xlane.f32.xlu0 %v4165
      %v4167 = vpop.xlane.xlu0 %4166
      %v4168 = vsel %vm600, %v4146, 0.0
      %4169 = vadd.xlane.f32.xlu0 %v4168
      %v4170 = vpop.xlane.xlu0 %4169
      %v4171 = vsel %vm600, %v4147, 0.0
      %4172 = vadd.xlane.f32.xlu0 %v4171
      %v4173 = vpop.xlane.xlu0 %4172
      %v4174 = vsel %vm600, %v4148, 0.0
      %4175 = vadd.xlane.f32.xlu0 %v4174
      %v4176 = vpop.xlane.xlu0 %4175
      %v4177 = vsel %vm600, %v4149, 0.0
      %4178 = vadd.xlane.f32.xlu0 %v4177
      %v4179 = vpop.xlane.xlu0 %4178
      %v4180 = vsel %vm600, %v4150, 0.0
      %4181 = vadd.xlane.f32.xlu0 %v4180
      %v4182 = vpop.xlane.xlu0 %4181
      %v4183 = vsel %vm600, %v4151, 0.0
      %4184 = vadd.xlane.f32.xlu0 %v4183
      %v4185 = vpop.xlane.xlu0 %4184
      %v4186 = vsel %vm600, %v4152, 0.0
      %4187 = vadd.xlane.f32.xlu0 %v4186
      %v4188 = vpop.xlane.xlu0 %4187
      %v4189 = vmul.f32 %v4155, %v637
      %v4190 = vmul.f32 %v4158, %v637
      %v4191 = vmul.f32 %v4161, %v637
      %v4192 = vmul.f32 %v4164, %v637
      %v4193 = vmul.f32 %v4167, %v637
      %v4194 = vmul.f32 %v4170, %v637
      %v4195 = vmul.f32 %v4173, %v637
      %v4196 = vmul.f32 %v4176, %v637
      %v4197 = vmul.f32 %v4179, %v637
      %v4198 = vmul.f32 %v4182, %v637
      %v4199 = vmul.f32 %v4185, %v637
      %v4200 = vmul.f32 %v4188, %v637
      %v4201 = vadd.f32 %v4189, 1e-05
      %v4202 = vadd.f32 %v4190, 1e-05
      %v4203 = vadd.f32 %v4191, 1e-05
      %v4204 = vadd.f32 %v4192, 1e-05
      %v4205 = vadd.f32 %v4193, 1e-05
      %v4206 = vadd.f32 %v4194, 1e-05
      %v4207 = vadd.f32 %v4195, 1e-05
      %v4208 = vadd.f32 %v4196, 1e-05
      %v4209 = vadd.f32 %v4197, 1e-05
      %v4210 = vadd.f32 %v4198, 1e-05
      %v4211 = vadd.f32 %v4199, 1e-05
      %v4212 = vadd.f32 %v4200, 1e-05
      %v4213 = vrsqrt.pop %v4201
      %v4214 = vrsqrt.pop %v4202
      %v4215 = vrsqrt.pop %v4203
      %v4216 = vrsqrt.pop %v4204
      %v4217 = vrsqrt.pop %v4205
      %v4218 = vrsqrt.pop %v4206
      %v4219 = vrsqrt.pop %v4207
      %v4220 = vrsqrt.pop %v4208
      %v4221 = vrsqrt.pop %v4209
      %v4222 = vrsqrt.pop %v4210
      %v4223 = vrsqrt.pop %v4211
      %v4224 = vrsqrt.pop %v4212
      %v4225 = vmul.f32 %v4129, %v4213
      %v4226 = vmul.f32 %v4130, %v4214
      %v4227 = vmul.f32 %v4131, %v4215
      %v4228 = vmul.f32 %v4132, %v4216
      %v4229 = vmul.f32 %v4133, %v4217
      %v4230 = vmul.f32 %v4134, %v4218
      %v4231 = vmul.f32 %v4135, %v4219
      %v4232 = vmul.f32 %v4136, %v4220
      %v4233 = vmul.f32 %v4137, %v4221
      %v4234 = vmul.f32 %v4138, %v4222
      %v4235 = vmul.f32 %v4139, %v4223
      %v4236 = vmul.f32 %v4140, %v4224
      %v4237 = vlaneseq
      %v4238 = vshrl.u32 %v4237, 7
      %v4239 = vsub.s32 2, %v4238
      %v4240 = vrot.slane %v790, %v4239
      %v4241 = vmul.f32 %v4225, %v4240
      %v4242 = vmul.f32 %v4226, %v4240
      %v4243 = vmul.f32 %v4227, %v4240
      %v4244 = vmul.f32 %v4228, %v4240
      %v4245 = vmul.f32 %v4229, %v4240
      %v4246 = vmul.f32 %v4230, %v4240
      %v4247 = vmul.f32 %v4231, %v4240
      %v4248 = vmul.f32 %v4232, %v4240
      %v4249 = vmul.f32 %v4233, %v4240
      %v4250 = vmul.f32 %v4234, %v4240
      %v4251 = vmul.f32 %v4235, %v4240
      %v4252 = vmul.f32 %v4236, %v4240
      %v4253 = vlaneseq
      %v4254 = vshrl.u32 %v4253, 7
      %v4255 = vsub.s32 3, %v4254
      %v4256 = vrot.slane %v790, %v4255
      %v4257 = vadd.f32 %v4241, %v4256
      %v4258 = vadd.f32 %v4242, %v4256
      %v4259 = vadd.f32 %v4243, %v4256
      %v4260 = vadd.f32 %v4244, %v4256
      %v4261 = vadd.f32 %v4245, %v4256
      %v4262 = vadd.f32 %v4246, %v4256
      %v4263 = vadd.f32 %v4247, %v4256
      %v4264 = vadd.f32 %v4248, %v4256
      %v4265 = vadd.f32 %v4249, %v4256
      %v4266 = vadd.f32 %v4250, %v4256
      %v4267 = vadd.f32 %v4251, %v4256
      %v4268 = vadd.f32 %v4252, %v4256
      %v4269 = vpack.c.bf16 %v4258, %v4257
      %v4270 = vpack.c.bf16 %v4260, %v4259
      %v4271 = vpack.c.bf16 %v4262, %v4261
      %v4272 = vpack.c.bf16 %v4264, %v4263
      %v4273 = vpack.c.bf16 %v4266, %v4265
      %v4274 = vpack.c.bf16 %v4268, %v4267
      %v4275 = vld [vmem:[%s9] sm:$0xf]
      %v4276 = vld [vmem:[%s9 + $0x4] sm:$0xf]
      %v4277 = vld [vmem:[%s9 + $0x8] sm:$0xf]
      %v4278 = vld [vmem:[%s9 + $0xc] sm:$0xf]
      %v4279 = vld [vmem:[%s10] sm:$0x1]
      %v4281 = vlaneseq
      %v4282 = vshrl.u32 %v4281, 7
      %v4283 = vsub.s32 0, %v4282
      %v4284 = vrot.slane %v4279, %v4283
      %v4290 = vunpack.c.l.b16 %v4275
      %v4291 = vunpack.c.l.b16 %v4276
      %v4292 = vunpack.c.l.b16 %v4277
      %v4293 = vunpack.c.l.b16 %v4278
      %v4294 = vpack.c.b16 %v4291, %v4290
      %v4295 = vpack.c.b16 %v4293, %v4292
      %v4299 = vsel %vm600, %v4269, 0
      %v4302 = vsel %vm600, %v4270, 0
      %v4305 = vsel %vm600, %v4271, 0
      %v4308 = vsel %vm600, %v4272, 0
      %v4311 = vsel %vm600, %v4273, 0
      %v4314 = vsel %vm600, %v4274, 0
      %4316 = vmatprep.subr.bf16.mxu0 0
      %4317 = vmatpush1.bf16.msra.mxu0 %v4294
      %4318 = vmatprep.subr.bf16.mxu0 0
      %4319 = vmatpush1.bf16.msra.mxu0 %v4295
      %4320 = vmatprep.subr.bf16.mxu0 0
      %4321 = vmatpush1.bf16.msra.mxu0 0
      %4322 = vmatprep.subr.bf16.mxu0 0
      %4323 = vmatpush1.bf16.msra.mxu0 0
      %4324 = vmatprep.subr.bf16.mxu0 0
      %4325 = vmatpush1.bf16.msra.mxu0 0
      %4326 = vmatprep.subr.bf16.mxu0 0
      %4327 = vmatpush1.bf16.msra.mxu0 0
      %4328 = vmatprep.subr.bf16.mxu0 0
      %4329 = vmatpush1.bf16.msra.mxu0 0
      %4330 = vmatprep.subr.bf16.mxu0 0
      %4331 = vmatpush1.bf16.msra.mxu0 0
      %4332 = vmatprep.subr.bf16.mxu0 0
      %4333 = vmatpush1.bf16.msra.mxu0 0
      %4334 = vmatprep.subr.bf16.mxu0 0
      %4335 = vmatpush1.bf16.msra.mxu0 0
      %4336 = vmatprep.subr.bf16.mxu0 0
      %4337 = vmatpush1.bf16.msra.mxu0 0
      %4338 = vmatprep.subr.bf16.mxu0 0
      %4339 = vmatpush1.bf16.msra.mxu0 0
      %4340 = vmatprep.subr.bf16.mxu0 0
      %4341 = vmatpush1.bf16.msra.mxu0 0
      %4342 = vmatprep.subr.bf16.mxu0 0
      %4343 = vmatpush1.bf16.msra.mxu0 0
      %4344 = vmatprep.subr.bf16.mxu0 0
      %4345 = vmatpush1.bf16.msra.mxu0 0
      %4346 = vmatprep.subr.bf16.mxu0 0
      %4347 = vmatpush1.bf16.msra.mxu0 0
      %4348 = vmatprep.mubr.bf16.mxu0 0
      %4349 = vmatmul.mubr.bf16.gmra.mrb[0].mxu0 %v4299
      %v4350 = vpop.f32.mrb[0].mxu0
      %v4351 = vadd.f32 %v4284, %v4350
      %v4352 = vpop.f32.mrb[0].mxu0
      %v4353 = vpop.f32.mrb[0].mxu0
      %v4354 = vadd.f32 %v4284, %v4353
      %v4355 = vpop.f32.mrb[0].mxu0
      %4356 = vmatprep.mubr.bf16.mxu0 0
      %4357 = vmatmul.mubr.bf16.gmra.mrb[0].mxu0 %v4302
      %v4358 = vpop.f32.mrb[0].mxu0
      %v4359 = vadd.f32 %v4284, %v4358
      %v4360 = vpop.f32.mrb[0].mxu0
      %v4361 = vpop.f32.mrb[0].mxu0
      %v4362 = vadd.f32 %v4284, %v4361
      %v4363 = vpop.f32.mrb[0].mxu0
      %4364 = vmatprep.mubr.bf16.mxu0 0
      %4365 = vmatmul.mubr.bf16.gmra.mrb[0].mxu0 %v4305
      %v4366 = vpop.f32.mrb[0].mxu0
      %v4367 = vadd.f32 %v4284, %v4366
      %v4368 = vpop.f32.mrb[0].mxu0
      %v4369 = vpop.f32.mrb[0].mxu0
      %v4370 = vadd.f32 %v4284, %v4369
      %v4371 = vpop.f32.mrb[0].mxu0
      %4372 = vmatprep.mubr.bf16.mxu0 0
      %4373 = vmatmul.mubr.bf16.gmra.mrb[0].mxu0 %v4308
      %v4374 = vpop.f32.mrb[0].mxu0
      %v4375 = vadd.f32 %v4284, %v4374
      %v4376 = vpop.f32.mrb[0].mxu0
      %v4377 = vpop.f32.mrb[0].mxu0
      %v4378 = vadd.f32 %v4284, %v4377
      %v4379 = vpop.f32.mrb[0].mxu0
      %4380 = vmatprep.mubr.bf16.mxu0 0
      %4381 = vmatmul.mubr.bf16.gmra.mrb[0].mxu0 %v4311
      %v4382 = vpop.f32.mrb[0].mxu0
      %v4383 = vadd.f32 %v4284, %v4382
      %v4384 = vpop.f32.mrb[0].mxu0
      %v4385 = vpop.f32.mrb[0].mxu0
      %v4386 = vadd.f32 %v4284, %v4385
      %v4387 = vpop.f32.mrb[0].mxu0
      %4388 = vmatprep.mubr.bf16.mxu0 0
      %4389 = vmatmul.mubr.bf16.gmra.mrb[0].mxu0 %v4314
      %v4390 = vpop.f32.mrb[0].mxu0
      %v4391 = vadd.f32 %v4284, %v4390
      %v4392 = vpop.f32.mrb[0].mxu0
      %v4393 = vpop.f32.mrb[0].mxu0
      %v4394 = vadd.f32 %v4284, %v4393
      %v4395 = vpop.f32.mrb[0].mxu0
      %4396 = vdwg.mxu0
      %v4397 = vmul.f32 %v4351, -1.702
      %v4398 = vmul.f32 %v4354, -1.702
      %v4399 = vmul.f32 %v4359, -1.702
      %v4400 = vmul.f32 %v4362, -1.702
      %v4401 = vmul.f32 %v4367, -1.702
      %v4402 = vmul.f32 %v4370, -1.702
      %v4403 = vmul.f32 %v4375, -1.702
      %v4404 = vmul.f32 %v4378, -1.702
      %v4405 = vmul.f32 %v4383, -1.702
      %v4406 = vmul.f32 %v4386, -1.702
      %v4407 = vmul.f32 %v4391, -1.702
      %v4408 = vmul.f32 %v4394, -1.702
      %v4409 = vmul.f32 %v4397, 1.442695
      %v4410 = vpow.pop %v4409
      %v4411 = vmul.f32 %v4398, 1.442695
      %v4412 = vpow.pop %v4411
      %v4413 = vmul.f32 %v4399, 1.442695
      %v4414 = vpow.pop %v4413
      %v4415 = vmul.f32 %v4400, 1.442695
      %v4416 = vpow.pop %v4415
      %v4417 = vmul.f32 %v4401, 1.442695
      %v4418 = vpow.pop %v4417
      %v4419 = vmul.f32 %v4402, 1.442695
      %v4420 = vpow.pop %v4419
      %v4421 = vmul.f32 %v4403, 1.442695
      %v4422 = vpow.pop %v4421
      %v4423 = vmul.f32 %v4404, 1.442695
      %v4424 = vpow.pop %v4423
      %v4425 = vmul.f32 %v4405, 1.442695
      %v4426 = vpow.pop %v4425
      %v4427 = vmul.f32 %v4406, 1.442695
      %v4428 = vpow.pop %v4427
      %v4429 = vmul.f32 %v4407, 1.442695
      %v4430 = vpow.pop %v4429
      %v4431 = vmul.f32 %v4408, 1.442695
      %v4432 = vpow.pop %v4431
      %v4433 = vadd.f32 %v4410, 1.0
      %v4434 = vadd.f32 %v4412, 1.0
      %v4435 = vadd.f32 %v4414, 1.0
      %v4436 = vadd.f32 %v4416, 1.0
      %v4437 = vadd.f32 %v4418, 1.0
      %v4438 = vadd.f32 %v4420, 1.0
      %v4439 = vadd.f32 %v4422, 1.0
      %v4440 = vadd.f32 %v4424, 1.0
      %v4441 = vadd.f32 %v4426, 1.0
      %v4442 = vadd.f32 %v4428, 1.0
      %v4443 = vadd.f32 %v4430, 1.0
      %v4444 = vadd.f32 %v4432, 1.0
      %v4445 = vrcp.pop %v4433
      %v4446 = vrcp.pop %v4434
      %v4447 = vrcp.pop %v4435
      %v4448 = vrcp.pop %v4436
      %v4449 = vrcp.pop %v4437
      %v4450 = vrcp.pop %v4438
      %v4451 = vrcp.pop %v4439
      %v4452 = vrcp.pop %v4440
      %v4453 = vrcp.pop %v4441
      %v4454 = vrcp.pop %v4442
      %v4455 = vrcp.pop %v4443
      %v4456 = vrcp.pop %v4444
      %v4457 = vmul.f32 %v4351, %v4445
      %v4458 = vmul.f32 %v4354, %v4446
      %v4459 = vmul.f32 %v4359, %v4447
      %v4460 = vmul.f32 %v4362, %v4448
      %v4461 = vmul.f32 %v4367, %v4449
      %v4462 = vmul.f32 %v4370, %v4450
      %v4463 = vmul.f32 %v4375, %v4451
      %v4464 = vmul.f32 %v4378, %v4452
      %v4465 = vmul.f32 %v4383, %v4453
      %v4466 = vmul.f32 %v4386, %v4454
      %v4467 = vmul.f32 %v4391, %v4455
      %v4468 = vmul.f32 %v4394, %v4456
      %v4469 = vpack.c.bf16 %v4458, %v4457
      %v4470 = vpack.c.bf16 %v4460, %v4459
      %v4471 = vpack.c.bf16 %v4462, %v4461
      %v4472 = vpack.c.bf16 %v4464, %v4463
      %v4473 = vpack.c.bf16 %v4466, %v4465
      %v4474 = vpack.c.bf16 %v4468, %v4467
      %v4475 = vld [vmem:[%s11] sm:$0xf]
      %v4476 = vld [vmem:[%s11 + $0x4] sm:$0xf]
      %v4477 = vld [vmem:[%s11 + $0x8] sm:$0xf]
      %v4478 = vld [vmem:[%s11 + $0xc] sm:$0xf]
      %v4479 = vld [vmem:[%s11 + $0x10] sm:$0xf]
      %v4480 = vld [vmem:[%s11 + $0x14] sm:$0xf]
      %v4481 = vld [vmem:[%s11 + $0x18] sm:$0xf]
      %v4482 = vld [vmem:[%s11 + $0x1c] sm:$0xf]
      %v4491 = vunpack.c.l.b16 %v4475
      %v4492 = vunpack.c.l.b16 %v4476
      %v4493 = vunpack.c.l.b16 %v4477
      %v4494 = vunpack.c.l.b16 %v4478
      %v4495 = vunpack.c.l.b16 %v4479
      %v4496 = vunpack.c.l.b16 %v4480
      %v4497 = vunpack.c.l.b16 %v4481
      %v4498 = vunpack.c.l.b16 %v4482
      %v4499 = vpack.c.b16 %v4492, %v4491
      %v4500 = vpack.c.b16 %v4494, %v4493
      %v4501 = vpack.c.b16 %v4496, %v4495
      %v4502 = vpack.c.b16 %v4498, %v4497
      %vm4507 = vcmask 523264
      %v4509 = vsel %vm4507, %v4469, 0
      %v4512 = vsel %vm4507, %v4470, 0
      %v4515 = vsel %vm4507, %v4471, 0
      %v4518 = vsel %vm4507, %v4472, 0
      %v4521 = vsel %vm4507, %v4473, 0
      %v4524 = vsel %vm4507, %v4474, 0
      %4526 = vmatprep.subr.bf16.mxu0 0
      %4527 = vmatpush1.bf16.msra.mxu0 %v4499
      %4528 = vmatprep.subr.bf16.mxu0 0
      %4529 = vmatpush1.bf16.msra.mxu0 %v4500
      %4530 = vmatprep.subr.bf16.mxu0 0
      %4531 = vmatpush1.bf16.msra.mxu0 %v4501
      %4532 = vmatprep.subr.bf16.mxu0 0
      %4533 = vmatpush1.bf16.msra.mxu0 %v4502
      %4534 = vmatprep.subr.bf16.mxu0 0
      %4535 = vmatpush1.bf16.msra.mxu0 0
      %4536 = vmatprep.subr.bf16.mxu0 0
      %4537 = vmatpush1.bf16.msra.mxu0 0
      %4538 = vmatprep.subr.bf16.mxu0 0
      %4539 = vmatpush1.bf16.msra.mxu0 0
      %4540 = vmatprep.subr.bf16.mxu0 0
      %4541 = vmatpush1.bf16.msra.mxu0 0
      %4542 = vmatprep.subr.bf16.mxu0 0
      %4543 = vmatpush1.bf16.msra.mxu0 0
      %4544 = vmatprep.subr.bf16.mxu0 0
      %4545 = vmatpush1.bf16.msra.mxu0 0
      %4546 = vmatprep.subr.bf16.mxu0 0
      %4547 = vmatpush1.bf16.msra.mxu0 0
      %4548 = vmatprep.subr.bf16.mxu0 0
      %4549 = vmatpush1.bf16.msra.mxu0 0
      %4550 = vmatprep.subr.bf16.mxu0 0
      %4551 = vmatpush1.bf16.msra.mxu0 0
      %4552 = vmatprep.subr.bf16.mxu0 0
      %4553 = vmatpush1.bf16.msra.mxu0 0
      %4554 = vmatprep.subr.bf16.mxu0 0
      %4555 = vmatpush1.bf16.msra.mxu0 0
      %4556 = vmatprep.subr.bf16.mxu0 0
      %4557 = vmatpush1.bf16.msra.mxu0 0
      %4558 = vmatprep.mubr.bf16.mxu0 0
      %4559 = vmatmul.mubr.bf16.gmra.mrb[0].mxu0 %v4509
      %v4560 = vpop.f32.mrb[0].mxu0
      %v4561 = vadd.f32 0.0, %v4560
      %v4562 = vpop.f32.mrb[0].mxu0
      %v4563 = vpop.f32.mrb[0].mxu0
      %v4564 = vadd.f32 0.0, %v4563
      %v4565 = vpop.f32.mrb[0].mxu0
      %4566 = vmatprep.mubr.bf16.mxu0 0
      %4567 = vmatmul.mubr.bf16.gmra.mrb[0].mxu0 %v4512
      %v4568 = vpop.f32.mrb[0].mxu0
      %v4569 = vadd.f32 0.0, %v4568
      %v4570 = vpop.f32.mrb[0].mxu0
      %v4571 = vpop.f32.mrb[0].mxu0
      %v4572 = vadd.f32 0.0, %v4571
      %v4573 = vpop.f32.mrb[0].mxu0
      %4574 = vmatprep.mubr.bf16.mxu0 0
      %4575 = vmatmul.mubr.bf16.gmra.mrb[0].mxu0 %v4515
      %v4576 = vpop.f32.mrb[0].mxu0
      %v4577 = vadd.f32 0.0, %v4576
      %v4578 = vpop.f32.mrb[0].mxu0
      %v4579 = vpop.f32.mrb[0].mxu0
      %v4580 = vadd.f32 0.0, %v4579
      %v4581 = vpop.f32.mrb[0].mxu0
      %4582 = vmatprep.mubr.bf16.mxu0 0
      %4583 = vmatmul.mubr.bf16.gmra.mrb[0].mxu0 %v4518
      %v4584 = vpop.f32.mrb[0].mxu0
      %v4585 = vadd.f32 0.0, %v4584
      %v4586 = vpop.f32.mrb[0].mxu0
      %v4587 = vpop.f32.mrb[0].mxu0
      %v4588 = vadd.f32 0.0, %v4587
      %v4589 = vpop.f32.mrb[0].mxu0
      %4590 = vmatprep.mubr.bf16.mxu0 0
      %4591 = vmatmul.mubr.bf16.gmra.mrb[0].mxu0 %v4521
      %v4592 = vpop.f32.mrb[0].mxu0
      %v4593 = vadd.f32 0.0, %v4592
      %v4594 = vpop.f32.mrb[0].mxu0
      %v4595 = vpop.f32.mrb[0].mxu0
      %v4596 = vadd.f32 0.0, %v4595
      %v4597 = vpop.f32.mrb[0].mxu0
      %4598 = vmatprep.mubr.bf16.mxu0 0
      %4599 = vmatmul.mubr.bf16.gmra.mrb[0].mxu0 %v4524
      %v4600 = vpop.f32.mrb[0].mxu0
      %v4601 = vadd.f32 0.0, %v4600
      %v4602 = vpop.f32.mrb[0].mxu0
      %v4603 = vpop.f32.mrb[0].mxu0
      %v4604 = vadd.f32 0.0, %v4603
      %v4605 = vpop.f32.mrb[0].mxu0
      %4606 = vdwg.mxu0
      %v4607 = vadd.f32 %v4069, %v4561
      %v4608 = vadd.f32 %v4070, %v4564
      %v4609 = vadd.f32 %v4071, %v4569
      %v4610 = vadd.f32 %v4072, %v4572
      %v4611 = vadd.f32 %v4073, %v4577
      %v4612 = vadd.f32 %v4074, %v4580
      %v4613 = vadd.f32 %v4075, %v4585
      %v4614 = vadd.f32 %v4076, %v4588
      %v4615 = vadd.f32 %v4077, %v4593
      %v4616 = vadd.f32 %v4078, %v4596
      %v4617 = vadd.f32 %v4079, %v4601
      %v4618 = vadd.f32 %v4080, %v4604
      %v4619 = vlaneseq
      %v4620 = vshrl.u32 %v4619, 7
      %v4621 = vsub.s32 1, %v4620
      %v4622 = vrot.slane %v791, %v4621
      %v4623 = vadd.f32 %v4607, %v4622
      %v4624 = vadd.f32 %v4608, %v4622
      %v4625 = vadd.f32 %v4609, %v4622
      %v4626 = vadd.f32 %v4610, %v4622
      %v4627 = vadd.f32 %v4611, %v4622
      %v4628 = vadd.f32 %v4612, %v4622
      %v4629 = vadd.f32 %v4613, %v4622
      %v4630 = vadd.f32 %v4614, %v4622
      %v4631 = vadd.f32 %v4615, %v4622
      %v4632 = vadd.f32 %v4616, %v4622
      %v4633 = vadd.f32 %v4617, %v4622
      %v4634 = vadd.f32 %v4618, %v4622
      %s4635 = scalar_lea.vmem %s4, 4
      %v4636 = vld [vmem:[%s4635] sm:$0xf]
      %s4637 = scalar_lea.vmem %s8, 2
      %v4638 = vld [vmem:[%s4637] sm:$0x3]
      %v4639 = vsel %vm600, %v4623, 0.0
      %4640 = vadd.xlane.f32.xlu0 %v4639
      %v4641 = vpop.xlane.xlu0 %4640
      %v4642 = vsel %vm600, %v4624, 0.0
      %4643 = vadd.xlane.f32.xlu0 %v4642
      %v4644 = vpop.xlane.xlu0 %4643
      %v4645 = vsel %vm600, %v4625, 0.0
      %4646 = vadd.xlane.f32.xlu0 %v4645
      %v4647 = vpop.xlane.xlu0 %4646
      %v4648 = vsel %vm600, %v4626, 0.0
      %4649 = vadd.xlane.f32.xlu0 %v4648
      %v4650 = vpop.xlane.xlu0 %4649
      %v4651 = vsel %vm600, %v4627, 0.0
      %4652 = vadd.xlane.f32.xlu0 %v4651
      %v4653 = vpop.xlane.xlu0 %4652
      %v4654 = vsel %vm600, %v4628, 0.0
      %4655 = vadd.xlane.f32.xlu0 %v4654
      %v4656 = vpop.xlane.xlu0 %4655
      %v4657 = vsel %vm600, %v4629, 0.0
      %4658 = vadd.xlane.f32.xlu0 %v4657
      %v4659 = vpop.xlane.xlu0 %4658
      %v4660 = vsel %vm600, %v4630, 0.0
      %4661 = vadd.xlane.f32.xlu0 %v4660
      %v4662 = vpop.xlane.xlu0 %4661
      %v4663 = vsel %vm600, %v4631, 0.0
      %4664 = vadd.xlane.f32.xlu0 %v4663
      %v4665 = vpop.xlane.xlu0 %4664
      %v4666 = vsel %vm600, %v4632, 0.0
      %4667 = vadd.xlane.f32.xlu0 %v4666
      %v4668 = vpop.xlane.xlu0 %4667
      %v4669 = vsel %vm600, %v4633, 0.0
      %4670 = vadd.xlane.f32.xlu0 %v4669
      %v4671 = vpop.xlane.xlu0 %4670
      %v4672 = vsel %vm600, %v4634, 0.0
      %4673 = vadd.xlane.f32.xlu0 %v4672
      %v4674 = vpop.xlane.xlu0 %4673
      %v4675 = vmul.f32 %v4641, %v637
      %v4676 = vmul.f32 %v4644, %v637
      %v4677 = vmul.f32 %v4647, %v637
      %v4678 = vmul.f32 %v4650, %v637
      %v4679 = vmul.f32 %v4653, %v637
      %v4680 = vmul.f32 %v4656, %v637
      %v4681 = vmul.f32 %v4659, %v637
      %v4682 = vmul.f32 %v4662, %v637
      %v4683 = vmul.f32 %v4665, %v637
      %v4684 = vmul.f32 %v4668, %v637
      %v4685 = vmul.f32 %v4671, %v637
      %v4686 = vmul.f32 %v4674, %v637
      %v4687 = vsub.f32 %v4623, %v4675
      %v4688 = vsub.f32 %v4624, %v4676
      %v4689 = vsub.f32 %v4625, %v4677
      %v4690 = vsub.f32 %v4626, %v4678
      %v4691 = vsub.f32 %v4627, %v4679
      %v4692 = vsub.f32 %v4628, %v4680
      %v4693 = vsub.f32 %v4629, %v4681
      %v4694 = vsub.f32 %v4630, %v4682
      %v4695 = vsub.f32 %v4631, %v4683
      %v4696 = vsub.f32 %v4632, %v4684
      %v4697 = vsub.f32 %v4633, %v4685
      %v4698 = vsub.f32 %v4634, %v4686
      %v4699 = vmul.f32 %v4687, %v4687
      %v4700 = vmul.f32 %v4688, %v4688
      %v4701 = vmul.f32 %v4689, %v4689
      %v4702 = vmul.f32 %v4690, %v4690
      %v4703 = vmul.f32 %v4691, %v4691
      %v4704 = vmul.f32 %v4692, %v4692
      %v4705 = vmul.f32 %v4693, %v4693
      %v4706 = vmul.f32 %v4694, %v4694
      %v4707 = vmul.f32 %v4695, %v4695
      %v4708 = vmul.f32 %v4696, %v4696
      %v4709 = vmul.f32 %v4697, %v4697
      %v4710 = vmul.f32 %v4698, %v4698
      %v4711 = vsel %vm600, %v4699, 0.0
      %4712 = vadd.xlane.f32.xlu0 %v4711
      %v4713 = vpop.xlane.xlu0 %4712
      %v4714 = vsel %vm600, %v4700, 0.0
      %4715 = vadd.xlane.f32.xlu0 %v4714
      %v4716 = vpop.xlane.xlu0 %4715
      %v4717 = vsel %vm600, %v4701, 0.0
      %4718 = vadd.xlane.f32.xlu0 %v4717
      %v4719 = vpop.xlane.xlu0 %4718
      %v4720 = vsel %vm600, %v4702, 0.0
      %4721 = vadd.xlane.f32.xlu0 %v4720
      %v4722 = vpop.xlane.xlu0 %4721
      %v4723 = vsel %vm600, %v4703, 0.0
      %4724 = vadd.xlane.f32.xlu0 %v4723
      %v4725 = vpop.xlane.xlu0 %4724
      %v4726 = vsel %vm600, %v4704, 0.0
      %4727 = vadd.xlane.f32.xlu0 %v4726
      %v4728 = vpop.xlane.xlu0 %4727
      %v4729 = vsel %vm600, %v4705, 0.0
      %4730 = vadd.xlane.f32.xlu0 %v4729
      %v4731 = vpop.xlane.xlu0 %4730
      %v4732 = vsel %vm600, %v4706, 0.0
      %4733 = vadd.xlane.f32.xlu0 %v4732
      %v4734 = vpop.xlane.xlu0 %4733
      %v4735 = vsel %vm600, %v4707, 0.0
      %4736 = vadd.xlane.f32.xlu0 %v4735
      %v4737 = vpop.xlane.xlu0 %4736
      %v4738 = vsel %vm600, %v4708, 0.0
      %4739 = vadd.xlane.f32.xlu0 %v4738
      %v4740 = vpop.xlane.xlu0 %4739
      %v4741 = vsel %vm600, %v4709, 0.0
      %4742 = vadd.xlane.f32.xlu0 %v4741
      %v4743 = vpop.xlane.xlu0 %4742
      %v4744 = vsel %vm600, %v4710, 0.0
      %4745 = vadd.xlane.f32.xlu0 %v4744
      %v4746 = vpop.xlane.xlu0 %4745
      %v4747 = vmul.f32 %v4713, %v637
      %v4748 = vmul.f32 %v4716, %v637
      %v4749 = vmul.f32 %v4719, %v637
      %v4750 = vmul.f32 %v4722, %v637
      %v4751 = vmul.f32 %v4725, %v637
      %v4752 = vmul.f32 %v4728, %v637
      %v4753 = vmul.f32 %v4731, %v637
      %v4754 = vmul.f32 %v4734, %v637
      %v4755 = vmul.f32 %v4737, %v637
      %v4756 = vmul.f32 %v4740, %v637
      %v4757 = vmul.f32 %v4743, %v637
      %v4758 = vmul.f32 %v4746, %v637
      %v4759 = vadd.f32 %v4747, 1e-05
      %v4760 = vadd.f32 %v4748, 1e-05
      %v4761 = vadd.f32 %v4749, 1e-05
      %v4762 = vadd.f32 %v4750, 1e-05
      %v4763 = vadd.f32 %v4751, 1e-05
      %v4764 = vadd.f32 %v4752, 1e-05
      %v4765 = vadd.f32 %v4753, 1e-05
      %v4766 = vadd.f32 %v4754, 1e-05
      %v4767 = vadd.f32 %v4755, 1e-05
      %v4768 = vadd.f32 %v4756, 1e-05
      %v4769 = vadd.f32 %v4757, 1e-05
      %v4770 = vadd.f32 %v4758, 1e-05
      %v4771 = vrsqrt.pop %v4759
      %v4772 = vrsqrt.pop %v4760
      %v4773 = vrsqrt.pop %v4761
      %v4774 = vrsqrt.pop %v4762
      %v4775 = vrsqrt.pop %v4763
      %v4776 = vrsqrt.pop %v4764
      %v4777 = vrsqrt.pop %v4765
      %v4778 = vrsqrt.pop %v4766
      %v4779 = vrsqrt.pop %v4767
      %v4780 = vrsqrt.pop %v4768
      %v4781 = vrsqrt.pop %v4769
      %v4782 = vrsqrt.pop %v4770
      %v4783 = vmul.f32 %v4687, %v4771
      %v4784 = vmul.f32 %v4688, %v4772
      %v4785 = vmul.f32 %v4689, %v4773
      %v4786 = vmul.f32 %v4690, %v4774
      %v4787 = vmul.f32 %v4691, %v4775
      %v4788 = vmul.f32 %v4692, %v4776
      %v4789 = vmul.f32 %v4693, %v4777
      %v4790 = vmul.f32 %v4694, %v4778
      %v4791 = vmul.f32 %v4695, %v4779
      %v4792 = vmul.f32 %v4696, %v4780
      %v4793 = vmul.f32 %v4697, %v4781
      %v4794 = vmul.f32 %v4698, %v4782
      %v4795 = vlaneseq
      %v4796 = vshrl.u32 %v4795, 7
      %v4797 = vsub.s32 0, %v4796
      %v4798 = vrot.slane %v4636, %v4797
      %v4799 = vmul.f32 %v4783, %v4798
      %v4800 = vmul.f32 %v4784, %v4798
      %v4801 = vmul.f32 %v4785, %v4798
      %v4802 = vmul.f32 %v4786, %v4798
      %v4803 = vmul.f32 %v4787, %v4798
      %v4804 = vmul.f32 %v4788, %v4798
      %v4805 = vmul.f32 %v4789, %v4798
      %v4806 = vmul.f32 %v4790, %v4798
      %v4807 = vmul.f32 %v4791, %v4798
      %v4808 = vmul.f32 %v4792, %v4798
      %v4809 = vmul.f32 %v4793, %v4798
      %v4810 = vmul.f32 %v4794, %v4798
      %v4811 = vlaneseq
      %v4812 = vshrl.u32 %v4811, 7
      %v4813 = vsub.s32 1, %v4812
      %v4814 = vrot.slane %v4636, %v4813
      %v4815 = vadd.f32 %v4799, %v4814
      %v4816 = vadd.f32 %v4800, %v4814
      %v4817 = vadd.f32 %v4801, %v4814
      %v4818 = vadd.f32 %v4802, %v4814
      %v4819 = vadd.f32 %v4803, %v4814
      %v4820 = vadd.f32 %v4804, %v4814
      %v4821 = vadd.f32 %v4805, %v4814
      %v4822 = vadd.f32 %v4806, %v4814
      %v4823 = vadd.f32 %v4807, %v4814
      %v4824 = vadd.f32 %v4808, %v4814
      %v4825 = vadd.f32 %v4809, %v4814
      %v4826 = vadd.f32 %v4810, %v4814
      %v4827 = vpack.c.bf16 %v4816, %v4815
      %v4828 = vpack.c.bf16 %v4818, %v4817
      %v4829 = vpack.c.bf16 %v4820, %v4819
      %v4830 = vpack.c.bf16 %v4822, %v4821
      %v4831 = vpack.c.bf16 %v4824, %v4823
      %v4832 = vpack.c.bf16 %v4826, %v4825
      %s4833 = scalar_lea.vmem %s5, 16
      %v4834 = vld [vmem:[%s4833] sm:$0xf]
      %v4835 = vld [vmem:[%s4833 + $0x4] sm:$0xf]
      %v4836 = vld [vmem:[%s4833 + $0x8] sm:$0xf]
      %v4837 = vld [vmem:[%s4833 + $0xc] sm:$0xf]
      %s4838 = scalar_lea.vmem %s6, 1
      %v4839 = vld [vmem:[%s4838] sm:$0x1]
      %v4841 = vlaneseq
      %v4842 = vshrl.u32 %v4841, 7
      %v4843 = vsub.s32 0, %v4842
      %v4844 = vrot.slane %v4839, %v4843
      %v4850 = vunpack.c.l.b16 %v4834
      %v4851 = vunpack.c.l.b16 %v4835
      %v4852 = vunpack.c.l.b16 %v4836
      %v4853 = vunpack.c.l.b16 %v4837
      %v4854 = vpack.c.b16 %v4851, %v4850
      %v4855 = vpack.c.b16 %v4853, %v4852
      %v4859 = vsel %vm600, %v4827, 0
      %v4862 = vsel %vm600, %v4828, 0
      %v4865 = vsel %vm600, %v4829, 0
      %v4868 = vsel %vm600, %v4830, 0
      %v4871 = vsel %vm600, %v4831, 0
      %v4874 = vsel %vm600, %v4832, 0
      %4876 = vmatprep.subr.bf16.mxu0 0
      %4877 = vmatpush1.bf16.msra.mxu0 %v4854
      %4878 = vmatprep.subr.bf16.mxu0 0
      %4879 = vmatpush1.bf16.msra.mxu0 %v4855
      %4880 = vmatprep.subr.bf16.mxu0 0
      %4881 = vmatpush1.bf16.msra.mxu0 0
      %4882 = vmatprep.subr.bf16.mxu0 0
      %4883 = vmatpush1.bf16.msra.mxu0 0
      %4884 = vmatprep.subr.bf16.mxu0 0
      %4885 = vmatpush1.bf16.msra.mxu0 0
      %4886 = vmatprep.subr.bf16.mxu0 0
      %4887 = vmatpush1.bf16.msra.mxu0 0
      %4888 = vmatprep.subr.bf16.mxu0 0
      %4889 = vmatpush1.bf16.msra.mxu0 0
      %4890 = vmatprep.subr.bf16.mxu0 0
      %4891 = vmatpush1.bf16.msra.mxu0 0
      %4892 = vmatprep.subr.bf16.mxu0 0
      %4893 = vmatpush1.bf16.msra.mxu0 0
      %4894 = vmatprep.subr.bf16.mxu0 0
      %4895 = vmatpush1.bf16.msra.mxu0 0
      %4896 = vmatprep.subr.bf16.mxu0 0
      %4897 = vmatpush1.bf16.msra.mxu0 0
      %4898 = vmatprep.subr.bf16.mxu0 0
      %4899 = vmatpush1.bf16.msra.mxu0 0
      %4900 = vmatprep.subr.bf16.mxu0 0
      %4901 = vmatpush1.bf16.msra.mxu0 0
      %4902 = vmatprep.subr.bf16.mxu0 0
      %4903 = vmatpush1.bf16.msra.mxu0 0
      %4904 = vmatprep.subr.bf16.mxu0 0
      %4905 = vmatpush1.bf16.msra.mxu0 0
      %4906 = vmatprep.subr.bf16.mxu0 0
      %4907 = vmatpush1.bf16.msra.mxu0 0
      %4908 = vmatprep.mubr.bf16.mxu0 0
      %4909 = vmatmul.mubr.bf16.gmra.mrb[0].mxu0 %v4859
      %v4910 = vpop.f32.mrb[0].mxu0
      %v4911 = vadd.f32 %v4844, %v4910
      %v4912 = vpop.f32.mrb[0].mxu0
      %v4913 = vpop.f32.mrb[0].mxu0
      %v4914 = vadd.f32 %v4844, %v4913
      %v4915 = vpop.f32.mrb[0].mxu0
      %4916 = vmatprep.mubr.bf16.mxu0 0
      %4917 = vmatmul.mubr.bf16.gmra.mrb[0].mxu0 %v4862
      %v4918 = vpop.f32.mrb[0].mxu0
      %v4919 = vadd.f32 %v4844, %v4918
      %v4920 = vpop.f32.mrb[0].mxu0
      %v4921 = vpop.f32.mrb[0].mxu0
      %v4922 = vadd.f32 %v4844, %v4921
      %v4923 = vpop.f32.mrb[0].mxu0
      %4924 = vmatprep.mubr.bf16.mxu0 0
      %4925 = vmatmul.mubr.bf16.gmra.mrb[0].mxu0 %v4865
      %v4926 = vpop.f32.mrb[0].mxu0
      %v4927 = vadd.f32 %v4844, %v4926
      %v4928 = vpop.f32.mrb[0].mxu0
      %v4929 = vpop.f32.mrb[0].mxu0
      %v4930 = vadd.f32 %v4844, %v4929
      %v4931 = vpop.f32.mrb[0].mxu0
      %4932 = vmatprep.mubr.bf16.mxu0 0
      %4933 = vmatmul.mubr.bf16.gmra.mrb[0].mxu0 %v4868
      %v4934 = vpop.f32.mrb[0].mxu0
      %v4935 = vadd.f32 %v4844, %v4934
      %v4936 = vpop.f32.mrb[0].mxu0
      %v4937 = vpop.f32.mrb[0].mxu0
      %v4938 = vadd.f32 %v4844, %v4937
      %v4939 = vpop.f32.mrb[0].mxu0
      %4940 = vmatprep.mubr.bf16.mxu0 0
      %4941 = vmatmul.mubr.bf16.gmra.mrb[0].mxu0 %v4871
      %v4942 = vpop.f32.mrb[0].mxu0
      %v4943 = vadd.f32 %v4844, %v4942
      %v4944 = vpop.f32.mrb[0].mxu0
      %v4945 = vpop.f32.mrb[0].mxu0
      %v4946 = vadd.f32 %v4844, %v4945
      %v4947 = vpop.f32.mrb[0].mxu0
      %4948 = vmatprep.mubr.bf16.mxu0 0
      %4949 = vmatmul.mubr.bf16.gmra.mrb[0].mxu0 %v4874
      %v4950 = vpop.f32.mrb[0].mxu0
      %v4951 = vadd.f32 %v4844, %v4950
      %v4952 = vpop.f32.mrb[0].mxu0
      %v4953 = vpop.f32.mrb[0].mxu0
      %v4954 = vadd.f32 %v4844, %v4953
      %v4955 = vpop.f32.mrb[0].mxu0
      %4956 = vdwg.mxu0
      %v4957 = vpack.c.bf16 %v4914, %v4911
      %v4958 = vpack.c.bf16 %v4919, %v4919
      %4961 = vrot.lane.b32.xlu0 %v4957, 96
      %v4962 = vpop.permute.xlu0 %4961
      %4963 = vrot.lane.b32.xlu0 %v4958, 96
      %v4964 = vpop.permute.xlu0 %4963
      %v4966 = vsel %vm1116, %v4957, 0
      %v4969 = vsel %vm1116, %v4958, 0
      %v4972 = vsel %vm1116, %v4962, 0
      %v4975 = vsel %vm1116, %v4964, 0
      %4977 = vmatprep.subr.bf16.mxu0 0
      %4978 = vmatpush1.bf16.xpose.msra.mxu0 %v4972
      %4979 = vmatprep.subr.bf16.mxu0 0
      %4980 = vmatpush1.bf16.xpose.msra.mxu0 %v4975
      %4981 = vmatprep.subr.bf16.mxu0 0
      %4982 = vmatpush1.bf16.xpose.msra.mxu0 0
      %4983 = vmatprep.subr.bf16.mxu0 0
      %4984 = vmatpush1.bf16.xpose.msra.mxu0 0
      %4985 = vmatprep.subr.bf16.mxu0 0
      %4986 = vmatpush1.bf16.xpose.msra.mxu0 0
      %4987 = vmatprep.subr.bf16.mxu0 0
      %4988 = vmatpush1.bf16.xpose.msra.mxu0 0
      %4989 = vmatprep.subr.bf16.mxu0 0
      %4990 = vmatpush1.bf16.xpose.msra.mxu0 0
      %4991 = vmatprep.subr.bf16.mxu0 0
      %4992 = vmatpush1.bf16.xpose.msra.mxu0 0
      %4993 = vmatprep.subr.bf16.mxu0 0
      %4994 = vmatpush1.bf16.xpose.msra.mxu0 0
      %4995 = vmatprep.subr.bf16.mxu0 0
      %4996 = vmatpush1.bf16.xpose.msra.mxu0 0
      %4997 = vmatprep.subr.bf16.mxu0 0
      %4998 = vmatpush1.bf16.xpose.msra.mxu0 0
      %4999 = vmatprep.subr.bf16.mxu0 0
      %5000 = vmatpush1.bf16.xpose.msra.mxu0 0
      %5001 = vmatprep.subr.bf16.mxu0 0
      %5002 = vmatpush1.bf16.xpose.msra.mxu0 0
      %5003 = vmatprep.subr.bf16.mxu0 0
      %5004 = vmatpush1.bf16.xpose.msra.mxu0 0
      %5005 = vmatprep.subr.bf16.mxu0 0
      %5006 = vmatpush1.bf16.xpose.msra.mxu0 0
      %5007 = vmatprep.subr.bf16.mxu0 0
      %5008 = vmatpush1.bf16.xpose.msra.mxu0 0
      %5009 = vmatprep.mubr.bf16.mxu0 0
      %5010 = vmatmul.mubr.bf16.gmra.mrb[0].mxu0 %v4966
      %v5011 = vpop.f32.mrb[0].mxu0
      %v5012 = vadd.f32 %v420, %v5011
      %v5013 = vpop.f32.mrb[0].mxu0
      %v5014 = vpop.f32.mrb[0].mxu0
      %v5015 = vadd.f32 %v420, %v5014
      %v5016 = vpop.f32.mrb[0].mxu0
      %5017 = vmatprep.mubr.bf16.mxu0 0
      %5018 = vmatmul.mubr.bf16.gmra.mrb[0].mxu0 %v4969
      %v5019 = vpop.f32.mrb[0].mxu0
      %v5020 = vadd.f32 %v420, %v5019
      %v5021 = vpop.f32.mrb[0].mxu0
      %v5022 = vpop.f32.mrb[0].mxu0
      %v5023 = vpop.f32.mrb[0].mxu0
      %5024 = vdwg.mxu0
      %v5025 = vsel %vm1177, %v5012, -inf
      %5026 = vmax.xlane.f32.xlu0 %v5025
      %v5027 = vpop.xlane.xlu0 %5026
      %v5028 = vsel %vm1177, %v5015, -inf
      %5029 = vmax.xlane.f32.xlu0 %v5028
      %v5030 = vpop.xlane.xlu0 %5029
      %v5031 = vsel %vm1177, %v5020, -inf
      %5032 = vmax.xlane.f32.xlu0 %v5031
      %v5033 = vpop.xlane.xlu0 %5032
      %v5034 = vsub.f32 %v5012, %v5027
      %v5035 = vsub.f32 %v5015, %v5030
      %v5036 = vsub.f32 %v5020, %v5033
      %v5037 = vmul.f32 %v5034, 1.442695
      %v5038 = vpow.pop %v5037
      %v5039 = vmul.f32 %v5035, 1.442695
      %v5040 = vpow.pop %v5039
      %v5041 = vmul.f32 %v5036, 1.442695
      %v5042 = vpow.pop %v5041
      %v5043 = vsel %vm1177, %v5038, 0.0
      %5044 = vadd.xlane.f32.xlu0 %v5043
      %v5045 = vpop.xlane.xlu0 %5044
      %v5046 = vsel %vm1177, %v5040, 0.0
      %5047 = vadd.xlane.f32.xlu0 %v5046
      %v5048 = vpop.xlane.xlu0 %5047
      %v5049 = vsel %vm1177, %v5042, 0.0
      %5050 = vadd.xlane.f32.xlu0 %v5049
      %v5051 = vpop.xlane.xlu0 %5050
      %v5052 = vrcp.pop %v5045
      %v5053 = vrcp.pop %v5048
      %v5054 = vrcp.pop %v5051
      %v5055 = vmul.f32 %v5038, %v5052
      %v5056 = vmul.f32 %v5040, %v5053
      %v5057 = vmul.f32 %v5042, %v5054
      %v5058 = vpack.c.bf16 %v5056, %v5055
      %v5059 = vpack.c.bf16 %v5057, %v5057
      %5060 = vrot.lane.b32.xlu0 %v4957, 64
      %v5061 = vpop.permute.xlu0 %5060
      %5062 = vrot.lane.b32.xlu0 %v4958, 64
      %v5063 = vpop.permute.xlu0 %5062
      %v5066 = vsel %vm1177, %v5058, 0
      %v5069 = vsel %vm1177, %v5059, 0
      %v5072 = vsel %vm1224, %v5063, 0
      %5074 = vmatprep.subr.bf16.mxu0 0
      %5075 = vmatpush1.bf16.msra.mxu0 %v5061
      %5076 = vmatprep.subr.bf16.mxu0 0
      %5077 = vmatpush1.bf16.msra.mxu0 %v5072
      %5078 = vmatprep.subr.bf16.mxu0 0
      %5079 = vmatpush1.bf16.msra.mxu0 0
      %5080 = vmatprep.subr.bf16.mxu0 0
      %5081 = vmatpush1.bf16.msra.mxu0 0
      %5082 = vmatprep.subr.bf16.mxu0 0
      %5083 = vmatpush1.bf16.msra.mxu0 0
      %5084 = vmatprep.subr.bf16.mxu0 0
      %5085 = vmatpush1.bf16.msra.mxu0 0
      %5086 = vmatprep.subr.bf16.mxu0 0
      %5087 = vmatpush1.bf16.msra.mxu0 0
      %5088 = vmatprep.subr.bf16.mxu0 0
      %5089 = vmatpush1.bf16.msra.mxu0 0
      %5090 = vmatprep.subr.bf16.mxu0 0
      %5091 = vmatpush1.bf16.msra.mxu0 0
      %5092 = vmatprep.subr.bf16.mxu0 0
      %5093 = vmatpush1.bf16.msra.mxu0 0
      %5094 = vmatprep.subr.bf16.mxu0 0
      %5095 = vmatpush1.bf16.msra.mxu0 0
      %5096 = vmatprep.subr.bf16.mxu0 0
      %5097 = vmatpush1.bf16.msra.mxu0 0
      %5098 = vmatprep.subr.bf16.mxu0 0
      %5099 = vmatpush1.bf16.msra.mxu0 0
      %5100 = vmatprep.subr.bf16.mxu0 0
      %5101 = vmatpush1.bf16.msra.mxu0 0
      %5102 = vmatprep.subr.bf16.mxu0 0
      %5103 = vmatpush1.bf16.msra.mxu0 0
      %5104 = vmatprep.subr.bf16.mxu0 0
      %5105 = vmatpush1.bf16.msra.mxu0 0
      %5106 = vmatprep.mubr.bf16.mxu0 0
      %5107 = vmatmul.mubr.bf16.gmra.mrb[0].mxu0 %v5066
      %v5108 = vpop.f32.mrb[0].mxu0
      %v5109 = vadd.f32 0.0, %v5108
      %v5110 = vpop.f32.mrb[0].mxu0
      %v5111 = vpop.f32.mrb[0].mxu0
      %v5112 = vadd.f32 0.0, %v5111
      %v5113 = vpop.f32.mrb[0].mxu0
      %5114 = vmatprep.mubr.bf16.mxu0 0
      %5115 = vmatmul.mubr.bf16.gmra.mrb[0].mxu0 %v5069
      %v5116 = vpop.f32.mrb[0].mxu0
      %v5117 = vadd.f32 0.0, %v5116
      %v5118 = vpop.f32.mrb[0].mxu0
      %v5119 = vpop.f32.mrb[0].mxu0
      %v5120 = vpop.f32.mrb[0].mxu0
      %5121 = vdwg.mxu0
      %5122 = vrot.lane.b32.xlu0 %v4957, 120
      %v5123 = vpop.permute.xlu0 %5122
      %5124 = vrot.lane.b32.xlu0 %v4958, 120
      %v5125 = vpop.permute.xlu0 %5124
      %5126 = vrot.lane.b32.xlu0 %v4957, 88
      %v5127 = vpop.permute.xlu0 %5126
      %5128 = vrot.lane.b32.xlu0 %v4958, 88
      %v5129 = vpop.permute.xlu0 %5128
      %v5131 = vsel %vm1116, %v5123, 0
      %v5134 = vsel %vm1116, %v5125, 0
      %v5137 = vsel %vm1116, %v5127, 0
      %v5140 = vsel %vm1116, %v5129, 0
      %5142 = vmatprep.subr.bf16.mxu0 0
      %5143 = vmatpush1.bf16.xpose.msra.mxu0 %v5137
      %5144 = vmatprep.subr.bf16.mxu0 0
      %5145 = vmatpush1.bf16.xpose.msra.mxu0 %v5140
      %5146 = vmatprep.subr.bf16.mxu0 0
      %5147 = vmatpush1.bf16.xpose.msra.mxu0 0
      %5148 = vmatprep.subr.bf16.mxu0 0
      %5149 = vmatpush1.bf16.xpose.msra.mxu0 0
      %5150 = vmatprep.subr.bf16.mxu0 0
      %5151 = vmatpush1.bf16.xpose.msra.mxu0 0
      %5152 = vmatprep.subr.bf16.mxu0 0
      %5153 = vmatpush1.bf16.xpose.msra.mxu0 0
      %5154 = vmatprep.subr.bf16.mxu0 0
      %5155 = vmatpush1.bf16.xpose.msra.mxu0 0
      %5156 = vmatprep.subr.bf16.mxu0 0
      %5157 = vmatpush1.bf16.xpose.msra.mxu0 0
      %5158 = vmatprep.subr.bf16.mxu0 0
      %5159 = vmatpush1.bf16.xpose.msra.mxu0 0
      %5160 = vmatprep.subr.bf16.mxu0 0
      %5161 = vmatpush1.bf16.xpose.msra.mxu0 0
      %5162 = vmatprep.subr.bf16.mxu0 0
      %5163 = vmatpush1.bf16.xpose.msra.mxu0 0
      %5164 = vmatprep.subr.bf16.mxu0 0
      %5165 = vmatpush1.bf16.xpose.msra.mxu0 0
      %5166 = vmatprep.subr.bf16.mxu0 0
      %5167 = vmatpush1.bf16.xpose.msra.mxu0 0
      %5168 = vmatprep.subr.bf16.mxu0 0
      %5169 = vmatpush1.bf16.xpose.msra.mxu0 0
      %5170 = vmatprep.subr.bf16.mxu0 0
      %5171 = vmatpush1.bf16.xpose.msra.mxu0 0
      %5172 = vmatprep.subr.bf16.mxu0 0
      %5173 = vmatpush1.bf16.xpose.msra.mxu0 0
      %5174 = vmatprep.mubr.bf16.mxu0 0
      %5175 = vmatmul.mubr.bf16.gmra.mrb[0].mxu0 %v5131
      %v5176 = vpop.f32.mrb[0].mxu0
      %v5177 = vadd.f32 %v420, %v5176
      %v5178 = vpop.f32.mrb[0].mxu0
      %v5179 = vpop.f32.mrb[0].mxu0
      %v5180 = vadd.f32 %v420, %v5179
      %v5181 = vpop.f32.mrb[0].mxu0
      %5182 = vmatprep.mubr.bf16.mxu0 0
      %5183 = vmatmul.mubr.bf16.gmra.mrb[0].mxu0 %v5134
      %v5184 = vpop.f32.mrb[0].mxu0
      %v5185 = vadd.f32 %v420, %v5184
      %v5186 = vpop.f32.mrb[0].mxu0
      %v5187 = vpop.f32.mrb[0].mxu0
      %v5188 = vpop.f32.mrb[0].mxu0
      %5189 = vdwg.mxu0
      %v5190 = vsel %vm1177, %v5177, -inf
      %5191 = vmax.xlane.f32.xlu0 %v5190
      %v5192 = vpop.xlane.xlu0 %5191
      %v5193 = vsel %vm1177, %v5180, -inf
      %5194 = vmax.xlane.f32.xlu0 %v5193
      %v5195 = vpop.xlane.xlu0 %5194
      %v5196 = vsel %vm1177, %v5185, -inf
      %5197 = vmax.xlane.f32.xlu0 %v5196
      %v5198 = vpop.xlane.xlu0 %5197
      %v5199 = vsub.f32 %v5177, %v5192
      %v5200 = vsub.f32 %v5180, %v5195
      %v5201 = vsub.f32 %v5185, %v5198
      %v5202 = vmul.f32 %v5199, 1.442695
      %v5203 = vpow.pop %v5202
      %v5204 = vmul.f32 %v5200, 1.442695
      %v5205 = vpow.pop %v5204
      %v5206 = vmul.f32 %v5201, 1.442695
      %v5207 = vpow.pop %v5206
      %v5208 = vsel %vm1177, %v5203, 0.0
      %5209 = vadd.xlane.f32.xlu0 %v5208
      %v5210 = vpop.xlane.xlu0 %5209
      %v5211 = vsel %vm1177, %v5205, 0.0
      %5212 = vadd.xlane.f32.xlu0 %v5211
      %v5213 = vpop.xlane.xlu0 %5212
      %v5214 = vsel %vm1177, %v5207, 0.0
      %5215 = vadd.xlane.f32.xlu0 %v5214
      %v5216 = vpop.xlane.xlu0 %5215
      %v5217 = vrcp.pop %v5210
      %v5218 = vrcp.pop %v5213
      %v5219 = vrcp.pop %v5216
      %v5220 = vmul.f32 %v5203, %v5217
      %v5221 = vmul.f32 %v5205, %v5218
      %v5222 = vmul.f32 %v5207, %v5219
      %v5223 = vpack.c.bf16 %v5221, %v5220
      %v5224 = vpack.c.bf16 %v5222, %v5222
      %5225 = vrot.lane.b32.xlu0 %v4957, 56
      %v5226 = vpop.permute.xlu0 %5225
      %5227 = vrot.lane.b32.xlu0 %v4958, 56
      %v5228 = vpop.permute.xlu0 %5227
      %v5231 = vsel %vm1177, %v5223, 0
      %v5234 = vsel %vm1177, %v5224, 0
      %v5237 = vsel %vm1224, %v5228, 0
      %5239 = vmatprep.subr.bf16.mxu0 0
      %5240 = vmatpush1.bf16.msra.mxu0 %v5226
      %5241 = vmatprep.subr.bf16.mxu0 0
      %5242 = vmatpush1.bf16.msra.mxu0 %v5237
      %5243 = vmatprep.subr.bf16.mxu0 0
      %5244 = vmatpush1.bf16.msra.mxu0 0
      %5245 = vmatprep.subr.bf16.mxu0 0
      %5246 = vmatpush1.bf16.msra.mxu0 0
      %5247 = vmatprep.subr.bf16.mxu0 0
      %5248 = vmatpush1.bf16.msra.mxu0 0
      %5249 = vmatprep.subr.bf16.mxu0 0
      %5250 = vmatpush1.bf16.msra.mxu0 0
      %5251 = vmatprep.subr.bf16.mxu0 0
      %5252 = vmatpush1.bf16.msra.mxu0 0
      %5253 = vmatprep.subr.bf16.mxu0 0
      %5254 = vmatpush1.bf16.msra.mxu0 0
      %5255 = vmatprep.subr.bf16.mxu0 0
      %5256 = vmatpush1.bf16.msra.mxu0 0
      %5257 = vmatprep.subr.bf16.mxu0 0
      %5258 = vmatpush1.bf16.msra.mxu0 0
      %5259 = vmatprep.subr.bf16.mxu0 0
      %5260 = vmatpush1.bf16.msra.mxu0 0
      %5261 = vmatprep.subr.bf16.mxu0 0
      %5262 = vmatpush1.bf16.msra.mxu0 0
      %5263 = vmatprep.subr.bf16.mxu0 0
      %5264 = vmatpush1.bf16.msra.mxu0 0
      %5265 = vmatprep.subr.bf16.mxu0 0
      %5266 = vmatpush1.bf16.msra.mxu0 0
      %5267 = vmatprep.subr.bf16.mxu0 0
      %5268 = vmatpush1.bf16.msra.mxu0 0
      %5269 = vmatprep.subr.bf16.mxu0 0
      %5270 = vmatpush1.bf16.msra.mxu0 0
      %5271 = vmatprep.mubr.bf16.mxu0 0
      %5272 = vmatmul.mubr.bf16.gmra.mrb[0].mxu0 %v5231
      %v5273 = vpop.f32.mrb[0].mxu0
      %v5274 = vadd.f32 0.0, %v5273
      %v5275 = vpop.f32.mrb[0].mxu0
      %v5276 = vpop.f32.mrb[0].mxu0
      %v5277 = vadd.f32 0.0, %v5276
      %v5278 = vpop.f32.mrb[0].mxu0
      %5279 = vmatprep.mubr.bf16.mxu0 0
      %5280 = vmatmul.mubr.bf16.gmra.mrb[0].mxu0 %v5234
      %v5281 = vpop.f32.mrb[0].mxu0
      %v5282 = vadd.f32 0.0, %v5281
      %v5283 = vpop.f32.mrb[0].mxu0
      %v5284 = vpop.f32.mrb[0].mxu0
      %v5285 = vpop.f32.mrb[0].mxu0
      %5286 = vdwg.mxu0
      %5287 = vrot.lane.b32.xlu0 %v4957, 112
      %v5288 = vpop.permute.xlu0 %5287
      %5289 = vrot.lane.b32.xlu0 %v4958, 112
      %v5290 = vpop.permute.xlu0 %5289
      %5291 = vrot.lane.b32.xlu0 %v4957, 80
      %v5292 = vpop.permute.xlu0 %5291
      %5293 = vrot.lane.b32.xlu0 %v4958, 80
      %v5294 = vpop.permute.xlu0 %5293
      %v5296 = vsel %vm1116, %v5288, 0
      %v5299 = vsel %vm1116, %v5290, 0
      %v5302 = vsel %vm1116, %v5292, 0
      %v5305 = vsel %vm1116, %v5294, 0
      %5307 = vmatprep.subr.bf16.mxu0 0
      %5308 = vmatpush1.bf16.xpose.msra.mxu0 %v5302
      %5309 = vmatprep.subr.bf16.mxu0 0
      %5310 = vmatpush1.bf16.xpose.msra.mxu0 %v5305
      %5311 = vmatprep.subr.bf16.mxu0 0
      %5312 = vmatpush1.bf16.xpose.msra.mxu0 0
      %5313 = vmatprep.subr.bf16.mxu0 0
      %5314 = vmatpush1.bf16.xpose.msra.mxu0 0
      %5315 = vmatprep.subr.bf16.mxu0 0
      %5316 = vmatpush1.bf16.xpose.msra.mxu0 0
      %5317 = vmatprep.subr.bf16.mxu0 0
      %5318 = vmatpush1.bf16.xpose.msra.mxu0 0
      %5319 = vmatprep.subr.bf16.mxu0 0
      %5320 = vmatpush1.bf16.xpose.msra.mxu0 0
      %5321 = vmatprep.subr.bf16.mxu0 0
      %5322 = vmatpush1.bf16.xpose.msra.mxu0 0
      %5323 = vmatprep.subr.bf16.mxu0 0
      %5324 = vmatpush1.bf16.xpose.msra.mxu0 0
      %5325 = vmatprep.subr.bf16.mxu0 0
      %5326 = vmatpush1.bf16.xpose.msra.mxu0 0
      %5327 = vmatprep.subr.bf16.mxu0 0
      %5328 = vmatpush1.bf16.xpose.msra.mxu0 0
      %5329 = vmatprep.subr.bf16.mxu0 0
      %5330 = vmatpush1.bf16.xpose.msra.mxu0 0
      %5331 = vmatprep.subr.bf16.mxu0 0
      %5332 = vmatpush1.bf16.xpose.msra.mxu0 0
      %5333 = vmatprep.subr.bf16.mxu0 0
      %5334 = vmatpush1.bf16.xpose.msra.mxu0 0
      %5335 = vmatprep.subr.bf16.mxu0 0
      %5336 = vmatpush1.bf16.xpose.msra.mxu0 0
      %5337 = vmatprep.subr.bf16.mxu0 0
      %5338 = vmatpush1.bf16.xpose.msra.mxu0 0
      %5339 = vmatprep.mubr.bf16.mxu0 0
      %5340 = vmatmul.mubr.bf16.gmra.mrb[0].mxu0 %v5296
      %v5341 = vpop.f32.mrb[0].mxu0
      %v5342 = vadd.f32 %v420, %v5341
      %v5343 = vpop.f32.mrb[0].mxu0
      %v5344 = vpop.f32.mrb[0].mxu0
      %v5345 = vadd.f32 %v420, %v5344
      %v5346 = vpop.f32.mrb[0].mxu0
      %5347 = vmatprep.mubr.bf16.mxu0 0
      %5348 = vmatmul.mubr.bf16.gmra.mrb[0].mxu0 %v5299
      %v5349 = vpop.f32.mrb[0].mxu0
      %v5350 = vadd.f32 %v420, %v5349
      %v5351 = vpop.f32.mrb[0].mxu0
      %v5352 = vpop.f32.mrb[0].mxu0
      %v5353 = vpop.f32.mrb[0].mxu0
      %5354 = vdwg.mxu0
      %v5355 = vsel %vm1177, %v5342, -inf
      %5356 = vmax.xlane.f32.xlu0 %v5355
      %v5357 = vpop.xlane.xlu0 %5356
      %v5358 = vsel %vm1177, %v5345, -inf
      %5359 = vmax.xlane.f32.xlu0 %v5358
      %v5360 = vpop.xlane.xlu0 %5359
      %v5361 = vsel %vm1177, %v5350, -inf
      %5362 = vmax.xlane.f32.xlu0 %v5361
      %v5363 = vpop.xlane.xlu0 %5362
      %v5364 = vsub.f32 %v5342, %v5357
      %v5365 = vsub.f32 %v5345, %v5360
      %v5366 = vsub.f32 %v5350, %v5363
      %v5367 = vmul.f32 %v5364, 1.442695
      %v5368 = vpow.pop %v5367
      %v5369 = vmul.f32 %v5365, 1.442695
      %v5370 = vpow.pop %v5369
      %v5371 = vmul.f32 %v5366, 1.442695
      %v5372 = vpow.pop %v5371
      %v5373 = vsel %vm1177, %v5368, 0.0
      %5374 = vadd.xlane.f32.xlu0 %v5373
      %v5375 = vpop.xlane.xlu0 %5374
      %v5376 = vsel %vm1177, %v5370, 0.0
      %5377 = vadd.xlane.f32.xlu0 %v5376
      %v5378 = vpop.xlane.xlu0 %5377
      %v5379 = vsel %vm1177, %v5372, 0.0
      %5380 = vadd.xlane.f32.xlu0 %v5379
      %v5381 = vpop.xlane.xlu0 %5380
      %v5382 = vrcp.pop %v5375
      %v5383 = vrcp.pop %v5378
      %v5384 = vrcp.pop %v5381
      %v5385 = vmul.f32 %v5368, %v5382
      %v5386 = vmul.f32 %v5370, %v5383
      %v5387 = vmul.f32 %v5372, %v5384
      %v5388 = vpack.c.bf16 %v5386, %v5385
      %v5389 = vpack.c.bf16 %v5387, %v5387
      %5390 = vrot.lane.b32.xlu0 %v4957, 48
      %v5391 = vpop.permute.xlu0 %5390
      %5392 = vrot.lane.b32.xlu0 %v4958, 48
      %v5393 = vpop.permute.xlu0 %5392
      %v5396 = vsel %vm1177, %v5388, 0
      %v5399 = vsel %vm1177, %v5389, 0
      %v5402 = vsel %vm1224, %v5393, 0
      %5404 = vmatprep.subr.bf16.mxu0 0
      %5405 = vmatpush1.bf16.msra.mxu0 %v5391
      %5406 = vmatprep.subr.bf16.mxu0 0
      %5407 = vmatpush1.bf16.msra.mxu0 %v5402
      %5408 = vmatprep.subr.bf16.mxu0 0
      %5409 = vmatpush1.bf16.msra.mxu0 0
      %5410 = vmatprep.subr.bf16.mxu0 0
      %5411 = vmatpush1.bf16.msra.mxu0 0
      %5412 = vmatprep.subr.bf16.mxu0 0
      %5413 = vmatpush1.bf16.msra.mxu0 0
      %5414 = vmatprep.subr.bf16.mxu0 0
      %5415 = vmatpush1.bf16.msra.mxu0 0
      %5416 = vmatprep.subr.bf16.mxu0 0
      %5417 = vmatpush1.bf16.msra.mxu0 0
      %5418 = vmatprep.subr.bf16.mxu0 0
      %5419 = vmatpush1.bf16.msra.mxu0 0
      %5420 = vmatprep.subr.bf16.mxu0 0
      %5421 = vmatpush1.bf16.msra.mxu0 0
      %5422 = vmatprep.subr.bf16.mxu0 0
      %5423 = vmatpush1.bf16.msra.mxu0 0
      %5424 = vmatprep.subr.bf16.mxu0 0
      %5425 = vmatpush1.bf16.msra.mxu0 0
      %5426 = vmatprep.subr.bf16.mxu0 0
      %5427 = vmatpush1.bf16.msra.mxu0 0
      %5428 = vmatprep.subr.bf16.mxu0 0
      %5429 = vmatpush1.bf16.msra.mxu0 0
      %5430 = vmatprep.subr.bf16.mxu0 0
      %5431 = vmatpush1.bf16.msra.mxu0 0
      %5432 = vmatprep.subr.bf16.mxu0 0
      %5433 = vmatpush1.bf16.msra.mxu0 0
      %5434 = vmatprep.subr.bf16.mxu0 0
      %5435 = vmatpush1.bf16.msra.mxu0 0
      %5436 = vmatprep.mubr.bf16.mxu0 0
      %5437 = vmatmul.mubr.bf16.gmra.mrb[0].mxu0 %v5396
      %v5438 = vpop.f32.mrb[0].mxu0
      %v5439 = vadd.f32 0.0, %v5438
      %v5440 = vpop.f32.mrb[0].mxu0
      %v5441 = vpop.f32.mrb[0].mxu0
      %v5442 = vadd.f32 0.0, %v5441
      %v5443 = vpop.f32.mrb[0].mxu0
      %5444 = vmatprep.mubr.bf16.mxu0 0
      %5445 = vmatmul.mubr.bf16.gmra.mrb[0].mxu0 %v5399
      %v5446 = vpop.f32.mrb[0].mxu0
      %v5447 = vadd.f32 0.0, %v5446
      %v5448 = vpop.f32.mrb[0].mxu0
      %v5449 = vpop.f32.mrb[0].mxu0
      %v5450 = vpop.f32.mrb[0].mxu0
      %5451 = vdwg.mxu0
      %5452 = vrot.lane.b32.xlu0 %v4957, 104
      %v5453 = vpop.permute.xlu0 %5452
      %5454 = vrot.lane.b32.xlu0 %v4958, 104
      %v5455 = vpop.permute.xlu0 %5454
      %5456 = vrot.lane.b32.xlu0 %v4957, 72
      %v5457 = vpop.permute.xlu0 %5456
      %5458 = vrot.lane.b32.xlu0 %v4958, 72
      %v5459 = vpop.permute.xlu0 %5458
      %v5461 = vsel %vm1116, %v5453, 0
      %v5464 = vsel %vm1116, %v5455, 0
      %v5467 = vsel %vm1116, %v5457, 0
      %v5470 = vsel %vm1116, %v5459, 0
      %5472 = vmatprep.subr.bf16.mxu0 0
      %5473 = vmatpush1.bf16.xpose.msra.mxu0 %v5467
      %5474 = vmatprep.subr.bf16.mxu0 0
      %5475 = vmatpush1.bf16.xpose.msra.mxu0 %v5470
      %5476 = vmatprep.subr.bf16.mxu0 0
      %5477 = vmatpush1.bf16.xpose.msra.mxu0 0
      %5478 = vmatprep.subr.bf16.mxu0 0
      %5479 = vmatpush1.bf16.xpose.msra.mxu0 0
      %5480 = vmatprep.subr.bf16.mxu0 0
      %5481 = vmatpush1.bf16.xpose.msra.mxu0 0
      %5482 = vmatprep.subr.bf16.mxu0 0
      %5483 = vmatpush1.bf16.xpose.msra.mxu0 0
      %5484 = vmatprep.subr.bf16.mxu0 0
      %5485 = vmatpush1.bf16.xpose.msra.mxu0 0
      %5486 = vmatprep.subr.bf16.mxu0 0
      %5487 = vmatpush1.bf16.xpose.msra.mxu0 0
      %5488 = vmatprep.subr.bf16.mxu0 0
      %5489 = vmatpush1.bf16.xpose.msra.mxu0 0
      %5490 = vmatprep.subr.bf16.mxu0 0
      %5491 = vmatpush1.bf16.xpose.msra.mxu0 0
      %5492 = vmatprep.subr.bf16.mxu0 0
      %5493 = vmatpush1.bf16.xpose.msra.mxu0 0
      %5494 = vmatprep.subr.bf16.mxu0 0
      %5495 = vmatpush1.bf16.xpose.msra.mxu0 0
      %5496 = vmatprep.subr.bf16.mxu0 0
      %5497 = vmatpush1.bf16.xpose.msra.mxu0 0
      %5498 = vmatprep.subr.bf16.mxu0 0
      %5499 = vmatpush1.bf16.xpose.msra.mxu0 0
      %5500 = vmatprep.subr.bf16.mxu0 0
      %5501 = vmatpush1.bf16.xpose.msra.mxu0 0
      %5502 = vmatprep.subr.bf16.mxu0 0
      %5503 = vmatpush1.bf16.xpose.msra.mxu0 0
      %5504 = vmatprep.mubr.bf16.mxu0 0
      %5505 = vmatmul.mubr.bf16.gmra.mrb[0].mxu0 %v5461
      %v5506 = vpop.f32.mrb[0].mxu0
      %v5507 = vadd.f32 %v420, %v5506
      %v5508 = vpop.f32.mrb[0].mxu0
      %v5509 = vpop.f32.mrb[0].mxu0
      %v5510 = vadd.f32 %v420, %v5509
      %v5511 = vpop.f32.mrb[0].mxu0
      %5512 = vmatprep.mubr.bf16.mxu0 0
      %5513 = vmatmul.mubr.bf16.gmra.mrb[0].mxu0 %v5464
      %v5514 = vpop.f32.mrb[0].mxu0
      %v5515 = vadd.f32 %v420, %v5514
      %v5516 = vpop.f32.mrb[0].mxu0
      %v5517 = vpop.f32.mrb[0].mxu0
      %v5518 = vpop.f32.mrb[0].mxu0
      %5519 = vdwg.mxu0
      %v5520 = vsel %vm1177, %v5507, -inf
      %5521 = vmax.xlane.f32.xlu0 %v5520
      %v5522 = vpop.xlane.xlu0 %5521
      %v5523 = vsel %vm1177, %v5510, -inf
      %5524 = vmax.xlane.f32.xlu0 %v5523
      %v5525 = vpop.xlane.xlu0 %5524
      %v5526 = vsel %vm1177, %v5515, -inf
      %5527 = vmax.xlane.f32.xlu0 %v5526
      %v5528 = vpop.xlane.xlu0 %5527
      %v5529 = vsub.f32 %v5507, %v5522
      %v5530 = vsub.f32 %v5510, %v5525
      %v5531 = vsub.f32 %v5515, %v5528
      %v5532 = vmul.f32 %v5529, 1.442695
      %v5533 = vpow.pop %v5532
      %v5534 = vmul.f32 %v5530, 1.442695
      %v5535 = vpow.pop %v5534
      %v5536 = vmul.f32 %v5531, 1.442695
      %v5537 = vpow.pop %v5536
      %v5538 = vsel %vm1177, %v5533, 0.0
      %5539 = vadd.xlane.f32.xlu0 %v5538
      %v5540 = vpop.xlane.xlu0 %5539
      %v5541 = vsel %vm1177, %v5535, 0.0
      %5542 = vadd.xlane.f32.xlu0 %v5541
      %v5543 = vpop.xlane.xlu0 %5542
      %v5544 = vsel %vm1177, %v5537, 0.0
      %5545 = vadd.xlane.f32.xlu0 %v5544
      %v5546 = vpop.xlane.xlu0 %5545
      %v5547 = vrcp.pop %v5540
      %v5548 = vrcp.pop %v5543
      %v5549 = vrcp.pop %v5546
      %v5550 = vmul.f32 %v5533, %v5547
      %v5551 = vmul.f32 %v5535, %v5548
      %v5552 = vmul.f32 %v5537, %v5549
      %v5553 = vpack.c.bf16 %v5551, %v5550
      %v5554 = vpack.c.bf16 %v5552, %v5552
      %5555 = vrot.lane.b32.xlu0 %v4957, 40
      %v5556 = vpop.permute.xlu0 %5555
      %5557 = vrot.lane.b32.xlu0 %v4958, 40
      %v5558 = vpop.permute.xlu0 %5557
      %v5561 = vsel %vm1177, %v5553, 0
      %v5564 = vsel %vm1177, %v5554, 0
      %v5567 = vsel %vm1224, %v5558, 0
      %5569 = vmatprep.subr.bf16.mxu0 0
      %5570 = vmatpush1.bf16.msra.mxu0 %v5556
      %5571 = vmatprep.subr.bf16.mxu0 0
      %5572 = vmatpush1.bf16.msra.mxu0 %v5567
      %5573 = vmatprep.subr.bf16.mxu0 0
      %5574 = vmatpush1.bf16.msra.mxu0 0
      %5575 = vmatprep.subr.bf16.mxu0 0
      %5576 = vmatpush1.bf16.msra.mxu0 0
      %5577 = vmatprep.subr.bf16.mxu0 0
      %5578 = vmatpush1.bf16.msra.mxu0 0
      %5579 = vmatprep.subr.bf16.mxu0 0
      %5580 = vmatpush1.bf16.msra.mxu0 0
      %5581 = vmatprep.subr.bf16.mxu0 0
      %5582 = vmatpush1.bf16.msra.mxu0 0
      %5583 = vmatprep.subr.bf16.mxu0 0
      %5584 = vmatpush1.bf16.msra.mxu0 0
      %5585 = vmatprep.subr.bf16.mxu0 0
      %5586 = vmatpush1.bf16.msra.mxu0 0
      %5587 = vmatprep.subr.bf16.mxu0 0
      %5588 = vmatpush1.bf16.msra.mxu0 0
      %5589 = vmatprep.subr.bf16.mxu0 0
      %5590 = vmatpush1.bf16.msra.mxu0 0
      %5591 = vmatprep.subr.bf16.mxu0 0
      %5592 = vmatpush1.bf16.msra.mxu0 0
      %5593 = vmatprep.subr.bf16.mxu0 0
      %5594 = vmatpush1.bf16.msra.mxu0 0
      %5595 = vmatprep.subr.bf16.mxu0 0
      %5596 = vmatpush1.bf16.msra.mxu0 0
      %5597 = vmatprep.subr.bf16.mxu0 0
      %5598 = vmatpush1.bf16.msra.mxu0 0
      %5599 = vmatprep.subr.bf16.mxu0 0
      %5600 = vmatpush1.bf16.msra.mxu0 0
      %5601 = vmatprep.mubr.bf16.mxu0 0
      %5602 = vmatmul.mubr.bf16.gmra.mrb[0].mxu0 %v5561
      %v5603 = vpop.f32.mrb[0].mxu0
      %v5604 = vadd.f32 0.0, %v5603
      %v5605 = vpop.f32.mrb[0].mxu0
      %v5606 = vpop.f32.mrb[0].mxu0
      %v5607 = vadd.f32 0.0, %v5606
      %v5608 = vpop.f32.mrb[0].mxu0
      %5609 = vmatprep.mubr.bf16.mxu0 0
      %5610 = vmatmul.mubr.bf16.gmra.mrb[0].mxu0 %v5564
      %v5611 = vpop.f32.mrb[0].mxu0
      %v5612 = vadd.f32 0.0, %v5611
      %v5613 = vpop.f32.mrb[0].mxu0
      %v5614 = vpop.f32.mrb[0].mxu0
      %v5615 = vpop.f32.mrb[0].mxu0
      %5616 = vdwg.mxu0
      %5620 = vrot.lane.b32.xlu0 %v5274, 8
      %v5621 = vpop.permute.xlu0 %5620
      %5622 = vrot.lane.b32.xlu0 %v5277, 8
      %v5623 = vpop.permute.xlu0 %5622
      %5624 = vrot.lane.b32.xlu0 %v5282, 8
      %v5625 = vpop.permute.xlu0 %5624
      %5632 = vrot.lane.b32.xlu0 %v5439, 16
      %v5633 = vpop.permute.xlu0 %5632
      %5634 = vrot.lane.b32.xlu0 %v5442, 16
      %v5635 = vpop.permute.xlu0 %5634
      %5636 = vrot.lane.b32.xlu0 %v5447, 16
      %v5637 = vpop.permute.xlu0 %5636
      %5644 = vrot.lane.b32.xlu0 %v5604, 24
      %v5645 = vpop.permute.xlu0 %5644
      %5646 = vrot.lane.b32.xlu0 %v5607, 24
      %v5647 = vpop.permute.xlu0 %5646
      %5648 = vrot.lane.b32.xlu0 %v5612, 24
      %v5649 = vpop.permute.xlu0 %5648
      %v5653 = vsel %vm1116, %v5109, %v5621
      %v5654 = vsel %vm1116, %v5112, %v5623
      %v5655 = vsel %vm1116, %v5117, %v5625
      %v5656 = vsel %vm1810, %v5653, %v5633
      %v5657 = vsel %vm1810, %v5654, %v5635
      %v5658 = vsel %vm1810, %v5655, %v5637
      %v5659 = vsel %vm1177, %v5656, %v5645
      %v5660 = vsel %vm1177, %v5657, %v5647
      %v5661 = vsel %vm1177, %v5658, %v5649
      %v5662 = vpack.c.bf16 %v4927, %v4922
      %v5663 = vpack.c.bf16 %v4930, %v4930
      %5666 = vrot.lane.b32.xlu0 %v5662, 96
      %v5667 = vpop.permute.xlu0 %5666
      %5668 = vrot.lane.b32.xlu0 %v5663, 96
      %v5669 = vpop.permute.xlu0 %5668
      %v5671 = vsel %vm1116, %v5662, 0
      %v5674 = vsel %vm1116, %v5663, 0
      %v5677 = vsel %vm1116, %v5667, 0
      %v5680 = vsel %vm1116, %v5669, 0
      %5682 = vmatprep.subr.bf16.mxu0 0
      %5683 = vmatpush1.bf16.xpose.msra.mxu0 %v5677
      %5684 = vmatprep.subr.bf16.mxu0 0
      %5685 = vmatpush1.bf16.xpose.msra.mxu0 %v5680
      %5686 = vmatprep.subr.bf16.mxu0 0
      %5687 = vmatpush1.bf16.xpose.msra.mxu0 0
      %5688 = vmatprep.subr.bf16.mxu0 0
      %5689 = vmatpush1.bf16.xpose.msra.mxu0 0
      %5690 = vmatprep.subr.bf16.mxu0 0
      %5691 = vmatpush1.bf16.xpose.msra.mxu0 0
      %5692 = vmatprep.subr.bf16.mxu0 0
      %5693 = vmatpush1.bf16.xpose.msra.mxu0 0
      %5694 = vmatprep.subr.bf16.mxu0 0
      %5695 = vmatpush1.bf16.xpose.msra.mxu0 0
      %5696 = vmatprep.subr.bf16.mxu0 0
      %5697 = vmatpush1.bf16.xpose.msra.mxu0 0
      %5698 = vmatprep.subr.bf16.mxu0 0
      %5699 = vmatpush1.bf16.xpose.msra.mxu0 0
      %5700 = vmatprep.subr.bf16.mxu0 0
      %5701 = vmatpush1.bf16.xpose.msra.mxu0 0
      %5702 = vmatprep.subr.bf16.mxu0 0
      %5703 = vmatpush1.bf16.xpose.msra.mxu0 0
      %5704 = vmatprep.subr.bf16.mxu0 0
      %5705 = vmatpush1.bf16.xpose.msra.mxu0 0
      %5706 = vmatprep.subr.bf16.mxu0 0
      %5707 = vmatpush1.bf16.xpose.msra.mxu0 0
      %5708 = vmatprep.subr.bf16.mxu0 0
      %5709 = vmatpush1.bf16.xpose.msra.mxu0 0
      %5710 = vmatprep.subr.bf16.mxu0 0
      %5711 = vmatpush1.bf16.xpose.msra.mxu0 0
      %5712 = vmatprep.subr.bf16.mxu0 0
      %5713 = vmatpush1.bf16.xpose.msra.mxu0 0
      %5714 = vmatprep.mubr.bf16.mxu0 0
      %5715 = vmatmul.mubr.bf16.gmra.mrb[0].mxu0 %v5671
      %v5716 = vpop.f32.mrb[0].mxu0
      %v5717 = vadd.f32 %v420, %v5716
      %v5718 = vpop.f32.mrb[0].mxu0
      %v5719 = vpop.f32.mrb[0].mxu0
      %v5720 = vadd.f32 %v420, %v5719
      %v5721 = vpop.f32.mrb[0].mxu0
      %5722 = vmatprep.mubr.bf16.mxu0 0
      %5723 = vmatmul.mubr.bf16.gmra.mrb[0].mxu0 %v5674
      %v5724 = vpop.f32.mrb[0].mxu0
      %v5725 = vadd.f32 %v420, %v5724
      %v5726 = vpop.f32.mrb[0].mxu0
      %v5727 = vpop.f32.mrb[0].mxu0
      %v5728 = vpop.f32.mrb[0].mxu0
      %5729 = vdwg.mxu0
      %v5730 = vsel %vm1177, %v5717, -inf
      %5731 = vmax.xlane.f32.xlu0 %v5730
      %v5732 = vpop.xlane.xlu0 %5731
      %v5733 = vsel %vm1177, %v5720, -inf
      %5734 = vmax.xlane.f32.xlu0 %v5733
      %v5735 = vpop.xlane.xlu0 %5734
      %v5736 = vsel %vm1177, %v5725, -inf
      %5737 = vmax.xlane.f32.xlu0 %v5736
      %v5738 = vpop.xlane.xlu0 %5737
      %v5739 = vsub.f32 %v5717, %v5732
      %v5740 = vsub.f32 %v5720, %v5735
      %v5741 = vsub.f32 %v5725, %v5738
      %v5742 = vmul.f32 %v5739, 1.442695
      %v5743 = vpow.pop %v5742
      %v5744 = vmul.f32 %v5740, 1.442695
      %v5745 = vpow.pop %v5744
      %v5746 = vmul.f32 %v5741, 1.442695
      %v5747 = vpow.pop %v5746
      %v5748 = vsel %vm1177, %v5743, 0.0
      %5749 = vadd.xlane.f32.xlu0 %v5748
      %v5750 = vpop.xlane.xlu0 %5749
      %v5751 = vsel %vm1177, %v5745, 0.0
      %5752 = vadd.xlane.f32.xlu0 %v5751
      %v5753 = vpop.xlane.xlu0 %5752
      %v5754 = vsel %vm1177, %v5747, 0.0
      %5755 = vadd.xlane.f32.xlu0 %v5754
      %v5756 = vpop.xlane.xlu0 %5755
      %v5757 = vrcp.pop %v5750
      %v5758 = vrcp.pop %v5753
      %v5759 = vrcp.pop %v5756
      %v5760 = vmul.f32 %v5743, %v5757
      %v5761 = vmul.f32 %v5745, %v5758
      %v5762 = vmul.f32 %v5747, %v5759
      %v5763 = vpack.c.bf16 %v5761, %v5760
      %v5764 = vpack.c.bf16 %v5762, %v5762
      %5765 = vrot.lane.b32.xlu0 %v5662, 64
      %v5766 = vpop.permute.xlu0 %5765
      %5767 = vrot.lane.b32.xlu0 %v5663, 64
      %v5768 = vpop.permute.xlu0 %5767
      %v5771 = vsel %vm1177, %v5763, 0
      %v5774 = vsel %vm1177, %v5764, 0
      %v5777 = vsel %vm1224, %v5768, 0
      %5779 = vmatprep.subr.bf16.mxu0 0
      %5780 = vmatpush1.bf16.msra.mxu0 %v5766
      %5781 = vmatprep.subr.bf16.mxu0 0
      %5782 = vmatpush1.bf16.msra.mxu0 %v5777
      %5783 = vmatprep.subr.bf16.mxu0 0
      %5784 = vmatpush1.bf16.msra.mxu0 0
      %5785 = vmatprep.subr.bf16.mxu0 0
      %5786 = vmatpush1.bf16.msra.mxu0 0
      %5787 = vmatprep.subr.bf16.mxu0 0
      %5788 = vmatpush1.bf16.msra.mxu0 0
      %5789 = vmatprep.subr.bf16.mxu0 0
      %5790 = vmatpush1.bf16.msra.mxu0 0
      %5791 = vmatprep.subr.bf16.mxu0 0
      %5792 = vmatpush1.bf16.msra.mxu0 0
      %5793 = vmatprep.subr.bf16.mxu0 0
      %5794 = vmatpush1.bf16.msra.mxu0 0
      %5795 = vmatprep.subr.bf16.mxu0 0
      %5796 = vmatpush1.bf16.msra.mxu0 0
      %5797 = vmatprep.subr.bf16.mxu0 0
      %5798 = vmatpush1.bf16.msra.mxu0 0
      %5799 = vmatprep.subr.bf16.mxu0 0
      %5800 = vmatpush1.bf16.msra.mxu0 0
      %5801 = vmatprep.subr.bf16.mxu0 0
      %5802 = vmatpush1.bf16.msra.mxu0 0
      %5803 = vmatprep.subr.bf16.mxu0 0
      %5804 = vmatpush1.bf16.msra.mxu0 0
      %5805 = vmatprep.subr.bf16.mxu0 0
      %5806 = vmatpush1.bf16.msra.mxu0 0
      %5807 = vmatprep.subr.bf16.mxu0 0
      %5808 = vmatpush1.bf16.msra.mxu0 0
      %5809 = vmatprep.subr.bf16.mxu0 0
      %5810 = vmatpush1.bf16.msra.mxu0 0
      %5811 = vmatprep.mubr.bf16.mxu0 0
      %5812 = vmatmul.mubr.bf16.gmra.mrb[0].mxu0 %v5771
      %v5813 = vpop.f32.mrb[0].mxu0
      %v5814 = vadd.f32 0.0, %v5813
      %v5815 = vpop.f32.mrb[0].mxu0
      %v5816 = vpop.f32.mrb[0].mxu0
      %v5817 = vadd.f32 0.0, %v5816
      %v5818 = vpop.f32.mrb[0].mxu0
      %5819 = vmatprep.mubr.bf16.mxu0 0
      %5820 = vmatmul.mubr.bf16.gmra.mrb[0].mxu0 %v5774
      %v5821 = vpop.f32.mrb[0].mxu0
      %v5822 = vadd.f32 0.0, %v5821
      %v5823 = vpop.f32.mrb[0].mxu0
      %v5824 = vpop.f32.mrb[0].mxu0
      %v5825 = vpop.f32.mrb[0].mxu0
      %5826 = vdwg.mxu0
      %5827 = vrot.lane.b32.xlu0 %v5662, 120
      %v5828 = vpop.permute.xlu0 %5827
      %5829 = vrot.lane.b32.xlu0 %v5663, 120
      %v5830 = vpop.permute.xlu0 %5829
      %5831 = vrot.lane.b32.xlu0 %v5662, 88
      %v5832 = vpop.permute.xlu0 %5831
      %5833 = vrot.lane.b32.xlu0 %v5663, 88
      %v5834 = vpop.permute.xlu0 %5833
      %v5836 = vsel %vm1116, %v5828, 0
      %v5839 = vsel %vm1116, %v5830, 0
      %v5842 = vsel %vm1116, %v5832, 0
      %v5845 = vsel %vm1116, %v5834, 0
      %5847 = vmatprep.subr.bf16.mxu0 0
      %5848 = vmatpush1.bf16.xpose.msra.mxu0 %v5842
      %5849 = vmatprep.subr.bf16.mxu0 0
      %5850 = vmatpush1.bf16.xpose.msra.mxu0 %v5845
      %5851 = vmatprep.subr.bf16.mxu0 0
      %5852 = vmatpush1.bf16.xpose.msra.mxu0 0
      %5853 = vmatprep.subr.bf16.mxu0 0
      %5854 = vmatpush1.bf16.xpose.msra.mxu0 0
      %5855 = vmatprep.subr.bf16.mxu0 0
      %5856 = vmatpush1.bf16.xpose.msra.mxu0 0
      %5857 = vmatprep.subr.bf16.mxu0 0
      %5858 = vmatpush1.bf16.xpose.msra.mxu0 0
      %5859 = vmatprep.subr.bf16.mxu0 0
      %5860 = vmatpush1.bf16.xpose.msra.mxu0 0
      %5861 = vmatprep.subr.bf16.mxu0 0
      %5862 = vmatpush1.bf16.xpose.msra.mxu0 0
      %5863 = vmatprep.subr.bf16.mxu0 0
      %5864 = vmatpush1.bf16.xpose.msra.mxu0 0
      %5865 = vmatprep.subr.bf16.mxu0 0
      %5866 = vmatpush1.bf16.xpose.msra.mxu0 0
      %5867 = vmatprep.subr.bf16.mxu0 0
      %5868 = vmatpush1.bf16.xpose.msra.mxu0 0
      %5869 = vmatprep.subr.bf16.mxu0 0
      %5870 = vmatpush1.bf16.xpose.msra.mxu0 0
      %5871 = vmatprep.subr.bf16.mxu0 0
      %5872 = vmatpush1.bf16.xpose.msra.mxu0 0
      %5873 = vmatprep.subr.bf16.mxu0 0
      %5874 = vmatpush1.bf16.xpose.msra.mxu0 0
      %5875 = vmatprep.subr.bf16.mxu0 0
      %5876 = vmatpush1.bf16.xpose.msra.mxu0 0
      %5877 = vmatprep.subr.bf16.mxu0 0
      %5878 = vmatpush1.bf16.xpose.msra.mxu0 0
      %5879 = vmatprep.mubr.bf16.mxu0 0
      %5880 = vmatmul.mubr.bf16.gmra.mrb[0].mxu0 %v5836
      %v5881 = vpop.f32.mrb[0].mxu0
      %v5882 = vadd.f32 %v420, %v5881
      %v5883 = vpop.f32.mrb[0].mxu0
      %v5884 = vpop.f32.mrb[0].mxu0
      %v5885 = vadd.f32 %v420, %v5884
      %v5886 = vpop.f32.mrb[0].mxu0
      %5887 = vmatprep.mubr.bf16.mxu0 0
      %5888 = vmatmul.mubr.bf16.gmra.mrb[0].mxu0 %v5839
      %v5889 = vpop.f32.mrb[0].mxu0
      %v5890 = vadd.f32 %v420, %v5889
      %v5891 = vpop.f32.mrb[0].mxu0
      %v5892 = vpop.f32.mrb[0].mxu0
      %v5893 = vpop.f32.mrb[0].mxu0
      %5894 = vdwg.mxu0
      %v5895 = vsel %vm1177, %v5882, -inf
      %5896 = vmax.xlane.f32.xlu0 %v5895
      %v5897 = vpop.xlane.xlu0 %5896
      %v5898 = vsel %vm1177, %v5885, -inf
      %5899 = vmax.xlane.f32.xlu0 %v5898
      %v5900 = vpop.xlane.xlu0 %5899
      %v5901 = vsel %vm1177, %v5890, -inf
      %5902 = vmax.xlane.f32.xlu0 %v5901
      %v5903 = vpop.xlane.xlu0 %5902
      %v5904 = vsub.f32 %v5882, %v5897
      %v5905 = vsub.f32 %v5885, %v5900
      %v5906 = vsub.f32 %v5890, %v5903
      %v5907 = vmul.f32 %v5904, 1.442695
      %v5908 = vpow.pop %v5907
      %v5909 = vmul.f32 %v5905, 1.442695
      %v5910 = vpow.pop %v5909
      %v5911 = vmul.f32 %v5906, 1.442695
      %v5912 = vpow.pop %v5911
      %v5913 = vsel %vm1177, %v5908, 0.0
      %5914 = vadd.xlane.f32.xlu0 %v5913
      %v5915 = vpop.xlane.xlu0 %5914
      %v5916 = vsel %vm1177, %v5910, 0.0
      %5917 = vadd.xlane.f32.xlu0 %v5916
      %v5918 = vpop.xlane.xlu0 %5917
      %v5919 = vsel %vm1177, %v5912, 0.0
      %5920 = vadd.xlane.f32.xlu0 %v5919
      %v5921 = vpop.xlane.xlu0 %5920
      %v5922 = vrcp.pop %v5915
      %v5923 = vrcp.pop %v5918
      %v5924 = vrcp.pop %v5921
      %v5925 = vmul.f32 %v5908, %v5922
      %v5926 = vmul.f32 %v5910, %v5923
      %v5927 = vmul.f32 %v5912, %v5924
      %v5928 = vpack.c.bf16 %v5926, %v5925
      %v5929 = vpack.c.bf16 %v5927, %v5927
      %5930 = vrot.lane.b32.xlu0 %v5662, 56
      %v5931 = vpop.permute.xlu0 %5930
      %5932 = vrot.lane.b32.xlu0 %v5663, 56
      %v5933 = vpop.permute.xlu0 %5932
      %v5936 = vsel %vm1177, %v5928, 0
      %v5939 = vsel %vm1177, %v5929, 0
      %v5942 = vsel %vm1224, %v5933, 0
      %5944 = vmatprep.subr.bf16.mxu0 0
      %5945 = vmatpush1.bf16.msra.mxu0 %v5931
      %5946 = vmatprep.subr.bf16.mxu0 0
      %5947 = vmatpush1.bf16.msra.mxu0 %v5942
      %5948 = vmatprep.subr.bf16.mxu0 0
      %5949 = vmatpush1.bf16.msra.mxu0 0
      %5950 = vmatprep.subr.bf16.mxu0 0
      %5951 = vmatpush1.bf16.msra.mxu0 0
      %5952 = vmatprep.subr.bf16.mxu0 0
      %5953 = vmatpush1.bf16.msra.mxu0 0
      %5954 = vmatprep.subr.bf16.mxu0 0
      %5955 = vmatpush1.bf16.msra.mxu0 0
      %5956 = vmatprep.subr.bf16.mxu0 0
      %5957 = vmatpush1.bf16.msra.mxu0 0
      %5958 = vmatprep.subr.bf16.mxu0 0
      %5959 = vmatpush1.bf16.msra.mxu0 0
      %5960 = vmatprep.subr.bf16.mxu0 0
      %5961 = vmatpush1.bf16.msra.mxu0 0
      %5962 = vmatprep.subr.bf16.mxu0 0
      %5963 = vmatpush1.bf16.msra.mxu0 0
      %5964 = vmatprep.subr.bf16.mxu0 0
      %5965 = vmatpush1.bf16.msra.mxu0 0
      %5966 = vmatprep.subr.bf16.mxu0 0
      %5967 = vmatpush1.bf16.msra.mxu0 0
      %5968 = vmatprep.subr.bf16.mxu0 0
      %5969 = vmatpush1.bf16.msra.mxu0 0
      %5970 = vmatprep.subr.bf16.mxu0 0
      %5971 = vmatpush1.bf16.msra.mxu0 0
      %5972 = vmatprep.subr.bf16.mxu0 0
      %5973 = vmatpush1.bf16.msra.mxu0 0
      %5974 = vmatprep.subr.bf16.mxu0 0
      %5975 = vmatpush1.bf16.msra.mxu0 0
      %5976 = vmatprep.mubr.bf16.mxu0 0
      %5977 = vmatmul.mubr.bf16.gmra.mrb[0].mxu0 %v5936
      %v5978 = vpop.f32.mrb[0].mxu0
      %v5979 = vadd.f32 0.0, %v5978
      %v5980 = vpop.f32.mrb[0].mxu0
      %v5981 = vpop.f32.mrb[0].mxu0
      %v5982 = vadd.f32 0.0, %v5981
      %v5983 = vpop.f32.mrb[0].mxu0
      %5984 = vmatprep.mubr.bf16.mxu0 0
      %5985 = vmatmul.mubr.bf16.gmra.mrb[0].mxu0 %v5939
      %v5986 = vpop.f32.mrb[0].mxu0
      %v5987 = vadd.f32 0.0, %v5986
      %v5988 = vpop.f32.mrb[0].mxu0
      %v5989 = vpop.f32.mrb[0].mxu0
      %v5990 = vpop.f32.mrb[0].mxu0
      %5991 = vdwg.mxu0
      %5992 = vrot.lane.b32.xlu0 %v5662, 112
      %v5993 = vpop.permute.xlu0 %5992
      %5994 = vrot.lane.b32.xlu0 %v5663, 112
      %v5995 = vpop.permute.xlu0 %5994
      %5996 = vrot.lane.b32.xlu0 %v5662, 80
      %v5997 = vpop.permute.xlu0 %5996
      %5998 = vrot.lane.b32.xlu0 %v5663, 80
      %v5999 = vpop.permute.xlu0 %5998
      %v6001 = vsel %vm1116, %v5993, 0
      %v6004 = vsel %vm1116, %v5995, 0
      %v6007 = vsel %vm1116, %v5997, 0
      %v6010 = vsel %vm1116, %v5999, 0
      %6012 = vmatprep.subr.bf16.mxu0 0
      %6013 = vmatpush1.bf16.xpose.msra.mxu0 %v6007
      %6014 = vmatprep.subr.bf16.mxu0 0
      %6015 = vmatpush1.bf16.xpose.msra.mxu0 %v6010
      %6016 = vmatprep.subr.bf16.mxu0 0
      %6017 = vmatpush1.bf16.xpose.msra.mxu0 0
      %6018 = vmatprep.subr.bf16.mxu0 0
      %6019 = vmatpush1.bf16.xpose.msra.mxu0 0
      %6020 = vmatprep.subr.bf16.mxu0 0
      %6021 = vmatpush1.bf16.xpose.msra.mxu0 0
      %6022 = vmatprep.subr.bf16.mxu0 0
      %6023 = vmatpush1.bf16.xpose.msra.mxu0 0
      %6024 = vmatprep.subr.bf16.mxu0 0
      %6025 = vmatpush1.bf16.xpose.msra.mxu0 0
      %6026 = vmatprep.subr.bf16.mxu0 0
      %6027 = vmatpush1.bf16.xpose.msra.mxu0 0
      %6028 = vmatprep.subr.bf16.mxu0 0
      %6029 = vmatpush1.bf16.xpose.msra.mxu0 0
      %6030 = vmatprep.subr.bf16.mxu0 0
      %6031 = vmatpush1.bf16.xpose.msra.mxu0 0
      %6032 = vmatprep.subr.bf16.mxu0 0
      %6033 = vmatpush1.bf16.xpose.msra.mxu0 0
      %6034 = vmatprep.subr.bf16.mxu0 0
      %6035 = vmatpush1.bf16.xpose.msra.mxu0 0
      %6036 = vmatprep.subr.bf16.mxu0 0
      %6037 = vmatpush1.bf16.xpose.msra.mxu0 0
      %6038 = vmatprep.subr.bf16.mxu0 0
      %6039 = vmatpush1.bf16.xpose.msra.mxu0 0
      %6040 = vmatprep.subr.bf16.mxu0 0
      %6041 = vmatpush1.bf16.xpose.msra.mxu0 0
      %6042 = vmatprep.subr.bf16.mxu0 0
      %6043 = vmatpush1.bf16.xpose.msra.mxu0 0
      %6044 = vmatprep.mubr.bf16.mxu0 0
      %6045 = vmatmul.mubr.bf16.gmra.mrb[0].mxu0 %v6001
      %v6046 = vpop.f32.mrb[0].mxu0
      %v6047 = vadd.f32 %v420, %v6046
      %v6048 = vpop.f32.mrb[0].mxu0
      %v6049 = vpop.f32.mrb[0].mxu0
      %v6050 = vadd.f32 %v420, %v6049
      %v6051 = vpop.f32.mrb[0].mxu0
      %6052 = vmatprep.mubr.bf16.mxu0 0
      %6053 = vmatmul.mubr.bf16.gmra.mrb[0].mxu0 %v6004
      %v6054 = vpop.f32.mrb[0].mxu0
      %v6055 = vadd.f32 %v420, %v6054
      %v6056 = vpop.f32.mrb[0].mxu0
      %v6057 = vpop.f32.mrb[0].mxu0
      %v6058 = vpop.f32.mrb[0].mxu0
      %6059 = vdwg.mxu0
      %v6060 = vsel %vm1177, %v6047, -inf
      %6061 = vmax.xlane.f32.xlu0 %v6060
      %v6062 = vpop.xlane.xlu0 %6061
      %v6063 = vsel %vm1177, %v6050, -inf
      %6064 = vmax.xlane.f32.xlu0 %v6063
      %v6065 = vpop.xlane.xlu0 %6064
      %v6066 = vsel %vm1177, %v6055, -inf
      %6067 = vmax.xlane.f32.xlu0 %v6066
      %v6068 = vpop.xlane.xlu0 %6067
      %v6069 = vsub.f32 %v6047, %v6062
      %v6070 = vsub.f32 %v6050, %v6065
      %v6071 = vsub.f32 %v6055, %v6068
      %v6072 = vmul.f32 %v6069, 1.442695
      %v6073 = vpow.pop %v6072
      %v6074 = vmul.f32 %v6070, 1.442695
      %v6075 = vpow.pop %v6074
      %v6076 = vmul.f32 %v6071, 1.442695
      %v6077 = vpow.pop %v6076
      %v6078 = vsel %vm1177, %v6073, 0.0
      %6079 = vadd.xlane.f32.xlu0 %v6078
      %v6080 = vpop.xlane.xlu0 %6079
      %v6081 = vsel %vm1177, %v6075, 0.0
      %6082 = vadd.xlane.f32.xlu0 %v6081
      %v6083 = vpop.xlane.xlu0 %6082
      %v6084 = vsel %vm1177, %v6077, 0.0
      %6085 = vadd.xlane.f32.xlu0 %v6084
      %v6086 = vpop.xlane.xlu0 %6085
      %v6087 = vrcp.pop %v6080
      %v6088 = vrcp.pop %v6083
      %v6089 = vrcp.pop %v6086
      %v6090 = vmul.f32 %v6073, %v6087
      %v6091 = vmul.f32 %v6075, %v6088
      %v6092 = vmul.f32 %v6077, %v6089
      %v6093 = vpack.c.bf16 %v6091, %v6090
      %v6094 = vpack.c.bf16 %v6092, %v6092
      %6095 = vrot.lane.b32.xlu0 %v5662, 48
      %v6096 = vpop.permute.xlu0 %6095
      %6097 = vrot.lane.b32.xlu0 %v5663, 48
      %v6098 = vpop.permute.xlu0 %6097
      %v6101 = vsel %vm1177, %v6093, 0
      %v6104 = vsel %vm1177, %v6094, 0
      %v6107 = vsel %vm1224, %v6098, 0
      %6109 = vmatprep.subr.bf16.mxu0 0
      %6110 = vmatpush1.bf16.msra.mxu0 %v6096
      %6111 = vmatprep.subr.bf16.mxu0 0
      %6112 = vmatpush1.bf16.msra.mxu0 %v6107
      %6113 = vmatprep.subr.bf16.mxu0 0
      %6114 = vmatpush1.bf16.msra.mxu0 0
      %6115 = vmatprep.subr.bf16.mxu0 0
      %6116 = vmatpush1.bf16.msra.mxu0 0
      %6117 = vmatprep.subr.bf16.mxu0 0
      %6118 = vmatpush1.bf16.msra.mxu0 0
      %6119 = vmatprep.subr.bf16.mxu0 0
      %6120 = vmatpush1.bf16.msra.mxu0 0
      %6121 = vmatprep.subr.bf16.mxu0 0
      %6122 = vmatpush1.bf16.msra.mxu0 0
      %6123 = vmatprep.subr.bf16.mxu0 0
      %6124 = vmatpush1.bf16.msra.mxu0 0
      %6125 = vmatprep.subr.bf16.mxu0 0
      %6126 = vmatpush1.bf16.msra.mxu0 0
      %6127 = vmatprep.subr.bf16.mxu0 0
      %6128 = vmatpush1.bf16.msra.mxu0 0
      %6129 = vmatprep.subr.bf16.mxu0 0
      %6130 = vmatpush1.bf16.msra.mxu0 0
      %6131 = vmatprep.subr.bf16.mxu0 0
      %6132 = vmatpush1.bf16.msra.mxu0 0
      %6133 = vmatprep.subr.bf16.mxu0 0
      %6134 = vmatpush1.bf16.msra.mxu0 0
      %6135 = vmatprep.subr.bf16.mxu0 0
      %6136 = vmatpush1.bf16.msra.mxu0 0
      %6137 = vmatprep.subr.bf16.mxu0 0
      %6138 = vmatpush1.bf16.msra.mxu0 0
      %6139 = vmatprep.subr.bf16.mxu0 0
      %6140 = vmatpush1.bf16.msra.mxu0 0
      %6141 = vmatprep.mubr.bf16.mxu0 0
      %6142 = vmatmul.mubr.bf16.gmra.mrb[0].mxu0 %v6101
      %v6143 = vpop.f32.mrb[0].mxu0
      %v6144 = vadd.f32 0.0, %v6143
      %v6145 = vpop.f32.mrb[0].mxu0
      %v6146 = vpop.f32.mrb[0].mxu0
      %v6147 = vadd.f32 0.0, %v6146
      %v6148 = vpop.f32.mrb[0].mxu0
      %6149 = vmatprep.mubr.bf16.mxu0 0
      %6150 = vmatmul.mubr.bf16.gmra.mrb[0].mxu0 %v6104
      %v6151 = vpop.f32.mrb[0].mxu0
      %v6152 = vadd.f32 0.0, %v6151
      %v6153 = vpop.f32.mrb[0].mxu0
      %v6154 = vpop.f32.mrb[0].mxu0
      %v6155 = vpop.f32.mrb[0].mxu0
      %6156 = vdwg.mxu0
      %6157 = vrot.lane.b32.xlu0 %v5662, 104
      %v6158 = vpop.permute.xlu0 %6157
      %6159 = vrot.lane.b32.xlu0 %v5663, 104
      %v6160 = vpop.permute.xlu0 %6159
      %6161 = vrot.lane.b32.xlu0 %v5662, 72
      %v6162 = vpop.permute.xlu0 %6161
      %6163 = vrot.lane.b32.xlu0 %v5663, 72
      %v6164 = vpop.permute.xlu0 %6163
      %v6166 = vsel %vm1116, %v6158, 0
      %v6169 = vsel %vm1116, %v6160, 0
      %v6172 = vsel %vm1116, %v6162, 0
      %v6175 = vsel %vm1116, %v6164, 0
      %6177 = vmatprep.subr.bf16.mxu0 0
      %6178 = vmatpush1.bf16.xpose.msra.mxu0 %v6172
      %6179 = vmatprep.subr.bf16.mxu0 0
      %6180 = vmatpush1.bf16.xpose.msra.mxu0 %v6175
      %6181 = vmatprep.subr.bf16.mxu0 0
      %6182 = vmatpush1.bf16.xpose.msra.mxu0 0
      %6183 = vmatprep.subr.bf16.mxu0 0
      %6184 = vmatpush1.bf16.xpose.msra.mxu0 0
      %6185 = vmatprep.subr.bf16.mxu0 0
      %6186 = vmatpush1.bf16.xpose.msra.mxu0 0
      %6187 = vmatprep.subr.bf16.mxu0 0
      %6188 = vmatpush1.bf16.xpose.msra.mxu0 0
      %6189 = vmatprep.subr.bf16.mxu0 0
      %6190 = vmatpush1.bf16.xpose.msra.mxu0 0
      %6191 = vmatprep.subr.bf16.mxu0 0
      %6192 = vmatpush1.bf16.xpose.msra.mxu0 0
      %6193 = vmatprep.subr.bf16.mxu0 0
      %6194 = vmatpush1.bf16.xpose.msra.mxu0 0
      %6195 = vmatprep.subr.bf16.mxu0 0
      %6196 = vmatpush1.bf16.xpose.msra.mxu0 0
      %6197 = vmatprep.subr.bf16.mxu0 0
      %6198 = vmatpush1.bf16.xpose.msra.mxu0 0
      %6199 = vmatprep.subr.bf16.mxu0 0
      %6200 = vmatpush1.bf16.xpose.msra.mxu0 0
      %6201 = vmatprep.subr.bf16.mxu0 0
      %6202 = vmatpush1.bf16.xpose.msra.mxu0 0
      %6203 = vmatprep.subr.bf16.mxu0 0
      %6204 = vmatpush1.bf16.xpose.msra.mxu0 0
      %6205 = vmatprep.subr.bf16.mxu0 0
      %6206 = vmatpush1.bf16.xpose.msra.mxu0 0
      %6207 = vmatprep.subr.bf16.mxu0 0
      %6208 = vmatpush1.bf16.xpose.msra.mxu0 0
      %6209 = vmatprep.mubr.bf16.mxu0 0
      %6210 = vmatmul.mubr.bf16.gmra.mrb[0].mxu0 %v6166
      %v6211 = vpop.f32.mrb[0].mxu0
      %v6212 = vadd.f32 %v420, %v6211
      %v6213 = vpop.f32.mrb[0].mxu0
      %v6214 = vpop.f32.mrb[0].mxu0
      %v6215 = vadd.f32 %v420, %v6214
      %v6216 = vpop.f32.mrb[0].mxu0
      %6217 = vmatprep.mubr.bf16.mxu0 0
      %6218 = vmatmul.mubr.bf16.gmra.mrb[0].mxu0 %v6169
      %v6219 = vpop.f32.mrb[0].mxu0
      %v6220 = vadd.f32 %v420, %v6219
      %v6221 = vpop.f32.mrb[0].mxu0
      %v6222 = vpop.f32.mrb[0].mxu0
      %v6223 = vpop.f32.mrb[0].mxu0
      %6224 = vdwg.mxu0
      %v6225 = vsel %vm1177, %v6212, -inf
      %6226 = vmax.xlane.f32.xlu0 %v6225
      %v6227 = vpop.xlane.xlu0 %6226
      %v6228 = vsel %vm1177, %v6215, -inf
      %6229 = vmax.xlane.f32.xlu0 %v6228
      %v6230 = vpop.xlane.xlu0 %6229
      %v6231 = vsel %vm1177, %v6220, -inf
      %6232 = vmax.xlane.f32.xlu0 %v6231
      %v6233 = vpop.xlane.xlu0 %6232
      %v6234 = vsub.f32 %v6212, %v6227
      %v6235 = vsub.f32 %v6215, %v6230
      %v6236 = vsub.f32 %v6220, %v6233
      %v6237 = vmul.f32 %v6234, 1.442695
      %v6238 = vpow.pop %v6237
      %v6239 = vmul.f32 %v6235, 1.442695
      %v6240 = vpow.pop %v6239
      %v6241 = vmul.f32 %v6236, 1.442695
      %v6242 = vpow.pop %v6241
      %v6243 = vsel %vm1177, %v6238, 0.0
      %6244 = vadd.xlane.f32.xlu0 %v6243
      %v6245 = vpop.xlane.xlu0 %6244
      %v6246 = vsel %vm1177, %v6240, 0.0
      %6247 = vadd.xlane.f32.xlu0 %v6246
      %v6248 = vpop.xlane.xlu0 %6247
      %v6249 = vsel %vm1177, %v6242, 0.0
      %6250 = vadd.xlane.f32.xlu0 %v6249
      %v6251 = vpop.xlane.xlu0 %6250
      %v6252 = vrcp.pop %v6245
      %v6253 = vrcp.pop %v6248
      %v6254 = vrcp.pop %v6251
      %v6255 = vmul.f32 %v6238, %v6252
      %v6256 = vmul.f32 %v6240, %v6253
      %v6257 = vmul.f32 %v6242, %v6254
      %v6258 = vpack.c.bf16 %v6256, %v6255
      %v6259 = vpack.c.bf16 %v6257, %v6257
      %6260 = vrot.lane.b32.xlu0 %v5662, 40
      %v6261 = vpop.permute.xlu0 %6260
      %6262 = vrot.lane.b32.xlu0 %v5663, 40
      %v6263 = vpop.permute.xlu0 %6262
      %v6266 = vsel %vm1177, %v6258, 0
      %v6269 = vsel %vm1177, %v6259, 0
      %v6272 = vsel %vm1224, %v6263, 0
      %6274 = vmatprep.subr.bf16.mxu0 0
      %6275 = vmatpush1.bf16.msra.mxu0 %v6261
      %6276 = vmatprep.subr.bf16.mxu0 0
      %6277 = vmatpush1.bf16.msra.mxu0 %v6272
      %6278 = vmatprep.subr.bf16.mxu0 0
      %6279 = vmatpush1.bf16.msra.mxu0 0
      %6280 = vmatprep.subr.bf16.mxu0 0
      %6281 = vmatpush1.bf16.msra.mxu0 0
      %6282 = vmatprep.subr.bf16.mxu0 0
      %6283 = vmatpush1.bf16.msra.mxu0 0
      %6284 = vmatprep.subr.bf16.mxu0 0
      %6285 = vmatpush1.bf16.msra.mxu0 0
      %6286 = vmatprep.subr.bf16.mxu0 0
      %6287 = vmatpush1.bf16.msra.mxu0 0
      %6288 = vmatprep.subr.bf16.mxu0 0
      %6289 = vmatpush1.bf16.msra.mxu0 0
      %6290 = vmatprep.subr.bf16.mxu0 0
      %6291 = vmatpush1.bf16.msra.mxu0 0
      %6292 = vmatprep.subr.bf16.mxu0 0
      %6293 = vmatpush1.bf16.msra.mxu0 0
      %6294 = vmatprep.subr.bf16.mxu0 0
      %6295 = vmatpush1.bf16.msra.mxu0 0
      %6296 = vmatprep.subr.bf16.mxu0 0
      %6297 = vmatpush1.bf16.msra.mxu0 0
      %6298 = vmatprep.subr.bf16.mxu0 0
      %6299 = vmatpush1.bf16.msra.mxu0 0
      %6300 = vmatprep.subr.bf16.mxu0 0
      %6301 = vmatpush1.bf16.msra.mxu0 0
      %6302 = vmatprep.subr.bf16.mxu0 0
      %6303 = vmatpush1.bf16.msra.mxu0 0
      %6304 = vmatprep.subr.bf16.mxu0 0
      %6305 = vmatpush1.bf16.msra.mxu0 0
      %6306 = vmatprep.mubr.bf16.mxu0 0
      %6307 = vmatmul.mubr.bf16.gmra.mrb[0].mxu0 %v6266
      %v6308 = vpop.f32.mrb[0].mxu0
      %v6309 = vadd.f32 0.0, %v6308
      %v6310 = vpop.f32.mrb[0].mxu0
      %v6311 = vpop.f32.mrb[0].mxu0
      %v6312 = vadd.f32 0.0, %v6311
      %v6313 = vpop.f32.mrb[0].mxu0
      %6314 = vmatprep.mubr.bf16.mxu0 0
      %6315 = vmatmul.mubr.bf16.gmra.mrb[0].mxu0 %v6269
      %v6316 = vpop.f32.mrb[0].mxu0
      %v6317 = vadd.f32 0.0, %v6316
      %v6318 = vpop.f32.mrb[0].mxu0
      %v6319 = vpop.f32.mrb[0].mxu0
      %v6320 = vpop.f32.mrb[0].mxu0
      %6321 = vdwg.mxu0
      %6325 = vrot.lane.b32.xlu0 %v5979, 8
      %v6326 = vpop.permute.xlu0 %6325
      %6327 = vrot.lane.b32.xlu0 %v5982, 8
      %v6328 = vpop.permute.xlu0 %6327
      %6329 = vrot.lane.b32.xlu0 %v5987, 8
      %v6330 = vpop.permute.xlu0 %6329
      %6337 = vrot.lane.b32.xlu0 %v6144, 16
      %v6338 = vpop.permute.xlu0 %6337
      %6339 = vrot.lane.b32.xlu0 %v6147, 16
      %v6340 = vpop.permute.xlu0 %6339
      %6341 = vrot.lane.b32.xlu0 %v6152, 16
      %v6342 = vpop.permute.xlu0 %6341
      %6349 = vrot.lane.b32.xlu0 %v6309, 24
      %v6350 = vpop.permute.xlu0 %6349
      %6351 = vrot.lane.b32.xlu0 %v6312, 24
      %v6352 = vpop.permute.xlu0 %6351
      %6353 = vrot.lane.b32.xlu0 %v6317, 24
      %v6354 = vpop.permute.xlu0 %6353
      %v6358 = vsel %vm1116, %v5814, %v6326
      %v6359 = vsel %vm1116, %v5817, %v6328
      %v6360 = vsel %vm1116, %v5822, %v6330
      %v6361 = vsel %vm1810, %v6358, %v6338
      %v6362 = vsel %vm1810, %v6359, %v6340
      %v6363 = vsel %vm1810, %v6360, %v6342
      %v6364 = vsel %vm1177, %v6361, %v6350
      %v6365 = vsel %vm1177, %v6362, %v6352
      %v6366 = vsel %vm1177, %v6363, %v6354
      %v6367 = vpack.c.bf16 %v4938, %v4935
      %v6368 = vpack.c.bf16 %v4943, %v4943
      %6371 = vrot.lane.b32.xlu0 %v6367, 96
      %v6372 = vpop.permute.xlu0 %6371
      %6373 = vrot.lane.b32.xlu0 %v6368, 96
      %v6374 = vpop.permute.xlu0 %6373
      %v6376 = vsel %vm1116, %v6367, 0
      %v6379 = vsel %vm1116, %v6368, 0
      %v6382 = vsel %vm1116, %v6372, 0
      %v6385 = vsel %vm1116, %v6374, 0
      %6387 = vmatprep.subr.bf16.mxu0 0
      %6388 = vmatpush1.bf16.xpose.msra.mxu0 %v6382
      %6389 = vmatprep.subr.bf16.mxu0 0
      %6390 = vmatpush1.bf16.xpose.msra.mxu0 %v6385
      %6391 = vmatprep.subr.bf16.mxu0 0
      %6392 = vmatpush1.bf16.xpose.msra.mxu0 0
      %6393 = vmatprep.subr.bf16.mxu0 0
      %6394 = vmatpush1.bf16.xpose.msra.mxu0 0
      %6395 = vmatprep.subr.bf16.mxu0 0
      %6396 = vmatpush1.bf16.xpose.msra.mxu0 0
      %6397 = vmatprep.subr.bf16.mxu0 0
      %6398 = vmatpush1.bf16.xpose.msra.mxu0 0
      %6399 = vmatprep.subr.bf16.mxu0 0
      %6400 = vmatpush1.bf16.xpose.msra.mxu0 0
      %6401 = vmatprep.subr.bf16.mxu0 0
      %6402 = vmatpush1.bf16.xpose.msra.mxu0 0
      %6403 = vmatprep.subr.bf16.mxu0 0
      %6404 = vmatpush1.bf16.xpose.msra.mxu0 0
      %6405 = vmatprep.subr.bf16.mxu0 0
      %6406 = vmatpush1.bf16.xpose.msra.mxu0 0
      %6407 = vmatprep.subr.bf16.mxu0 0
      %6408 = vmatpush1.bf16.xpose.msra.mxu0 0
      %6409 = vmatprep.subr.bf16.mxu0 0
      %6410 = vmatpush1.bf16.xpose.msra.mxu0 0
      %6411 = vmatprep.subr.bf16.mxu0 0
      %6412 = vmatpush1.bf16.xpose.msra.mxu0 0
      %6413 = vmatprep.subr.bf16.mxu0 0
      %6414 = vmatpush1.bf16.xpose.msra.mxu0 0
      %6415 = vmatprep.subr.bf16.mxu0 0
      %6416 = vmatpush1.bf16.xpose.msra.mxu0 0
      %6417 = vmatprep.subr.bf16.mxu0 0
      %6418 = vmatpush1.bf16.xpose.msra.mxu0 0
      %6419 = vmatprep.mubr.bf16.mxu0 0
      %6420 = vmatmul.mubr.bf16.gmra.mrb[0].mxu0 %v6376
      %v6421 = vpop.f32.mrb[0].mxu0
      %v6422 = vadd.f32 %v420, %v6421
      %v6423 = vpop.f32.mrb[0].mxu0
      %v6424 = vpop.f32.mrb[0].mxu0
      %v6425 = vadd.f32 %v420, %v6424
      %v6426 = vpop.f32.mrb[0].mxu0
      %6427 = vmatprep.mubr.bf16.mxu0 0
      %6428 = vmatmul.mubr.bf16.gmra.mrb[0].mxu0 %v6379
      %v6429 = vpop.f32.mrb[0].mxu0
      %v6430 = vadd.f32 %v420, %v6429
      %v6431 = vpop.f32.mrb[0].mxu0
      %v6432 = vpop.f32.mrb[0].mxu0
      %v6433 = vpop.f32.mrb[0].mxu0
      %6434 = vdwg.mxu0
      %v6435 = vsel %vm1177, %v6422, -inf
      %6436 = vmax.xlane.f32.xlu0 %v6435
      %v6437 = vpop.xlane.xlu0 %6436
      %v6438 = vsel %vm1177, %v6425, -inf
      %6439 = vmax.xlane.f32.xlu0 %v6438
      %v6440 = vpop.xlane.xlu0 %6439
      %v6441 = vsel %vm1177, %v6430, -inf
      %6442 = vmax.xlane.f32.xlu0 %v6441
      %v6443 = vpop.xlane.xlu0 %6442
      %v6444 = vsub.f32 %v6422, %v6437
      %v6445 = vsub.f32 %v6425, %v6440
      %v6446 = vsub.f32 %v6430, %v6443
      %v6447 = vmul.f32 %v6444, 1.442695
      %v6448 = vpow.pop %v6447
      %v6449 = vmul.f32 %v6445, 1.442695
      %v6450 = vpow.pop %v6449
      %v6451 = vmul.f32 %v6446, 1.442695
      %v6452 = vpow.pop %v6451
      %v6453 = vsel %vm1177, %v6448, 0.0
      %6454 = vadd.xlane.f32.xlu0 %v6453
      %v6455 = vpop.xlane.xlu0 %6454
      %v6456 = vsel %vm1177, %v6450, 0.0
      %6457 = vadd.xlane.f32.xlu0 %v6456
      %v6458 = vpop.xlane.xlu0 %6457
      %v6459 = vsel %vm1177, %v6452, 0.0
      %6460 = vadd.xlane.f32.xlu0 %v6459
      %v6461 = vpop.xlane.xlu0 %6460
      %v6462 = vrcp.pop %v6455
      %v6463 = vrcp.pop %v6458
      %v6464 = vrcp.pop %v6461
      %v6465 = vmul.f32 %v6448, %v6462
      %v6466 = vmul.f32 %v6450, %v6463
      %v6467 = vmul.f32 %v6452, %v6464
      %v6468 = vpack.c.bf16 %v6466, %v6465
      %v6469 = vpack.c.bf16 %v6467, %v6467
      %6470 = vrot.lane.b32.xlu0 %v6367, 64
      %v6471 = vpop.permute.xlu0 %6470
      %6472 = vrot.lane.b32.xlu0 %v6368, 64
      %v6473 = vpop.permute.xlu0 %6472
      %v6476 = vsel %vm1177, %v6468, 0
      %v6479 = vsel %vm1177, %v6469, 0
      %v6482 = vsel %vm1224, %v6473, 0
      %6484 = vmatprep.subr.bf16.mxu0 0
      %6485 = vmatpush1.bf16.msra.mxu0 %v6471
      %6486 = vmatprep.subr.bf16.mxu0 0
      %6487 = vmatpush1.bf16.msra.mxu0 %v6482
      %6488 = vmatprep.subr.bf16.mxu0 0
      %6489 = vmatpush1.bf16.msra.mxu0 0
      %6490 = vmatprep.subr.bf16.mxu0 0
      %6491 = vmatpush1.bf16.msra.mxu0 0
      %6492 = vmatprep.subr.bf16.mxu0 0
      %6493 = vmatpush1.bf16.msra.mxu0 0
      %6494 = vmatprep.subr.bf16.mxu0 0
      %6495 = vmatpush1.bf16.msra.mxu0 0
      %6496 = vmatprep.subr.bf16.mxu0 0
      %6497 = vmatpush1.bf16.msra.mxu0 0
      %6498 = vmatprep.subr.bf16.mxu0 0
      %6499 = vmatpush1.bf16.msra.mxu0 0
      %6500 = vmatprep.subr.bf16.mxu0 0
      %6501 = vmatpush1.bf16.msra.mxu0 0
      %6502 = vmatprep.subr.bf16.mxu0 0
      %6503 = vmatpush1.bf16.msra.mxu0 0
      %6504 = vmatprep.subr.bf16.mxu0 0
      %6505 = vmatpush1.bf16.msra.mxu0 0
      %6506 = vmatprep.subr.bf16.mxu0 0
      %6507 = vmatpush1.bf16.msra.mxu0 0
      %6508 = vmatprep.subr.bf16.mxu0 0
      %6509 = vmatpush1.bf16.msra.mxu0 0
      %6510 = vmatprep.subr.bf16.mxu0 0
      %6511 = vmatpush1.bf16.msra.mxu0 0
      %6512 = vmatprep.subr.bf16.mxu0 0
      %6513 = vmatpush1.bf16.msra.mxu0 0
      %6514 = vmatprep.subr.bf16.mxu0 0
      %6515 = vmatpush1.bf16.msra.mxu0 0
      %6516 = vmatprep.mubr.bf16.mxu0 0
      %6517 = vmatmul.mubr.bf16.gmra.mrb[0].mxu0 %v6476
      %v6518 = vpop.f32.mrb[0].mxu0
      %v6519 = vadd.f32 0.0, %v6518
      %v6520 = vpop.f32.mrb[0].mxu0
      %v6521 = vpop.f32.mrb[0].mxu0
      %v6522 = vadd.f32 0.0, %v6521
      %v6523 = vpop.f32.mrb[0].mxu0
      %6524 = vmatprep.mubr.bf16.mxu0 0
      %6525 = vmatmul.mubr.bf16.gmra.mrb[0].mxu0 %v6479
      %v6526 = vpop.f32.mrb[0].mxu0
      %v6527 = vadd.f32 0.0, %v6526
      %v6528 = vpop.f32.mrb[0].mxu0
      %v6529 = vpop.f32.mrb[0].mxu0
      %v6530 = vpop.f32.mrb[0].mxu0
      %6531 = vdwg.mxu0
      %6532 = vrot.lane.b32.xlu0 %v6367, 120
      %v6533 = vpop.permute.xlu0 %6532
      %6534 = vrot.lane.b32.xlu0 %v6368, 120
      %v6535 = vpop.permute.xlu0 %6534
      %6536 = vrot.lane.b32.xlu0 %v6367, 88
      %v6537 = vpop.permute.xlu0 %6536
      %6538 = vrot.lane.b32.xlu0 %v6368, 88
      %v6539 = vpop.permute.xlu0 %6538
      %v6541 = vsel %vm1116, %v6533, 0
      %v6544 = vsel %vm1116, %v6535, 0
      %v6547 = vsel %vm1116, %v6537, 0
      %v6550 = vsel %vm1116, %v6539, 0
      %6552 = vmatprep.subr.bf16.mxu0 0
      %6553 = vmatpush1.bf16.xpose.msra.mxu0 %v6547
      %6554 = vmatprep.subr.bf16.mxu0 0
      %6555 = vmatpush1.bf16.xpose.msra.mxu0 %v6550
      %6556 = vmatprep.subr.bf16.mxu0 0
      %6557 = vmatpush1.bf16.xpose.msra.mxu0 0
      %6558 = vmatprep.subr.bf16.mxu0 0
      %6559 = vmatpush1.bf16.xpose.msra.mxu0 0
      %6560 = vmatprep.subr.bf16.mxu0 0
      %6561 = vmatpush1.bf16.xpose.msra.mxu0 0
      %6562 = vmatprep.subr.bf16.mxu0 0
      %6563 = vmatpush1.bf16.xpose.msra.mxu0 0
      %6564 = vmatprep.subr.bf16.mxu0 0
      %6565 = vmatpush1.bf16.xpose.msra.mxu0 0
      %6566 = vmatprep.subr.bf16.mxu0 0
      %6567 = vmatpush1.bf16.xpose.msra.mxu0 0
      %6568 = vmatprep.subr.bf16.mxu0 0
      %6569 = vmatpush1.bf16.xpose.msra.mxu0 0
      %6570 = vmatprep.subr.bf16.mxu0 0
      %6571 = vmatpush1.bf16.xpose.msra.mxu0 0
      %6572 = vmatprep.subr.bf16.mxu0 0
      %6573 = vmatpush1.bf16.xpose.msra.mxu0 0
      %6574 = vmatprep.subr.bf16.mxu0 0
      %6575 = vmatpush1.bf16.xpose.msra.mxu0 0
      %6576 = vmatprep.subr.bf16.mxu0 0
      %6577 = vmatpush1.bf16.xpose.msra.mxu0 0
      %6578 = vmatprep.subr.bf16.mxu0 0
      %6579 = vmatpush1.bf16.xpose.msra.mxu0 0
      %6580 = vmatprep.subr.bf16.mxu0 0
      %6581 = vmatpush1.bf16.xpose.msra.mxu0 0
      %6582 = vmatprep.subr.bf16.mxu0 0
      %6583 = vmatpush1.bf16.xpose.msra.mxu0 0
      %6584 = vmatprep.mubr.bf16.mxu0 0
      %6585 = vmatmul.mubr.bf16.gmra.mrb[0].mxu0 %v6541
      %v6586 = vpop.f32.mrb[0].mxu0
      %v6587 = vadd.f32 %v420, %v6586
      %v6588 = vpop.f32.mrb[0].mxu0
      %v6589 = vpop.f32.mrb[0].mxu0
      %v6590 = vadd.f32 %v420, %v6589
      %v6591 = vpop.f32.mrb[0].mxu0
      %6592 = vmatprep.mubr.bf16.mxu0 0
      %6593 = vmatmul.mubr.bf16.gmra.mrb[0].mxu0 %v6544
      %v6594 = vpop.f32.mrb[0].mxu0
      %v6595 = vadd.f32 %v420, %v6594
      %v6596 = vpop.f32.mrb[0].mxu0
      %v6597 = vpop.f32.mrb[0].mxu0
      %v6598 = vpop.f32.mrb[0].mxu0
      %6599 = vdwg.mxu0
      %v6600 = vsel %vm1177, %v6587, -inf
      %6601 = vmax.xlane.f32.xlu0 %v6600
      %v6602 = vpop.xlane.xlu0 %6601
      %v6603 = vsel %vm1177, %v6590, -inf
      %6604 = vmax.xlane.f32.xlu0 %v6603
      %v6605 = vpop.xlane.xlu0 %6604
      %v6606 = vsel %vm1177, %v6595, -inf
      %6607 = vmax.xlane.f32.xlu0 %v6606
      %v6608 = vpop.xlane.xlu0 %6607
      %v6609 = vsub.f32 %v6587, %v6602
      %v6610 = vsub.f32 %v6590, %v6605
      %v6611 = vsub.f32 %v6595, %v6608
      %v6612 = vmul.f32 %v6609, 1.442695
      %v6613 = vpow.pop %v6612
      %v6614 = vmul.f32 %v6610, 1.442695
      %v6615 = vpow.pop %v6614
      %v6616 = vmul.f32 %v6611, 1.442695
      %v6617 = vpow.pop %v6616
      %v6618 = vsel %vm1177, %v6613, 0.0
      %6619 = vadd.xlane.f32.xlu0 %v6618
      %v6620 = vpop.xlane.xlu0 %6619
      %v6621 = vsel %vm1177, %v6615, 0.0
      %6622 = vadd.xlane.f32.xlu0 %v6621
      %v6623 = vpop.xlane.xlu0 %6622
      %v6624 = vsel %vm1177, %v6617, 0.0
      %6625 = vadd.xlane.f32.xlu0 %v6624
      %v6626 = vpop.xlane.xlu0 %6625
      %v6627 = vrcp.pop %v6620
      %v6628 = vrcp.pop %v6623
      %v6629 = vrcp.pop %v6626
      %v6630 = vmul.f32 %v6613, %v6627
      %v6631 = vmul.f32 %v6615, %v6628
      %v6632 = vmul.f32 %v6617, %v6629
      %v6633 = vpack.c.bf16 %v6631, %v6630
      %v6634 = vpack.c.bf16 %v6632, %v6632
      %6635 = vrot.lane.b32.xlu0 %v6367, 56
      %v6636 = vpop.permute.xlu0 %6635
      %6637 = vrot.lane.b32.xlu0 %v6368, 56
      %v6638 = vpop.permute.xlu0 %6637
      %v6641 = vsel %vm1177, %v6633, 0
      %v6644 = vsel %vm1177, %v6634, 0
      %v6647 = vsel %vm1224, %v6638, 0
      %6649 = vmatprep.subr.bf16.mxu0 0
      %6650 = vmatpush1.bf16.msra.mxu0 %v6636
      %6651 = vmatprep.subr.bf16.mxu0 0
      %6652 = vmatpush1.bf16.msra.mxu0 %v6647
      %6653 = vmatprep.subr.bf16.mxu0 0
      %6654 = vmatpush1.bf16.msra.mxu0 0
      %6655 = vmatprep.subr.bf16.mxu0 0
      %6656 = vmatpush1.bf16.msra.mxu0 0
      %6657 = vmatprep.subr.bf16.mxu0 0
      %6658 = vmatpush1.bf16.msra.mxu0 0
      %6659 = vmatprep.subr.bf16.mxu0 0
      %6660 = vmatpush1.bf16.msra.mxu0 0
      %6661 = vmatprep.subr.bf16.mxu0 0
      %6662 = vmatpush1.bf16.msra.mxu0 0
      %6663 = vmatprep.subr.bf16.mxu0 0
      %6664 = vmatpush1.bf16.msra.mxu0 0
      %6665 = vmatprep.subr.bf16.mxu0 0
      %6666 = vmatpush1.bf16.msra.mxu0 0
      %6667 = vmatprep.subr.bf16.mxu0 0
      %6668 = vmatpush1.bf16.msra.mxu0 0
      %6669 = vmatprep.subr.bf16.mxu0 0
      %6670 = vmatpush1.bf16.msra.mxu0 0
      %6671 = vmatprep.subr.bf16.mxu0 0
      %6672 = vmatpush1.bf16.msra.mxu0 0
      %6673 = vmatprep.subr.bf16.mxu0 0
      %6674 = vmatpush1.bf16.msra.mxu0 0
      %6675 = vmatprep.subr.bf16.mxu0 0
      %6676 = vmatpush1.bf16.msra.mxu0 0
      %6677 = vmatprep.subr.bf16.mxu0 0
      %6678 = vmatpush1.bf16.msra.mxu0 0
      %6679 = vmatprep.subr.bf16.mxu0 0
      %6680 = vmatpush1.bf16.msra.mxu0 0
      %6681 = vmatprep.mubr.bf16.mxu0 0
      %6682 = vmatmul.mubr.bf16.gmra.mrb[0].mxu0 %v6641
      %v6683 = vpop.f32.mrb[0].mxu0
      %v6684 = vadd.f32 0.0, %v6683
      %v6685 = vpop.f32.mrb[0].mxu0
      %v6686 = vpop.f32.mrb[0].mxu0
      %v6687 = vadd.f32 0.0, %v6686
      %v6688 = vpop.f32.mrb[0].mxu0
      %6689 = vmatprep.mubr.bf16.mxu0 0
      %6690 = vmatmul.mubr.bf16.gmra.mrb[0].mxu0 %v6644
      %v6691 = vpop.f32.mrb[0].mxu0
      %v6692 = vadd.f32 0.0, %v6691
      %v6693 = vpop.f32.mrb[0].mxu0
      %v6694 = vpop.f32.mrb[0].mxu0
      %v6695 = vpop.f32.mrb[0].mxu0
      %6696 = vdwg.mxu0
      %6697 = vrot.lane.b32.xlu0 %v6367, 112
      %v6698 = vpop.permute.xlu0 %6697
      %6699 = vrot.lane.b32.xlu0 %v6368, 112
      %v6700 = vpop.permute.xlu0 %6699
      %6701 = vrot.lane.b32.xlu0 %v6367, 80
      %v6702 = vpop.permute.xlu0 %6701
      %6703 = vrot.lane.b32.xlu0 %v6368, 80
      %v6704 = vpop.permute.xlu0 %6703
      %v6706 = vsel %vm1116, %v6698, 0
      %v6709 = vsel %vm1116, %v6700, 0
      %v6712 = vsel %vm1116, %v6702, 0
      %v6715 = vsel %vm1116, %v6704, 0
      %6717 = vmatprep.subr.bf16.mxu0 0
      %6718 = vmatpush1.bf16.xpose.msra.mxu0 %v6712
      %6719 = vmatprep.subr.bf16.mxu0 0
      %6720 = vmatpush1.bf16.xpose.msra.mxu0 %v6715
      %6721 = vmatprep.subr.bf16.mxu0 0
      %6722 = vmatpush1.bf16.xpose.msra.mxu0 0
      %6723 = vmatprep.subr.bf16.mxu0 0
      %6724 = vmatpush1.bf16.xpose.msra.mxu0 0
      %6725 = vmatprep.subr.bf16.mxu0 0
      %6726 = vmatpush1.bf16.xpose.msra.mxu0 0
      %6727 = vmatprep.subr.bf16.mxu0 0
      %6728 = vmatpush1.bf16.xpose.msra.mxu0 0
      %6729 = vmatprep.subr.bf16.mxu0 0
      %6730 = vmatpush1.bf16.xpose.msra.mxu0 0
      %6731 = vmatprep.subr.bf16.mxu0 0
      %6732 = vmatpush1.bf16.xpose.msra.mxu0 0
      %6733 = vmatprep.subr.bf16.mxu0 0
      %6734 = vmatpush1.bf16.xpose.msra.mxu0 0
      %6735 = vmatprep.subr.bf16.mxu0 0
      %6736 = vmatpush1.bf16.xpose.msra.mxu0 0
      %6737 = vmatprep.subr.bf16.mxu0 0
      %6738 = vmatpush1.bf16.xpose.msra.mxu0 0
      %6739 = vmatprep.subr.bf16.mxu0 0
      %6740 = vmatpush1.bf16.xpose.msra.mxu0 0
      %6741 = vmatprep.subr.bf16.mxu0 0
      %6742 = vmatpush1.bf16.xpose.msra.mxu0 0
      %6743 = vmatprep.subr.bf16.mxu0 0
      %6744 = vmatpush1.bf16.xpose.msra.mxu0 0
      %6745 = vmatprep.subr.bf16.mxu0 0
      %6746 = vmatpush1.bf16.xpose.msra.mxu0 0
      %6747 = vmatprep.subr.bf16.mxu0 0
      %6748 = vmatpush1.bf16.xpose.msra.mxu0 0
      %6749 = vmatprep.mubr.bf16.mxu0 0
      %6750 = vmatmul.mubr.bf16.gmra.mrb[0].mxu0 %v6706
      %v6751 = vpop.f32.mrb[0].mxu0
      %v6752 = vadd.f32 %v420, %v6751
      %v6753 = vpop.f32.mrb[0].mxu0
      %v6754 = vpop.f32.mrb[0].mxu0
      %v6755 = vadd.f32 %v420, %v6754
      %v6756 = vpop.f32.mrb[0].mxu0
      %6757 = vmatprep.mubr.bf16.mxu0 0
      %6758 = vmatmul.mubr.bf16.gmra.mrb[0].mxu0 %v6709
      %v6759 = vpop.f32.mrb[0].mxu0
      %v6760 = vadd.f32 %v420, %v6759
      %v6761 = vpop.f32.mrb[0].mxu0
      %v6762 = vpop.f32.mrb[0].mxu0
      %v6763 = vpop.f32.mrb[0].mxu0
      %6764 = vdwg.mxu0
      %v6765 = vsel %vm1177, %v6752, -inf
      %6766 = vmax.xlane.f32.xlu0 %v6765
      %v6767 = vpop.xlane.xlu0 %6766
      %v6768 = vsel %vm1177, %v6755, -inf
      %6769 = vmax.xlane.f32.xlu0 %v6768
      %v6770 = vpop.xlane.xlu0 %6769
      %v6771 = vsel %vm1177, %v6760, -inf
      %6772 = vmax.xlane.f32.xlu0 %v6771
      %v6773 = vpop.xlane.xlu0 %6772
      %v6774 = vsub.f32 %v6752, %v6767
      %v6775 = vsub.f32 %v6755, %v6770
      %v6776 = vsub.f32 %v6760, %v6773
      %v6777 = vmul.f32 %v6774, 1.442695
      %v6778 = vpow.pop %v6777
      %v6779 = vmul.f32 %v6775, 1.442695
      %v6780 = vpow.pop %v6779
      %v6781 = vmul.f32 %v6776, 1.442695
      %v6782 = vpow.pop %v6781
      %v6783 = vsel %vm1177, %v6778, 0.0
      %6784 = vadd.xlane.f32.xlu0 %v6783
      %v6785 = vpop.xlane.xlu0 %6784
      %v6786 = vsel %vm1177, %v6780, 0.0
      %6787 = vadd.xlane.f32.xlu0 %v6786
      %v6788 = vpop.xlane.xlu0 %6787
      %v6789 = vsel %vm1177, %v6782, 0.0
      %6790 = vadd.xlane.f32.xlu0 %v6789
      %v6791 = vpop.xlane.xlu0 %6790
      %v6792 = vrcp.pop %v6785
      %v6793 = vrcp.pop %v6788
      %v6794 = vrcp.pop %v6791
      %v6795 = vmul.f32 %v6778, %v6792
      %v6796 = vmul.f32 %v6780, %v6793
      %v6797 = vmul.f32 %v6782, %v6794
      %v6798 = vpack.c.bf16 %v6796, %v6795
      %v6799 = vpack.c.bf16 %v6797, %v6797
      %6800 = vrot.lane.b32.xlu0 %v6367, 48
      %v6801 = vpop.permute.xlu0 %6800
      %6802 = vrot.lane.b32.xlu0 %v6368, 48
      %v6803 = vpop.permute.xlu0 %6802
      %v6806 = vsel %vm1177, %v6798, 0
      %v6809 = vsel %vm1177, %v6799, 0
      %v6812 = vsel %vm1224, %v6803, 0
      %6814 = vmatprep.subr.bf16.mxu0 0
      %6815 = vmatpush1.bf16.msra.mxu0 %v6801
      %6816 = vmatprep.subr.bf16.mxu0 0
      %6817 = vmatpush1.bf16.msra.mxu0 %v6812
      %6818 = vmatprep.subr.bf16.mxu0 0
      %6819 = vmatpush1.bf16.msra.mxu0 0
      %6820 = vmatprep.subr.bf16.mxu0 0
      %6821 = vmatpush1.bf16.msra.mxu0 0
      %6822 = vmatprep.subr.bf16.mxu0 0
      %6823 = vmatpush1.bf16.msra.mxu0 0
      %6824 = vmatprep.subr.bf16.mxu0 0
      %6825 = vmatpush1.bf16.msra.mxu0 0
      %6826 = vmatprep.subr.bf16.mxu0 0
      %6827 = vmatpush1.bf16.msra.mxu0 0
      %6828 = vmatprep.subr.bf16.mxu0 0
      %6829 = vmatpush1.bf16.msra.mxu0 0
      %6830 = vmatprep.subr.bf16.mxu0 0
      %6831 = vmatpush1.bf16.msra.mxu0 0
      %6832 = vmatprep.subr.bf16.mxu0 0
      %6833 = vmatpush1.bf16.msra.mxu0 0
      %6834 = vmatprep.subr.bf16.mxu0 0
      %6835 = vmatpush1.bf16.msra.mxu0 0
      %6836 = vmatprep.subr.bf16.mxu0 0
      %6837 = vmatpush1.bf16.msra.mxu0 0
      %6838 = vmatprep.subr.bf16.mxu0 0
      %6839 = vmatpush1.bf16.msra.mxu0 0
      %6840 = vmatprep.subr.bf16.mxu0 0
      %6841 = vmatpush1.bf16.msra.mxu0 0
      %6842 = vmatprep.subr.bf16.mxu0 0
      %6843 = vmatpush1.bf16.msra.mxu0 0
      %6844 = vmatprep.subr.bf16.mxu0 0
      %6845 = vmatpush1.bf16.msra.mxu0 0
      %6846 = vmatprep.mubr.bf16.mxu0 0
      %6847 = vmatmul.mubr.bf16.gmra.mrb[0].mxu0 %v6806
      %v6848 = vpop.f32.mrb[0].mxu0
      %v6849 = vadd.f32 0.0, %v6848
      %v6850 = vpop.f32.mrb[0].mxu0
      %v6851 = vpop.f32.mrb[0].mxu0
      %v6852 = vadd.f32 0.0, %v6851
      %v6853 = vpop.f32.mrb[0].mxu0
      %6854 = vmatprep.mubr.bf16.mxu0 0
      %6855 = vmatmul.mubr.bf16.gmra.mrb[0].mxu0 %v6809
      %v6856 = vpop.f32.mrb[0].mxu0
      %v6857 = vadd.f32 0.0, %v6856
      %v6858 = vpop.f32.mrb[0].mxu0
      %v6859 = vpop.f32.mrb[0].mxu0
      %v6860 = vpop.f32.mrb[0].mxu0
      %6861 = vdwg.mxu0
      %6862 = vrot.lane.b32.xlu0 %v6367, 104
      %v6863 = vpop.permute.xlu0 %6862
      %6864 = vrot.lane.b32.xlu0 %v6368, 104
      %v6865 = vpop.permute.xlu0 %6864
      %6866 = vrot.lane.b32.xlu0 %v6367, 72
      %v6867 = vpop.permute.xlu0 %6866
      %6868 = vrot.lane.b32.xlu0 %v6368, 72
      %v6869 = vpop.permute.xlu0 %6868
      %v6871 = vsel %vm1116, %v6863, 0
      %v6874 = vsel %vm1116, %v6865, 0
      %v6877 = vsel %vm1116, %v6867, 0
      %v6880 = vsel %vm1116, %v6869, 0
      %6882 = vmatprep.subr.bf16.mxu0 0
      %6883 = vmatpush1.bf16.xpose.msra.mxu0 %v6877
      %6884 = vmatprep.subr.bf16.mxu0 0
      %6885 = vmatpush1.bf16.xpose.msra.mxu0 %v6880
      %6886 = vmatprep.subr.bf16.mxu0 0
      %6887 = vmatpush1.bf16.xpose.msra.mxu0 0
      %6888 = vmatprep.subr.bf16.mxu0 0
      %6889 = vmatpush1.bf16.xpose.msra.mxu0 0
      %6890 = vmatprep.subr.bf16.mxu0 0
      %6891 = vmatpush1.bf16.xpose.msra.mxu0 0
      %6892 = vmatprep.subr.bf16.mxu0 0
      %6893 = vmatpush1.bf16.xpose.msra.mxu0 0
      %6894 = vmatprep.subr.bf16.mxu0 0
      %6895 = vmatpush1.bf16.xpose.msra.mxu0 0
      %6896 = vmatprep.subr.bf16.mxu0 0
      %6897 = vmatpush1.bf16.xpose.msra.mxu0 0
      %6898 = vmatprep.subr.bf16.mxu0 0
      %6899 = vmatpush1.bf16.xpose.msra.mxu0 0
      %6900 = vmatprep.subr.bf16.mxu0 0
      %6901 = vmatpush1.bf16.xpose.msra.mxu0 0
      %6902 = vmatprep.subr.bf16.mxu0 0
      %6903 = vmatpush1.bf16.xpose.msra.mxu0 0
      %6904 = vmatprep.subr.bf16.mxu0 0
      %6905 = vmatpush1.bf16.xpose.msra.mxu0 0
      %6906 = vmatprep.subr.bf16.mxu0 0
      %6907 = vmatpush1.bf16.xpose.msra.mxu0 0
      %6908 = vmatprep.subr.bf16.mxu0 0
      %6909 = vmatpush1.bf16.xpose.msra.mxu0 0
      %6910 = vmatprep.subr.bf16.mxu0 0
      %6911 = vmatpush1.bf16.xpose.msra.mxu0 0
      %6912 = vmatprep.subr.bf16.mxu0 0
      %6913 = vmatpush1.bf16.xpose.msra.mxu0 0
      %6914 = vmatprep.mubr.bf16.mxu0 0
      %6915 = vmatmul.mubr.bf16.gmra.mrb[0].mxu0 %v6871
      %v6916 = vpop.f32.mrb[0].mxu0
      %v6917 = vadd.f32 %v420, %v6916
      %v6918 = vpop.f32.mrb[0].mxu0
      %v6919 = vpop.f32.mrb[0].mxu0
      %v6920 = vadd.f32 %v420, %v6919
      %v6921 = vpop.f32.mrb[0].mxu0
      %6922 = vmatprep.mubr.bf16.mxu0 0
      %6923 = vmatmul.mubr.bf16.gmra.mrb[0].mxu0 %v6874
      %v6924 = vpop.f32.mrb[0].mxu0
      %v6925 = vadd.f32 %v420, %v6924
      %v6926 = vpop.f32.mrb[0].mxu0
      %v6927 = vpop.f32.mrb[0].mxu0
      %v6928 = vpop.f32.mrb[0].mxu0
      %6929 = vdwg.mxu0
      %v6930 = vsel %vm1177, %v6917, -inf
      %6931 = vmax.xlane.f32.xlu0 %v6930
      %v6932 = vpop.xlane.xlu0 %6931
      %v6933 = vsel %vm1177, %v6920, -inf
      %6934 = vmax.xlane.f32.xlu0 %v6933
      %v6935 = vpop.xlane.xlu0 %6934
      %v6936 = vsel %vm1177, %v6925, -inf
      %6937 = vmax.xlane.f32.xlu0 %v6936
      %v6938 = vpop.xlane.xlu0 %6937
      %v6939 = vsub.f32 %v6917, %v6932
      %v6940 = vsub.f32 %v6920, %v6935
      %v6941 = vsub.f32 %v6925, %v6938
      %v6942 = vmul.f32 %v6939, 1.442695
      %v6943 = vpow.pop %v6942
      %v6944 = vmul.f32 %v6940, 1.442695
      %v6945 = vpow.pop %v6944
      %v6946 = vmul.f32 %v6941, 1.442695
      %v6947 = vpow.pop %v6946
      %v6948 = vsel %vm1177, %v6943, 0.0
      %6949 = vadd.xlane.f32.xlu0 %v6948
      %v6950 = vpop.xlane.xlu0 %6949
      %v6951 = vsel %vm1177, %v6945, 0.0
      %6952 = vadd.xlane.f32.xlu0 %v6951
      %v6953 = vpop.xlane.xlu0 %6952
      %v6954 = vsel %vm1177, %v6947, 0.0
      %6955 = vadd.xlane.f32.xlu0 %v6954
      %v6956 = vpop.xlane.xlu0 %6955
      %v6957 = vrcp.pop %v6950
      %v6958 = vrcp.pop %v6953
      %v6959 = vrcp.pop %v6956
      %v6960 = vmul.f32 %v6943, %v6957
      %v6961 = vmul.f32 %v6945, %v6958
      %v6962 = vmul.f32 %v6947, %v6959
      %v6963 = vpack.c.bf16 %v6961, %v6960
      %v6964 = vpack.c.bf16 %v6962, %v6962
      %6965 = vrot.lane.b32.xlu0 %v6367, 40
      %v6966 = vpop.permute.xlu0 %6965
      %6967 = vrot.lane.b32.xlu0 %v6368, 40
      %v6968 = vpop.permute.xlu0 %6967
      %v6971 = vsel %vm1177, %v6963, 0
      %v6974 = vsel %vm1177, %v6964, 0
      %v6977 = vsel %vm1224, %v6968, 0
      %6979 = vmatprep.subr.bf16.mxu0 0
      %6980 = vmatpush1.bf16.msra.mxu0 %v6966
      %6981 = vmatprep.subr.bf16.mxu0 0
      %6982 = vmatpush1.bf16.msra.mxu0 %v6977
      %6983 = vmatprep.subr.bf16.mxu0 0
      %6984 = vmatpush1.bf16.msra.mxu0 0
      %6985 = vmatprep.subr.bf16.mxu0 0
      %6986 = vmatpush1.bf16.msra.mxu0 0
      %6987 = vmatprep.subr.bf16.mxu0 0
      %6988 = vmatpush1.bf16.msra.mxu0 0
      %6989 = vmatprep.subr.bf16.mxu0 0
      %6990 = vmatpush1.bf16.msra.mxu0 0
      %6991 = vmatprep.subr.bf16.mxu0 0
      %6992 = vmatpush1.bf16.msra.mxu0 0
      %6993 = vmatprep.subr.bf16.mxu0 0
      %6994 = vmatpush1.bf16.msra.mxu0 0
      %6995 = vmatprep.subr.bf16.mxu0 0
      %6996 = vmatpush1.bf16.msra.mxu0 0
      %6997 = vmatprep.subr.bf16.mxu0 0
      %6998 = vmatpush1.bf16.msra.mxu0 0
      %6999 = vmatprep.subr.bf16.mxu0 0
      %7000 = vmatpush1.bf16.msra.mxu0 0
      %7001 = vmatprep.subr.bf16.mxu0 0
      %7002 = vmatpush1.bf16.msra.mxu0 0
      %7003 = vmatprep.subr.bf16.mxu0 0
      %7004 = vmatpush1.bf16.msra.mxu0 0
      %7005 = vmatprep.subr.bf16.mxu0 0
      %7006 = vmatpush1.bf16.msra.mxu0 0
      %7007 = vmatprep.subr.bf16.mxu0 0
      %7008 = vmatpush1.bf16.msra.mxu0 0
      %7009 = vmatprep.subr.bf16.mxu0 0
      %7010 = vmatpush1.bf16.msra.mxu0 0
      %7011 = vmatprep.mubr.bf16.mxu0 0
      %7012 = vmatmul.mubr.bf16.gmra.mrb[0].mxu0 %v6971
      %v7013 = vpop.f32.mrb[0].mxu0
      %v7014 = vadd.f32 0.0, %v7013
      %v7015 = vpop.f32.mrb[0].mxu0
      %v7016 = vpop.f32.mrb[0].mxu0
      %v7017 = vadd.f32 0.0, %v7016
      %v7018 = vpop.f32.mrb[0].mxu0
      %7019 = vmatprep.mubr.bf16.mxu0 0
      %7020 = vmatmul.mubr.bf16.gmra.mrb[0].mxu0 %v6974
      %v7021 = vpop.f32.mrb[0].mxu0
      %v7022 = vadd.f32 0.0, %v7021
      %v7023 = vpop.f32.mrb[0].mxu0
      %v7024 = vpop.f32.mrb[0].mxu0
      %v7025 = vpop.f32.mrb[0].mxu0
      %7026 = vdwg.mxu0
      %7030 = vrot.lane.b32.xlu0 %v6684, 8
      %v7031 = vpop.permute.xlu0 %7030
      %7032 = vrot.lane.b32.xlu0 %v6687, 8
      %v7033 = vpop.permute.xlu0 %7032
      %7034 = vrot.lane.b32.xlu0 %v6692, 8
      %v7035 = vpop.permute.xlu0 %7034
      %7042 = vrot.lane.b32.xlu0 %v6849, 16
      %v7043 = vpop.permute.xlu0 %7042
      %7044 = vrot.lane.b32.xlu0 %v6852, 16
      %v7045 = vpop.permute.xlu0 %7044
      %7046 = vrot.lane.b32.xlu0 %v6857, 16
      %v7047 = vpop.permute.xlu0 %7046
      %7054 = vrot.lane.b32.xlu0 %v7014, 24
      %v7055 = vpop.permute.xlu0 %7054
      %7056 = vrot.lane.b32.xlu0 %v7017, 24
      %v7057 = vpop.permute.xlu0 %7056
      %7058 = vrot.lane.b32.xlu0 %v7022, 24
      %v7059 = vpop.permute.xlu0 %7058
      %v7063 = vsel %vm1116, %v6519, %v7031
      %v7064 = vsel %vm1116, %v6522, %v7033
      %v7065 = vsel %vm1116, %v6527, %v7035
      %v7066 = vsel %vm1810, %v7063, %v7043
      %v7067 = vsel %vm1810, %v7064, %v7045
      %v7068 = vsel %vm1810, %v7065, %v7047
      %v7069 = vsel %vm1177, %v7066, %v7055
      %v7070 = vsel %vm1177, %v7067, %v7057
      %v7071 = vsel %vm1177, %v7068, %v7059
      %v7072 = vpack.c.bf16 %v4951, %v4946
      %v7073 = vpack.c.bf16 %v4954, %v4954
      %7076 = vrot.lane.b32.xlu0 %v7072, 96
      %v7077 = vpop.permute.xlu0 %7076
      %7078 = vrot.lane.b32.xlu0 %v7073, 96
      %v7079 = vpop.permute.xlu0 %7078
      %v7081 = vsel %vm1116, %v7072, 0
      %v7084 = vsel %vm1116, %v7073, 0
      %v7087 = vsel %vm1116, %v7077, 0
      %v7090 = vsel %vm1116, %v7079, 0
      %7092 = vmatprep.subr.bf16.mxu0 0
      %7093 = vmatpush1.bf16.xpose.msra.mxu0 %v7087
      %7094 = vmatprep.subr.bf16.mxu0 0
      %7095 = vmatpush1.bf16.xpose.msra.mxu0 %v7090
      %7096 = vmatprep.subr.bf16.mxu0 0
      %7097 = vmatpush1.bf16.xpose.msra.mxu0 0
      %7098 = vmatprep.subr.bf16.mxu0 0
      %7099 = vmatpush1.bf16.xpose.msra.mxu0 0
      %7100 = vmatprep.subr.bf16.mxu0 0
      %7101 = vmatpush1.bf16.xpose.msra.mxu0 0
      %7102 = vmatprep.subr.bf16.mxu0 0
      %7103 = vmatpush1.bf16.xpose.msra.mxu0 0
      %7104 = vmatprep.subr.bf16.mxu0 0
      %7105 = vmatpush1.bf16.xpose.msra.mxu0 0
      %7106 = vmatprep.subr.bf16.mxu0 0
      %7107 = vmatpush1.bf16.xpose.msra.mxu0 0
      %7108 = vmatprep.subr.bf16.mxu0 0
      %7109 = vmatpush1.bf16.xpose.msra.mxu0 0
      %7110 = vmatprep.subr.bf16.mxu0 0
      %7111 = vmatpush1.bf16.xpose.msra.mxu0 0
      %7112 = vmatprep.subr.bf16.mxu0 0
      %7113 = vmatpush1.bf16.xpose.msra.mxu0 0
      %7114 = vmatprep.subr.bf16.mxu0 0
      %7115 = vmatpush1.bf16.xpose.msra.mxu0 0
      %7116 = vmatprep.subr.bf16.mxu0 0
      %7117 = vmatpush1.bf16.xpose.msra.mxu0 0
      %7118 = vmatprep.subr.bf16.mxu0 0
      %7119 = vmatpush1.bf16.xpose.msra.mxu0 0
      %7120 = vmatprep.subr.bf16.mxu0 0
      %7121 = vmatpush1.bf16.xpose.msra.mxu0 0
      %7122 = vmatprep.subr.bf16.mxu0 0
      %7123 = vmatpush1.bf16.xpose.msra.mxu0 0
      %7124 = vmatprep.mubr.bf16.mxu0 0
      %7125 = vmatmul.mubr.bf16.gmra.mrb[0].mxu0 %v7081
      %v7126 = vpop.f32.mrb[0].mxu0
      %v7127 = vadd.f32 %v420, %v7126
      %v7128 = vpop.f32.mrb[0].mxu0
      %v7129 = vpop.f32.mrb[0].mxu0
      %v7130 = vadd.f32 %v420, %v7129
      %v7131 = vpop.f32.mrb[0].mxu0
      %7132 = vmatprep.mubr.bf16.mxu0 0
      %7133 = vmatmul.mubr.bf16.gmra.mrb[0].mxu0 %v7084
      %v7134 = vpop.f32.mrb[0].mxu0
      %v7135 = vadd.f32 %v420, %v7134
      %v7136 = vpop.f32.mrb[0].mxu0
      %v7137 = vpop.f32.mrb[0].mxu0
      %v7138 = vpop.f32.mrb[0].mxu0
      %7139 = vdwg.mxu0
      %v7140 = vsel %vm1177, %v7127, -inf
      %7141 = vmax.xlane.f32.xlu0 %v7140
      %v7142 = vpop.xlane.xlu0 %7141
      %v7143 = vsel %vm1177, %v7130, -inf
      %7144 = vmax.xlane.f32.xlu0 %v7143
      %v7145 = vpop.xlane.xlu0 %7144
      %v7146 = vsel %vm1177, %v7135, -inf
      %7147 = vmax.xlane.f32.xlu0 %v7146
      %v7148 = vpop.xlane.xlu0 %7147
      %v7149 = vsub.f32 %v7127, %v7142
      %v7150 = vsub.f32 %v7130, %v7145
      %v7151 = vsub.f32 %v7135, %v7148
      %v7152 = vmul.f32 %v7149, 1.442695
      %v7153 = vpow.pop %v7152
      %v7154 = vmul.f32 %v7150, 1.442695
      %v7155 = vpow.pop %v7154
      %v7156 = vmul.f32 %v7151, 1.442695
      %v7157 = vpow.pop %v7156
      %v7158 = vsel %vm1177, %v7153, 0.0
      %7159 = vadd.xlane.f32.xlu0 %v7158
      %v7160 = vpop.xlane.xlu0 %7159
      %v7161 = vsel %vm1177, %v7155, 0.0
      %7162 = vadd.xlane.f32.xlu0 %v7161
      %v7163 = vpop.xlane.xlu0 %7162
      %v7164 = vsel %vm1177, %v7157, 0.0
      %7165 = vadd.xlane.f32.xlu0 %v7164
      %v7166 = vpop.xlane.xlu0 %7165
      %v7167 = vrcp.pop %v7160
      %v7168 = vrcp.pop %v7163
      %v7169 = vrcp.pop %v7166
      %v7170 = vmul.f32 %v7153, %v7167
      %v7171 = vmul.f32 %v7155, %v7168
      %v7172 = vmul.f32 %v7157, %v7169
      %v7173 = vpack.c.bf16 %v7171, %v7170
      %v7174 = vpack.c.bf16 %v7172, %v7172
      %7175 = vrot.lane.b32.xlu0 %v7072, 64
      %v7176 = vpop.permute.xlu0 %7175
      %7177 = vrot.lane.b32.xlu0 %v7073, 64
      %v7178 = vpop.permute.xlu0 %7177
      %v7181 = vsel %vm1177, %v7173, 0
      %v7184 = vsel %vm1177, %v7174, 0
      %v7187 = vsel %vm1224, %v7178, 0
      %7189 = vmatprep.subr.bf16.mxu0 0
      %7190 = vmatpush1.bf16.msra.mxu0 %v7176
      %7191 = vmatprep.subr.bf16.mxu0 0
      %7192 = vmatpush1.bf16.msra.mxu0 %v7187
      %7193 = vmatprep.subr.bf16.mxu0 0
      %7194 = vmatpush1.bf16.msra.mxu0 0
      %7195 = vmatprep.subr.bf16.mxu0 0
      %7196 = vmatpush1.bf16.msra.mxu0 0
      %7197 = vmatprep.subr.bf16.mxu0 0
      %7198 = vmatpush1.bf16.msra.mxu0 0
      %7199 = vmatprep.subr.bf16.mxu0 0
      %7200 = vmatpush1.bf16.msra.mxu0 0
      %7201 = vmatprep.subr.bf16.mxu0 0
      %7202 = vmatpush1.bf16.msra.mxu0 0
      %7203 = vmatprep.subr.bf16.mxu0 0
      %7204 = vmatpush1.bf16.msra.mxu0 0
      %7205 = vmatprep.subr.bf16.mxu0 0
      %7206 = vmatpush1.bf16.msra.mxu0 0
      %7207 = vmatprep.subr.bf16.mxu0 0
      %7208 = vmatpush1.bf16.msra.mxu0 0
      %7209 = vmatprep.subr.bf16.mxu0 0
      %7210 = vmatpush1.bf16.msra.mxu0 0
      %7211 = vmatprep.subr.bf16.mxu0 0
      %7212 = vmatpush1.bf16.msra.mxu0 0
      %7213 = vmatprep.subr.bf16.mxu0 0
      %7214 = vmatpush1.bf16.msra.mxu0 0
      %7215 = vmatprep.subr.bf16.mxu0 0
      %7216 = vmatpush1.bf16.msra.mxu0 0
      %7217 = vmatprep.subr.bf16.mxu0 0
      %7218 = vmatpush1.bf16.msra.mxu0 0
      %7219 = vmatprep.subr.bf16.mxu0 0
      %7220 = vmatpush1.bf16.msra.mxu0 0
      %7221 = vmatprep.mubr.bf16.mxu0 0
      %7222 = vmatmul.mubr.bf16.gmra.mrb[0].mxu0 %v7181
      %v7223 = vpop.f32.mrb[0].mxu0
      %v7224 = vadd.f32 0.0, %v7223
      %v7225 = vpop.f32.mrb[0].mxu0
      %v7226 = vpop.f32.mrb[0].mxu0
      %v7227 = vadd.f32 0.0, %v7226
      %v7228 = vpop.f32.mrb[0].mxu0
      %7229 = vmatprep.mubr.bf16.mxu0 0
      %7230 = vmatmul.mubr.bf16.gmra.mrb[0].mxu0 %v7184
      %v7231 = vpop.f32.mrb[0].mxu0
      %v7232 = vadd.f32 0.0, %v7231
      %v7233 = vpop.f32.mrb[0].mxu0
      %v7234 = vpop.f32.mrb[0].mxu0
      %v7235 = vpop.f32.mrb[0].mxu0
      %7236 = vdwg.mxu0
      %7237 = vrot.lane.b32.xlu0 %v7072, 120
      %v7238 = vpop.permute.xlu0 %7237
      %7239 = vrot.lane.b32.xlu0 %v7073, 120
      %v7240 = vpop.permute.xlu0 %7239
      %7241 = vrot.lane.b32.xlu0 %v7072, 88
      %v7242 = vpop.permute.xlu0 %7241
      %7243 = vrot.lane.b32.xlu0 %v7073, 88
      %v7244 = vpop.permute.xlu0 %7243
      %v7246 = vsel %vm1116, %v7238, 0
      %v7249 = vsel %vm1116, %v7240, 0
      %v7252 = vsel %vm1116, %v7242, 0
      %v7255 = vsel %vm1116, %v7244, 0
      %7257 = vmatprep.subr.bf16.mxu0 0
      %7258 = vmatpush1.bf16.xpose.msra.mxu0 %v7252
      %7259 = vmatprep.subr.bf16.mxu0 0
      %7260 = vmatpush1.bf16.xpose.msra.mxu0 %v7255
      %7261 = vmatprep.subr.bf16.mxu0 0
      %7262 = vmatpush1.bf16.xpose.msra.mxu0 0
      %7263 = vmatprep.subr.bf16.mxu0 0
      %7264 = vmatpush1.bf16.xpose.msra.mxu0 0
      %7265 = vmatprep.subr.bf16.mxu0 0
      %7266 = vmatpush1.bf16.xpose.msra.mxu0 0
      %7267 = vmatprep.subr.bf16.mxu0 0
      %7268 = vmatpush1.bf16.xpose.msra.mxu0 0
      %7269 = vmatprep.subr.bf16.mxu0 0
      %7270 = vmatpush1.bf16.xpose.msra.mxu0 0
      %7271 = vmatprep.subr.bf16.mxu0 0
      %7272 = vmatpush1.bf16.xpose.msra.mxu0 0
      %7273 = vmatprep.subr.bf16.mxu0 0
      %7274 = vmatpush1.bf16.xpose.msra.mxu0 0
      %7275 = vmatprep.subr.bf16.mxu0 0
      %7276 = vmatpush1.bf16.xpose.msra.mxu0 0
      %7277 = vmatprep.subr.bf16.mxu0 0
      %7278 = vmatpush1.bf16.xpose.msra.mxu0 0
      %7279 = vmatprep.subr.bf16.mxu0 0
      %7280 = vmatpush1.bf16.xpose.msra.mxu0 0
      %7281 = vmatprep.subr.bf16.mxu0 0
      %7282 = vmatpush1.bf16.xpose.msra.mxu0 0
      %7283 = vmatprep.subr.bf16.mxu0 0
      %7284 = vmatpush1.bf16.xpose.msra.mxu0 0
      %7285 = vmatprep.subr.bf16.mxu0 0
      %7286 = vmatpush1.bf16.xpose.msra.mxu0 0
      %7287 = vmatprep.subr.bf16.mxu0 0
      %7288 = vmatpush1.bf16.xpose.msra.mxu0 0
      %7289 = vmatprep.mubr.bf16.mxu0 0
      %7290 = vmatmul.mubr.bf16.gmra.mrb[0].mxu0 %v7246
      %v7291 = vpop.f32.mrb[0].mxu0
      %v7292 = vadd.f32 %v420, %v7291
      %v7293 = vpop.f32.mrb[0].mxu0
      %v7294 = vpop.f32.mrb[0].mxu0
      %v7295 = vadd.f32 %v420, %v7294
      %v7296 = vpop.f32.mrb[0].mxu0
      %7297 = vmatprep.mubr.bf16.mxu0 0
      %7298 = vmatmul.mubr.bf16.gmra.mrb[0].mxu0 %v7249
      %v7299 = vpop.f32.mrb[0].mxu0
      %v7300 = vadd.f32 %v420, %v7299
      %v7301 = vpop.f32.mrb[0].mxu0
      %v7302 = vpop.f32.mrb[0].mxu0
      %v7303 = vpop.f32.mrb[0].mxu0
      %7304 = vdwg.mxu0
      %v7305 = vsel %vm1177, %v7292, -inf
      %7306 = vmax.xlane.f32.xlu0 %v7305
      %v7307 = vpop.xlane.xlu0 %7306
      %v7308 = vsel %vm1177, %v7295, -inf
      %7309 = vmax.xlane.f32.xlu0 %v7308
      %v7310 = vpop.xlane.xlu0 %7309
      %v7311 = vsel %vm1177, %v7300, -inf
      %7312 = vmax.xlane.f32.xlu0 %v7311
      %v7313 = vpop.xlane.xlu0 %7312
      %v7314 = vsub.f32 %v7292, %v7307
      %v7315 = vsub.f32 %v7295, %v7310
      %v7316 = vsub.f32 %v7300, %v7313
      %v7317 = vmul.f32 %v7314, 1.442695
      %v7318 = vpow.pop %v7317
      %v7319 = vmul.f32 %v7315, 1.442695
      %v7320 = vpow.pop %v7319
      %v7321 = vmul.f32 %v7316, 1.442695
      %v7322 = vpow.pop %v7321
      %v7323 = vsel %vm1177, %v7318, 0.0
      %7324 = vadd.xlane.f32.xlu0 %v7323
      %v7325 = vpop.xlane.xlu0 %7324
      %v7326 = vsel %vm1177, %v7320, 0.0
      %7327 = vadd.xlane.f32.xlu0 %v7326
      %v7328 = vpop.xlane.xlu0 %7327
      %v7329 = vsel %vm1177, %v7322, 0.0
      %7330 = vadd.xlane.f32.xlu0 %v7329
      %v7331 = vpop.xlane.xlu0 %7330
      %v7332 = vrcp.pop %v7325
      %v7333 = vrcp.pop %v7328
      %v7334 = vrcp.pop %v7331
      %v7335 = vmul.f32 %v7318, %v7332
      %v7336 = vmul.f32 %v7320, %v7333
      %v7337 = vmul.f32 %v7322, %v7334
      %v7338 = vpack.c.bf16 %v7336, %v7335
      %v7339 = vpack.c.bf16 %v7337, %v7337
      %7340 = vrot.lane.b32.xlu0 %v7072, 56
      %v7341 = vpop.permute.xlu0 %7340
      %7342 = vrot.lane.b32.xlu0 %v7073, 56
      %v7343 = vpop.permute.xlu0 %7342
      %v7346 = vsel %vm1177, %v7338, 0
      %v7349 = vsel %vm1177, %v7339, 0
      %v7352 = vsel %vm1224, %v7343, 0
      %7354 = vmatprep.subr.bf16.mxu0 0
      %7355 = vmatpush1.bf16.msra.mxu0 %v7341
      %7356 = vmatprep.subr.bf16.mxu0 0
      %7357 = vmatpush1.bf16.msra.mxu0 %v7352
      %7358 = vmatprep.subr.bf16.mxu0 0
      %7359 = vmatpush1.bf16.msra.mxu0 0
      %7360 = vmatprep.subr.bf16.mxu0 0
      %7361 = vmatpush1.bf16.msra.mxu0 0
      %7362 = vmatprep.subr.bf16.mxu0 0
      %7363 = vmatpush1.bf16.msra.mxu0 0
      %7364 = vmatprep.subr.bf16.mxu0 0
      %7365 = vmatpush1.bf16.msra.mxu0 0
      %7366 = vmatprep.subr.bf16.mxu0 0
      %7367 = vmatpush1.bf16.msra.mxu0 0
      %7368 = vmatprep.subr.bf16.mxu0 0
      %7369 = vmatpush1.bf16.msra.mxu0 0
      %7370 = vmatprep.subr.bf16.mxu0 0
      %7371 = vmatpush1.bf16.msra.mxu0 0
      %7372 = vmatprep.subr.bf16.mxu0 0
      %7373 = vmatpush1.bf16.msra.mxu0 0
      %7374 = vmatprep.subr.bf16.mxu0 0
      %7375 = vmatpush1.bf16.msra.mxu0 0
      %7376 = vmatprep.subr.bf16.mxu0 0
      %7377 = vmatpush1.bf16.msra.mxu0 0
      %7378 = vmatprep.subr.bf16.mxu0 0
      %7379 = vmatpush1.bf16.msra.mxu0 0
      %7380 = vmatprep.subr.bf16.mxu0 0
      %7381 = vmatpush1.bf16.msra.mxu0 0
      %7382 = vmatprep.subr.bf16.mxu0 0
      %7383 = vmatpush1.bf16.msra.mxu0 0
      %7384 = vmatprep.subr.bf16.mxu0 0
      %7385 = vmatpush1.bf16.msra.mxu0 0
      %7386 = vmatprep.mubr.bf16.mxu0 0
      %7387 = vmatmul.mubr.bf16.gmra.mrb[0].mxu0 %v7346
      %v7388 = vpop.f32.mrb[0].mxu0
      %v7389 = vadd.f32 0.0, %v7388
      %v7390 = vpop.f32.mrb[0].mxu0
      %v7391 = vpop.f32.mrb[0].mxu0
      %v7392 = vadd.f32 0.0, %v7391
      %v7393 = vpop.f32.mrb[0].mxu0
      %7394 = vmatprep.mubr.bf16.mxu0 0
      %7395 = vmatmul.mubr.bf16.gmra.mrb[0].mxu0 %v7349
      %v7396 = vpop.f32.mrb[0].mxu0
      %v7397 = vadd.f32 0.0, %v7396
      %v7398 = vpop.f32.mrb[0].mxu0
      %v7399 = vpop.f32.mrb[0].mxu0
      %v7400 = vpop.f32.mrb[0].mxu0
      %7401 = vdwg.mxu0
      %7402 = vrot.lane.b32.xlu0 %v7072, 112
      %v7403 = vpop.permute.xlu0 %7402
      %7404 = vrot.lane.b32.xlu0 %v7073, 112
      %v7405 = vpop.permute.xlu0 %7404
      %7406 = vrot.lane.b32.xlu0 %v7072, 80
      %v7407 = vpop.permute.xlu0 %7406
      %7408 = vrot.lane.b32.xlu0 %v7073, 80
      %v7409 = vpop.permute.xlu0 %7408
      %v7411 = vsel %vm1116, %v7403, 0
      %v7414 = vsel %vm1116, %v7405, 0
      %v7417 = vsel %vm1116, %v7407, 0
      %v7420 = vsel %vm1116, %v7409, 0
      %7422 = vmatprep.subr.bf16.mxu0 0
      %7423 = vmatpush1.bf16.xpose.msra.mxu0 %v7417
      %7424 = vmatprep.subr.bf16.mxu0 0
      %7425 = vmatpush1.bf16.xpose.msra.mxu0 %v7420
      %7426 = vmatprep.subr.bf16.mxu0 0
      %7427 = vmatpush1.bf16.xpose.msra.mxu0 0
      %7428 = vmatprep.subr.bf16.mxu0 0
      %7429 = vmatpush1.bf16.xpose.msra.mxu0 0
      %7430 = vmatprep.subr.bf16.mxu0 0
      %7431 = vmatpush1.bf16.xpose.msra.mxu0 0
      %7432 = vmatprep.subr.bf16.mxu0 0
      %7433 = vmatpush1.bf16.xpose.msra.mxu0 0
      %7434 = vmatprep.subr.bf16.mxu0 0
      %7435 = vmatpush1.bf16.xpose.msra.mxu0 0
      %7436 = vmatprep.subr.bf16.mxu0 0
      %7437 = vmatpush1.bf16.xpose.msra.mxu0 0
      %7438 = vmatprep.subr.bf16.mxu0 0
      %7439 = vmatpush1.bf16.xpose.msra.mxu0 0
      %7440 = vmatprep.subr.bf16.mxu0 0
      %7441 = vmatpush1.bf16.xpose.msra.mxu0 0
      %7442 = vmatprep.subr.bf16.mxu0 0
      %7443 = vmatpush1.bf16.xpose.msra.mxu0 0
      %7444 = vmatprep.subr.bf16.mxu0 0
      %7445 = vmatpush1.bf16.xpose.msra.mxu0 0
      %7446 = vmatprep.subr.bf16.mxu0 0
      %7447 = vmatpush1.bf16.xpose.msra.mxu0 0
      %7448 = vmatprep.subr.bf16.mxu0 0
      %7449 = vmatpush1.bf16.xpose.msra.mxu0 0
      %7450 = vmatprep.subr.bf16.mxu0 0
      %7451 = vmatpush1.bf16.xpose.msra.mxu0 0
      %7452 = vmatprep.subr.bf16.mxu0 0
      %7453 = vmatpush1.bf16.xpose.msra.mxu0 0
      %7454 = vmatprep.mubr.bf16.mxu0 0
      %7455 = vmatmul.mubr.bf16.gmra.mrb[0].mxu0 %v7411
      %v7456 = vpop.f32.mrb[0].mxu0
      %v7457 = vadd.f32 %v420, %v7456
      %v7458 = vpop.f32.mrb[0].mxu0
      %v7459 = vpop.f32.mrb[0].mxu0
      %v7460 = vadd.f32 %v420, %v7459
      %v7461 = vpop.f32.mrb[0].mxu0
      %7462 = vmatprep.mubr.bf16.mxu0 0
      %7463 = vmatmul.mubr.bf16.gmra.mrb[0].mxu0 %v7414
      %v7464 = vpop.f32.mrb[0].mxu0
      %v7465 = vadd.f32 %v420, %v7464
      %v7466 = vpop.f32.mrb[0].mxu0
      %v7467 = vpop.f32.mrb[0].mxu0
      %v7468 = vpop.f32.mrb[0].mxu0
      %7469 = vdwg.mxu0
      %v7470 = vsel %vm1177, %v7457, -inf
      %7471 = vmax.xlane.f32.xlu0 %v7470
      %v7472 = vpop.xlane.xlu0 %7471
      %v7473 = vsel %vm1177, %v7460, -inf
      %7474 = vmax.xlane.f32.xlu0 %v7473
      %v7475 = vpop.xlane.xlu0 %7474
      %v7476 = vsel %vm1177, %v7465, -inf
      %7477 = vmax.xlane.f32.xlu0 %v7476
      %v7478 = vpop.xlane.xlu0 %7477
      %v7479 = vsub.f32 %v7457, %v7472
      %v7480 = vsub.f32 %v7460, %v7475
      %v7481 = vsub.f32 %v7465, %v7478
      %v7482 = vmul.f32 %v7479, 1.442695
      %v7483 = vpow.pop %v7482
      %v7484 = vmul.f32 %v7480, 1.442695
      %v7485 = vpow.pop %v7484
      %v7486 = vmul.f32 %v7481, 1.442695
      %v7487 = vpow.pop %v7486
      %v7488 = vsel %vm1177, %v7483, 0.0
      %7489 = vadd.xlane.f32.xlu0 %v7488
      %v7490 = vpop.xlane.xlu0 %7489
      %v7491 = vsel %vm1177, %v7485, 0.0
      %7492 = vadd.xlane.f32.xlu0 %v7491
      %v7493 = vpop.xlane.xlu0 %7492
      %v7494 = vsel %vm1177, %v7487, 0.0
      %7495 = vadd.xlane.f32.xlu0 %v7494
      %v7496 = vpop.xlane.xlu0 %7495
      %v7497 = vrcp.pop %v7490
      %v7498 = vrcp.pop %v7493
      %v7499 = vrcp.pop %v7496
      %v7500 = vmul.f32 %v7483, %v7497
      %v7501 = vmul.f32 %v7485, %v7498
      %v7502 = vmul.f32 %v7487, %v7499
      %v7503 = vpack.c.bf16 %v7501, %v7500
      %v7504 = vpack.c.bf16 %v7502, %v7502
      %7505 = vrot.lane.b32.xlu0 %v7072, 48
      %v7506 = vpop.permute.xlu0 %7505
      %7507 = vrot.lane.b32.xlu0 %v7073, 48
      %v7508 = vpop.permute.xlu0 %7507
      %v7511 = vsel %vm1177, %v7503, 0
      %v7514 = vsel %vm1177, %v7504, 0
      %v7517 = vsel %vm1224, %v7508, 0
      %7519 = vmatprep.subr.bf16.mxu0 0
      %7520 = vmatpush1.bf16.msra.mxu0 %v7506
      %7521 = vmatprep.subr.bf16.mxu0 0
      %7522 = vmatpush1.bf16.msra.mxu0 %v7517
      %7523 = vmatprep.subr.bf16.mxu0 0
      %7524 = vmatpush1.bf16.msra.mxu0 0
      %7525 = vmatprep.subr.bf16.mxu0 0
      %7526 = vmatpush1.bf16.msra.mxu0 0
      %7527 = vmatprep.subr.bf16.mxu0 0
      %7528 = vmatpush1.bf16.msra.mxu0 0
      %7529 = vmatprep.subr.bf16.mxu0 0
      %7530 = vmatpush1.bf16.msra.mxu0 0
      %7531 = vmatprep.subr.bf16.mxu0 0
      %7532 = vmatpush1.bf16.msra.mxu0 0
      %7533 = vmatprep.subr.bf16.mxu0 0
      %7534 = vmatpush1.bf16.msra.mxu0 0
      %7535 = vmatprep.subr.bf16.mxu0 0
      %7536 = vmatpush1.bf16.msra.mxu0 0
      %7537 = vmatprep.subr.bf16.mxu0 0
      %7538 = vmatpush1.bf16.msra.mxu0 0
      %7539 = vmatprep.subr.bf16.mxu0 0
      %7540 = vmatpush1.bf16.msra.mxu0 0
      %7541 = vmatprep.subr.bf16.mxu0 0
      %7542 = vmatpush1.bf16.msra.mxu0 0
      %7543 = vmatprep.subr.bf16.mxu0 0
      %7544 = vmatpush1.bf16.msra.mxu0 0
      %7545 = vmatprep.subr.bf16.mxu0 0
      %7546 = vmatpush1.bf16.msra.mxu0 0
      %7547 = vmatprep.subr.bf16.mxu0 0
      %7548 = vmatpush1.bf16.msra.mxu0 0
      %7549 = vmatprep.subr.bf16.mxu0 0
      %7550 = vmatpush1.bf16.msra.mxu0 0
      %7551 = vmatprep.mubr.bf16.mxu0 0
      %7552 = vmatmul.mubr.bf16.gmra.mrb[0].mxu0 %v7511
      %v7553 = vpop.f32.mrb[0].mxu0
      %v7554 = vadd.f32 0.0, %v7553
      %v7555 = vpop.f32.mrb[0].mxu0
      %v7556 = vpop.f32.mrb[0].mxu0
      %v7557 = vadd.f32 0.0, %v7556
      %v7558 = vpop.f32.mrb[0].mxu0
      %7559 = vmatprep.mubr.bf16.mxu0 0
      %7560 = vmatmul.mubr.bf16.gmra.mrb[0].mxu0 %v7514
      %v7561 = vpop.f32.mrb[0].mxu0
      %v7562 = vadd.f32 0.0, %v7561
      %v7563 = vpop.f32.mrb[0].mxu0
      %v7564 = vpop.f32.mrb[0].mxu0
      %v7565 = vpop.f32.mrb[0].mxu0
      %7566 = vdwg.mxu0
      %7567 = vrot.lane.b32.xlu0 %v7072, 104
      %v7568 = vpop.permute.xlu0 %7567
      %7569 = vrot.lane.b32.xlu0 %v7073, 104
      %v7570 = vpop.permute.xlu0 %7569
      %7571 = vrot.lane.b32.xlu0 %v7072, 72
      %v7572 = vpop.permute.xlu0 %7571
      %7573 = vrot.lane.b32.xlu0 %v7073, 72
      %v7574 = vpop.permute.xlu0 %7573
      %v7576 = vsel %vm1116, %v7568, 0
      %v7579 = vsel %vm1116, %v7570, 0
      %v7582 = vsel %vm1116, %v7572, 0
      %v7585 = vsel %vm1116, %v7574, 0
      %7587 = vmatprep.subr.bf16.mxu0 0
      %7588 = vmatpush1.bf16.xpose.msra.mxu0 %v7582
      %7589 = vmatprep.subr.bf16.mxu0 0
      %7590 = vmatpush1.bf16.xpose.msra.mxu0 %v7585
      %7591 = vmatprep.subr.bf16.mxu0 0
      %7592 = vmatpush1.bf16.xpose.msra.mxu0 0
      %7593 = vmatprep.subr.bf16.mxu0 0
      %7594 = vmatpush1.bf16.xpose.msra.mxu0 0
      %7595 = vmatprep.subr.bf16.mxu0 0
      %7596 = vmatpush1.bf16.xpose.msra.mxu0 0
      %7597 = vmatprep.subr.bf16.mxu0 0
      %7598 = vmatpush1.bf16.xpose.msra.mxu0 0
      %7599 = vmatprep.subr.bf16.mxu0 0
      %7600 = vmatpush1.bf16.xpose.msra.mxu0 0
      %7601 = vmatprep.subr.bf16.mxu0 0
      %7602 = vmatpush1.bf16.xpose.msra.mxu0 0
      %7603 = vmatprep.subr.bf16.mxu0 0
      %7604 = vmatpush1.bf16.xpose.msra.mxu0 0
      %7605 = vmatprep.subr.bf16.mxu0 0
      %7606 = vmatpush1.bf16.xpose.msra.mxu0 0
      %7607 = vmatprep.subr.bf16.mxu0 0
      %7608 = vmatpush1.bf16.xpose.msra.mxu0 0
      %7609 = vmatprep.subr.bf16.mxu0 0
      %7610 = vmatpush1.bf16.xpose.msra.mxu0 0
      %7611 = vmatprep.subr.bf16.mxu0 0
      %7612 = vmatpush1.bf16.xpose.msra.mxu0 0
      %7613 = vmatprep.subr.bf16.mxu0 0
      %7614 = vmatpush1.bf16.xpose.msra.mxu0 0
      %7615 = vmatprep.subr.bf16.mxu0 0
      %7616 = vmatpush1.bf16.xpose.msra.mxu0 0
      %7617 = vmatprep.subr.bf16.mxu0 0
      %7618 = vmatpush1.bf16.xpose.msra.mxu0 0
      %7619 = vmatprep.mubr.bf16.mxu0 0
      %7620 = vmatmul.mubr.bf16.gmra.mrb[0].mxu0 %v7576
      %v7621 = vpop.f32.mrb[0].mxu0
      %v7622 = vadd.f32 %v420, %v7621
      %v7623 = vpop.f32.mrb[0].mxu0
      %v7624 = vpop.f32.mrb[0].mxu0
      %v7625 = vadd.f32 %v420, %v7624
      %v7626 = vpop.f32.mrb[0].mxu0
      %7627 = vmatprep.mubr.bf16.mxu0 0
      %7628 = vmatmul.mubr.bf16.gmra.mrb[0].mxu0 %v7579
      %v7629 = vpop.f32.mrb[0].mxu0
      %v7630 = vadd.f32 %v420, %v7629
      %v7631 = vpop.f32.mrb[0].mxu0
      %v7632 = vpop.f32.mrb[0].mxu0
      %v7633 = vpop.f32.mrb[0].mxu0
      %7634 = vdwg.mxu0
      %v7635 = vsel %vm1177, %v7622, -inf
      %7636 = vmax.xlane.f32.xlu0 %v7635
      %v7637 = vpop.xlane.xlu0 %7636
      %v7638 = vsel %vm1177, %v7625, -inf
      %7639 = vmax.xlane.f32.xlu0 %v7638
      %v7640 = vpop.xlane.xlu0 %7639
      %v7641 = vsel %vm1177, %v7630, -inf
      %7642 = vmax.xlane.f32.xlu0 %v7641
      %v7643 = vpop.xlane.xlu0 %7642
      %v7644 = vsub.f32 %v7622, %v7637
      %v7645 = vsub.f32 %v7625, %v7640
      %v7646 = vsub.f32 %v7630, %v7643
      %v7647 = vmul.f32 %v7644, 1.442695
      %v7648 = vpow.pop %v7647
      %v7649 = vmul.f32 %v7645, 1.442695
      %v7650 = vpow.pop %v7649
      %v7651 = vmul.f32 %v7646, 1.442695
      %v7652 = vpow.pop %v7651
      %v7653 = vsel %vm1177, %v7648, 0.0
      %7654 = vadd.xlane.f32.xlu0 %v7653
      %v7655 = vpop.xlane.xlu0 %7654
      %v7656 = vsel %vm1177, %v7650, 0.0
      %7657 = vadd.xlane.f32.xlu0 %v7656
      %v7658 = vpop.xlane.xlu0 %7657
      %v7659 = vsel %vm1177, %v7652, 0.0
      %7660 = vadd.xlane.f32.xlu0 %v7659
      %v7661 = vpop.xlane.xlu0 %7660
      %v7662 = vrcp.pop %v7655
      %v7663 = vrcp.pop %v7658
      %v7664 = vrcp.pop %v7661
      %v7665 = vmul.f32 %v7648, %v7662
      %v7666 = vmul.f32 %v7650, %v7663
      %v7667 = vmul.f32 %v7652, %v7664
      %v7668 = vpack.c.bf16 %v7666, %v7665
      %v7669 = vpack.c.bf16 %v7667, %v7667
      %7670 = vrot.lane.b32.xlu0 %v7072, 40
      %v7671 = vpop.permute.xlu0 %7670
      %7672 = vrot.lane.b32.xlu0 %v7073, 40
      %v7673 = vpop.permute.xlu0 %7672
      %v7676 = vsel %vm1177, %v7668, 0
      %v7679 = vsel %vm1177, %v7669, 0
      %v7682 = vsel %vm1224, %v7673, 0
      %7684 = vmatprep.subr.bf16.mxu0 0
      %7685 = vmatpush1.bf16.msra.mxu0 %v7671
      %7686 = vmatprep.subr.bf16.mxu0 0
      %7687 = vmatpush1.bf16.msra.mxu0 %v7682
      %7688 = vmatprep.subr.bf16.mxu0 0
      %7689 = vmatpush1.bf16.msra.mxu0 0
      %7690 = vmatprep.subr.bf16.mxu0 0
      %7691 = vmatpush1.bf16.msra.mxu0 0
      %7692 = vmatprep.subr.bf16.mxu0 0
      %7693 = vmatpush1.bf16.msra.mxu0 0
      %7694 = vmatprep.subr.bf16.mxu0 0
      %7695 = vmatpush1.bf16.msra.mxu0 0
      %7696 = vmatprep.subr.bf16.mxu0 0
      %7697 = vmatpush1.bf16.msra.mxu0 0
      %7698 = vmatprep.subr.bf16.mxu0 0
      %7699 = vmatpush1.bf16.msra.mxu0 0
      %7700 = vmatprep.subr.bf16.mxu0 0
      %7701 = vmatpush1.bf16.msra.mxu0 0
      %7702 = vmatprep.subr.bf16.mxu0 0
      %7703 = vmatpush1.bf16.msra.mxu0 0
      %7704 = vmatprep.subr.bf16.mxu0 0
      %7705 = vmatpush1.bf16.msra.mxu0 0
      %7706 = vmatprep.subr.bf16.mxu0 0
      %7707 = vmatpush1.bf16.msra.mxu0 0
      %7708 = vmatprep.subr.bf16.mxu0 0
      %7709 = vmatpush1.bf16.msra.mxu0 0
      %7710 = vmatprep.subr.bf16.mxu0 0
      %7711 = vmatpush1.bf16.msra.mxu0 0
      %7712 = vmatprep.subr.bf16.mxu0 0
      %7713 = vmatpush1.bf16.msra.mxu0 0
      %7714 = vmatprep.subr.bf16.mxu0 0
      %7715 = vmatpush1.bf16.msra.mxu0 0
      %7716 = vmatprep.mubr.bf16.mxu0 0
      %7717 = vmatmul.mubr.bf16.gmra.mrb[0].mxu0 %v7676
      %v7718 = vpop.f32.mrb[0].mxu0
      %v7719 = vadd.f32 0.0, %v7718
      %v7720 = vpop.f32.mrb[0].mxu0
      %v7721 = vpop.f32.mrb[0].mxu0
      %v7722 = vadd.f32 0.0, %v7721
      %v7723 = vpop.f32.mrb[0].mxu0
      %7724 = vmatprep.mubr.bf16.mxu0 0
      %7725 = vmatmul.mubr.bf16.gmra.mrb[0].mxu0 %v7679
      %v7726 = vpop.f32.mrb[0].mxu0
      %v7727 = vadd.f32 0.0, %v7726
      %v7728 = vpop.f32.mrb[0].mxu0
      %v7729 = vpop.f32.mrb[0].mxu0
      %v7730 = vpop.f32.mrb[0].mxu0
      %7731 = vdwg.mxu0
      %7735 = vrot.lane.b32.xlu0 %v7389, 8
      %v7736 = vpop.permute.xlu0 %7735
      %7737 = vrot.lane.b32.xlu0 %v7392, 8
      %v7738 = vpop.permute.xlu0 %7737
      %7739 = vrot.lane.b32.xlu0 %v7397, 8
      %v7740 = vpop.permute.xlu0 %7739
      %7747 = vrot.lane.b32.xlu0 %v7554, 16
      %v7748 = vpop.permute.xlu0 %7747
      %7749 = vrot.lane.b32.xlu0 %v7557, 16
      %v7750 = vpop.permute.xlu0 %7749
      %7751 = vrot.lane.b32.xlu0 %v7562, 16
      %v7752 = vpop.permute.xlu0 %7751
      %7759 = vrot.lane.b32.xlu0 %v7719, 24
      %v7760 = vpop.permute.xlu0 %7759
      %7761 = vrot.lane.b32.xlu0 %v7722, 24
      %v7762 = vpop.permute.xlu0 %7761
      %7763 = vrot.lane.b32.xlu0 %v7727, 24
      %v7764 = vpop.permute.xlu0 %7763
      %v7768 = vsel %vm1116, %v7224, %v7736
      %v7769 = vsel %vm1116, %v7227, %v7738
      %v7770 = vsel %vm1116, %v7232, %v7740
      %v7771 = vsel %vm1810, %v7768, %v7748
      %v7772 = vsel %vm1810, %v7769, %v7750
      %v7773 = vsel %vm1810, %v7770, %v7752
      %v7774 = vsel %vm1177, %v7771, %v7760
      %v7775 = vsel %vm1177, %v7772, %v7762
      %v7776 = vsel %vm1177, %v7773, %v7764
      %v7777 = vpack.c.bf16 %v5660, %v5659
      %v7778 = vpack.c.bf16 %v6364, %v5661
      %v7779 = vpack.c.bf16 %v6366, %v6365
      %v7780 = vpack.c.bf16 %v7070, %v7069
      %v7781 = vpack.c.bf16 %v7774, %v7071
      %v7782 = vpack.c.bf16 %v7776, %v7775
      %s7783 = scalar_lea.vmem %s7, 16
      %v7784 = vld [vmem:[%s7783] sm:$0xf]
      %v7785 = vld [vmem:[%s7783 + $0x4] sm:$0xf]
      %v7786 = vld [vmem:[%s7783 + $0x8] sm:$0xf]
      %v7787 = vld [vmem:[%s7783 + $0xc] sm:$0xf]
      %v7792 = vunpack.c.l.b16 %v7784
      %v7793 = vunpack.c.l.b16 %v7785
      %v7794 = vunpack.c.l.b16 %v7786
      %v7795 = vunpack.c.l.b16 %v7787
      %v7796 = vpack.c.b16 %v7793, %v7792
      %v7797 = vpack.c.b16 %v7795, %v7794
      %v7801 = vsel %vm600, %v7777, 0
      %v7804 = vsel %vm600, %v7778, 0
      %v7807 = vsel %vm600, %v7779, 0
      %v7810 = vsel %vm600, %v7780, 0
      %v7813 = vsel %vm600, %v7781, 0
      %v7816 = vsel %vm600, %v7782, 0
      %7818 = vmatprep.subr.bf16.mxu0 0
      %7819 = vmatpush1.bf16.msra.mxu0 %v7796
      %7820 = vmatprep.subr.bf16.mxu0 0
      %7821 = vmatpush1.bf16.msra.mxu0 %v7797
      %7822 = vmatprep.subr.bf16.mxu0 0
      %7823 = vmatpush1.bf16.msra.mxu0 0
      %7824 = vmatprep.subr.bf16.mxu0 0
      %7825 = vmatpush1.bf16.msra.mxu0 0
      %7826 = vmatprep.subr.bf16.mxu0 0
      %7827 = vmatpush1.bf16.msra.mxu0 0
      %7828 = vmatprep.subr.bf16.mxu0 0
      %7829 = vmatpush1.bf16.msra.mxu0 0
      %7830 = vmatprep.subr.bf16.mxu0 0
      %7831 = vmatpush1.bf16.msra.mxu0 0
      %7832 = vmatprep.subr.bf16.mxu0 0
      %7833 = vmatpush1.bf16.msra.mxu0 0
      %7834 = vmatprep.subr.bf16.mxu0 0
      %7835 = vmatpush1.bf16.msra.mxu0 0
      %7836 = vmatprep.subr.bf16.mxu0 0
      %7837 = vmatpush1.bf16.msra.mxu0 0
      %7838 = vmatprep.subr.bf16.mxu0 0
      %7839 = vmatpush1.bf16.msra.mxu0 0
      %7840 = vmatprep.subr.bf16.mxu0 0
      %7841 = vmatpush1.bf16.msra.mxu0 0
      %7842 = vmatprep.subr.bf16.mxu0 0
      %7843 = vmatpush1.bf16.msra.mxu0 0
      %7844 = vmatprep.subr.bf16.mxu0 0
      %7845 = vmatpush1.bf16.msra.mxu0 0
      %7846 = vmatprep.subr.bf16.mxu0 0
      %7847 = vmatpush1.bf16.msra.mxu0 0
      %7848 = vmatprep.subr.bf16.mxu0 0
      %7849 = vmatpush1.bf16.msra.mxu0 0
      %7850 = vmatprep.mubr.bf16.mxu0 0
      %7851 = vmatmul.mubr.bf16.gmra.mrb[0].mxu0 %v7801
      %v7852 = vpop.f32.mrb[0].mxu0
      %v7853 = vadd.f32 0.0, %v7852
      %v7854 = vpop.f32.mrb[0].mxu0
      %v7855 = vpop.f32.mrb[0].mxu0
      %v7856 = vadd.f32 0.0, %v7855
      %v7857 = vpop.f32.mrb[0].mxu0
      %7858 = vmatprep.mubr.bf16.mxu0 0
      %7859 = vmatmul.mubr.bf16.gmra.mrb[0].mxu0 %v7804
      %v7860 = vpop.f32.mrb[0].mxu0
      %v7861 = vadd.f32 0.0, %v7860
      %v7862 = vpop.f32.mrb[0].mxu0
      %v7863 = vpop.f32.mrb[0].mxu0
      %v7864 = vadd.f32 0.0, %v7863
      %v7865 = vpop.f32.mrb[0].mxu0
      %7866 = vmatprep.mubr.bf16.mxu0 0
      %7867 = vmatmul.mubr.bf16.gmra.mrb[0].mxu0 %v7807
      %v7868 = vpop.f32.mrb[0].mxu0
      %v7869 = vadd.f32 0.0, %v7868
      %v7870 = vpop.f32.mrb[0].mxu0
      %v7871 = vpop.f32.mrb[0].mxu0
      %v7872 = vadd.f32 0.0, %v7871
      %v7873 = vpop.f32.mrb[0].mxu0
      %7874 = vmatprep.mubr.bf16.mxu0 0
      %7875 = vmatmul.mubr.bf16.gmra.mrb[0].mxu0 %v7810
      %v7876 = vpop.f32.mrb[0].mxu0
      %v7877 = vadd.f32 0.0, %v7876
      %v7878 = vpop.f32.mrb[0].mxu0
      %v7879 = vpop.f32.mrb[0].mxu0
      %v7880 = vadd.f32 0.0, %v7879
      %v7881 = vpop.f32.mrb[0].mxu0
      %7882 = vmatprep.mubr.bf16.mxu0 0
      %7883 = vmatmul.mubr.bf16.gmra.mrb[0].mxu0 %v7813
      %v7884 = vpop.f32.mrb[0].mxu0
      %v7885 = vadd.f32 0.0, %v7884
      %v7886 = vpop.f32.mrb[0].mxu0
      %v7887 = vpop.f32.mrb[0].mxu0
      %v7888 = vadd.f32 0.0, %v7887
      %v7889 = vpop.f32.mrb[0].mxu0
      %7890 = vmatprep.mubr.bf16.mxu0 0
      %7891 = vmatmul.mubr.bf16.gmra.mrb[0].mxu0 %v7816
      %v7892 = vpop.f32.mrb[0].mxu0
      %v7893 = vadd.f32 0.0, %v7892
      %v7894 = vpop.f32.mrb[0].mxu0
      %v7895 = vpop.f32.mrb[0].mxu0
      %v7896 = vadd.f32 0.0, %v7895
      %v7897 = vpop.f32.mrb[0].mxu0
      %7898 = vdwg.mxu0
      %v7899 = vadd.f32 %v4623, %v7853
      %v7900 = vadd.f32 %v4624, %v7856
      %v7901 = vadd.f32 %v4625, %v7861
      %v7902 = vadd.f32 %v4626, %v7864
      %v7903 = vadd.f32 %v4627, %v7869
      %v7904 = vadd.f32 %v4628, %v7872
      %v7905 = vadd.f32 %v4629, %v7877
      %v7906 = vadd.f32 %v4630, %v7880
      %v7907 = vadd.f32 %v4631, %v7885
      %v7908 = vadd.f32 %v4632, %v7888
      %v7909 = vadd.f32 %v4633, %v7893
      %v7910 = vadd.f32 %v4634, %v7896
      %v7911 = vlaneseq
      %v7912 = vshrl.u32 %v7911, 7
      %v7913 = vsub.s32 0, %v7912
      %v7914 = vrot.slane %v4638, %v7913
      %v7915 = vadd.f32 %v7899, %v7914
      %v7916 = vadd.f32 %v7900, %v7914
      %v7917 = vadd.f32 %v7901, %v7914
      %v7918 = vadd.f32 %v7902, %v7914
      %v7919 = vadd.f32 %v7903, %v7914
      %v7920 = vadd.f32 %v7904, %v7914
      %v7921 = vadd.f32 %v7905, %v7914
      %v7922 = vadd.f32 %v7906, %v7914
      %v7923 = vadd.f32 %v7907, %v7914
      %v7924 = vadd.f32 %v7908, %v7914
      %v7925 = vadd.f32 %v7909, %v7914
      %v7926 = vadd.f32 %v7910, %v7914
      %v7927 = vsel %vm600, %v7915, 0.0
      %7928 = vadd.xlane.f32.xlu0 %v7927
      %v7929 = vpop.xlane.xlu0 %7928
      %v7930 = vsel %vm600, %v7916, 0.0
      %7931 = vadd.xlane.f32.xlu0 %v7930
      %v7932 = vpop.xlane.xlu0 %7931
      %v7933 = vsel %vm600, %v7917, 0.0
      %7934 = vadd.xlane.f32.xlu0 %v7933
      %v7935 = vpop.xlane.xlu0 %7934
      %v7936 = vsel %vm600, %v7918, 0.0
      %7937 = vadd.xlane.f32.xlu0 %v7936
      %v7938 = vpop.xlane.xlu0 %7937
      %v7939 = vsel %vm600, %v7919, 0.0
      %7940 = vadd.xlane.f32.xlu0 %v7939
      %v7941 = vpop.xlane.xlu0 %7940
      %v7942 = vsel %vm600, %v7920, 0.0
      %7943 = vadd.xlane.f32.xlu0 %v7942
      %v7944 = vpop.xlane.xlu0 %7943
      %v7945 = vsel %vm600, %v7921, 0.0
      %7946 = vadd.xlane.f32.xlu0 %v7945
      %v7947 = vpop.xlane.xlu0 %7946
      %v7948 = vsel %vm600, %v7922, 0.0
      %7949 = vadd.xlane.f32.xlu0 %v7948
      %v7950 = vpop.xlane.xlu0 %7949
      %v7951 = vsel %vm600, %v7923, 0.0
      %7952 = vadd.xlane.f32.xlu0 %v7951
      %v7953 = vpop.xlane.xlu0 %7952
      %v7954 = vsel %vm600, %v7924, 0.0
      %7955 = vadd.xlane.f32.xlu0 %v7954
      %v7956 = vpop.xlane.xlu0 %7955
      %v7957 = vsel %vm600, %v7925, 0.0
      %7958 = vadd.xlane.f32.xlu0 %v7957
      %v7959 = vpop.xlane.xlu0 %7958
      %v7960 = vsel %vm600, %v7926, 0.0
      %7961 = vadd.xlane.f32.xlu0 %v7960
      %v7962 = vpop.xlane.xlu0 %7961
      %v7963 = vmul.f32 %v7929, %v637
      %v7964 = vmul.f32 %v7932, %v637
      %v7965 = vmul.f32 %v7935, %v637
      %v7966 = vmul.f32 %v7938, %v637
      %v7967 = vmul.f32 %v7941, %v637
      %v7968 = vmul.f32 %v7944, %v637
      %v7969 = vmul.f32 %v7947, %v637
      %v7970 = vmul.f32 %v7950, %v637
      %v7971 = vmul.f32 %v7953, %v637
      %v7972 = vmul.f32 %v7956, %v637
      %v7973 = vmul.f32 %v7959, %v637
      %v7974 = vmul.f32 %v7962, %v637
      %v7975 = vsub.f32 %v7915, %v7963
      %v7976 = vsub.f32 %v7916, %v7964
      %v7977 = vsub.f32 %v7917, %v7965
      %v7978 = vsub.f32 %v7918, %v7966
      %v7979 = vsub.f32 %v7919, %v7967
      %v7980 = vsub.f32 %v7920, %v7968
      %v7981 = vsub.f32 %v7921, %v7969
      %v7982 = vsub.f32 %v7922, %v7970
      %v7983 = vsub.f32 %v7923, %v7971
      %v7984 = vsub.f32 %v7924, %v7972
      %v7985 = vsub.f32 %v7925, %v7973
      %v7986 = vsub.f32 %v7926, %v7974
      %v7987 = vmul.f32 %v7975, %v7975
      %v7988 = vmul.f32 %v7976, %v7976
      %v7989 = vmul.f32 %v7977, %v7977
      %v7990 = vmul.f32 %v7978, %v7978
      %v7991 = vmul.f32 %v7979, %v7979
      %v7992 = vmul.f32 %v7980, %v7980
      %v7993 = vmul.f32 %v7981, %v7981
      %v7994 = vmul.f32 %v7982, %v7982
      %v7995 = vmul.f32 %v7983, %v7983
      %v7996 = vmul.f32 %v7984, %v7984
      %v7997 = vmul.f32 %v7985, %v7985
      %v7998 = vmul.f32 %v7986, %v7986
      %v7999 = vsel %vm600, %v7987, 0.0
      %8000 = vadd.xlane.f32.xlu0 %v7999
      %v8001 = vpop.xlane.xlu0 %8000
      %v8002 = vsel %vm600, %v7988, 0.0
      %8003 = vadd.xlane.f32.xlu0 %v8002
      %v8004 = vpop.xlane.xlu0 %8003
      %v8005 = vsel %vm600, %v7989, 0.0
      %8006 = vadd.xlane.f32.xlu0 %v8005
      %v8007 = vpop.xlane.xlu0 %8006
      %v8008 = vsel %vm600, %v7990, 0.0
      %8009 = vadd.xlane.f32.xlu0 %v8008
      %v8010 = vpop.xlane.xlu0 %8009
      %v8011 = vsel %vm600, %v7991, 0.0
      %8012 = vadd.xlane.f32.xlu0 %v8011
      %v8013 = vpop.xlane.xlu0 %8012
      %v8014 = vsel %vm600, %v7992, 0.0
      %8015 = vadd.xlane.f32.xlu0 %v8014
      %v8016 = vpop.xlane.xlu0 %8015
      %v8017 = vsel %vm600, %v7993, 0.0
      %8018 = vadd.xlane.f32.xlu0 %v8017
      %v8019 = vpop.xlane.xlu0 %8018
      %v8020 = vsel %vm600, %v7994, 0.0
      %8021 = vadd.xlane.f32.xlu0 %v8020
      %v8022 = vpop.xlane.xlu0 %8021
      %v8023 = vsel %vm600, %v7995, 0.0
      %8024 = vadd.xlane.f32.xlu0 %v8023
      %v8025 = vpop.xlane.xlu0 %8024
      %v8026 = vsel %vm600, %v7996, 0.0
      %8027 = vadd.xlane.f32.xlu0 %v8026
      %v8028 = vpop.xlane.xlu0 %8027
      %v8029 = vsel %vm600, %v7997, 0.0
      %8030 = vadd.xlane.f32.xlu0 %v8029
      %v8031 = vpop.xlane.xlu0 %8030
      %v8032 = vsel %vm600, %v7998, 0.0
      %8033 = vadd.xlane.f32.xlu0 %v8032
      %v8034 = vpop.xlane.xlu0 %8033
      %v8035 = vmul.f32 %v8001, %v637
      %v8036 = vmul.f32 %v8004, %v637
      %v8037 = vmul.f32 %v8007, %v637
      %v8038 = vmul.f32 %v8010, %v637
      %v8039 = vmul.f32 %v8013, %v637
      %v8040 = vmul.f32 %v8016, %v637
      %v8041 = vmul.f32 %v8019, %v637
      %v8042 = vmul.f32 %v8022, %v637
      %v8043 = vmul.f32 %v8025, %v637
      %v8044 = vmul.f32 %v8028, %v637
      %v8045 = vmul.f32 %v8031, %v637
      %v8046 = vmul.f32 %v8034, %v637
      %v8047 = vadd.f32 %v8035, 1e-05
      %v8048 = vadd.f32 %v8036, 1e-05
      %v8049 = vadd.f32 %v8037, 1e-05
      %v8050 = vadd.f32 %v8038, 1e-05
      %v8051 = vadd.f32 %v8039, 1e-05
      %v8052 = vadd.f32 %v8040, 1e-05
      %v8053 = vadd.f32 %v8041, 1e-05
      %v8054 = vadd.f32 %v8042, 1e-05
      %v8055 = vadd.f32 %v8043, 1e-05
      %v8056 = vadd.f32 %v8044, 1e-05
      %v8057 = vadd.f32 %v8045, 1e-05
      %v8058 = vadd.f32 %v8046, 1e-05
      %v8059 = vrsqrt.pop %v8047
      %v8060 = vrsqrt.pop %v8048
      %v8061 = vrsqrt.pop %v8049
      %v8062 = vrsqrt.pop %v8050
      %v8063 = vrsqrt.pop %v8051
      %v8064 = vrsqrt.pop %v8052
      %v8065 = vrsqrt.pop %v8053
      %v8066 = vrsqrt.pop %v8054
      %v8067 = vrsqrt.pop %v8055
      %v8068 = vrsqrt.pop %v8056
      %v8069 = vrsqrt.pop %v8057
      %v8070 = vrsqrt.pop %v8058
      %v8071 = vmul.f32 %v7975, %v8059
      %v8072 = vmul.f32 %v7976, %v8060
      %v8073 = vmul.f32 %v7977, %v8061
      %v8074 = vmul.f32 %v7978, %v8062
      %v8075 = vmul.f32 %v7979, %v8063
      %v8076 = vmul.f32 %v7980, %v8064
      %v8077 = vmul.f32 %v7981, %v8065
      %v8078 = vmul.f32 %v7982, %v8066
      %v8079 = vmul.f32 %v7983, %v8067
      %v8080 = vmul.f32 %v7984, %v8068
      %v8081 = vmul.f32 %v7985, %v8069
      %v8082 = vmul.f32 %v7986, %v8070
      %v8083 = vlaneseq
      %v8084 = vshrl.u32 %v8083, 7
      %v8085 = vsub.s32 2, %v8084
      %v8086 = vrot.slane %v4636, %v8085
      %v8087 = vmul.f32 %v8071, %v8086
      %v8088 = vmul.f32 %v8072, %v8086
      %v8089 = vmul.f32 %v8073, %v8086
      %v8090 = vmul.f32 %v8074, %v8086
      %v8091 = vmul.f32 %v8075, %v8086
      %v8092 = vmul.f32 %v8076, %v8086
      %v8093 = vmul.f32 %v8077, %v8086
      %v8094 = vmul.f32 %v8078, %v8086
      %v8095 = vmul.f32 %v8079, %v8086
      %v8096 = vmul.f32 %v8080, %v8086
      %v8097 = vmul.f32 %v8081, %v8086
      %v8098 = vmul.f32 %v8082, %v8086
      %v8099 = vlaneseq
      %v8100 = vshrl.u32 %v8099, 7
      %v8101 = vsub.s32 3, %v8100
      %v8102 = vrot.slane %v4636, %v8101
      %v8103 = vadd.f32 %v8087, %v8102
      %v8104 = vadd.f32 %v8088, %v8102
      %v8105 = vadd.f32 %v8089, %v8102
      %v8106 = vadd.f32 %v8090, %v8102
      %v8107 = vadd.f32 %v8091, %v8102
      %v8108 = vadd.f32 %v8092, %v8102
      %v8109 = vadd.f32 %v8093, %v8102
      %v8110 = vadd.f32 %v8094, %v8102
      %v8111 = vadd.f32 %v8095, %v8102
      %v8112 = vadd.f32 %v8096, %v8102
      %v8113 = vadd.f32 %v8097, %v8102
      %v8114 = vadd.f32 %v8098, %v8102
      %v8115 = vpack.c.bf16 %v8104, %v8103
      %v8116 = vpack.c.bf16 %v8106, %v8105
      %v8117 = vpack.c.bf16 %v8108, %v8107
      %v8118 = vpack.c.bf16 %v8110, %v8109
      %v8119 = vpack.c.bf16 %v8112, %v8111
      %v8120 = vpack.c.bf16 %v8114, %v8113
      %s8121 = scalar_lea.vmem %s9, 16
      %v8122 = vld [vmem:[%s8121] sm:$0xf]
      %v8123 = vld [vmem:[%s8121 + $0x4] sm:$0xf]
      %v8124 = vld [vmem:[%s8121 + $0x8] sm:$0xf]
      %v8125 = vld [vmem:[%s8121 + $0xc] sm:$0xf]
      %s8126 = scalar_lea.vmem %s10, 1
      %v8127 = vld [vmem:[%s8126] sm:$0x1]
      %v8129 = vlaneseq
      %v8130 = vshrl.u32 %v8129, 7
      %v8131 = vsub.s32 0, %v8130
      %v8132 = vrot.slane %v8127, %v8131
      %v8138 = vunpack.c.l.b16 %v8122
      %v8139 = vunpack.c.l.b16 %v8123
      %v8140 = vunpack.c.l.b16 %v8124
      %v8141 = vunpack.c.l.b16 %v8125
      %v8142 = vpack.c.b16 %v8139, %v8138
      %v8143 = vpack.c.b16 %v8141, %v8140
      %v8147 = vsel %vm600, %v8115, 0
      %v8150 = vsel %vm600, %v8116, 0
      %v8153 = vsel %vm600, %v8117, 0
      %v8156 = vsel %vm600, %v8118, 0
      %v8159 = vsel %vm600, %v8119, 0
      %v8162 = vsel %vm600, %v8120, 0
      %8164 = vmatprep.subr.bf16.mxu0 0
      %8165 = vmatpush1.bf16.msra.mxu0 %v8142
      %8166 = vmatprep.subr.bf16.mxu0 0
      %8167 = vmatpush1.bf16.msra.mxu0 %v8143
      %8168 = vmatprep.subr.bf16.mxu0 0
      %8169 = vmatpush1.bf16.msra.mxu0 0
      %8170 = vmatprep.subr.bf16.mxu0 0
      %8171 = vmatpush1.bf16.msra.mxu0 0
      %8172 = vmatprep.subr.bf16.mxu0 0
      %8173 = vmatpush1.bf16.msra.mxu0 0
      %8174 = vmatprep.subr.bf16.mxu0 0
      %8175 = vmatpush1.bf16.msra.mxu0 0
      %8176 = vmatprep.subr.bf16.mxu0 0
      %8177 = vmatpush1.bf16.msra.mxu0 0
      %8178 = vmatprep.subr.bf16.mxu0 0
      %8179 = vmatpush1.bf16.msra.mxu0 0
      %8180 = vmatprep.subr.bf16.mxu0 0
      %8181 = vmatpush1.bf16.msra.mxu0 0
      %8182 = vmatprep.subr.bf16.mxu0 0
      %8183 = vmatpush1.bf16.msra.mxu0 0
      %8184 = vmatprep.subr.bf16.mxu0 0
      %8185 = vmatpush1.bf16.msra.mxu0 0
      %8186 = vmatprep.subr.bf16.mxu0 0
      %8187 = vmatpush1.bf16.msra.mxu0 0
      %8188 = vmatprep.subr.bf16.mxu0 0
      %8189 = vmatpush1.bf16.msra.mxu0 0
      %8190 = vmatprep.subr.bf16.mxu0 0
      %8191 = vmatpush1.bf16.msra.mxu0 0
      %8192 = vmatprep.subr.bf16.mxu0 0
      %8193 = vmatpush1.bf16.msra.mxu0 0
      %8194 = vmatprep.subr.bf16.mxu0 0
      %8195 = vmatpush1.bf16.msra.mxu0 0
      %8196 = vmatprep.mubr.bf16.mxu0 0
      %8197 = vmatmul.mubr.bf16.gmra.mrb[0].mxu0 %v8147
      %v8198 = vpop.f32.mrb[0].mxu0
      %v8199 = vadd.f32 %v8132, %v8198
      %v8200 = vpop.f32.mrb[0].mxu0
      %v8201 = vpop.f32.mrb[0].mxu0
      %v8202 = vadd.f32 %v8132, %v8201
      %v8203 = vpop.f32.mrb[0].mxu0
      %8204 = vmatprep.mubr.bf16.mxu0 0
      %8205 = vmatmul.mubr.bf16.gmra.mrb[0].mxu0 %v8150
      %v8206 = vpop.f32.mrb[0].mxu0
      %v8207 = vadd.f32 %v8132, %v8206
      %v8208 = vpop.f32.mrb[0].mxu0
      %v8209 = vpop.f32.mrb[0].mxu0
      %v8210 = vadd.f32 %v8132, %v8209
      %v8211 = vpop.f32.mrb[0].mxu0
      %8212 = vmatprep.mubr.bf16.mxu0 0
      %8213 = vmatmul.mubr.bf16.gmra.mrb[0].mxu0 %v8153
      %v8214 = vpop.f32.mrb[0].mxu0
      %v8215 = vadd.f32 %v8132, %v8214
      %v8216 = vpop.f32.mrb[0].mxu0
      %v8217 = vpop.f32.mrb[0].mxu0
      %v8218 = vadd.f32 %v8132, %v8217
      %v8219 = vpop.f32.mrb[0].mxu0
      %8220 = vmatprep.mubr.bf16.mxu0 0
      %8221 = vmatmul.mubr.bf16.gmra.mrb[0].mxu0 %v8156
      %v8222 = vpop.f32.mrb[0].mxu0
      %v8223 = vadd.f32 %v8132, %v8222
      %v8224 = vpop.f32.mrb[0].mxu0
      %v8225 = vpop.f32.mrb[0].mxu0
      %v8226 = vadd.f32 %v8132, %v8225
      %v8227 = vpop.f32.mrb[0].mxu0
      %8228 = vmatprep.mubr.bf16.mxu0 0
      %8229 = vmatmul.mubr.bf16.gmra.mrb[0].mxu0 %v8159
      %v8230 = vpop.f32.mrb[0].mxu0
      %v8231 = vadd.f32 %v8132, %v8230
      %v8232 = vpop.f32.mrb[0].mxu0
      %v8233 = vpop.f32.mrb[0].mxu0
      %v8234 = vadd.f32 %v8132, %v8233
      %v8235 = vpop.f32.mrb[0].mxu0
      %8236 = vmatprep.mubr.bf16.mxu0 0
      %8237 = vmatmul.mubr.bf16.gmra.mrb[0].mxu0 %v8162
      %v8238 = vpop.f32.mrb[0].mxu0
      %v8239 = vadd.f32 %v8132, %v8238
      %v8240 = vpop.f32.mrb[0].mxu0
      %v8241 = vpop.f32.mrb[0].mxu0
      %v8242 = vadd.f32 %v8132, %v8241
      %v8243 = vpop.f32.mrb[0].mxu0
      %8244 = vdwg.mxu0
      %v8245 = vmul.f32 %v8199, -1.702
      %v8246 = vmul.f32 %v8202, -1.702
      %v8247 = vmul.f32 %v8207, -1.702
      %v8248 = vmul.f32 %v8210, -1.702
      %v8249 = vmul.f32 %v8215, -1.702
      %v8250 = vmul.f32 %v8218, -1.702
      %v8251 = vmul.f32 %v8223, -1.702
      %v8252 = vmul.f32 %v8226, -1.702
      %v8253 = vmul.f32 %v8231, -1.702
      %v8254 = vmul.f32 %v8234, -1.702
      %v8255 = vmul.f32 %v8239, -1.702
      %v8256 = vmul.f32 %v8242, -1.702
      %v8257 = vmul.f32 %v8245, 1.442695
      %v8258 = vpow.pop %v8257
      %v8259 = vmul.f32 %v8246, 1.442695
      %v8260 = vpow.pop %v8259
      %v8261 = vmul.f32 %v8247, 1.442695
      %v8262 = vpow.pop %v8261
      %v8263 = vmul.f32 %v8248, 1.442695
      %v8264 = vpow.pop %v8263
      %v8265 = vmul.f32 %v8249, 1.442695
      %v8266 = vpow.pop %v8265
      %v8267 = vmul.f32 %v8250, 1.442695
      %v8268 = vpow.pop %v8267
      %v8269 = vmul.f32 %v8251, 1.442695
      %v8270 = vpow.pop %v8269
      %v8271 = vmul.f32 %v8252, 1.442695
      %v8272 = vpow.pop %v8271
      %v8273 = vmul.f32 %v8253, 1.442695
      %v8274 = vpow.pop %v8273
      %v8275 = vmul.f32 %v8254, 1.442695
      %v8276 = vpow.pop %v8275
      %v8277 = vmul.f32 %v8255, 1.442695
      %v8278 = vpow.pop %v8277
      %v8279 = vmul.f32 %v8256, 1.442695
      %v8280 = vpow.pop %v8279
      %v8281 = vadd.f32 %v8258, 1.0
      %v8282 = vadd.f32 %v8260, 1.0
      %v8283 = vadd.f32 %v8262, 1.0
      %v8284 = vadd.f32 %v8264, 1.0
      %v8285 = vadd.f32 %v8266, 1.0
      %v8286 = vadd.f32 %v8268, 1.0
      %v8287 = vadd.f32 %v8270, 1.0
      %v8288 = vadd.f32 %v8272, 1.0
      %v8289 = vadd.f32 %v8274, 1.0
      %v8290 = vadd.f32 %v8276, 1.0
      %v8291 = vadd.f32 %v8278, 1.0
      %v8292 = vadd.f32 %v8280, 1.0
      %v8293 = vrcp.pop %v8281
      %v8294 = vrcp.pop %v8282
      %v8295 = vrcp.pop %v8283
      %v8296 = vrcp.pop %v8284
      %v8297 = vrcp.pop %v8285
      %v8298 = vrcp.pop %v8286
      %v8299 = vrcp.pop %v8287
      %v8300 = vrcp.pop %v8288
      %v8301 = vrcp.pop %v8289
      %v8302 = vrcp.pop %v8290
      %v8303 = vrcp.pop %v8291
      %v8304 = vrcp.pop %v8292
      %v8305 = vmul.f32 %v8199, %v8293
      %v8306 = vmul.f32 %v8202, %v8294
      %v8307 = vmul.f32 %v8207, %v8295
      %v8308 = vmul.f32 %v8210, %v8296
      %v8309 = vmul.f32 %v8215, %v8297
      %v8310 = vmul.f32 %v8218, %v8298
      %v8311 = vmul.f32 %v8223, %v8299
      %v8312 = vmul.f32 %v8226, %v8300
      %v8313 = vmul.f32 %v8231, %v8301
      %v8314 = vmul.f32 %v8234, %v8302
      %v8315 = vmul.f32 %v8239, %v8303
      %v8316 = vmul.f32 %v8242, %v8304
      %v8317 = vpack.c.bf16 %v8306, %v8305
      %v8318 = vpack.c.bf16 %v8308, %v8307
      %v8319 = vpack.c.bf16 %v8310, %v8309
      %v8320 = vpack.c.bf16 %v8312, %v8311
      %v8321 = vpack.c.bf16 %v8314, %v8313
      %v8322 = vpack.c.bf16 %v8316, %v8315
      %s8323 = scalar_lea.vmem %s11, 32
      %v8324 = vld [vmem:[%s8323] sm:$0xf]
      %v8325 = vld [vmem:[%s8323 + $0x4] sm:$0xf]
      %v8326 = vld [vmem:[%s8323 + $0x8] sm:$0xf]
      %v8327 = vld [vmem:[%s8323 + $0xc] sm:$0xf]
      %v8328 = vld [vmem:[%s8323 + $0x10] sm:$0xf]
      %v8329 = vld [vmem:[%s8323 + $0x14] sm:$0xf]
      %v8330 = vld [vmem:[%s8323 + $0x18] sm:$0xf]
      %v8331 = vld [vmem:[%s8323 + $0x1c] sm:$0xf]
      %v8340 = vunpack.c.l.b16 %v8324
      %v8341 = vunpack.c.l.b16 %v8325
      %v8342 = vunpack.c.l.b16 %v8326
      %v8343 = vunpack.c.l.b16 %v8327
      %v8344 = vunpack.c.l.b16 %v8328
      %v8345 = vunpack.c.l.b16 %v8329
      %v8346 = vunpack.c.l.b16 %v8330
      %v8347 = vunpack.c.l.b16 %v8331
      %v8348 = vpack.c.b16 %v8341, %v8340
      %v8349 = vpack.c.b16 %v8343, %v8342
      %v8350 = vpack.c.b16 %v8345, %v8344
      %v8351 = vpack.c.b16 %v8347, %v8346
      %v8357 = vsel %vm4507, %v8317, 0
      %v8360 = vsel %vm4507, %v8318, 0
      %v8363 = vsel %vm4507, %v8319, 0
      %v8366 = vsel %vm4507, %v8320, 0
      %v8369 = vsel %vm4507, %v8321, 0
      %v8372 = vsel %vm4507, %v8322, 0
      %8374 = vmatprep.subr.bf16.mxu0 0
      %8375 = vmatpush1.bf16.msra.mxu0 %v8348
      %8376 = vmatprep.subr.bf16.mxu0 0
      %8377 = vmatpush1.bf16.msra.mxu0 %v8349
      %8378 = vmatprep.subr.bf16.mxu0 0
      %8379 = vmatpush1.bf16.msra.mxu0 %v8350
      %8380 = vmatprep.subr.bf16.mxu0 0
      %8381 = vmatpush1.bf16.msra.mxu0 %v8351
      %8382 = vmatprep.subr.bf16.mxu0 0
      %8383 = vmatpush1.bf16.msra.mxu0 0
      %8384 = vmatprep.subr.bf16.mxu0 0
      %8385 = vmatpush1.bf16.msra.mxu0 0
      %8386 = vmatprep.subr.bf16.mxu0 0
      %8387 = vmatpush1.bf16.msra.mxu0 0
      %8388 = vmatprep.subr.bf16.mxu0 0
      %8389 = vmatpush1.bf16.msra.mxu0 0
      %8390 = vmatprep.subr.bf16.mxu0 0
      %8391 = vmatpush1.bf16.msra.mxu0 0
      %8392 = vmatprep.subr.bf16.mxu0 0
      %8393 = vmatpush1.bf16.msra.mxu0 0
      %8394 = vmatprep.subr.bf16.mxu0 0
      %8395 = vmatpush1.bf16.msra.mxu0 0
      %8396 = vmatprep.subr.bf16.mxu0 0
      %8397 = vmatpush1.bf16.msra.mxu0 0
      %8398 = vmatprep.subr.bf16.mxu0 0
      %8399 = vmatpush1.bf16.msra.mxu0 0
      %8400 = vmatprep.subr.bf16.mxu0 0
      %8401 = vmatpush1.bf16.msra.mxu0 0
      %8402 = vmatprep.subr.bf16.mxu0 0
      %8403 = vmatpush1.bf16.msra.mxu0 0
      %8404 = vmatprep.subr.bf16.mxu0 0
      %8405 = vmatpush1.bf16.msra.mxu0 0
      %8406 = vmatprep.mubr.bf16.mxu0 0
      %8407 = vmatmul.mubr.bf16.gmra.mrb[0].mxu0 %v8357
      %v8408 = vpop.f32.mrb[0].mxu0
      %v8409 = vadd.f32 0.0, %v8408
      %v8410 = vpop.f32.mrb[0].mxu0
      %v8411 = vpop.f32.mrb[0].mxu0
      %v8412 = vadd.f32 0.0, %v8411
      %v8413 = vpop.f32.mrb[0].mxu0
      %8414 = vmatprep.mubr.bf16.mxu0 0
      %8415 = vmatmul.mubr.bf16.gmra.mrb[0].mxu0 %v8360
      %v8416 = vpop.f32.mrb[0].mxu0
      %v8417 = vpop.f32.mrb[0].mxu0
      %v8418 = vpop.f32.mrb[0].mxu0
      %v8419 = vadd.f32 0.0, %v8418
      %v8420 = vpop.f32.mrb[0].mxu0
      %8421 = vmatprep.mubr.bf16.mxu0 0
      %8422 = vmatmul.mubr.bf16.gmra.mrb[0].mxu0 %v8363
      %v8423 = vpop.f32.mrb[0].mxu0
      %v8424 = vadd.f32 0.0, %v8423
      %v8425 = vpop.f32.mrb[0].mxu0
      %v8426 = vpop.f32.mrb[0].mxu0
      %v8427 = vpop.f32.mrb[0].mxu0
      %8428 = vmatprep.mubr.bf16.mxu0 0
      %8429 = vmatmul.mubr.bf16.gmra.mrb[0].mxu0 %v8366
      %v8430 = vpop.f32.mrb[0].mxu0
      %v8431 = vadd.f32 0.0, %v8430
      %v8432 = vpop.f32.mrb[0].mxu0
      %v8433 = vpop.f32.mrb[0].mxu0
      %v8434 = vadd.f32 0.0, %v8433
      %v8435 = vpop.f32.mrb[0].mxu0
      %8436 = vmatprep.mubr.bf16.mxu0 0
      %8437 = vmatmul.mubr.bf16.gmra.mrb[0].mxu0 %v8369
      %v8438 = vpop.f32.mrb[0].mxu0
      %v8439 = vpop.f32.mrb[0].mxu0
      %v8440 = vpop.f32.mrb[0].mxu0
      %v8441 = vadd.f32 0.0, %v8440
      %v8442 = vpop.f32.mrb[0].mxu0
      %8443 = vmatprep.mubr.bf16.mxu0 0
      %8444 = vmatmul.mubr.bf16.gmra.mrb[0].mxu0 %v8372
      %v8445 = vpop.f32.mrb[0].mxu0
      %v8446 = vadd.f32 0.0, %v8445
      %v8447 = vpop.f32.mrb[0].mxu0
      %v8448 = vpop.f32.mrb[0].mxu0
      %v8449 = vpop.f32.mrb[0].mxu0
      %8450 = vdwg.mxu0
      %v8451 = vadd.f32 %v7915, %v8409
      %v8452 = vadd.f32 %v7916, %v8412
      %v8453 = vadd.f32 %v7918, %v8419
      %v8454 = vadd.f32 %v7919, %v8424
      %v8455 = vadd.f32 %v7921, %v8431
      %v8456 = vadd.f32 %v7922, %v8434
      %v8457 = vadd.f32 %v7924, %v8441
      %v8458 = vadd.f32 %v7925, %v8446
      %v8459 = vlaneseq
      %v8460 = vshrl.u32 %v8459, 7
      %v8461 = vsub.s32 1, %v8460
      %v8462 = vrot.slane %v4638, %v8461
      %v8463 = vadd.f32 %v8451, %v8462
      %v8464 = vadd.f32 %v8452, %v8462
      %v8465 = vadd.f32 %v8453, %v8462
      %v8466 = vadd.f32 %v8454, %v8462
      %v8467 = vadd.f32 %v8455, %v8462
      %v8468 = vadd.f32 %v8456, %v8462
      %v8469 = vadd.f32 %v8457, %v8462
      %v8470 = vadd.f32 %v8458, %v8462
      %8473 = vrot.lane.b32.xlu0 %v8465, 32
      %v8474 = vpop.permute.xlu0 %8473
      %8475 = vrot.lane.b32.xlu0 %v8466, 32
      %v8476 = vpop.permute.xlu0 %8475
      %8481 = vrot.lane.b32.xlu0 %v8467, 64
      %v8482 = vpop.permute.xlu0 %8481
      %8483 = vrot.lane.b32.xlu0 %v8468, 64
      %v8484 = vpop.permute.xlu0 %8483
      %8489 = vrot.lane.b32.xlu0 %v8469, 96
      %v8490 = vpop.permute.xlu0 %8489
      %8491 = vrot.lane.b32.xlu0 %v8470, 96
      %v8492 = vpop.permute.xlu0 %8491
      %v8495 = vsel %vm600, %v8463, %v8474
      %v8496 = vsel %vm600, %v8464, %v8476
      %v8497 = vsel %vm4507, %v8495, %v8482
      %v8498 = vsel %vm4507, %v8496, %v8484
      %vm8499 = vcmask 785408
      %v8500 = vsel %vm8499, %v8497, %v8490
      %v8501 = vsel %vm8499, %v8498, %v8492
      %8502 = vst [vmem:[%s415] sm:$0xff] %v8500
      %8503 = vst [vmem:[%s415 + $0x8] sm:$0xff] %v8501
      %p8504 = scmp.lt.s32.totalorder %s23, 6
      %s8505 = scalar_select %p8504, %s23, 6
      %s8506 = smul.addr %s8505, 2
      %s8507 = smul.addr %s8506, 8
      %s8508 = scalar_lea.vmem %s12, %s8507
      // Predicated region
      $region69: #{run.1} parent=67 // pred_check
        %p8509 = pneg %p298
      $region70: #{run.1} parent=67 // pred_check_branch
        %8511 = sbr.rel (%p8509) target = $region72
      $region71: #{run.1} parent=67 // pred_region
        _
      $region72: #{run.1} parent=67 // pred_fallthru
        _
    $region68: #{run.1} parent=5 // pred_fallthru
      _
    %p8512 = scmp.le.s32.totalorder 2, %s18
    // Predicated region
    $region73: #{run.1} parent=5 // pred_check
      %p8513 = pneg %p8512
    $region74: #{run.1} parent=5 // pred_check_branch
      %8515 = sbr.rel (%p8513) target = $region76
    $region75: #{run.1} parent=5 // pred_region
      %s8516 = ssub.s32 %s18, 2
      // Predicated region
      $region77: #{run.1} parent=75 // pred_check
        %p8517 = pneg %p304
      $region78: #{run.1} parent=75 // pred_check_branch
        %8519 = sbr.rel (%p8517) target = $region80
      $region79: #{run.1} parent=75 // pred_region
        %p8520 = scmp.lt.s32.totalorder %s24, 6
        %s8521 = scalar_select %p8520, %s24, 6
        %s8522 = smul.addr %s8521, 2
        %s8523 = smul.addr %s8522, 8
        %s8524 = scalar_lea.vmem %s12, %s8523
      $region80: #{run.1} parent=75 // pred_fallthru
        _
    $region76: #{run.1} parent=5 // pred_fallthru
      _
  $region6: #{run.1} parent=0 // loop_footer
    %s22 = sadd.s32 1, %s18
  $region7: #{run.1} parent=0 // loop_footer_branch
    %17 = sbr.rel target = $region3
  $region8: #{run.1} parent=0 // loop_exit
    _

</llo_original>
